<compile_context>
chip_gen: v5e
topology: v5e:2x2
jax: 0.10.0
libtpu: 0.0.40
codegen_flags: <defaults>
</compile_context>

<pallas_src>
import math

import jax
import jax.numpy as jnp
from jax.experimental import pallas as pl
from jax.experimental.pallas import tpu as pltpu


_NEG_SLOPE = 0.2  # the module explicitly uses LeakyReLU(0.2)
_F32 = jnp.float32
_BF16 = jnp.bfloat16


# -----------------------------------------------------------------------------
# In-kernel helpers
# -----------------------------------------------------------------------------
def _set_padded(pad_ref, value, pad):
    """Write `value` (C, L) into pad_ref (C, L + 2*pad).

    Only the 2*pad edge columns are zero-filled; the interior is fully
    overwritten every call, so no full-buffer memset is needed.
    """
    c, lp = pad_ref.shape
    zeros = jnp.zeros((c, pad), pad_ref.dtype)
    pad_ref[:, :pad] = zeros
    pad_ref[:, lp - pad:] = zeros
    pad_ref[:, pad:lp - pad] = value.astype(pad_ref.dtype)


def _conv_stage(src, im_ref, w_ref, b_ref, pool_ref, *, c_in, ksize, lo, pool_k,
                off=0):
    """Conv1d (stride 1, pre-padded input) + LeakyReLU(0.2) + AvgPool1d(pool_k).

    src:      (c_in, Lp) padded input value (already in vregs/VMEM)
    im_ref:   (c_in*ksize, lo) im2col VMEM scratch (row index = k*c_in + c)
    w_ref:    (c_out, c_in*ksize) weights, column index = k*c_in + c
    b_ref:    (c_out, 1) f32 bias
    pool_ref: (lo_trim, lo // pool_k) block-averaging matrix (None iff pool_k==1)
    off:      column offset of tap 0 inside src (lets convolutions with
              different paddings share one padded copy of the input)
    returns:  (c_out, lo // pool_k) f32 activation value
    """
    for k in range(ksize):                       # im2col: one shifted slice per tap
        im_ref[k * c_in:(k + 1) * c_in, :] = (
            src[:, off + k:off + k + lo].astype(im_ref.dtype))
    y = jnp.dot(w_ref[...], im_ref[...], preferred_element_type=jnp.float32)
    y = y + b_ref[...]                           # (c_out, 1) broadcast
    y = jnp.where(y >= 0.0, y, _NEG_SLOPE * y)   # LeakyReLU(0.2)
    if pool_k > 1:                               # floor-mode average pooling (MXU)
        lo_trim = (lo // pool_k) * pool_k
        y = jnp.dot(y[:, :lo_trim].astype(pool_ref.dtype), pool_ref[...],
                    preferred_element_type=jnp.float32)
    return y


def _dot_head(h, w2d, b11):
    """Fused Linear(1024 -> 1) head on the (32,32) feature map."""
    t = jnp.sum(h * w2d, axis=1, keepdims=True)      # (32, 1)
    return jnp.sum(t, axis=0, keepdims=True) + b11   # (1, 1)


# -----------------------------------------------------------------------------
# Single fused forward kernel (DM + score, SM1, FM + classifier + softmax)
# -----------------------------------------------------------------------------
def _make_fused_kernel(classes):
    del classes  # shape is carried by the refs

    def kernel(x_ref,
               # DM branch + score head
               dw1, db1, dw2, db2, dw3, db3, ws, bs,
               # SM1 branch
               sw1, sb1, sw2, sb2, sw3, sb3,
               # FM branch + classifier head
               fw1, fb1, fw2, fb2, fw3, fb3, fw4, fb4, wc, bc,
               # shared pooling matrices
               p1024, p256, p64,
               # outputs
               sc_ref, lab_ref, dm_ref, sm_ref, fm_ref,
               # scratch
               pad_x,
               im_d1, pad_d2, im_d2, pad_d3, im_d3,
               im_s1, pad_s2, im_s2, pad_s3, im_s3,
               pad_f1, im_f1, pad_f2, im_f2, pad_f3, im_f3, pad_f4, im_f4):
        # ------------------------------------------------------------------
        # Shared padded copy of the raw signal: x at columns [5, 1029).
        # Serves dm1 (pad=5 -> taps at columns 0..9+j) and sm1_1 (pad=2 ->
        # taps at columns 3..7+j via off=3).
        # ------------------------------------------------------------------
        _set_padded(pad_x, x_ref[0], 5)
        src_x = pad_x[...]

        # ------------------------------- DM branch --------------------------
        h = _conv_stage(src_x, im_d1, dw1, db1, p1024,
                        c_in=1, ksize=10, lo=1024, pool_k=4)          # (8, 256)
        _set_padded(pad_d2, h, 7)
        h = _conv_stage(pad_d2[...], im_d2, dw2, db2, p256,
                        c_in=8, ksize=15, lo=256, pool_k=4)           # (16, 64)
        _set_padded(pad_d3, h, 7)
        dm = _conv_stage(pad_d3[...], im_d3, dw3, db3, p64,
                         c_in=16, ksize=15, lo=64, pool_k=2)          # (32, 32)
        dm_ref[0] = dm
        sc_ref[0] = _dot_head(dm, ws[...], bs[...])                   # score head

        # ------------------------------- SM1 branch -------------------------
        h = _conv_stage(src_x, im_s1, sw1, sb1, p1024,
                        c_in=1, ksize=5, lo=1024, pool_k=4, off=3)    # (8, 256)
        _set_padded(pad_s2, h, 3)
        h = _conv_stage(pad_s2[...], im_s2, sw2, sb2, p256,
                        c_in=8, ksize=7, lo=256, pool_k=4)            # (16, 64)
        _set_padded(pad_s3, h, 3)
        sm = _conv_stage(pad_s3[...], im_s3, sw3, sb3, p64,
                         c_in=16, ksize=7, lo=64, pool_k=2)           # (32, 32)
        sm_ref[0] = sm

        # ------------------------------- FM branch --------------------------
        # Classifier input channels: (SM1, SM2, DM), zero-padded by 1.  The
        # reference forward overwrites SM2 with SM1, so the SM2 conv chain is
        # dead code and never computed.
        # The (32 ch, 32 len) -> (1, 1024) flatten (torch.flatten order,
        # index = ch*32 + pos) is done row-by-row with static slices; a lane
        # relayout via jnp.reshape inside the kernel is avoided on purpose.
        zc = jnp.zeros((3, 1), pad_f1.dtype)
        pad_f1[:, 0:1] = zc
        pad_f1[:, 1025:1026] = zc
        for r in range(32):
            lo_c = 1 + 32 * r
            pad_f1[0:1, lo_c:lo_c + 32] = sm[r:r + 1, :]
            pad_f1[2:3, lo_c:lo_c + 32] = dm[r:r + 1, :]
        pad_f1[1:2, :] = pad_f1[0:1, :]     # SM2 channel == SM1 channel

        h = _conv_stage(pad_f1[...], im_f1, fw1, fb1, None,
                        c_in=3, ksize=3, lo=1024, pool_k=1)           # (16, 1024)
        _set_padded(pad_f2, h, 3)
        h = _conv_stage(pad_f2[...], im_f2, fw2, fb2, p1024,
                        c_in=16, ksize=7, lo=1024, pool_k=4)          # (16, 256)
        _set_padded(pad_f3, h, 3)
        h = _conv_stage(pad_f3[...], im_f3, fw3, fb3, p256,
                        c_in=16, ksize=7, lo=256, pool_k=4)           # (16, 64)
        _set_padded(pad_f4, h, 3)
        fm = _conv_stage(pad_f4[...], im_f4, fw4, fb4, p64,
                         c_in=16, ksize=7, lo=64, pool_k=2)           # (32, 32)
        fm_ref[0] = fm

        # Fused classifier head: Linear(1024 -> classes) + stable softmax,
        # vectorized over classes.  The class axis lives on sublanes so no
        # tiny in-kernel transpose is needed (output shape (classes, 1)).
        t = jnp.sum(wc[...] * fm, axis=2)                             # (classes, 32)
        logits = jnp.sum(t, axis=1, keepdims=True) + bc[...]          # (classes, 1)
        logits = logits - jnp.max(logits, axis=0, keepdims=True)
        e = jnp.exp(logits)
        lab_ref[0] = e / jnp.sum(e, axis=0, keepdims=True)            # (classes, 1)

    return kernel


# -----------------------------------------------------------------------------
# pallas_call wrapper
# -----------------------------------------------------------------------------
def _const_spec(a):
    nd = a.ndim
    return pl.BlockSpec(a.shape, lambda i, _n=nd: (0,) * _n)


def _forward_impl(prep, x):
    """x: (B, 1, 1024) f32 -> (scores (B,1,1), label (B,classes,1), DM/SM/FM (B,32,32))."""
    B = x.shape[0]
    classes = prep["cm_w"].shape[0]
    f32 = jnp.float32

    consts = (
        # DM branch + score head
        prep["dm_w"][0], prep["dm_b"][0], prep["dm_w"][1], prep["dm_b"][1],
        prep["dm_w"][2], prep["dm_b"][2], prep["score_w"], prep["score_b"],
        # SM1 branch
        prep["sm_w"][0], prep["sm_b"][0], prep["sm_w"][1], prep["sm_b"][1],
        prep["sm_w"][2], prep["sm_b"][2],
        # FM branch + classifier head
        prep["fm_w"][0], prep["fm_b"][0], prep["fm_w"][1], prep["fm_b"][1],
        prep["fm_w"][2], prep["fm_b"][2], prep["fm_w"][3], prep["fm_b"][3],
        prep["cm_w"], prep["cm_b"],
        # shared pooling matrices
        prep["pool_1024"], prep["pool_256"], prep["pool_64"],
    )

    scratch = [
        pltpu.VMEM((1, 1034), _F32),     # pad_x : x padded by 5 (shared dm1 / sm1_1)
        pltpu.VMEM((10, 1024), _F32),    # im_d1  (c_in=1 -> odd sublane rows: f32)
        pltpu.VMEM((8, 270), _BF16),     # pad_d2 (256 + 2*7)
        pltpu.VMEM((120, 256), _BF16),   # im_d2
        pltpu.VMEM((16, 78), _BF16),     # pad_d3 (64 + 2*7)
        pltpu.VMEM((240, 64), _BF16),    # im_d3
        pltpu.VMEM((5, 1024), _F32),     # im_s1  (c_in=1: f32)
        pltpu.VMEM((8, 262), _BF16),     # pad_s2 (256 + 2*3)
        pltpu.VMEM((56, 256), _BF16),    # im_s2
        pltpu.VMEM((16, 70), _BF16),     # pad_s3 (64 + 2*3)
        pltpu.VMEM((112, 64), _BF16),    # im_s3
        pltpu.VMEM((3, 1026), _F32),     # pad_f1 (flattened SM1, SM2, DM; pad=1)
        pltpu.VMEM((9, 1024), _F32),     # im_f1  (c_in=3: f32)
        pltpu.VMEM((16, 1030), _BF16),   # pad_f2 (1024 + 2*3)
        pltpu.VMEM((112, 1024), _BF16),  # im_f2
        pltpu.VMEM((16, 262), _BF16),    # pad_f3
        pltpu.VMEM((112, 256), _BF16),   # im_f3
        pltpu.VMEM((16, 70), _BF16),     # pad_f4
        pltpu.VMEM((112, 64), _BF16),    # im_f4
    ]

    return pl.pallas_call(
        _make_fused_kernel(classes),
        out_shape=(jax.ShapeDtypeStruct((B, 1, 1), f32),
                   jax.ShapeDtypeStruct((B, classes, 1), f32),
                   jax.ShapeDtypeStruct((B, 32, 32), f32),
                   jax.ShapeDtypeStruct((B, 32, 32), f32),
                   jax.ShapeDtypeStruct((B, 32, 32), f32)),
        grid=(B,),
        in_specs=[pl.BlockSpec((1, 1, 1024), lambda i: (i, 0, 0))]
                 + [_const_spec(a) for a in consts],
        out_specs=(pl.BlockSpec((1, 1, 1), lambda i: (i, 0, 0)),
                   pl.BlockSpec((1, classes, 1), lambda i: (i, 0, 0)),
                   pl.BlockSpec((1, 32, 32), lambda i: (i, 0, 0)),
                   pl.BlockSpec((1, 32, 32), lambda i: (i, 0, 0)),
                   pl.BlockSpec((1, 32, 32), lambda i: (i, 0, 0))),
        scratch_shapes=scratch,
        compiler_params=pltpu.CompilerParams(dimension_semantics=("parallel",)),
    )(x, *consts)


# -----------------------------------------------------------------------------
# One-time parameter preparation (hoisted glue)
# -----------------------------------------------------------------------------
def prepare_params(params):
    """Hoist weight re-layouts / pooling matrices out of the per-call path."""
    f32, bf16 = jnp.float32, jnp.bfloat16

    def conv_w(w, dtype):
        c_out, c_in, k = w.shape
        # column index k*c_in + c  <->  im2col row ordering in _conv_stage
        return (jnp.transpose(w.astype(f32), (0, 2, 1))
                .reshape(c_out, k * c_in).astype(dtype))

    def bias_col(b):
        return b.astype(f32).reshape(-1, 1)

    def pool_mat(l_out, p):
        # entries are 0 / (1/p) with p in {2,4}: exact in bf16
        return (jnp.repeat(jnp.eye(l_out, dtype=f32), p, axis=0) / float(p)).astype(bf16)

    classes = params["cm"][0].shape[0]
    # NOTE: the sm2_* parameters are intentionally unused; the reference forward
    # overwrites SM2 with SM1, so that branch is dead code.
    # First-stage convs (c_in in {1,3}) stay f32 (their im2col rows land at odd
    # sublane offsets); all deeper convs + pool matrices are staged in bf16 with
    # f32 accumulation.
    prep = {
        "dm_w": (conv_w(params["dm1"][0], f32),
                 conv_w(params["dm2"][0], bf16),
                 conv_w(params["dm3"][0], bf16)),
        "dm_b": tuple(bias_col(params[k][1]) for k in ("dm1", "dm2", "dm3")),
        "sm_w": (conv_w(params["sm1_1"][0], f32),
                 conv_w(params["sm1_2"][0], bf16),
                 conv_w(params["sm1_3"][0], bf16)),
        "sm_b": tuple(bias_col(params[k][1]) for k in ("sm1_1", "sm1_2", "sm1_3")),
        "fm_w": (conv_w(params["fm1"][0], f32),
                 conv_w(params["fm2"][0], bf16),
                 conv_w(params["fm3"][0], bf16),
                 conv_w(params["fm4"][0], bf16)),
        "fm_b": tuple(bias_col(params[k][1]) for k in ("fm1", "fm2", "fm3", "fm4")),
        "score_w": params["score"][0].astype(f32).reshape(32, 32),
        "score_b": params["score"][1].astype(f32).reshape(1, 1),
        "cm_w": params["cm"][0].astype(f32).reshape(classes, 32, 32),
        "cm_b": params["cm"][1].astype(f32).reshape(classes, 1),
        "pool_1024": pool_mat(256, 4),   # (1024, 256) bf16
        "pool_256": pool_mat(64, 4),     # (256, 64)  bf16
        "pool_64": pool_mat(32, 2),      # (64, 32)   bf16
    }
    return jax.tree_util.tree_map(jnp.asarray, prep)


# -----------------------------------------------------------------------------
# Deterministic parameter init (PyTorch-style fan_in uniform bounds)
# -----------------------------------------------------------------------------
def _init_conv(key, c_out, c_in, k):
    kw, kb = jax.random.split(key)
    bound = 1.0 / math.sqrt(c_in * k)
    w = jax.random.uniform(kw, (c_out, c_in, k), jnp.float32, -bound, bound)
    b = jax.random.uniform(kb, (c_out,), jnp.float32, -bound, bound)
    return w, b


def _init_linear(key, out_f, in_f):
    kw, kb = jax.random.split(key)
    bound = 1.0 / math.sqrt(in_f)
    w = jax.random.uniform(kw, (out_f, in_f), jnp.float32, -bound, bound)
    b = jax.random.uniform(kb, (out_f,), jnp.float32, -bound, bound)
    return w, b


def init_params(key, classes=2):
    keys = jax.random.split(key, 15)
    p = {}
    p["dm1"] = _init_conv(keys[0], 8, 1, 10)
    p["dm2"] = _init_conv(keys[1], 16, 8, 15)
    p["dm3"] = _init_conv(keys[2], 32, 16, 15)
    p["score"] = _init_linear(keys[3], 1, 1024)
    p["sm1_1"] = _init_conv(keys[4], 8, 1, 5)
    p["sm1_2"] = _init_conv(keys[5], 16, 8, 7)
    p["sm1_3"] = _init_conv(keys[6], 32, 16, 7)
    p["sm2_1"] = _init_conv(keys[7], 8, 1, 75)   # dead branch (kept for module parity)
    p["sm2_2"] = _init_conv(keys[8], 16, 8, 7)
    p["sm2_3"] = _init_conv(keys[9], 32, 16, 7)
    p["fm1"] = _init_conv(keys[10], 16, 3, 3)
    p["fm2"] = _init_conv(keys[11], 16, 16, 7)
    p["fm3"] = _init_conv(keys[12], 16, 16, 7)
    p["fm4"] = _init_conv(keys[13], 32, 16, 7)
    p["cm"] = _init_linear(keys[14], classes, 1024)
    return p


# -----------------------------------------------------------------------------
# Full forward pass (mirrors Discriminator_1024V2.forward), jit-compiled
# -----------------------------------------------------------------------------
@jax.jit
def forward(prep, X):
    B = X.shape[0]
    x = X.reshape(B, 1, -1).astype(jnp.float32)        # (B, 1, 1024)
    sc, lab, dm_t, sm_t, fm_t = _forward_impl(prep, x)
    scores = sc.reshape(B, 1)                          # (B, 1)
    label = lab.reshape(B, -1)                         # (B, classes)
    DM = dm_t.reshape(B, -1)                           # (B, 1024)
    SM = sm_t.reshape(B, -1)                           # (B, 1024)
    FM = fm_t.reshape(B, -1)                           # (B, 1024)
    # note: self.activ (Sigmoid) is defined but never used in the reference forward.
    return scores, label, DM, SM, FM


# -----------------------------------------------------------------------------
# Plain-JAX/XLA reference for correctness checking
# -----------------------------------------------------------------------------
def _reference_forward(params, X):
    B = X.shape[0]
    x = X.reshape(B, 1, -1).astype(jnp.float32)

    def block(h, w, b, pad, p):
        y = jax.lax.conv_general_dilated(
            h, w.astype(jnp.float32), window_strides=(1,), padding=[(pad, pad)],
            dimension_numbers=("NCH", "OIH", "NCH"))
        y = y + b.astype(jnp.float32).reshape(1, -1, 1)
        y = jnp.where(y >= 0.0, y, _NEG_SLOPE * y)
        if p > 1:
            Bc, C, L = y.shape
            y = y[:, :, :(L // p) * p].reshape(Bc, C, L // p, p).mean(axis=-1)
        return y

    h = block(x, *params["dm1"], 5, 4)
    h = block(h, *params["dm2"], 7, 4)
    h = block(h, *params["dm3"], 7, 2)
    DM = h.reshape(B, -1)
    scores = DM @ params["score"][0].astype(jnp.float32).T + params["score"][1]
    s = block(x, *params["sm1_1"], 2, 4)
    s = block(s, *params["sm1_2"], 3, 4)
    s = block(s, *params["sm1_3"], 3, 2)
    SM = s.reshape(B, -1)
    cat = jnp.stack([SM, SM, DM], axis=1)        # SM2 == SM1 in the reference code
    f = block(cat, *params["fm1"], 1, 1)
    f = block(f, *params["fm2"], 3, 4)
    f = block(f, *params["fm3"], 3, 4)
    f = block(f, *params["fm4"], 3, 2)
    FM = f.reshape(B, -1)
    label = jax.nn.softmax(FM @ params["cm"][0].astype(jnp.float32).T + params["cm"][1], axis=1)
    return scores, label, DM, SM, FM


if __name__ == "__main__":
    key = jax.random.PRNGKey(0)
    pkey, xkey = jax.random.split(key)
    params = init_params(pkey, classes=2)
    prep = prepare_params(params)

    # Input (2, 4, 16, 16): each sample is flattened to a length-1024 signal,
    # as required by the hard-coded Linear(1024, ...) heads.
    X = jax.random.normal(xkey, (2, 4, 16, 16), jnp.float32)

    outs = jax.block_until_ready(forward(prep, X))
    scores, label, DM, SM, FM = outs

    assert scores.shape == (2, 1)
    assert label.shape == (2, 2)
    assert DM.shape == (2, 1024)
    assert SM.shape == (2, 1024)
    assert FM.shape == (2, 1024)
    assert bool(jnp.all(jnp.isfinite(scores)))
    assert bool(jnp.allclose(jnp.sum(label, axis=1), 1.0, atol=1e-5))

    # Cross-check against a plain-JAX/XLA f32 reference (tolerance covers the
    # bf16 staging of deep-layer weights/activations with f32 accumulation).
    ref = _reference_forward(params, X)
    for got, want in zip(outs, ref):
        assert bool(jnp.allclose(got, want, rtol=2e-2, atol=2e-2)), \
            float(jnp.max(jnp.abs(got - want)))

    print("KERNEL_OK")
</pallas_src>

<mosaic_0001>
module attributes {stable_mosaic.version = 11 : i64} {
  func.func @kernel(%arg0: i32, %arg1: memref<1x1x1024xf32, #tpu.memory_space<vmem>>, %arg2: memref<8x10xf32, #tpu.memory_space<vmem>>, %arg3: memref<8x1xf32, #tpu.memory_space<vmem>>, %arg4: memref<16x120xbf16, #tpu.memory_space<vmem>>, %arg5: memref<16x1xf32, #tpu.memory_space<vmem>>, %arg6: memref<32x240xbf16, #tpu.memory_space<vmem>>, %arg7: memref<32x1xf32, #tpu.memory_space<vmem>>, %arg8: memref<32x32xf32, #tpu.memory_space<vmem>>, %arg9: memref<1x1xf32, #tpu.memory_space<vmem>>, %arg10: memref<8x5xf32, #tpu.memory_space<vmem>>, %arg11: memref<8x1xf32, #tpu.memory_space<vmem>>, %arg12: memref<16x56xbf16, #tpu.memory_space<vmem>>, %arg13: memref<16x1xf32, #tpu.memory_space<vmem>>, %arg14: memref<32x112xbf16, #tpu.memory_space<vmem>>, %arg15: memref<32x1xf32, #tpu.memory_space<vmem>>, %arg16: memref<16x9xf32, #tpu.memory_space<vmem>>, %arg17: memref<16x1xf32, #tpu.memory_space<vmem>>, %arg18: memref<16x112xbf16, #tpu.memory_space<vmem>>, %arg19: memref<16x1xf32, #tpu.memory_space<vmem>>, %arg20: memref<16x112xbf16, #tpu.memory_space<vmem>>, %arg21: memref<16x1xf32, #tpu.memory_space<vmem>>, %arg22: memref<32x112xbf16, #tpu.memory_space<vmem>>, %arg23: memref<32x1xf32, #tpu.memory_space<vmem>>, %arg24: memref<2x32x32xf32, #tpu.memory_space<vmem>>, %arg25: memref<2x1xf32, #tpu.memory_space<vmem>>, %arg26: memref<1024x256xbf16, #tpu.memory_space<vmem>>, %arg27: memref<256x64xbf16, #tpu.memory_space<vmem>>, %arg28: memref<64x32xbf16, #tpu.memory_space<vmem>>, %arg29: memref<1x1x1xf32, #tpu.memory_space<vmem>>, %arg30: memref<1x2x1xf32, #tpu.memory_space<vmem>>, %arg31: memref<1x32x32xf32, #tpu.memory_space<vmem>>, %arg32: memref<1x32x32xf32, #tpu.memory_space<vmem>>, %arg33: memref<1x32x32xf32, #tpu.memory_space<vmem>>, %arg34: memref<1x1034xf32, #tpu.memory_space<vmem>>, %arg35: memref<10x1024xf32, #tpu.memory_space<vmem>>, %arg36: memref<8x270xbf16, #tpu.memory_space<vmem>>, %arg37: memref<120x256xbf16, #tpu.memory_space<vmem>>, %arg38: memref<16x78xbf16, #tpu.memory_space<vmem>>, %arg39: memref<240x64xbf16, #tpu.memory_space<vmem>>, %arg40: memref<5x1024xf32, #tpu.memory_space<vmem>>, %arg41: memref<8x262xbf16, #tpu.memory_space<vmem>>, %arg42: memref<56x256xbf16, #tpu.memory_space<vmem>>, %arg43: memref<16x70xbf16, #tpu.memory_space<vmem>>, %arg44: memref<112x64xbf16, #tpu.memory_space<vmem>>, %arg45: memref<3x1026xf32, #tpu.memory_space<vmem>>, %arg46: memref<9x1024xf32, #tpu.memory_space<vmem>>, %arg47: memref<16x1030xbf16, #tpu.memory_space<vmem>>, %arg48: memref<112x1024xbf16, #tpu.memory_space<vmem>>, %arg49: memref<16x262xbf16, #tpu.memory_space<vmem>>, %arg50: memref<112x256xbf16, #tpu.memory_space<vmem>>, %arg51: memref<16x70xbf16, #tpu.memory_space<vmem>>, %arg52: memref<112x64xbf16, #tpu.memory_space<vmem>>) attributes {dimension_semantics = [#tpu.dimension_semantics<parallel>], iteration_bounds = array<i64: 2>, scalar_prefetch = 0 : i64, scratch_operands = 19 : i64, tpu.core_type = #tpu.core_type<tc>, window_params = [{transform_indices = @transform_0, window_bounds = array<i64: 1, 1, 1024>}, {pipeline_mode = #tpu.pipeline_mode<synchronous>, transform_indices = @transform_1, window_bounds = array<i64: 8, 10>}, {pipeline_mode = #tpu.pipeline_mode<synchronous>, transform_indices = @transform_2, window_bounds = array<i64: 8, 1>}, {pipeline_mode = #tpu.pipeline_mode<synchronous>, transform_indices = @transform_3, window_bounds = array<i64: 16, 120>}, {pipeline_mode = #tpu.pipeline_mode<synchronous>, transform_indices = @transform_4, window_bounds = array<i64: 16, 1>}, {pipeline_mode = #tpu.pipeline_mode<synchronous>, transform_indices = @transform_5, window_bounds = array<i64: 32, 240>}, {pipeline_mode = #tpu.pipeline_mode<synchronous>, transform_indices = @transform_6, window_bounds = array<i64: 32, 1>}, {pipeline_mode = #tpu.pipeline_mode<synchronous>, transform_indices = @transform_7, window_bounds = array<i64: 32, 32>}, {pipeline_mode = #tpu.pipeline_mode<synchronous>, transform_indices = @transform_8, window_bounds = array<i64: 1, 1>}, {pipeline_mode = #tpu.pipeline_mode<synchronous>, transform_indices = @transform_9, window_bounds = array<i64: 8, 5>}, {pipeline_mode = #tpu.pipeline_mode<synchronous>, transform_indices = @transform_10, window_bounds = array<i64: 8, 1>}, {pipeline_mode = #tpu.pipeline_mode<synchronous>, transform_indices = @transform_11, window_bounds = array<i64: 16, 56>}, {pipeline_mode = #tpu.pipeline_mode<synchronous>, transform_indices = @transform_12, window_bounds = array<i64: 16, 1>}, {pipeline_mode = #tpu.pipeline_mode<synchronous>, transform_indices = @transform_13, window_bounds = array<i64: 32, 112>}, {pipeline_mode = #tpu.pipeline_mode<synchronous>, transform_indices = @transform_14, window_bounds = array<i64: 32, 1>}, {pipeline_mode = #tpu.pipeline_mode<synchronous>, transform_indices = @transform_15, window_bounds = array<i64: 16, 9>}, {pipeline_mode = #tpu.pipeline_mode<synchronous>, transform_indices = @transform_16, window_bounds = array<i64: 16, 1>}, {pipeline_mode = #tpu.pipeline_mode<synchronous>, transform_indices = @transform_17, window_bounds = array<i64: 16, 112>}, {pipeline_mode = #tpu.pipeline_mode<synchronous>, transform_indices = @transform_18, window_bounds = array<i64: 16, 1>}, {pipeline_mode = #tpu.pipeline_mode<synchronous>, transform_indices = @transform_19, window_bounds = array<i64: 16, 112>}, {pipeline_mode = #tpu.pipeline_mode<synchronous>, transform_indices = @transform_20, window_bounds = array<i64: 16, 1>}, {pipeline_mode = #tpu.pipeline_mode<synchronous>, transform_indices = @transform_21, window_bounds = array<i64: 32, 112>}, {pipeline_mode = #tpu.pipeline_mode<synchronous>, transform_indices = @transform_22, window_bounds = array<i64: 32, 1>}, {pipeline_mode = #tpu.pipeline_mode<synchronous>, transform_indices = @transform_23, window_bounds = array<i64: 2, 32, 32>}, {pipeline_mode = #tpu.pipeline_mode<synchronous>, transform_indices = @transform_24, window_bounds = array<i64: 2, 1>}, {pipeline_mode = #tpu.pipeline_mode<synchronous>, transform_indices = @transform_25, window_bounds = array<i64: 1024, 256>}, {pipeline_mode = #tpu.pipeline_mode<synchronous>, transform_indices = @transform_26, window_bounds = array<i64: 256, 64>}, {pipeline_mode = #tpu.pipeline_mode<synchronous>, transform_indices = @transform_27, window_bounds = array<i64: 64, 32>}, {transform_indices = @transform_28, window_bounds = array<i64: 1, 1, 1>}, {transform_indices = @transform_29, window_bounds = array<i64: 1, 2, 1>}, {transform_indices = @transform_30, window_bounds = array<i64: 1, 32, 32>}, {transform_indices = @transform_31, window_bounds = array<i64: 1, 32, 32>}, {transform_indices = @transform_32, window_bounds = array<i64: 1, 32, 32>}]} {
    %c0 = arith.constant 0 : index
    %c0_0 = arith.constant 0 : index
    %c0_1 = arith.constant 0 : index
    %0 = vector.load %arg1[%c0, %c0_0, %c0_1] : memref<1x1x1024xf32, #tpu.memory_space<vmem>>, vector<1x1x1024xf32>
    %1 = vector.shape_cast %0 : vector<1x1x1024xf32> to vector<1x1024xf32>
    %cst = arith.constant 0.000000e+00 : f32
    %2 = vector.broadcast %cst : f32 to vector<1x5xf32>
    %c0_2 = arith.constant 0 : index
    %c0_3 = arith.constant 0 : index
    %3 = vector.load %arg34[%c0_2, %c0_3] : memref<1x1034xf32, #tpu.memory_space<vmem>>, vector<1x5xf32>
    tpu.vector_store %arg34[%c0_2, %c0_3], %2 {strides = array<i32>} : memref<1x1034xf32, #tpu.memory_space<vmem>>, vector<1x5xf32>,
    %c0_4 = arith.constant 0 : index
    %c1029 = arith.constant 1029 : index
    %4 = vector.load %arg34[%c0_4, %c1029] : memref<1x1034xf32, #tpu.memory_space<vmem>>, vector<1x5xf32>
    tpu.vector_store %arg34[%c0_4, %c1029], %2 {strides = array<i32>} : memref<1x1034xf32, #tpu.memory_space<vmem>>, vector<1x5xf32>,
    %c0_5 = arith.constant 0 : index
    %c5 = arith.constant 5 : index
    %5 = vector.load %arg34[%c0_5, %c5] : memref<1x1034xf32, #tpu.memory_space<vmem>>, vector<1x1024xf32>
    tpu.vector_store %arg34[%c0_5, %c5], %1 {strides = array<i32>} : memref<1x1034xf32, #tpu.memory_space<vmem>>, vector<1x1024xf32>,
    %c0_6 = arith.constant 0 : index
    %c0_7 = arith.constant 0 : index
    %6 = vector.load %arg34[%c0_6, %c0_7] : memref<1x1034xf32, #tpu.memory_space<vmem>>, vector<1x1034xf32>
    %7 = vector.extract_strided_slice %6 {offsets = [0, 0], sizes = [1, 1024], strides = [1, 1]} : vector<1x1034xf32> to vector<1x1024xf32>
    %c0_8 = arith.constant 0 : index
    %c0_9 = arith.constant 0 : index
    %8 = vector.load %arg35[%c0_8, %c0_9] : memref<10x1024xf32, #tpu.memory_space<vmem>>, vector<1x1024xf32>
    tpu.vector_store %arg35[%c0_8, %c0_9], %7 {strides = array<i32>} : memref<10x1024xf32, #tpu.memory_space<vmem>>, vector<1x1024xf32>,
    %9 = vector.extract_strided_slice %6 {offsets = [0, 1], sizes = [1, 1024], strides = [1, 1]} : vector<1x1034xf32> to vector<1x1024xf32>
    %c1 = arith.constant 1 : index
    %c0_10 = arith.constant 0 : index
    %10 = vector.load %arg35[%c1, %c0_10] : memref<10x1024xf32, #tpu.memory_space<vmem>>, vector<1x1024xf32>
    tpu.vector_store %arg35[%c1, %c0_10], %9 {strides = array<i32>} : memref<10x1024xf32, #tpu.memory_space<vmem>>, vector<1x1024xf32>,
    %11 = vector.extract_strided_slice %6 {offsets = [0, 2], sizes = [1, 1024], strides = [1, 1]} : vector<1x1034xf32> to vector<1x1024xf32>
    %c2 = arith.constant 2 : index
    %c0_11 = arith.constant 0 : index
    %12 = vector.load %arg35[%c2, %c0_11] : memref<10x1024xf32, #tpu.memory_space<vmem>>, vector<1x1024xf32>
    tpu.vector_store %arg35[%c2, %c0_11], %11 {strides = array<i32>} : memref<10x1024xf32, #tpu.memory_space<vmem>>, vector<1x1024xf32>,
    %13 = vector.extract_strided_slice %6 {offsets = [0, 3], sizes = [1, 1024], strides = [1, 1]} : vector<1x1034xf32> to vector<1x1024xf32>
    %c3 = arith.constant 3 : index
    %c0_12 = arith.constant 0 : index
    %14 = vector.load %arg35[%c3, %c0_12] : memref<10x1024xf32, #tpu.memory_space<vmem>>, vector<1x1024xf32>
    tpu.vector_store %arg35[%c3, %c0_12], %13 {strides = array<i32>} : memref<10x1024xf32, #tpu.memory_space<vmem>>, vector<1x1024xf32>,
    %15 = vector.extract_strided_slice %6 {offsets = [0, 4], sizes = [1, 1024], strides = [1, 1]} : vector<1x1034xf32> to vector<1x1024xf32>
    %c4 = arith.constant 4 : index
    %c0_13 = arith.constant 0 : index
    %16 = vector.load %arg35[%c4, %c0_13] : memref<10x1024xf32, #tpu.memory_space<vmem>>, vector<1x1024xf32>
    tpu.vector_store %arg35[%c4, %c0_13], %15 {strides = array<i32>} : memref<10x1024xf32, #tpu.memory_space<vmem>>, vector<1x1024xf32>,
    %17 = vector.extract_strided_slice %6 {offsets = [0, 5], sizes = [1, 1024], strides = [1, 1]} : vector<1x1034xf32> to vector<1x1024xf32>
    %c5_14 = arith.constant 5 : index
    %c0_15 = arith.constant 0 : index
    %18 = vector.load %arg35[%c5_14, %c0_15] : memref<10x1024xf32, #tpu.memory_space<vmem>>, vector<1x1024xf32>
    tpu.vector_store %arg35[%c5_14, %c0_15], %17 {strides = array<i32>} : memref<10x1024xf32, #tpu.memory_space<vmem>>, vector<1x1024xf32>,
    %19 = vector.extract_strided_slice %6 {offsets = [0, 6], sizes = [1, 1024], strides = [1, 1]} : vector<1x1034xf32> to vector<1x1024xf32>
    %c6 = arith.constant 6 : index
    %c0_16 = arith.constant 0 : index
    %20 = vector.load %arg35[%c6, %c0_16] : memref<10x1024xf32, #tpu.memory_space<vmem>>, vector<1x1024xf32>
    tpu.vector_store %arg35[%c6, %c0_16], %19 {strides = array<i32>} : memref<10x1024xf32, #tpu.memory_space<vmem>>, vector<1x1024xf32>,
    %21 = vector.extract_strided_slice %6 {offsets = [0, 7], sizes = [1, 1024], strides = [1, 1]} : vector<1x1034xf32> to vector<1x1024xf32>
    %c7 = arith.constant 7 : index
    %c0_17 = arith.constant 0 : index
    %22 = vector.load %arg35[%c7, %c0_17] : memref<10x1024xf32, #tpu.memory_space<vmem>>, vector<1x1024xf32>
    tpu.vector_store %arg35[%c7, %c0_17], %21 {strides = array<i32>} : memref<10x1024xf32, #tpu.memory_space<vmem>>, vector<1x1024xf32>,
    %23 = vector.extract_strided_slice %6 {offsets = [0, 8], sizes = [1, 1024], strides = [1, 1]} : vector<1x1034xf32> to vector<1x1024xf32>
    %c8 = arith.constant 8 : index
    %c0_18 = arith.constant 0 : index
    %24 = vector.load %arg35[%c8, %c0_18] : memref<10x1024xf32, #tpu.memory_space<vmem>>, vector<1x1024xf32>
    tpu.vector_store %arg35[%c8, %c0_18], %23 {strides = array<i32>} : memref<10x1024xf32, #tpu.memory_space<vmem>>, vector<1x1024xf32>,
    %25 = vector.extract_strided_slice %6 {offsets = [0, 9], sizes = [1, 1024], strides = [1, 1]} : vector<1x1034xf32> to vector<1x1024xf32>
    %c9 = arith.constant 9 : index
    %c0_19 = arith.constant 0 : index
    %26 = vector.load %arg35[%c9, %c0_19] : memref<10x1024xf32, #tpu.memory_space<vmem>>, vector<1x1024xf32>
    tpu.vector_store %arg35[%c9, %c0_19], %25 {strides = array<i32>} : memref<10x1024xf32, #tpu.memory_space<vmem>>, vector<1x1024xf32>,
    %c0_20 = arith.constant 0 : index
    %c0_21 = arith.constant 0 : index
    %27 = vector.load %arg2[%c0_20, %c0_21] : memref<8x10xf32, #tpu.memory_space<vmem>>, vector<8x10xf32>
    %c0_22 = arith.constant 0 : index
    %c0_23 = arith.constant 0 : index
    %28 = vector.load %arg35[%c0_22, %c0_23] : memref<10x1024xf32, #tpu.memory_space<vmem>>, vector<10x1024xf32>
    %cst_24 = arith.constant dense<0.000000e+00> : vector<8x1024xf32>
    %29 = tpu.matmul %27, %28, %cst_24 {dimension_numbers = #tpu.dot_dimension_numbers<[1], [0], [0], [1], [0, 0, 1, 1], [], []>} : vector<8x10xf32>, vector<10x1024xf32>, vector<8x1024xf32> -> vector<8x1024xf32>
    %c0_25 = arith.constant 0 : index
    %c0_26 = arith.constant 0 : index
    %30 = vector.load %arg3[%c0_25, %c0_26] : memref<8x1xf32, #tpu.memory_space<vmem>>, vector<8x1xf32>
    %31 = vector.broadcast %30 : vector<8x1xf32> to vector<8x1024xf32>
    %32 = arith.addf %29, %31 : vector<8x1024xf32>
    %cst_27 = arith.constant 0.000000e+00 : f32
    %33 = vector.broadcast %cst_27 : f32 to vector<8x1024xf32>
    %34 = arith.cmpf oge, %32, %33 : vector<8x1024xf32>
    %cst_28 = arith.constant 2.000000e-01 : f32
    %35 = vector.broadcast %cst_28 : f32 to vector<8x1024xf32>
    %36 = arith.mulf %35, %32 : vector<8x1024xf32>
    %37 = arith.select %34, %32, %36 : vector<8x1024xi1>, vector<8x1024xf32>
    %38 = arith.truncf %37 : vector<8x1024xf32> to vector<8x1024xbf16>
    %c0_29 = arith.constant 0 : index
    %c0_30 = arith.constant 0 : index
    %39 = vector.load %arg26[%c0_29, %c0_30] : memref<1024x256xbf16, #tpu.memory_space<vmem>>, vector<1024x256xbf16>
    %cst_31 = arith.constant dense<0.000000e+00> : vector<8x256xf32>
    %40 = tpu.matmul %38, %39, %cst_31 {dimension_numbers = #tpu.dot_dimension_numbers<[1], [0], [0], [1], [0, 0, 1, 1], [], []>} : vector<8x1024xbf16>, vector<1024x256xbf16>, vector<8x256xf32> -> vector<8x256xf32>
    %cst_32 = arith.constant 0.000000e+00 : bf16
    %41 = vector.broadcast %cst_32 : bf16 to vector<8x7xbf16>
    %c0_33 = arith.constant 0 : index
    %c0_34 = arith.constant 0 : index
    %42 = vector.load %arg36[%c0_33, %c0_34] : memref<8x270xbf16, #tpu.memory_space<vmem>>, vector<8x7xbf16>
    tpu.vector_store %arg36[%c0_33, %c0_34], %41 {strides = array<i32>} : memref<8x270xbf16, #tpu.memory_space<vmem>>, vector<8x7xbf16>,
    %c0_35 = arith.constant 0 : index
    %c263 = arith.constant 263 : index
    %43 = vector.load %arg36[%c0_35, %c263] : memref<8x270xbf16, #tpu.memory_space<vmem>>, vector<8x7xbf16>
    tpu.vector_store %arg36[%c0_35, %c263], %41 {strides = array<i32>} : memref<8x270xbf16, #tpu.memory_space<vmem>>, vector<8x7xbf16>,
    %44 = arith.truncf %40 : vector<8x256xf32> to vector<8x256xbf16>
    %c0_36 = arith.constant 0 : index
    %c7_37 = arith.constant 7 : index
    %45 = vector.load %arg36[%c0_36, %c7_37] : memref<8x270xbf16, #tpu.memory_space<vmem>>, vector<8x256xbf16>
    tpu.vector_store %arg36[%c0_36, %c7_37], %44 {strides = array<i32>} : memref<8x270xbf16, #tpu.memory_space<vmem>>, vector<8x256xbf16>,
    %c0_38 = arith.constant 0 : index
    %c0_39 = arith.constant 0 : index
    %46 = vector.load %arg36[%c0_38, %c0_39] : memref<8x270xbf16, #tpu.memory_space<vmem>>, vector<8x270xbf16>
    %47 = vector.extract_strided_slice %46 {offsets = [0, 0], sizes = [8, 256], strides = [1, 1]} : vector<8x270xbf16> to vector<8x256xbf16>
    %c0_40 = arith.constant 0 : index
    %c0_41 = arith.constant 0 : index
    %48 = vector.load %arg37[%c0_40, %c0_41] : memref<120x256xbf16, #tpu.memory_space<vmem>>, vector<8x256xbf16>
    tpu.vector_store %arg37[%c0_40, %c0_41], %47 {strides = array<i32>} : memref<120x256xbf16, #tpu.memory_space<vmem>>, vector<8x256xbf16>,
    %49 = vector.extract_strided_slice %46 {offsets = [0, 1], sizes = [8, 256], strides = [1, 1]} : vector<8x270xbf16> to vector<8x256xbf16>
    %c8_42 = arith.constant 8 : index
    %c0_43 = arith.constant 0 : index
    %50 = vector.load %arg37[%c8_42, %c0_43] : memref<120x256xbf16, #tpu.memory_space<vmem>>, vector<8x256xbf16>
    tpu.vector_store %arg37[%c8_42, %c0_43], %49 {strides = array<i32>} : memref<120x256xbf16, #tpu.memory_space<vmem>>, vector<8x256xbf16>,
    %51 = vector.extract_strided_slice %46 {offsets = [0, 2], sizes = [8, 256], strides = [1, 1]} : vector<8x270xbf16> to vector<8x256xbf16>
    %c16 = arith.constant 16 : index
    %c0_44 = arith.constant 0 : index
    %52 = vector.load %arg37[%c16, %c0_44] : memref<120x256xbf16, #tpu.memory_space<vmem>>, vector<8x256xbf16>
    tpu.vector_store %arg37[%c16, %c0_44], %51 {strides = array<i32>} : memref<120x256xbf16, #tpu.memory_space<vmem>>, vector<8x256xbf16>,
    %53 = vector.extract_strided_slice %46 {offsets = [0, 3], sizes = [8, 256], strides = [1, 1]} : vector<8x270xbf16> to vector<8x256xbf16>
    %c24 = arith.constant 24 : index
    %c0_45 = arith.constant 0 : index
    %54 = vector.load %arg37[%c24, %c0_45] : memref<120x256xbf16, #tpu.memory_space<vmem>>, vector<8x256xbf16>
    tpu.vector_store %arg37[%c24, %c0_45], %53 {strides = array<i32>} : memref<120x256xbf16, #tpu.memory_space<vmem>>, vector<8x256xbf16>,
    %55 = vector.extract_strided_slice %46 {offsets = [0, 4], sizes = [8, 256], strides = [1, 1]} : vector<8x270xbf16> to vector<8x256xbf16>
    %c32 = arith.constant 32 : index
    %c0_46 = arith.constant 0 : index
    %56 = vector.load %arg37[%c32, %c0_46] : memref<120x256xbf16, #tpu.memory_space<vmem>>, vector<8x256xbf16>
    tpu.vector_store %arg37[%c32, %c0_46], %55 {strides = array<i32>} : memref<120x256xbf16, #tpu.memory_space<vmem>>, vector<8x256xbf16>,
    %57 = vector.extract_strided_slice %46 {offsets = [0, 5], sizes = [8, 256], strides = [1, 1]} : vector<8x270xbf16> to vector<8x256xbf16>
    %c40 = arith.constant 40 : index
    %c0_47 = arith.constant 0 : index
    %58 = vector.load %arg37[%c40, %c0_47] : memref<120x256xbf16, #tpu.memory_space<vmem>>, vector<8x256xbf16>
    tpu.vector_store %arg37[%c40, %c0_47], %57 {strides = array<i32>} : memref<120x256xbf16, #tpu.memory_space<vmem>>, vector<8x256xbf16>,
    %59 = vector.extract_strided_slice %46 {offsets = [0, 6], sizes = [8, 256], strides = [1, 1]} : vector<8x270xbf16> to vector<8x256xbf16>
    %c48 = arith.constant 48 : index
    %c0_48 = arith.constant 0 : index
    %60 = vector.load %arg37[%c48, %c0_48] : memref<120x256xbf16, #tpu.memory_space<vmem>>, vector<8x256xbf16>
    tpu.vector_store %arg37[%c48, %c0_48], %59 {strides = array<i32>} : memref<120x256xbf16, #tpu.memory_space<vmem>>, vector<8x256xbf16>,
    %61 = vector.extract_strided_slice %46 {offsets = [0, 7], sizes = [8, 256], strides = [1, 1]} : vector<8x270xbf16> to vector<8x256xbf16>
    %c56 = arith.constant 56 : index
    %c0_49 = arith.constant 0 : index
    %62 = vector.load %arg37[%c56, %c0_49] : memref<120x256xbf16, #tpu.memory_space<vmem>>, vector<8x256xbf16>
    tpu.vector_store %arg37[%c56, %c0_49], %61 {strides = array<i32>} : memref<120x256xbf16, #tpu.memory_space<vmem>>, vector<8x256xbf16>,
    %63 = vector.extract_strided_slice %46 {offsets = [0, 8], sizes = [8, 256], strides = [1, 1]} : vector<8x270xbf16> to vector<8x256xbf16>
    %c64 = arith.constant 64 : index
    %c0_50 = arith.constant 0 : index
    %64 = vector.load %arg37[%c64, %c0_50] : memref<120x256xbf16, #tpu.memory_space<vmem>>, vector<8x256xbf16>
    tpu.vector_store %arg37[%c64, %c0_50], %63 {strides = array<i32>} : memref<120x256xbf16, #tpu.memory_space<vmem>>, vector<8x256xbf16>,
    %65 = vector.extract_strided_slice %46 {offsets = [0, 9], sizes = [8, 256], strides = [1, 1]} : vector<8x270xbf16> to vector<8x256xbf16>
    %c72 = arith.constant 72 : index
    %c0_51 = arith.constant 0 : index
    %66 = vector.load %arg37[%c72, %c0_51] : memref<120x256xbf16, #tpu.memory_space<vmem>>, vector<8x256xbf16>
    tpu.vector_store %arg37[%c72, %c0_51], %65 {strides = array<i32>} : memref<120x256xbf16, #tpu.memory_space<vmem>>, vector<8x256xbf16>,
    %67 = vector.extract_strided_slice %46 {offsets = [0, 10], sizes = [8, 256], strides = [1, 1]} : vector<8x270xbf16> to vector<8x256xbf16>
    %c80 = arith.constant 80 : index
    %c0_52 = arith.constant 0 : index
    %68 = vector.load %arg37[%c80, %c0_52] : memref<120x256xbf16, #tpu.memory_space<vmem>>, vector<8x256xbf16>
    tpu.vector_store %arg37[%c80, %c0_52], %67 {strides = array<i32>} : memref<120x256xbf16, #tpu.memory_space<vmem>>, vector<8x256xbf16>,
    %69 = vector.extract_strided_slice %46 {offsets = [0, 11], sizes = [8, 256], strides = [1, 1]} : vector<8x270xbf16> to vector<8x256xbf16>
    %c88 = arith.constant 88 : index
    %c0_53 = arith.constant 0 : index
    %70 = vector.load %arg37[%c88, %c0_53] : memref<120x256xbf16, #tpu.memory_space<vmem>>, vector<8x256xbf16>
    tpu.vector_store %arg37[%c88, %c0_53], %69 {strides = array<i32>} : memref<120x256xbf16, #tpu.memory_space<vmem>>, vector<8x256xbf16>,
    %71 = vector.extract_strided_slice %46 {offsets = [0, 12], sizes = [8, 256], strides = [1, 1]} : vector<8x270xbf16> to vector<8x256xbf16>
    %c96 = arith.constant 96 : index
    %c0_54 = arith.constant 0 : index
    %72 = vector.load %arg37[%c96, %c0_54] : memref<120x256xbf16, #tpu.memory_space<vmem>>, vector<8x256xbf16>
    tpu.vector_store %arg37[%c96, %c0_54], %71 {strides = array<i32>} : memref<120x256xbf16, #tpu.memory_space<vmem>>, vector<8x256xbf16>,
    %73 = vector.extract_strided_slice %46 {offsets = [0, 13], sizes = [8, 256], strides = [1, 1]} : vector<8x270xbf16> to vector<8x256xbf16>
    %c104 = arith.constant 104 : index
    %c0_55 = arith.constant 0 : index
    %74 = vector.load %arg37[%c104, %c0_55] : memref<120x256xbf16, #tpu.memory_space<vmem>>, vector<8x256xbf16>
    tpu.vector_store %arg37[%c104, %c0_55], %73 {strides = array<i32>} : memref<120x256xbf16, #tpu.memory_space<vmem>>, vector<8x256xbf16>,
    %75 = vector.extract_strided_slice %46 {offsets = [0, 14], sizes = [8, 256], strides = [1, 1]} : vector<8x270xbf16> to vector<8x256xbf16>
    %c112 = arith.constant 112 : index
    %c0_56 = arith.constant 0 : index
    %76 = vector.load %arg37[%c112, %c0_56] : memref<120x256xbf16, #tpu.memory_space<vmem>>, vector<8x256xbf16>
    tpu.vector_store %arg37[%c112, %c0_56], %75 {strides = array<i32>} : memref<120x256xbf16, #tpu.memory_space<vmem>>, vector<8x256xbf16>,
    %c0_57 = arith.constant 0 : index
    %c0_58 = arith.constant 0 : index
    %77 = vector.load %arg4[%c0_57, %c0_58] : memref<16x120xbf16, #tpu.memory_space<vmem>>, vector<16x120xbf16>
    %c0_59 = arith.constant 0 : index
    %c0_60 = arith.constant 0 : index
    %78 = vector.load %arg37[%c0_59, %c0_60] : memref<120x256xbf16, #tpu.memory_space<vmem>>, vector<120x256xbf16>
    %cst_61 = arith.constant dense<0.000000e+00> : vector<16x256xf32>
    %79 = tpu.matmul %77, %78, %cst_61 {dimension_numbers = #tpu.dot_dimension_numbers<[1], [0], [0], [1], [0, 0, 1, 1], [], []>} : vector<16x120xbf16>, vector<120x256xbf16>, vector<16x256xf32> -> vector<16x256xf32>
    %c0_62 = arith.constant 0 : index
    %c0_63 = arith.constant 0 : index
    %80 = vector.load %arg5[%c0_62, %c0_63] : memref<16x1xf32, #tpu.memory_space<vmem>>, vector<16x1xf32>
    %81 = vector.broadcast %80 : vector<16x1xf32> to vector<16x256xf32>
    %82 = arith.addf %79, %81 : vector<16x256xf32>
    %cst_64 = arith.constant 0.000000e+00 : f32
    %83 = vector.broadcast %cst_64 : f32 to vector<16x256xf32>
    %84 = arith.cmpf oge, %82, %83 : vector<16x256xf32>
    %cst_65 = arith.constant 2.000000e-01 : f32
    %85 = vector.broadcast %cst_65 : f32 to vector<16x256xf32>
    %86 = arith.mulf %85, %82 : vector<16x256xf32>
    %87 = arith.select %84, %82, %86 : vector<16x256xi1>, vector<16x256xf32>
    %88 = arith.truncf %87 : vector<16x256xf32> to vector<16x256xbf16>
    %c0_66 = arith.constant 0 : index
    %c0_67 = arith.constant 0 : index
    %89 = vector.load %arg27[%c0_66, %c0_67] : memref<256x64xbf16, #tpu.memory_space<vmem>>, vector<256x64xbf16>
    %cst_68 = arith.constant dense<0.000000e+00> : vector<16x64xf32>
    %90 = tpu.matmul %88, %89, %cst_68 {dimension_numbers = #tpu.dot_dimension_numbers<[1], [0], [0], [1], [0, 0, 1, 1], [], []>} : vector<16x256xbf16>, vector<256x64xbf16>, vector<16x64xf32> -> vector<16x64xf32>
    %cst_69 = arith.constant 0.000000e+00 : bf16
    %91 = vector.broadcast %cst_69 : bf16 to vector<16x7xbf16>
    %c0_70 = arith.constant 0 : index
    %c0_71 = arith.constant 0 : index
    %92 = vector.load %arg38[%c0_70, %c0_71] : memref<16x78xbf16, #tpu.memory_space<vmem>>, vector<16x7xbf16>
    tpu.vector_store %arg38[%c0_70, %c0_71], %91 {strides = array<i32>} : memref<16x78xbf16, #tpu.memory_space<vmem>>, vector<16x7xbf16>,
    %c0_72 = arith.constant 0 : index
    %c71 = arith.constant 71 : index
    %93 = vector.load %arg38[%c0_72, %c71] : memref<16x78xbf16, #tpu.memory_space<vmem>>, vector<16x7xbf16>
    tpu.vector_store %arg38[%c0_72, %c71], %91 {strides = array<i32>} : memref<16x78xbf16, #tpu.memory_space<vmem>>, vector<16x7xbf16>,
    %94 = arith.truncf %90 : vector<16x64xf32> to vector<16x64xbf16>
    %c0_73 = arith.constant 0 : index
    %c7_74 = arith.constant 7 : index
    %95 = vector.load %arg38[%c0_73, %c7_74] : memref<16x78xbf16, #tpu.memory_space<vmem>>, vector<16x64xbf16>
    tpu.vector_store %arg38[%c0_73, %c7_74], %94 {strides = array<i32>} : memref<16x78xbf16, #tpu.memory_space<vmem>>, vector<16x64xbf16>,
    %c0_75 = arith.constant 0 : index
    %c0_76 = arith.constant 0 : index
    %96 = vector.load %arg38[%c0_75, %c0_76] : memref<16x78xbf16, #tpu.memory_space<vmem>>, vector<16x78xbf16>
    %97 = vector.extract_strided_slice %96 {offsets = [0, 0], sizes = [16, 64], strides = [1, 1]} : vector<16x78xbf16> to vector<16x64xbf16>
    %c0_77 = arith.constant 0 : index
    %c0_78 = arith.constant 0 : index
    %98 = vector.load %arg39[%c0_77, %c0_78] : memref<240x64xbf16, #tpu.memory_space<vmem>>, vector<16x64xbf16>
    tpu.vector_store %arg39[%c0_77, %c0_78], %97 {strides = array<i32>} : memref<240x64xbf16, #tpu.memory_space<vmem>>, vector<16x64xbf16>,
    %99 = vector.extract_strided_slice %96 {offsets = [0, 1], sizes = [16, 64], strides = [1, 1]} : vector<16x78xbf16> to vector<16x64xbf16>
    %c16_79 = arith.constant 16 : index
    %c0_80 = arith.constant 0 : index
    %100 = vector.load %arg39[%c16_79, %c0_80] : memref<240x64xbf16, #tpu.memory_space<vmem>>, vector<16x64xbf16>
    tpu.vector_store %arg39[%c16_79, %c0_80], %99 {strides = array<i32>} : memref<240x64xbf16, #tpu.memory_space<vmem>>, vector<16x64xbf16>,
    %101 = vector.extract_strided_slice %96 {offsets = [0, 2], sizes = [16, 64], strides = [1, 1]} : vector<16x78xbf16> to vector<16x64xbf16>
    %c32_81 = arith.constant 32 : index
    %c0_82 = arith.constant 0 : index
    %102 = vector.load %arg39[%c32_81, %c0_82] : memref<240x64xbf16, #tpu.memory_space<vmem>>, vector<16x64xbf16>
    tpu.vector_store %arg39[%c32_81, %c0_82], %101 {strides = array<i32>} : memref<240x64xbf16, #tpu.memory_space<vmem>>, vector<16x64xbf16>,
    %103 = vector.extract_strided_slice %96 {offsets = [0, 3], sizes = [16, 64], strides = [1, 1]} : vector<16x78xbf16> to vector<16x64xbf16>
    %c48_83 = arith.constant 48 : index
    %c0_84 = arith.constant 0 : index
    %104 = vector.load %arg39[%c48_83, %c0_84] : memref<240x64xbf16, #tpu.memory_space<vmem>>, vector<16x64xbf16>
    tpu.vector_store %arg39[%c48_83, %c0_84], %103 {strides = array<i32>} : memref<240x64xbf16, #tpu.memory_space<vmem>>, vector<16x64xbf16>,
    %105 = vector.extract_strided_slice %96 {offsets = [0, 4], sizes = [16, 64], strides = [1, 1]} : vector<16x78xbf16> to vector<16x64xbf16>
    %c64_85 = arith.constant 64 : index
    %c0_86 = arith.constant 0 : index
    %106 = vector.load %arg39[%c64_85, %c0_86] : memref<240x64xbf16, #tpu.memory_space<vmem>>, vector<16x64xbf16>
    tpu.vector_store %arg39[%c64_85, %c0_86], %105 {strides = array<i32>} : memref<240x64xbf16, #tpu.memory_space<vmem>>, vector<16x64xbf16>,
    %107 = vector.extract_strided_slice %96 {offsets = [0, 5], sizes = [16, 64], strides = [1, 1]} : vector<16x78xbf16> to vector<16x64xbf16>
    %c80_87 = arith.constant 80 : index
    %c0_88 = arith.constant 0 : index
    %108 = vector.load %arg39[%c80_87, %c0_88] : memref<240x64xbf16, #tpu.memory_space<vmem>>, vector<16x64xbf16>
    tpu.vector_store %arg39[%c80_87, %c0_88], %107 {strides = array<i32>} : memref<240x64xbf16, #tpu.memory_space<vmem>>, vector<16x64xbf16>,
    %109 = vector.extract_strided_slice %96 {offsets = [0, 6], sizes = [16, 64], strides = [1, 1]} : vector<16x78xbf16> to vector<16x64xbf16>
    %c96_89 = arith.constant 96 : index
    %c0_90 = arith.constant 0 : index
    %110 = vector.load %arg39[%c96_89, %c0_90] : memref<240x64xbf16, #tpu.memory_space<vmem>>, vector<16x64xbf16>
    tpu.vector_store %arg39[%c96_89, %c0_90], %109 {strides = array<i32>} : memref<240x64xbf16, #tpu.memory_space<vmem>>, vector<16x64xbf16>,
    %111 = vector.extract_strided_slice %96 {offsets = [0, 7], sizes = [16, 64], strides = [1, 1]} : vector<16x78xbf16> to vector<16x64xbf16>
    %c112_91 = arith.constant 112 : index
    %c0_92 = arith.constant 0 : index
    %112 = vector.load %arg39[%c112_91, %c0_92] : memref<240x64xbf16, #tpu.memory_space<vmem>>, vector<16x64xbf16>
    tpu.vector_store %arg39[%c112_91, %c0_92], %111 {strides = array<i32>} : memref<240x64xbf16, #tpu.memory_space<vmem>>, vector<16x64xbf16>,
    %113 = vector.extract_strided_slice %96 {offsets = [0, 8], sizes = [16, 64], strides = [1, 1]} : vector<16x78xbf16> to vector<16x64xbf16>
    %c128 = arith.constant 128 : index
    %c0_93 = arith.constant 0 : index
    %114 = vector.load %arg39[%c128, %c0_93] : memref<240x64xbf16, #tpu.memory_space<vmem>>, vector<16x64xbf16>
    tpu.vector_store %arg39[%c128, %c0_93], %113 {strides = array<i32>} : memref<240x64xbf16, #tpu.memory_space<vmem>>, vector<16x64xbf16>,
    %115 = vector.extract_strided_slice %96 {offsets = [0, 9], sizes = [16, 64], strides = [1, 1]} : vector<16x78xbf16> to vector<16x64xbf16>
    %c144 = arith.constant 144 : index
    %c0_94 = arith.constant 0 : index
    %116 = vector.load %arg39[%c144, %c0_94] : memref<240x64xbf16, #tpu.memory_space<vmem>>, vector<16x64xbf16>
    tpu.vector_store %arg39[%c144, %c0_94], %115 {strides = array<i32>} : memref<240x64xbf16, #tpu.memory_space<vmem>>, vector<16x64xbf16>,
    %117 = vector.extract_strided_slice %96 {offsets = [0, 10], sizes = [16, 64], strides = [1, 1]} : vector<16x78xbf16> to vector<16x64xbf16>
    %c160 = arith.constant 160 : index
    %c0_95 = arith.constant 0 : index
    %118 = vector.load %arg39[%c160, %c0_95] : memref<240x64xbf16, #tpu.memory_space<vmem>>, vector<16x64xbf16>
    tpu.vector_store %arg39[%c160, %c0_95], %117 {strides = array<i32>} : memref<240x64xbf16, #tpu.memory_space<vmem>>, vector<16x64xbf16>,
    %119 = vector.extract_strided_slice %96 {offsets = [0, 11], sizes = [16, 64], strides = [1, 1]} : vector<16x78xbf16> to vector<16x64xbf16>
    %c176 = arith.constant 176 : index
    %c0_96 = arith.constant 0 : index
    %120 = vector.load %arg39[%c176, %c0_96] : memref<240x64xbf16, #tpu.memory_space<vmem>>, vector<16x64xbf16>
    tpu.vector_store %arg39[%c176, %c0_96], %119 {strides = array<i32>} : memref<240x64xbf16, #tpu.memory_space<vmem>>, vector<16x64xbf16>,
    %121 = vector.extract_strided_slice %96 {offsets = [0, 12], sizes = [16, 64], strides = [1, 1]} : vector<16x78xbf16> to vector<16x64xbf16>
    %c192 = arith.constant 192 : index
    %c0_97 = arith.constant 0 : index
    %122 = vector.load %arg39[%c192, %c0_97] : memref<240x64xbf16, #tpu.memory_space<vmem>>, vector<16x64xbf16>
    tpu.vector_store %arg39[%c192, %c0_97], %121 {strides = array<i32>} : memref<240x64xbf16, #tpu.memory_space<vmem>>, vector<16x64xbf16>,
    %123 = vector.extract_strided_slice %96 {offsets = [0, 13], sizes = [16, 64], strides = [1, 1]} : vector<16x78xbf16> to vector<16x64xbf16>
    %c208 = arith.constant 208 : index
    %c0_98 = arith.constant 0 : index
    %124 = vector.load %arg39[%c208, %c0_98] : memref<240x64xbf16, #tpu.memory_space<vmem>>, vector<16x64xbf16>
    tpu.vector_store %arg39[%c208, %c0_98], %123 {strides = array<i32>} : memref<240x64xbf16, #tpu.memory_space<vmem>>, vector<16x64xbf16>,
    %125 = vector.extract_strided_slice %96 {offsets = [0, 14], sizes = [16, 64], strides = [1, 1]} : vector<16x78xbf16> to vector<16x64xbf16>
    %c224 = arith.constant 224 : index
    %c0_99 = arith.constant 0 : index
    %126 = vector.load %arg39[%c224, %c0_99] : memref<240x64xbf16, #tpu.memory_space<vmem>>, vector<16x64xbf16>
    tpu.vector_store %arg39[%c224, %c0_99], %125 {strides = array<i32>} : memref<240x64xbf16, #tpu.memory_space<vmem>>, vector<16x64xbf16>,
    %c0_100 = arith.constant 0 : index
    %c0_101 = arith.constant 0 : index
    %127 = vector.load %arg6[%c0_100, %c0_101] : memref<32x240xbf16, #tpu.memory_space<vmem>>, vector<32x240xbf16>
    %c0_102 = arith.constant 0 : index
    %c0_103 = arith.constant 0 : index
    %128 = vector.load %arg39[%c0_102, %c0_103] : memref<240x64xbf16, #tpu.memory_space<vmem>>, vector<240x64xbf16>
    %cst_104 = arith.constant dense<0.000000e+00> : vector<32x64xf32>
    %129 = tpu.matmul %127, %128, %cst_104 {dimension_numbers = #tpu.dot_dimension_numbers<[1], [0], [0], [1], [0, 0, 1, 1], [], []>} : vector<32x240xbf16>, vector<240x64xbf16>, vector<32x64xf32> -> vector<32x64xf32>
    %c0_105 = arith.constant 0 : index
    %c0_106 = arith.constant 0 : index
    %130 = vector.load %arg7[%c0_105, %c0_106] : memref<32x1xf32, #tpu.memory_space<vmem>>, vector<32x1xf32>
    %131 = vector.broadcast %130 : vector<32x1xf32> to vector<32x64xf32>
    %132 = arith.addf %129, %131 : vector<32x64xf32>
    %cst_107 = arith.constant 0.000000e+00 : f32
    %133 = vector.broadcast %cst_107 : f32 to vector<32x64xf32>
    %134 = arith.cmpf oge, %132, %133 : vector<32x64xf32>
    %cst_108 = arith.constant 2.000000e-01 : f32
    %135 = vector.broadcast %cst_108 : f32 to vector<32x64xf32>
    %136 = arith.mulf %135, %132 : vector<32x64xf32>
    %137 = arith.select %134, %132, %136 : vector<32x64xi1>, vector<32x64xf32>
    %138 = arith.truncf %137 : vector<32x64xf32> to vector<32x64xbf16>
    %c0_109 = arith.constant 0 : index
    %c0_110 = arith.constant 0 : index
    %139 = vector.load %arg28[%c0_109, %c0_110] : memref<64x32xbf16, #tpu.memory_space<vmem>>, vector<64x32xbf16>
    %cst_111 = arith.constant dense<0.000000e+00> : vector<32x32xf32>
    %140 = tpu.matmul %138, %139, %cst_111 {dimension_numbers = #tpu.dot_dimension_numbers<[1], [0], [0], [1], [0, 0, 1, 1], [], []>} : vector<32x64xbf16>, vector<64x32xbf16>, vector<32x32xf32> -> vector<32x32xf32>
    %c0_112 = arith.constant 0 : index
    %c0_113 = arith.constant 0 : index
    %c0_114 = arith.constant 0 : index
    %141 = vector.load %arg31[%c0_112, %c0_113, %c0_114] : memref<1x32x32xf32, #tpu.memory_space<vmem>>, vector<1x32x32xf32>
    %142 = vector.shape_cast %141 : vector<1x32x32xf32> to vector<32x32xf32>
    %143 = vector.shape_cast %140 : vector<32x32xf32> to vector<1x32x32xf32>
    tpu.vector_store %arg31[%c0_112, %c0_113, %c0_114], %143 {strides = array<i32>} : memref<1x32x32xf32, #tpu.memory_space<vmem>>, vector<1x32x32xf32>,
    %c0_115 = arith.constant 0 : index
    %c0_116 = arith.constant 0 : index
    %144 = vector.load %arg8[%c0_115, %c0_116] : memref<32x32xf32, #tpu.memory_space<vmem>>, vector<32x32xf32>
    %c0_117 = arith.constant 0 : index
    %c0_118 = arith.constant 0 : index
    %145 = vector.load %arg9[%c0_117, %c0_118] : memref<1x1xf32, #tpu.memory_space<vmem>>, vector<1x1xf32>
    %146 = arith.mulf %140, %144 : vector<32x32xf32>
    %cst_119 = arith.constant dense<0.000000e+00> : vector<32xf32>
    %147 = vector.multi_reduction <add>, %146, %cst_119 [1] : vector<32x32xf32> to vector<32xf32>
    %148 = vector.shape_cast %147 : vector<32xf32> to vector<32x1xf32>
    %cst_120 = arith.constant dense<0.000000e+00> : vector<1xf32>
    %149 = vector.multi_reduction <add>, %148, %cst_120 [0] : vector<32x1xf32> to vector<1xf32>
    %150 = vector.shape_cast %149 : vector<1xf32> to vector<1x1xf32>
    %151 = arith.addf %150, %145 : vector<1x1xf32>
    %c0_121 = arith.constant 0 : index
    %c0_122 = arith.constant 0 : index
    %c0_123 = arith.constant 0 : index
    %152 = vector.load %arg29[%c0_121, %c0_122, %c0_123] : memref<1x1x1xf32, #tpu.memory_space<vmem>>, vector<1x1x1xf32>
    %153 = vector.shape_cast %152 : vector<1x1x1xf32> to vector<1x1xf32>
    %154 = vector.shape_cast %151 : vector<1x1xf32> to vector<1x1x1xf32>
    tpu.vector_store %arg29[%c0_121, %c0_122, %c0_123], %154 {strides = array<i32>} : memref<1x1x1xf32, #tpu.memory_space<vmem>>, vector<1x1x1xf32>,
    %155 = vector.extract_strided_slice %6 {offsets = [0, 3], sizes = [1, 1024], strides = [1, 1]} : vector<1x1034xf32> to vector<1x1024xf32>
    %c0_124 = arith.constant 0 : index
    %c0_125 = arith.constant 0 : index
    %156 = vector.load %arg40[%c0_124, %c0_125] : memref<5x1024xf32, #tpu.memory_space<vmem>>, vector<1x1024xf32>
    tpu.vector_store %arg40[%c0_124, %c0_125], %155 {strides = array<i32>} : memref<5x1024xf32, #tpu.memory_space<vmem>>, vector<1x1024xf32>,
    %157 = vector.extract_strided_slice %6 {offsets = [0, 4], sizes = [1, 1024], strides = [1, 1]} : vector<1x1034xf32> to vector<1x1024xf32>
    %c1_126 = arith.constant 1 : index
    %c0_127 = arith.constant 0 : index
    %158 = vector.load %arg40[%c1_126, %c0_127] : memref<5x1024xf32, #tpu.memory_space<vmem>>, vector<1x1024xf32>
    tpu.vector_store %arg40[%c1_126, %c0_127], %157 {strides = array<i32>} : memref<5x1024xf32, #tpu.memory_space<vmem>>, vector<1x1024xf32>,
    %159 = vector.extract_strided_slice %6 {offsets = [0, 5], sizes = [1, 1024], strides = [1, 1]} : vector<1x1034xf32> to vector<1x1024xf32>
    %c2_128 = arith.constant 2 : index
    %c0_129 = arith.constant 0 : index
    %160 = vector.load %arg40[%c2_128, %c0_129] : memref<5x1024xf32, #tpu.memory_space<vmem>>, vector<1x1024xf32>
    tpu.vector_store %arg40[%c2_128, %c0_129], %159 {strides = array<i32>} : memref<5x1024xf32, #tpu.memory_space<vmem>>, vector<1x1024xf32>,
    %161 = vector.extract_strided_slice %6 {offsets = [0, 6], sizes = [1, 1024], strides = [1, 1]} : vector<1x1034xf32> to vector<1x1024xf32>
    %c3_130 = arith.constant 3 : index
    %c0_131 = arith.constant 0 : index
    %162 = vector.load %arg40[%c3_130, %c0_131] : memref<5x1024xf32, #tpu.memory_space<vmem>>, vector<1x1024xf32>
    tpu.vector_store %arg40[%c3_130, %c0_131], %161 {strides = array<i32>} : memref<5x1024xf32, #tpu.memory_space<vmem>>, vector<1x1024xf32>,
    %163 = vector.extract_strided_slice %6 {offsets = [0, 7], sizes = [1, 1024], strides = [1, 1]} : vector<1x1034xf32> to vector<1x1024xf32>
    %c4_132 = arith.constant 4 : index
    %c0_133 = arith.constant 0 : index
    %164 = vector.load %arg40[%c4_132, %c0_133] : memref<5x1024xf32, #tpu.memory_space<vmem>>, vector<1x1024xf32>
    tpu.vector_store %arg40[%c4_132, %c0_133], %163 {strides = array<i32>} : memref<5x1024xf32, #tpu.memory_space<vmem>>, vector<1x1024xf32>,
    %c0_134 = arith.constant 0 : index
    %c0_135 = arith.constant 0 : index
    %165 = vector.load %arg10[%c0_134, %c0_135] : memref<8x5xf32, #tpu.memory_space<vmem>>, vector<8x5xf32>
    %c0_136 = arith.constant 0 : index
    %c0_137 = arith.constant 0 : index
    %166 = vector.load %arg40[%c0_136, %c0_137] : memref<5x1024xf32, #tpu.memory_space<vmem>>, vector<5x1024xf32>
    %cst_138 = arith.constant dense<0.000000e+00> : vector<8x1024xf32>
    %167 = tpu.matmul %165, %166, %cst_138 {dimension_numbers = #tpu.dot_dimension_numbers<[1], [0], [0], [1], [0, 0, 1, 1], [], []>} : vector<8x5xf32>, vector<5x1024xf32>, vector<8x1024xf32> -> vector<8x1024xf32>
    %c0_139 = arith.constant 0 : index
    %c0_140 = arith.constant 0 : index
    %168 = vector.load %arg11[%c0_139, %c0_140] : memref<8x1xf32, #tpu.memory_space<vmem>>, vector<8x1xf32>
    %169 = vector.broadcast %168 : vector<8x1xf32> to vector<8x1024xf32>
    %170 = arith.addf %167, %169 : vector<8x1024xf32>
    %cst_141 = arith.constant 0.000000e+00 : f32
    %171 = vector.broadcast %cst_141 : f32 to vector<8x1024xf32>
    %172 = arith.cmpf oge, %170, %171 : vector<8x1024xf32>
    %cst_142 = arith.constant 2.000000e-01 : f32
    %173 = vector.broadcast %cst_142 : f32 to vector<8x1024xf32>
    %174 = arith.mulf %173, %170 : vector<8x1024xf32>
    %175 = arith.select %172, %170, %174 : vector<8x1024xi1>, vector<8x1024xf32>
    %176 = arith.truncf %175 : vector<8x1024xf32> to vector<8x1024xbf16>
    %c0_143 = arith.constant 0 : index
    %c0_144 = arith.constant 0 : index
    %177 = vector.load %arg26[%c0_143, %c0_144] : memref<1024x256xbf16, #tpu.memory_space<vmem>>, vector<1024x256xbf16>
    %cst_145 = arith.constant dense<0.000000e+00> : vector<8x256xf32>
    %178 = tpu.matmul %176, %177, %cst_145 {dimension_numbers = #tpu.dot_dimension_numbers<[1], [0], [0], [1], [0, 0, 1, 1], [], []>} : vector<8x1024xbf16>, vector<1024x256xbf16>, vector<8x256xf32> -> vector<8x256xf32>
    %cst_146 = arith.constant 0.000000e+00 : bf16
    %179 = vector.broadcast %cst_146 : bf16 to vector<8x3xbf16>
    %c0_147 = arith.constant 0 : index
    %c0_148 = arith.constant 0 : index
    %180 = vector.load %arg41[%c0_147, %c0_148] : memref<8x262xbf16, #tpu.memory_space<vmem>>, vector<8x3xbf16>
    tpu.vector_store %arg41[%c0_147, %c0_148], %179 {strides = array<i32>} : memref<8x262xbf16, #tpu.memory_space<vmem>>, vector<8x3xbf16>,
    %c0_149 = arith.constant 0 : index
    %c259 = arith.constant 259 : index
    %181 = vector.load %arg41[%c0_149, %c259] : memref<8x262xbf16, #tpu.memory_space<vmem>>, vector<8x3xbf16>
    tpu.vector_store %arg41[%c0_149, %c259], %179 {strides = array<i32>} : memref<8x262xbf16, #tpu.memory_space<vmem>>, vector<8x3xbf16>,
    %182 = arith.truncf %178 : vector<8x256xf32> to vector<8x256xbf16>
    %c0_150 = arith.constant 0 : index
    %c3_151 = arith.constant 3 : index
    %183 = vector.load %arg41[%c0_150, %c3_151] : memref<8x262xbf16, #tpu.memory_space<vmem>>, vector<8x256xbf16>
    tpu.vector_store %arg41[%c0_150, %c3_151], %182 {strides = array<i32>} : memref<8x262xbf16, #tpu.memory_space<vmem>>, vector<8x256xbf16>,
    %c0_152 = arith.constant 0 : index
    %c0_153 = arith.constant 0 : index
    %184 = vector.load %arg41[%c0_152, %c0_153] : memref<8x262xbf16, #tpu.memory_space<vmem>>, vector<8x262xbf16>
    %185 = vector.extract_strided_slice %184 {offsets = [0, 0], sizes = [8, 256], strides = [1, 1]} : vector<8x262xbf16> to vector<8x256xbf16>
    %c0_154 = arith.constant 0 : index
    %c0_155 = arith.constant 0 : index
    %186 = vector.load %arg42[%c0_154, %c0_155] : memref<56x256xbf16, #tpu.memory_space<vmem>>, vector<8x256xbf16>
    tpu.vector_store %arg42[%c0_154, %c0_155], %185 {strides = array<i32>} : memref<56x256xbf16, #tpu.memory_space<vmem>>, vector<8x256xbf16>,
    %187 = vector.extract_strided_slice %184 {offsets = [0, 1], sizes = [8, 256], strides = [1, 1]} : vector<8x262xbf16> to vector<8x256xbf16>
    %c8_156 = arith.constant 8 : index
    %c0_157 = arith.constant 0 : index
    %188 = vector.load %arg42[%c8_156, %c0_157] : memref<56x256xbf16, #tpu.memory_space<vmem>>, vector<8x256xbf16>
    tpu.vector_store %arg42[%c8_156, %c0_157], %187 {strides = array<i32>} : memref<56x256xbf16, #tpu.memory_space<vmem>>, vector<8x256xbf16>,
    %189 = vector.extract_strided_slice %184 {offsets = [0, 2], sizes = [8, 256], strides = [1, 1]} : vector<8x262xbf16> to vector<8x256xbf16>
    %c16_158 = arith.constant 16 : index
    %c0_159 = arith.constant 0 : index
    %190 = vector.load %arg42[%c16_158, %c0_159] : memref<56x256xbf16, #tpu.memory_space<vmem>>, vector<8x256xbf16>
    tpu.vector_store %arg42[%c16_158, %c0_159], %189 {strides = array<i32>} : memref<56x256xbf16, #tpu.memory_space<vmem>>, vector<8x256xbf16>,
    %191 = vector.extract_strided_slice %184 {offsets = [0, 3], sizes = [8, 256], strides = [1, 1]} : vector<8x262xbf16> to vector<8x256xbf16>
    %c24_160 = arith.constant 24 : index
    %c0_161 = arith.constant 0 : index
    %192 = vector.load %arg42[%c24_160, %c0_161] : memref<56x256xbf16, #tpu.memory_space<vmem>>, vector<8x256xbf16>
    tpu.vector_store %arg42[%c24_160, %c0_161], %191 {strides = array<i32>} : memref<56x256xbf16, #tpu.memory_space<vmem>>, vector<8x256xbf16>,
    %193 = vector.extract_strided_slice %184 {offsets = [0, 4], sizes = [8, 256], strides = [1, 1]} : vector<8x262xbf16> to vector<8x256xbf16>
    %c32_162 = arith.constant 32 : index
    %c0_163 = arith.constant 0 : index
    %194 = vector.load %arg42[%c32_162, %c0_163] : memref<56x256xbf16, #tpu.memory_space<vmem>>, vector<8x256xbf16>
    tpu.vector_store %arg42[%c32_162, %c0_163], %193 {strides = array<i32>} : memref<56x256xbf16, #tpu.memory_space<vmem>>, vector<8x256xbf16>,
    %195 = vector.extract_strided_slice %184 {offsets = [0, 5], sizes = [8, 256], strides = [1, 1]} : vector<8x262xbf16> to vector<8x256xbf16>
    %c40_164 = arith.constant 40 : index
    %c0_165 = arith.constant 0 : index
    %196 = vector.load %arg42[%c40_164, %c0_165] : memref<56x256xbf16, #tpu.memory_space<vmem>>, vector<8x256xbf16>
    tpu.vector_store %arg42[%c40_164, %c0_165], %195 {strides = array<i32>} : memref<56x256xbf16, #tpu.memory_space<vmem>>, vector<8x256xbf16>,
    %197 = vector.extract_strided_slice %184 {offsets = [0, 6], sizes = [8, 256], strides = [1, 1]} : vector<8x262xbf16> to vector<8x256xbf16>
    %c48_166 = arith.constant 48 : index
    %c0_167 = arith.constant 0 : index
    %198 = vector.load %arg42[%c48_166, %c0_167] : memref<56x256xbf16, #tpu.memory_space<vmem>>, vector<8x256xbf16>
    tpu.vector_store %arg42[%c48_166, %c0_167], %197 {strides = array<i32>} : memref<56x256xbf16, #tpu.memory_space<vmem>>, vector<8x256xbf16>,
    %c0_168 = arith.constant 0 : index
    %c0_169 = arith.constant 0 : index
    %199 = vector.load %arg12[%c0_168, %c0_169] : memref<16x56xbf16, #tpu.memory_space<vmem>>, vector<16x56xbf16>
    %c0_170 = arith.constant 0 : index
    %c0_171 = arith.constant 0 : index
    %200 = vector.load %arg42[%c0_170, %c0_171] : memref<56x256xbf16, #tpu.memory_space<vmem>>, vector<56x256xbf16>
    %cst_172 = arith.constant dense<0.000000e+00> : vector<16x256xf32>
    %201 = tpu.matmul %199, %200, %cst_172 {dimension_numbers = #tpu.dot_dimension_numbers<[1], [0], [0], [1], [0, 0, 1, 1], [], []>} : vector<16x56xbf16>, vector<56x256xbf16>, vector<16x256xf32> -> vector<16x256xf32>
    %c0_173 = arith.constant 0 : index
    %c0_174 = arith.constant 0 : index
    %202 = vector.load %arg13[%c0_173, %c0_174] : memref<16x1xf32, #tpu.memory_space<vmem>>, vector<16x1xf32>
    %203 = vector.broadcast %202 : vector<16x1xf32> to vector<16x256xf32>
    %204 = arith.addf %201, %203 : vector<16x256xf32>
    %cst_175 = arith.constant 0.000000e+00 : f32
    %205 = vector.broadcast %cst_175 : f32 to vector<16x256xf32>
    %206 = arith.cmpf oge, %204, %205 : vector<16x256xf32>
    %cst_176 = arith.constant 2.000000e-01 : f32
    %207 = vector.broadcast %cst_176 : f32 to vector<16x256xf32>
    %208 = arith.mulf %207, %204 : vector<16x256xf32>
    %209 = arith.select %206, %204, %208 : vector<16x256xi1>, vector<16x256xf32>
    %210 = arith.truncf %209 : vector<16x256xf32> to vector<16x256xbf16>
    %c0_177 = arith.constant 0 : index
    %c0_178 = arith.constant 0 : index
    %211 = vector.load %arg27[%c0_177, %c0_178] : memref<256x64xbf16, #tpu.memory_space<vmem>>, vector<256x64xbf16>
    %cst_179 = arith.constant dense<0.000000e+00> : vector<16x64xf32>
    %212 = tpu.matmul %210, %211, %cst_179 {dimension_numbers = #tpu.dot_dimension_numbers<[1], [0], [0], [1], [0, 0, 1, 1], [], []>} : vector<16x256xbf16>, vector<256x64xbf16>, vector<16x64xf32> -> vector<16x64xf32>
    %cst_180 = arith.constant 0.000000e+00 : bf16
    %213 = vector.broadcast %cst_180 : bf16 to vector<16x3xbf16>
    %c0_181 = arith.constant 0 : index
    %c0_182 = arith.constant 0 : index
    %214 = vector.load %arg43[%c0_181, %c0_182] : memref<16x70xbf16, #tpu.memory_space<vmem>>, vector<16x3xbf16>
    tpu.vector_store %arg43[%c0_181, %c0_182], %213 {strides = array<i32>} : memref<16x70xbf16, #tpu.memory_space<vmem>>, vector<16x3xbf16>,
    %c0_183 = arith.constant 0 : index
    %c67 = arith.constant 67 : index
    %215 = vector.load %arg43[%c0_183, %c67] : memref<16x70xbf16, #tpu.memory_space<vmem>>, vector<16x3xbf16>
    tpu.vector_store %arg43[%c0_183, %c67], %213 {strides = array<i32>} : memref<16x70xbf16, #tpu.memory_space<vmem>>, vector<16x3xbf16>,
    %216 = arith.truncf %212 : vector<16x64xf32> to vector<16x64xbf16>
    %c0_184 = arith.constant 0 : index
    %c3_185 = arith.constant 3 : index
    %217 = vector.load %arg43[%c0_184, %c3_185] : memref<16x70xbf16, #tpu.memory_space<vmem>>, vector<16x64xbf16>
    tpu.vector_store %arg43[%c0_184, %c3_185], %216 {strides = array<i32>} : memref<16x70xbf16, #tpu.memory_space<vmem>>, vector<16x64xbf16>,
    %c0_186 = arith.constant 0 : index
    %c0_187 = arith.constant 0 : index
    %218 = vector.load %arg43[%c0_186, %c0_187] : memref<16x70xbf16, #tpu.memory_space<vmem>>, vector<16x70xbf16>
    %219 = vector.extract_strided_slice %218 {offsets = [0, 0], sizes = [16, 64], strides = [1, 1]} : vector<16x70xbf16> to vector<16x64xbf16>
    %c0_188 = arith.constant 0 : index
    %c0_189 = arith.constant 0 : index
    %220 = vector.load %arg44[%c0_188, %c0_189] : memref<112x64xbf16, #tpu.memory_space<vmem>>, vector<16x64xbf16>
    tpu.vector_store %arg44[%c0_188, %c0_189], %219 {strides = array<i32>} : memref<112x64xbf16, #tpu.memory_space<vmem>>, vector<16x64xbf16>,
    %221 = vector.extract_strided_slice %218 {offsets = [0, 1], sizes = [16, 64], strides = [1, 1]} : vector<16x70xbf16> to vector<16x64xbf16>
    %c16_190 = arith.constant 16 : index
    %c0_191 = arith.constant 0 : index
    %222 = vector.load %arg44[%c16_190, %c0_191] : memref<112x64xbf16, #tpu.memory_space<vmem>>, vector<16x64xbf16>
    tpu.vector_store %arg44[%c16_190, %c0_191], %221 {strides = array<i32>} : memref<112x64xbf16, #tpu.memory_space<vmem>>, vector<16x64xbf16>,
    %223 = vector.extract_strided_slice %218 {offsets = [0, 2], sizes = [16, 64], strides = [1, 1]} : vector<16x70xbf16> to vector<16x64xbf16>
    %c32_192 = arith.constant 32 : index
    %c0_193 = arith.constant 0 : index
    %224 = vector.load %arg44[%c32_192, %c0_193] : memref<112x64xbf16, #tpu.memory_space<vmem>>, vector<16x64xbf16>
    tpu.vector_store %arg44[%c32_192, %c0_193], %223 {strides = array<i32>} : memref<112x64xbf16, #tpu.memory_space<vmem>>, vector<16x64xbf16>,
    %225 = vector.extract_strided_slice %218 {offsets = [0, 3], sizes = [16, 64], strides = [1, 1]} : vector<16x70xbf16> to vector<16x64xbf16>
    %c48_194 = arith.constant 48 : index
    %c0_195 = arith.constant 0 : index
    %226 = vector.load %arg44[%c48_194, %c0_195] : memref<112x64xbf16, #tpu.memory_space<vmem>>, vector<16x64xbf16>
    tpu.vector_store %arg44[%c48_194, %c0_195], %225 {strides = array<i32>} : memref<112x64xbf16, #tpu.memory_space<vmem>>, vector<16x64xbf16>,
    %227 = vector.extract_strided_slice %218 {offsets = [0, 4], sizes = [16, 64], strides = [1, 1]} : vector<16x70xbf16> to vector<16x64xbf16>
    %c64_196 = arith.constant 64 : index
    %c0_197 = arith.constant 0 : index
    %228 = vector.load %arg44[%c64_196, %c0_197] : memref<112x64xbf16, #tpu.memory_space<vmem>>, vector<16x64xbf16>
    tpu.vector_store %arg44[%c64_196, %c0_197], %227 {strides = array<i32>} : memref<112x64xbf16, #tpu.memory_space<vmem>>, vector<16x64xbf16>,
    %229 = vector.extract_strided_slice %218 {offsets = [0, 5], sizes = [16, 64], strides = [1, 1]} : vector<16x70xbf16> to vector<16x64xbf16>
    %c80_198 = arith.constant 80 : index
    %c0_199 = arith.constant 0 : index
    %230 = vector.load %arg44[%c80_198, %c0_199] : memref<112x64xbf16, #tpu.memory_space<vmem>>, vector<16x64xbf16>
    tpu.vector_store %arg44[%c80_198, %c0_199], %229 {strides = array<i32>} : memref<112x64xbf16, #tpu.memory_space<vmem>>, vector<16x64xbf16>,
    %231 = vector.extract_strided_slice %218 {offsets = [0, 6], sizes = [16, 64], strides = [1, 1]} : vector<16x70xbf16> to vector<16x64xbf16>
    %c96_200 = arith.constant 96 : index
    %c0_201 = arith.constant 0 : index
    %232 = vector.load %arg44[%c96_200, %c0_201] : memref<112x64xbf16, #tpu.memory_space<vmem>>, vector<16x64xbf16>
    tpu.vector_store %arg44[%c96_200, %c0_201], %231 {strides = array<i32>} : memref<112x64xbf16, #tpu.memory_space<vmem>>, vector<16x64xbf16>,
    %c0_202 = arith.constant 0 : index
    %c0_203 = arith.constant 0 : index
    %233 = vector.load %arg14[%c0_202, %c0_203] : memref<32x112xbf16, #tpu.memory_space<vmem>>, vector<32x112xbf16>
    %c0_204 = arith.constant 0 : index
    %c0_205 = arith.constant 0 : index
    %234 = vector.load %arg44[%c0_204, %c0_205] : memref<112x64xbf16, #tpu.memory_space<vmem>>, vector<112x64xbf16>
    %cst_206 = arith.constant dense<0.000000e+00> : vector<32x64xf32>
    %235 = tpu.matmul %233, %234, %cst_206 {dimension_numbers = #tpu.dot_dimension_numbers<[1], [0], [0], [1], [0, 0, 1, 1], [], []>} : vector<32x112xbf16>, vector<112x64xbf16>, vector<32x64xf32> -> vector<32x64xf32>
    %c0_207 = arith.constant 0 : index
    %c0_208 = arith.constant 0 : index
    %236 = vector.load %arg15[%c0_207, %c0_208] : memref<32x1xf32, #tpu.memory_space<vmem>>, vector<32x1xf32>
    %237 = vector.broadcast %236 : vector<32x1xf32> to vector<32x64xf32>
    %238 = arith.addf %235, %237 : vector<32x64xf32>
    %cst_209 = arith.constant 0.000000e+00 : f32
    %239 = vector.broadcast %cst_209 : f32 to vector<32x64xf32>
    %240 = arith.cmpf oge, %238, %239 : vector<32x64xf32>
    %cst_210 = arith.constant 2.000000e-01 : f32
    %241 = vector.broadcast %cst_210 : f32 to vector<32x64xf32>
    %242 = arith.mulf %241, %238 : vector<32x64xf32>
    %243 = arith.select %240, %238, %242 : vector<32x64xi1>, vector<32x64xf32>
    %244 = arith.truncf %243 : vector<32x64xf32> to vector<32x64xbf16>
    %c0_211 = arith.constant 0 : index
    %c0_212 = arith.constant 0 : index
    %245 = vector.load %arg28[%c0_211, %c0_212] : memref<64x32xbf16, #tpu.memory_space<vmem>>, vector<64x32xbf16>
    %cst_213 = arith.constant dense<0.000000e+00> : vector<32x32xf32>
    %246 = tpu.matmul %244, %245, %cst_213 {dimension_numbers = #tpu.dot_dimension_numbers<[1], [0], [0], [1], [0, 0, 1, 1], [], []>} : vector<32x64xbf16>, vector<64x32xbf16>, vector<32x32xf32> -> vector<32x32xf32>
    %c0_214 = arith.constant 0 : index
    %c0_215 = arith.constant 0 : index
    %c0_216 = arith.constant 0 : index
    %247 = vector.load %arg32[%c0_214, %c0_215, %c0_216] : memref<1x32x32xf32, #tpu.memory_space<vmem>>, vector<1x32x32xf32>
    %248 = vector.shape_cast %247 : vector<1x32x32xf32> to vector<32x32xf32>
    %249 = vector.shape_cast %246 : vector<32x32xf32> to vector<1x32x32xf32>
    tpu.vector_store %arg32[%c0_214, %c0_215, %c0_216], %249 {strides = array<i32>} : memref<1x32x32xf32, #tpu.memory_space<vmem>>, vector<1x32x32xf32>,
    %cst_217 = arith.constant 0.000000e+00 : f32
    %250 = vector.broadcast %cst_217 : f32 to vector<3x1xf32>
    %c0_218 = arith.constant 0 : index
    %c0_219 = arith.constant 0 : index
    %251 = vector.load %arg45[%c0_218, %c0_219] : memref<3x1026xf32, #tpu.memory_space<vmem>>, vector<3x1xf32>
    tpu.vector_store %arg45[%c0_218, %c0_219], %250 {strides = array<i32>} : memref<3x1026xf32, #tpu.memory_space<vmem>>, vector<3x1xf32>,
    %c0_220 = arith.constant 0 : index
    %c1025 = arith.constant 1025 : index
    %252 = vector.load %arg45[%c0_220, %c1025] : memref<3x1026xf32, #tpu.memory_space<vmem>>, vector<3x1xf32>
    tpu.vector_store %arg45[%c0_220, %c1025], %250 {strides = array<i32>} : memref<3x1026xf32, #tpu.memory_space<vmem>>, vector<3x1xf32>,
    %253 = vector.extract_strided_slice %246 {offsets = [0, 0], sizes = [1, 32], strides = [1, 1]} : vector<32x32xf32> to vector<1x32xf32>
    %c0_221 = arith.constant 0 : index
    %c1_222 = arith.constant 1 : index
    %254 = vector.load %arg45[%c0_221, %c1_222] : memref<3x1026xf32, #tpu.memory_space<vmem>>, vector<1x32xf32>
    tpu.vector_store %arg45[%c0_221, %c1_222], %253 {strides = array<i32>} : memref<3x1026xf32, #tpu.memory_space<vmem>>, vector<1x32xf32>,
    %255 = vector.extract_strided_slice %140 {offsets = [0, 0], sizes = [1, 32], strides = [1, 1]} : vector<32x32xf32> to vector<1x32xf32>
    %c2_223 = arith.constant 2 : index
    %c1_224 = arith.constant 1 : index
    %256 = vector.load %arg45[%c2_223, %c1_224] : memref<3x1026xf32, #tpu.memory_space<vmem>>, vector<1x32xf32>
    tpu.vector_store %arg45[%c2_223, %c1_224], %255 {strides = array<i32>} : memref<3x1026xf32, #tpu.memory_space<vmem>>, vector<1x32xf32>,
    %257 = vector.extract_strided_slice %246 {offsets = [1, 0], sizes = [1, 32], strides = [1, 1]} : vector<32x32xf32> to vector<1x32xf32>
    %c0_225 = arith.constant 0 : index
    %c33 = arith.constant 33 : index
    %258 = vector.load %arg45[%c0_225, %c33] : memref<3x1026xf32, #tpu.memory_space<vmem>>, vector<1x32xf32>
    tpu.vector_store %arg45[%c0_225, %c33], %257 {strides = array<i32>} : memref<3x1026xf32, #tpu.memory_space<vmem>>, vector<1x32xf32>,
    %259 = vector.extract_strided_slice %140 {offsets = [1, 0], sizes = [1, 32], strides = [1, 1]} : vector<32x32xf32> to vector<1x32xf32>
    %c2_226 = arith.constant 2 : index
    %c33_227 = arith.constant 33 : index
    %260 = vector.load %arg45[%c2_226, %c33_227] : memref<3x1026xf32, #tpu.memory_space<vmem>>, vector<1x32xf32>
    tpu.vector_store %arg45[%c2_226, %c33_227], %259 {strides = array<i32>} : memref<3x1026xf32, #tpu.memory_space<vmem>>, vector<1x32xf32>,
    %261 = vector.extract_strided_slice %246 {offsets = [2, 0], sizes = [1, 32], strides = [1, 1]} : vector<32x32xf32> to vector<1x32xf32>
    %c0_228 = arith.constant 0 : index
    %c65 = arith.constant 65 : index
    %262 = vector.load %arg45[%c0_228, %c65] : memref<3x1026xf32, #tpu.memory_space<vmem>>, vector<1x32xf32>
    tpu.vector_store %arg45[%c0_228, %c65], %261 {strides = array<i32>} : memref<3x1026xf32, #tpu.memory_space<vmem>>, vector<1x32xf32>,
    %263 = vector.extract_strided_slice %140 {offsets = [2, 0], sizes = [1, 32], strides = [1, 1]} : vector<32x32xf32> to vector<1x32xf32>
    %c2_229 = arith.constant 2 : index
    %c65_230 = arith.constant 65 : index
    %264 = vector.load %arg45[%c2_229, %c65_230] : memref<3x1026xf32, #tpu.memory_space<vmem>>, vector<1x32xf32>
    tpu.vector_store %arg45[%c2_229, %c65_230], %263 {strides = array<i32>} : memref<3x1026xf32, #tpu.memory_space<vmem>>, vector<1x32xf32>,
    %265 = vector.extract_strided_slice %246 {offsets = [3, 0], sizes = [1, 32], strides = [1, 1]} : vector<32x32xf32> to vector<1x32xf32>
    %c0_231 = arith.constant 0 : index
    %c97 = arith.constant 97 : index
    %266 = vector.load %arg45[%c0_231, %c97] : memref<3x1026xf32, #tpu.memory_space<vmem>>, vector<1x32xf32>
    tpu.vector_store %arg45[%c0_231, %c97], %265 {strides = array<i32>} : memref<3x1026xf32, #tpu.memory_space<vmem>>, vector<1x32xf32>,
    %267 = vector.extract_strided_slice %140 {offsets = [3, 0], sizes = [1, 32], strides = [1, 1]} : vector<32x32xf32> to vector<1x32xf32>
    %c2_232 = arith.constant 2 : index
    %c97_233 = arith.constant 97 : index
    %268 = vector.load %arg45[%c2_232, %c97_233] : memref<3x1026xf32, #tpu.memory_space<vmem>>, vector<1x32xf32>
    tpu.vector_store %arg45[%c2_232, %c97_233], %267 {strides = array<i32>} : memref<3x1026xf32, #tpu.memory_space<vmem>>, vector<1x32xf32>,
    %269 = vector.extract_strided_slice %246 {offsets = [4, 0], sizes = [1, 32], strides = [1, 1]} : vector<32x32xf32> to vector<1x32xf32>
    %c0_234 = arith.constant 0 : index
    %c129 = arith.constant 129 : index
    %270 = vector.load %arg45[%c0_234, %c129] : memref<3x1026xf32, #tpu.memory_space<vmem>>, vector<1x32xf32>
    tpu.vector_store %arg45[%c0_234, %c129], %269 {strides = array<i32>} : memref<3x1026xf32, #tpu.memory_space<vmem>>, vector<1x32xf32>,
    %271 = vector.extract_strided_slice %140 {offsets = [4, 0], sizes = [1, 32], strides = [1, 1]} : vector<32x32xf32> to vector<1x32xf32>
    %c2_235 = arith.constant 2 : index
    %c129_236 = arith.constant 129 : index
    %272 = vector.load %arg45[%c2_235, %c129_236] : memref<3x1026xf32, #tpu.memory_space<vmem>>, vector<1x32xf32>
    tpu.vector_store %arg45[%c2_235, %c129_236], %271 {strides = array<i32>} : memref<3x1026xf32, #tpu.memory_space<vmem>>, vector<1x32xf32>,
    %273 = vector.extract_strided_slice %246 {offsets = [5, 0], sizes = [1, 32], strides = [1, 1]} : vector<32x32xf32> to vector<1x32xf32>
    %c0_237 = arith.constant 0 : index
    %c161 = arith.constant 161 : index
    %274 = vector.load %arg45[%c0_237, %c161] : memref<3x1026xf32, #tpu.memory_space<vmem>>, vector<1x32xf32>
    tpu.vector_store %arg45[%c0_237, %c161], %273 {strides = array<i32>} : memref<3x1026xf32, #tpu.memory_space<vmem>>, vector<1x32xf32>,
    %275 = vector.extract_strided_slice %140 {offsets = [5, 0], sizes = [1, 32], strides = [1, 1]} : vector<32x32xf32> to vector<1x32xf32>
    %c2_238 = arith.constant 2 : index
    %c161_239 = arith.constant 161 : index
    %276 = vector.load %arg45[%c2_238, %c161_239] : memref<3x1026xf32, #tpu.memory_space<vmem>>, vector<1x32xf32>
    tpu.vector_store %arg45[%c2_238, %c161_239], %275 {strides = array<i32>} : memref<3x1026xf32, #tpu.memory_space<vmem>>, vector<1x32xf32>,
    %277 = vector.extract_strided_slice %246 {offsets = [6, 0], sizes = [1, 32], strides = [1, 1]} : vector<32x32xf32> to vector<1x32xf32>
    %c0_240 = arith.constant 0 : index
    %c193 = arith.constant 193 : index
    %278 = vector.load %arg45[%c0_240, %c193] : memref<3x1026xf32, #tpu.memory_space<vmem>>, vector<1x32xf32>
    tpu.vector_store %arg45[%c0_240, %c193], %277 {strides = array<i32>} : memref<3x1026xf32, #tpu.memory_space<vmem>>, vector<1x32xf32>,
    %279 = vector.extract_strided_slice %140 {offsets = [6, 0], sizes = [1, 32], strides = [1, 1]} : vector<32x32xf32> to vector<1x32xf32>
    %c2_241 = arith.constant 2 : index
    %c193_242 = arith.constant 193 : index
    %280 = vector.load %arg45[%c2_241, %c193_242] : memref<3x1026xf32, #tpu.memory_space<vmem>>, vector<1x32xf32>
    tpu.vector_store %arg45[%c2_241, %c193_242], %279 {strides = array<i32>} : memref<3x1026xf32, #tpu.memory_space<vmem>>, vector<1x32xf32>,
    %281 = vector.extract_strided_slice %246 {offsets = [7, 0], sizes = [1, 32], strides = [1, 1]} : vector<32x32xf32> to vector<1x32xf32>
    %c0_243 = arith.constant 0 : index
    %c225 = arith.constant 225 : index
    %282 = vector.load %arg45[%c0_243, %c225] : memref<3x1026xf32, #tpu.memory_space<vmem>>, vector<1x32xf32>
    tpu.vector_store %arg45[%c0_243, %c225], %281 {strides = array<i32>} : memref<3x1026xf32, #tpu.memory_space<vmem>>, vector<1x32xf32>,
    %283 = vector.extract_strided_slice %140 {offsets = [7, 0], sizes = [1, 32], strides = [1, 1]} : vector<32x32xf32> to vector<1x32xf32>
    %c2_244 = arith.constant 2 : index
    %c225_245 = arith.constant 225 : index
    %284 = vector.load %arg45[%c2_244, %c225_245] : memref<3x1026xf32, #tpu.memory_space<vmem>>, vector<1x32xf32>
    tpu.vector_store %arg45[%c2_244, %c225_245], %283 {strides = array<i32>} : memref<3x1026xf32, #tpu.memory_space<vmem>>, vector<1x32xf32>,
    %285 = vector.extract_strided_slice %246 {offsets = [8, 0], sizes = [1, 32], strides = [1, 1]} : vector<32x32xf32> to vector<1x32xf32>
    %c0_246 = arith.constant 0 : index
    %c257 = arith.constant 257 : index
    %286 = vector.load %arg45[%c0_246, %c257] : memref<3x1026xf32, #tpu.memory_space<vmem>>, vector<1x32xf32>
    tpu.vector_store %arg45[%c0_246, %c257], %285 {strides = array<i32>} : memref<3x1026xf32, #tpu.memory_space<vmem>>, vector<1x32xf32>,
    %287 = vector.extract_strided_slice %140 {offsets = [8, 0], sizes = [1, 32], strides = [1, 1]} : vector<32x32xf32> to vector<1x32xf32>
    %c2_247 = arith.constant 2 : index
    %c257_248 = arith.constant 257 : index
    %288 = vector.load %arg45[%c2_247, %c257_248] : memref<3x1026xf32, #tpu.memory_space<vmem>>, vector<1x32xf32>
    tpu.vector_store %arg45[%c2_247, %c257_248], %287 {strides = array<i32>} : memref<3x1026xf32, #tpu.memory_space<vmem>>, vector<1x32xf32>,
    %289 = vector.extract_strided_slice %246 {offsets = [9, 0], sizes = [1, 32], strides = [1, 1]} : vector<32x32xf32> to vector<1x32xf32>
    %c0_249 = arith.constant 0 : index
    %c289 = arith.constant 289 : index
    %290 = vector.load %arg45[%c0_249, %c289] : memref<3x1026xf32, #tpu.memory_space<vmem>>, vector<1x32xf32>
    tpu.vector_store %arg45[%c0_249, %c289], %289 {strides = array<i32>} : memref<3x1026xf32, #tpu.memory_space<vmem>>, vector<1x32xf32>,
    %291 = vector.extract_strided_slice %140 {offsets = [9, 0], sizes = [1, 32], strides = [1, 1]} : vector<32x32xf32> to vector<1x32xf32>
    %c2_250 = arith.constant 2 : index
    %c289_251 = arith.constant 289 : index
    %292 = vector.load %arg45[%c2_250, %c289_251] : memref<3x1026xf32, #tpu.memory_space<vmem>>, vector<1x32xf32>
    tpu.vector_store %arg45[%c2_250, %c289_251], %291 {strides = array<i32>} : memref<3x1026xf32, #tpu.memory_space<vmem>>, vector<1x32xf32>,
    %293 = vector.extract_strided_slice %246 {offsets = [10, 0], sizes = [1, 32], strides = [1, 1]} : vector<32x32xf32> to vector<1x32xf32>
    %c0_252 = arith.constant 0 : index
    %c321 = arith.constant 321 : index
    %294 = vector.load %arg45[%c0_252, %c321] : memref<3x1026xf32, #tpu.memory_space<vmem>>, vector<1x32xf32>
    tpu.vector_store %arg45[%c0_252, %c321], %293 {strides = array<i32>} : memref<3x1026xf32, #tpu.memory_space<vmem>>, vector<1x32xf32>,
    %295 = vector.extract_strided_slice %140 {offsets = [10, 0], sizes = [1, 32], strides = [1, 1]} : vector<32x32xf32> to vector<1x32xf32>
    %c2_253 = arith.constant 2 : index
    %c321_254 = arith.constant 321 : index
    %296 = vector.load %arg45[%c2_253, %c321_254] : memref<3x1026xf32, #tpu.memory_space<vmem>>, vector<1x32xf32>
    tpu.vector_store %arg45[%c2_253, %c321_254], %295 {strides = array<i32>} : memref<3x1026xf32, #tpu.memory_space<vmem>>, vector<1x32xf32>,
    %297 = vector.extract_strided_slice %246 {offsets = [11, 0], sizes = [1, 32], strides = [1, 1]} : vector<32x32xf32> to vector<1x32xf32>
    %c0_255 = arith.constant 0 : index
    %c353 = arith.constant 353 : index
    %298 = vector.load %arg45[%c0_255, %c353] : memref<3x1026xf32, #tpu.memory_space<vmem>>, vector<1x32xf32>
    tpu.vector_store %arg45[%c0_255, %c353], %297 {strides = array<i32>} : memref<3x1026xf32, #tpu.memory_space<vmem>>, vector<1x32xf32>,
    %299 = vector.extract_strided_slice %140 {offsets = [11, 0], sizes = [1, 32], strides = [1, 1]} : vector<32x32xf32> to vector<1x32xf32>
    %c2_256 = arith.constant 2 : index
    %c353_257 = arith.constant 353 : index
    %300 = vector.load %arg45[%c2_256, %c353_257] : memref<3x1026xf32, #tpu.memory_space<vmem>>, vector<1x32xf32>
    tpu.vector_store %arg45[%c2_256, %c353_257], %299 {strides = array<i32>} : memref<3x1026xf32, #tpu.memory_space<vmem>>, vector<1x32xf32>,
    %301 = vector.extract_strided_slice %246 {offsets = [12, 0], sizes = [1, 32], strides = [1, 1]} : vector<32x32xf32> to vector<1x32xf32>
    %c0_258 = arith.constant 0 : index
    %c385 = arith.constant 385 : index
    %302 = vector.load %arg45[%c0_258, %c385] : memref<3x1026xf32, #tpu.memory_space<vmem>>, vector<1x32xf32>
    tpu.vector_store %arg45[%c0_258, %c385], %301 {strides = array<i32>} : memref<3x1026xf32, #tpu.memory_space<vmem>>, vector<1x32xf32>,
    %303 = vector.extract_strided_slice %140 {offsets = [12, 0], sizes = [1, 32], strides = [1, 1]} : vector<32x32xf32> to vector<1x32xf32>
    %c2_259 = arith.constant 2 : index
    %c385_260 = arith.constant 385 : index
    %304 = vector.load %arg45[%c2_259, %c385_260] : memref<3x1026xf32, #tpu.memory_space<vmem>>, vector<1x32xf32>
    tpu.vector_store %arg45[%c2_259, %c385_260], %303 {strides = array<i32>} : memref<3x1026xf32, #tpu.memory_space<vmem>>, vector<1x32xf32>,
    %305 = vector.extract_strided_slice %246 {offsets = [13, 0], sizes = [1, 32], strides = [1, 1]} : vector<32x32xf32> to vector<1x32xf32>
    %c0_261 = arith.constant 0 : index
    %c417 = arith.constant 417 : index
    %306 = vector.load %arg45[%c0_261, %c417] : memref<3x1026xf32, #tpu.memory_space<vmem>>, vector<1x32xf32>
    tpu.vector_store %arg45[%c0_261, %c417], %305 {strides = array<i32>} : memref<3x1026xf32, #tpu.memory_space<vmem>>, vector<1x32xf32>,
    %307 = vector.extract_strided_slice %140 {offsets = [13, 0], sizes = [1, 32], strides = [1, 1]} : vector<32x32xf32> to vector<1x32xf32>
    %c2_262 = arith.constant 2 : index
    %c417_263 = arith.constant 417 : index
    %308 = vector.load %arg45[%c2_262, %c417_263] : memref<3x1026xf32, #tpu.memory_space<vmem>>, vector<1x32xf32>
    tpu.vector_store %arg45[%c2_262, %c417_263], %307 {strides = array<i32>} : memref<3x1026xf32, #tpu.memory_space<vmem>>, vector<1x32xf32>,
    %309 = vector.extract_strided_slice %246 {offsets = [14, 0], sizes = [1, 32], strides = [1, 1]} : vector<32x32xf32> to vector<1x32xf32>
    %c0_264 = arith.constant 0 : index
    %c449 = arith.constant 449 : index
    %310 = vector.load %arg45[%c0_264, %c449] : memref<3x1026xf32, #tpu.memory_space<vmem>>, vector<1x32xf32>
    tpu.vector_store %arg45[%c0_264, %c449], %309 {strides = array<i32>} : memref<3x1026xf32, #tpu.memory_space<vmem>>, vector<1x32xf32>,
    %311 = vector.extract_strided_slice %140 {offsets = [14, 0], sizes = [1, 32], strides = [1, 1]} : vector<32x32xf32> to vector<1x32xf32>
    %c2_265 = arith.constant 2 : index
    %c449_266 = arith.constant 449 : index
    %312 = vector.load %arg45[%c2_265, %c449_266] : memref<3x1026xf32, #tpu.memory_space<vmem>>, vector<1x32xf32>
    tpu.vector_store %arg45[%c2_265, %c449_266], %311 {strides = array<i32>} : memref<3x1026xf32, #tpu.memory_space<vmem>>, vector<1x32xf32>,
    %313 = vector.extract_strided_slice %246 {offsets = [15, 0], sizes = [1, 32], strides = [1, 1]} : vector<32x32xf32> to vector<1x32xf32>
    %c0_267 = arith.constant 0 : index
    %c481 = arith.constant 481 : index
    %314 = vector.load %arg45[%c0_267, %c481] : memref<3x1026xf32, #tpu.memory_space<vmem>>, vector<1x32xf32>
    tpu.vector_store %arg45[%c0_267, %c481], %313 {strides = array<i32>} : memref<3x1026xf32, #tpu.memory_space<vmem>>, vector<1x32xf32>,
    %315 = vector.extract_strided_slice %140 {offsets = [15, 0], sizes = [1, 32], strides = [1, 1]} : vector<32x32xf32> to vector<1x32xf32>
    %c2_268 = arith.constant 2 : index
    %c481_269 = arith.constant 481 : index
    %316 = vector.load %arg45[%c2_268, %c481_269] : memref<3x1026xf32, #tpu.memory_space<vmem>>, vector<1x32xf32>
    tpu.vector_store %arg45[%c2_268, %c481_269], %315 {strides = array<i32>} : memref<3x1026xf32, #tpu.memory_space<vmem>>, vector<1x32xf32>,
    %317 = vector.extract_strided_slice %246 {offsets = [16, 0], sizes = [1, 32], strides = [1, 1]} : vector<32x32xf32> to vector<1x32xf32>
    %c0_270 = arith.constant 0 : index
    %c513 = arith.constant 513 : index
    %318 = vector.load %arg45[%c0_270, %c513] : memref<3x1026xf32, #tpu.memory_space<vmem>>, vector<1x32xf32>
    tpu.vector_store %arg45[%c0_270, %c513], %317 {strides = array<i32>} : memref<3x1026xf32, #tpu.memory_space<vmem>>, vector<1x32xf32>,
    %319 = vector.extract_strided_slice %140 {offsets = [16, 0], sizes = [1, 32], strides = [1, 1]} : vector<32x32xf32> to vector<1x32xf32>
    %c2_271 = arith.constant 2 : index
    %c513_272 = arith.constant 513 : index
    %320 = vector.load %arg45[%c2_271, %c513_272] : memref<3x1026xf32, #tpu.memory_space<vmem>>, vector<1x32xf32>
    tpu.vector_store %arg45[%c2_271, %c513_272], %319 {strides = array<i32>} : memref<3x1026xf32, #tpu.memory_space<vmem>>, vector<1x32xf32>,
    %321 = vector.extract_strided_slice %246 {offsets = [17, 0], sizes = [1, 32], strides = [1, 1]} : vector<32x32xf32> to vector<1x32xf32>
    %c0_273 = arith.constant 0 : index
    %c545 = arith.constant 545 : index
    %322 = vector.load %arg45[%c0_273, %c545] : memref<3x1026xf32, #tpu.memory_space<vmem>>, vector<1x32xf32>
    tpu.vector_store %arg45[%c0_273, %c545], %321 {strides = array<i32>} : memref<3x1026xf32, #tpu.memory_space<vmem>>, vector<1x32xf32>,
    %323 = vector.extract_strided_slice %140 {offsets = [17, 0], sizes = [1, 32], strides = [1, 1]} : vector<32x32xf32> to vector<1x32xf32>
    %c2_274 = arith.constant 2 : index
    %c545_275 = arith.constant 545 : index
    %324 = vector.load %arg45[%c2_274, %c545_275] : memref<3x1026xf32, #tpu.memory_space<vmem>>, vector<1x32xf32>
    tpu.vector_store %arg45[%c2_274, %c545_275], %323 {strides = array<i32>} : memref<3x1026xf32, #tpu.memory_space<vmem>>, vector<1x32xf32>,
    %325 = vector.extract_strided_slice %246 {offsets = [18, 0], sizes = [1, 32], strides = [1, 1]} : vector<32x32xf32> to vector<1x32xf32>
    %c0_276 = arith.constant 0 : index
    %c577 = arith.constant 577 : index
    %326 = vector.load %arg45[%c0_276, %c577] : memref<3x1026xf32, #tpu.memory_space<vmem>>, vector<1x32xf32>
    tpu.vector_store %arg45[%c0_276, %c577], %325 {strides = array<i32>} : memref<3x1026xf32, #tpu.memory_space<vmem>>, vector<1x32xf32>,
    %327 = vector.extract_strided_slice %140 {offsets = [18, 0], sizes = [1, 32], strides = [1, 1]} : vector<32x32xf32> to vector<1x32xf32>
    %c2_277 = arith.constant 2 : index
    %c577_278 = arith.constant 577 : index
    %328 = vector.load %arg45[%c2_277, %c577_278] : memref<3x1026xf32, #tpu.memory_space<vmem>>, vector<1x32xf32>
    tpu.vector_store %arg45[%c2_277, %c577_278], %327 {strides = array<i32>} : memref<3x1026xf32, #tpu.memory_space<vmem>>, vector<1x32xf32>,
    %329 = vector.extract_strided_slice %246 {offsets = [19, 0], sizes = [1, 32], strides = [1, 1]} : vector<32x32xf32> to vector<1x32xf32>
    %c0_279 = arith.constant 0 : index
    %c609 = arith.constant 609 : index
    %330 = vector.load %arg45[%c0_279, %c609] : memref<3x1026xf32, #tpu.memory_space<vmem>>, vector<1x32xf32>
    tpu.vector_store %arg45[%c0_279, %c609], %329 {strides = array<i32>} : memref<3x1026xf32, #tpu.memory_space<vmem>>, vector<1x32xf32>,
    %331 = vector.extract_strided_slice %140 {offsets = [19, 0], sizes = [1, 32], strides = [1, 1]} : vector<32x32xf32> to vector<1x32xf32>
    %c2_280 = arith.constant 2 : index
    %c609_281 = arith.constant 609 : index
    %332 = vector.load %arg45[%c2_280, %c609_281] : memref<3x1026xf32, #tpu.memory_space<vmem>>, vector<1x32xf32>
    tpu.vector_store %arg45[%c2_280, %c609_281], %331 {strides = array<i32>} : memref<3x1026xf32, #tpu.memory_space<vmem>>, vector<1x32xf32>,
    %333 = vector.extract_strided_slice %246 {offsets = [20, 0], sizes = [1, 32], strides = [1, 1]} : vector<32x32xf32> to vector<1x32xf32>
    %c0_282 = arith.constant 0 : index
    %c641 = arith.constant 641 : index
    %334 = vector.load %arg45[%c0_282, %c641] : memref<3x1026xf32, #tpu.memory_space<vmem>>, vector<1x32xf32>
    tpu.vector_store %arg45[%c0_282, %c641], %333 {strides = array<i32>} : memref<3x1026xf32, #tpu.memory_space<vmem>>, vector<1x32xf32>,
    %335 = vector.extract_strided_slice %140 {offsets = [20, 0], sizes = [1, 32], strides = [1, 1]} : vector<32x32xf32> to vector<1x32xf32>
    %c2_283 = arith.constant 2 : index
    %c641_284 = arith.constant 641 : index
    %336 = vector.load %arg45[%c2_283, %c641_284] : memref<3x1026xf32, #tpu.memory_space<vmem>>, vector<1x32xf32>
    tpu.vector_store %arg45[%c2_283, %c641_284], %335 {strides = array<i32>} : memref<3x1026xf32, #tpu.memory_space<vmem>>, vector<1x32xf32>,
    %337 = vector.extract_strided_slice %246 {offsets = [21, 0], sizes = [1, 32], strides = [1, 1]} : vector<32x32xf32> to vector<1x32xf32>
    %c0_285 = arith.constant 0 : index
    %c673 = arith.constant 673 : index
    %338 = vector.load %arg45[%c0_285, %c673] : memref<3x1026xf32, #tpu.memory_space<vmem>>, vector<1x32xf32>
    tpu.vector_store %arg45[%c0_285, %c673], %337 {strides = array<i32>} : memref<3x1026xf32, #tpu.memory_space<vmem>>, vector<1x32xf32>,
    %339 = vector.extract_strided_slice %140 {offsets = [21, 0], sizes = [1, 32], strides = [1, 1]} : vector<32x32xf32> to vector<1x32xf32>
    %c2_286 = arith.constant 2 : index
    %c673_287 = arith.constant 673 : index
    %340 = vector.load %arg45[%c2_286, %c673_287] : memref<3x1026xf32, #tpu.memory_space<vmem>>, vector<1x32xf32>
    tpu.vector_store %arg45[%c2_286, %c673_287], %339 {strides = array<i32>} : memref<3x1026xf32, #tpu.memory_space<vmem>>, vector<1x32xf32>,
    %341 = vector.extract_strided_slice %246 {offsets = [22, 0], sizes = [1, 32], strides = [1, 1]} : vector<32x32xf32> to vector<1x32xf32>
    %c0_288 = arith.constant 0 : index
    %c705 = arith.constant 705 : index
    %342 = vector.load %arg45[%c0_288, %c705] : memref<3x1026xf32, #tpu.memory_space<vmem>>, vector<1x32xf32>
    tpu.vector_store %arg45[%c0_288, %c705], %341 {strides = array<i32>} : memref<3x1026xf32, #tpu.memory_space<vmem>>, vector<1x32xf32>,
    %343 = vector.extract_strided_slice %140 {offsets = [22, 0], sizes = [1, 32], strides = [1, 1]} : vector<32x32xf32> to vector<1x32xf32>
    %c2_289 = arith.constant 2 : index
    %c705_290 = arith.constant 705 : index
    %344 = vector.load %arg45[%c2_289, %c705_290] : memref<3x1026xf32, #tpu.memory_space<vmem>>, vector<1x32xf32>
    tpu.vector_store %arg45[%c2_289, %c705_290], %343 {strides = array<i32>} : memref<3x1026xf32, #tpu.memory_space<vmem>>, vector<1x32xf32>,
    %345 = vector.extract_strided_slice %246 {offsets = [23, 0], sizes = [1, 32], strides = [1, 1]} : vector<32x32xf32> to vector<1x32xf32>
    %c0_291 = arith.constant 0 : index
    %c737 = arith.constant 737 : index
    %346 = vector.load %arg45[%c0_291, %c737] : memref<3x1026xf32, #tpu.memory_space<vmem>>, vector<1x32xf32>
    tpu.vector_store %arg45[%c0_291, %c737], %345 {strides = array<i32>} : memref<3x1026xf32, #tpu.memory_space<vmem>>, vector<1x32xf32>,
    %347 = vector.extract_strided_slice %140 {offsets = [23, 0], sizes = [1, 32], strides = [1, 1]} : vector<32x32xf32> to vector<1x32xf32>
    %c2_292 = arith.constant 2 : index
    %c737_293 = arith.constant 737 : index
    %348 = vector.load %arg45[%c2_292, %c737_293] : memref<3x1026xf32, #tpu.memory_space<vmem>>, vector<1x32xf32>
    tpu.vector_store %arg45[%c2_292, %c737_293], %347 {strides = array<i32>} : memref<3x1026xf32, #tpu.memory_space<vmem>>, vector<1x32xf32>,
    %349 = vector.extract_strided_slice %246 {offsets = [24, 0], sizes = [1, 32], strides = [1, 1]} : vector<32x32xf32> to vector<1x32xf32>
    %c0_294 = arith.constant 0 : index
    %c769 = arith.constant 769 : index
    %350 = vector.load %arg45[%c0_294, %c769] : memref<3x1026xf32, #tpu.memory_space<vmem>>, vector<1x32xf32>
    tpu.vector_store %arg45[%c0_294, %c769], %349 {strides = array<i32>} : memref<3x1026xf32, #tpu.memory_space<vmem>>, vector<1x32xf32>,
    %351 = vector.extract_strided_slice %140 {offsets = [24, 0], sizes = [1, 32], strides = [1, 1]} : vector<32x32xf32> to vector<1x32xf32>
    %c2_295 = arith.constant 2 : index
    %c769_296 = arith.constant 769 : index
    %352 = vector.load %arg45[%c2_295, %c769_296] : memref<3x1026xf32, #tpu.memory_space<vmem>>, vector<1x32xf32>
    tpu.vector_store %arg45[%c2_295, %c769_296], %351 {strides = array<i32>} : memref<3x1026xf32, #tpu.memory_space<vmem>>, vector<1x32xf32>,
    %353 = vector.extract_strided_slice %246 {offsets = [25, 0], sizes = [1, 32], strides = [1, 1]} : vector<32x32xf32> to vector<1x32xf32>
    %c0_297 = arith.constant 0 : index
    %c801 = arith.constant 801 : index
    %354 = vector.load %arg45[%c0_297, %c801] : memref<3x1026xf32, #tpu.memory_space<vmem>>, vector<1x32xf32>
    tpu.vector_store %arg45[%c0_297, %c801], %353 {strides = array<i32>} : memref<3x1026xf32, #tpu.memory_space<vmem>>, vector<1x32xf32>,
    %355 = vector.extract_strided_slice %140 {offsets = [25, 0], sizes = [1, 32], strides = [1, 1]} : vector<32x32xf32> to vector<1x32xf32>
    %c2_298 = arith.constant 2 : index
    %c801_299 = arith.constant 801 : index
    %356 = vector.load %arg45[%c2_298, %c801_299] : memref<3x1026xf32, #tpu.memory_space<vmem>>, vector<1x32xf32>
    tpu.vector_store %arg45[%c2_298, %c801_299], %355 {strides = array<i32>} : memref<3x1026xf32, #tpu.memory_space<vmem>>, vector<1x32xf32>,
    %357 = vector.extract_strided_slice %246 {offsets = [26, 0], sizes = [1, 32], strides = [1, 1]} : vector<32x32xf32> to vector<1x32xf32>
    %c0_300 = arith.constant 0 : index
    %c833 = arith.constant 833 : index
    %358 = vector.load %arg45[%c0_300, %c833] : memref<3x1026xf32, #tpu.memory_space<vmem>>, vector<1x32xf32>
    tpu.vector_store %arg45[%c0_300, %c833], %357 {strides = array<i32>} : memref<3x1026xf32, #tpu.memory_space<vmem>>, vector<1x32xf32>,
    %359 = vector.extract_strided_slice %140 {offsets = [26, 0], sizes = [1, 32], strides = [1, 1]} : vector<32x32xf32> to vector<1x32xf32>
    %c2_301 = arith.constant 2 : index
    %c833_302 = arith.constant 833 : index
    %360 = vector.load %arg45[%c2_301, %c833_302] : memref<3x1026xf32, #tpu.memory_space<vmem>>, vector<1x32xf32>
    tpu.vector_store %arg45[%c2_301, %c833_302], %359 {strides = array<i32>} : memref<3x1026xf32, #tpu.memory_space<vmem>>, vector<1x32xf32>,
    %361 = vector.extract_strided_slice %246 {offsets = [27, 0], sizes = [1, 32], strides = [1, 1]} : vector<32x32xf32> to vector<1x32xf32>
    %c0_303 = arith.constant 0 : index
    %c865 = arith.constant 865 : index
    %362 = vector.load %arg45[%c0_303, %c865] : memref<3x1026xf32, #tpu.memory_space<vmem>>, vector<1x32xf32>
    tpu.vector_store %arg45[%c0_303, %c865], %361 {strides = array<i32>} : memref<3x1026xf32, #tpu.memory_space<vmem>>, vector<1x32xf32>,
    %363 = vector.extract_strided_slice %140 {offsets = [27, 0], sizes = [1, 32], strides = [1, 1]} : vector<32x32xf32> to vector<1x32xf32>
    %c2_304 = arith.constant 2 : index
    %c865_305 = arith.constant 865 : index
    %364 = vector.load %arg45[%c2_304, %c865_305] : memref<3x1026xf32, #tpu.memory_space<vmem>>, vector<1x32xf32>
    tpu.vector_store %arg45[%c2_304, %c865_305], %363 {strides = array<i32>} : memref<3x1026xf32, #tpu.memory_space<vmem>>, vector<1x32xf32>,
    %365 = vector.extract_strided_slice %246 {offsets = [28, 0], sizes = [1, 32], strides = [1, 1]} : vector<32x32xf32> to vector<1x32xf32>
    %c0_306 = arith.constant 0 : index
    %c897 = arith.constant 897 : index
    %366 = vector.load %arg45[%c0_306, %c897] : memref<3x1026xf32, #tpu.memory_space<vmem>>, vector<1x32xf32>
    tpu.vector_store %arg45[%c0_306, %c897], %365 {strides = array<i32>} : memref<3x1026xf32, #tpu.memory_space<vmem>>, vector<1x32xf32>,
    %367 = vector.extract_strided_slice %140 {offsets = [28, 0], sizes = [1, 32], strides = [1, 1]} : vector<32x32xf32> to vector<1x32xf32>
    %c2_307 = arith.constant 2 : index
    %c897_308 = arith.constant 897 : index
    %368 = vector.load %arg45[%c2_307, %c897_308] : memref<3x1026xf32, #tpu.memory_space<vmem>>, vector<1x32xf32>
    tpu.vector_store %arg45[%c2_307, %c897_308], %367 {strides = array<i32>} : memref<3x1026xf32, #tpu.memory_space<vmem>>, vector<1x32xf32>,
    %369 = vector.extract_strided_slice %246 {offsets = [29, 0], sizes = [1, 32], strides = [1, 1]} : vector<32x32xf32> to vector<1x32xf32>
    %c0_309 = arith.constant 0 : index
    %c929 = arith.constant 929 : index
    %370 = vector.load %arg45[%c0_309, %c929] : memref<3x1026xf32, #tpu.memory_space<vmem>>, vector<1x32xf32>
    tpu.vector_store %arg45[%c0_309, %c929], %369 {strides = array<i32>} : memref<3x1026xf32, #tpu.memory_space<vmem>>, vector<1x32xf32>,
    %371 = vector.extract_strided_slice %140 {offsets = [29, 0], sizes = [1, 32], strides = [1, 1]} : vector<32x32xf32> to vector<1x32xf32>
    %c2_310 = arith.constant 2 : index
    %c929_311 = arith.constant 929 : index
    %372 = vector.load %arg45[%c2_310, %c929_311] : memref<3x1026xf32, #tpu.memory_space<vmem>>, vector<1x32xf32>
    tpu.vector_store %arg45[%c2_310, %c929_311], %371 {strides = array<i32>} : memref<3x1026xf32, #tpu.memory_space<vmem>>, vector<1x32xf32>,
    %373 = vector.extract_strided_slice %246 {offsets = [30, 0], sizes = [1, 32], strides = [1, 1]} : vector<32x32xf32> to vector<1x32xf32>
    %c0_312 = arith.constant 0 : index
    %c961 = arith.constant 961 : index
    %374 = vector.load %arg45[%c0_312, %c961] : memref<3x1026xf32, #tpu.memory_space<vmem>>, vector<1x32xf32>
    tpu.vector_store %arg45[%c0_312, %c961], %373 {strides = array<i32>} : memref<3x1026xf32, #tpu.memory_space<vmem>>, vector<1x32xf32>,
    %375 = vector.extract_strided_slice %140 {offsets = [30, 0], sizes = [1, 32], strides = [1, 1]} : vector<32x32xf32> to vector<1x32xf32>
    %c2_313 = arith.constant 2 : index
    %c961_314 = arith.constant 961 : index
    %376 = vector.load %arg45[%c2_313, %c961_314] : memref<3x1026xf32, #tpu.memory_space<vmem>>, vector<1x32xf32>
    tpu.vector_store %arg45[%c2_313, %c961_314], %375 {strides = array<i32>} : memref<3x1026xf32, #tpu.memory_space<vmem>>, vector<1x32xf32>,
    %377 = vector.extract_strided_slice %246 {offsets = [31, 0], sizes = [1, 32], strides = [1, 1]} : vector<32x32xf32> to vector<1x32xf32>
    %c0_315 = arith.constant 0 : index
    %c993 = arith.constant 993 : index
    %378 = vector.load %arg45[%c0_315, %c993] : memref<3x1026xf32, #tpu.memory_space<vmem>>, vector<1x32xf32>
    tpu.vector_store %arg45[%c0_315, %c993], %377 {strides = array<i32>} : memref<3x1026xf32, #tpu.memory_space<vmem>>, vector<1x32xf32>,
    %379 = vector.extract_strided_slice %140 {offsets = [31, 0], sizes = [1, 32], strides = [1, 1]} : vector<32x32xf32> to vector<1x32xf32>
    %c2_316 = arith.constant 2 : index
    %c993_317 = arith.constant 993 : index
    %380 = vector.load %arg45[%c2_316, %c993_317] : memref<3x1026xf32, #tpu.memory_space<vmem>>, vector<1x32xf32>
    tpu.vector_store %arg45[%c2_316, %c993_317], %379 {strides = array<i32>} : memref<3x1026xf32, #tpu.memory_space<vmem>>, vector<1x32xf32>,
    %c0_318 = arith.constant 0 : index
    %c0_319 = arith.constant 0 : index
    %381 = vector.load %arg45[%c0_318, %c0_319] : memref<3x1026xf32, #tpu.memory_space<vmem>>, vector<1x1026xf32>
    %c1_320 = arith.constant 1 : index
    %c0_321 = arith.constant 0 : index
    %382 = vector.load %arg45[%c1_320, %c0_321] : memref<3x1026xf32, #tpu.memory_space<vmem>>, vector<1x1026xf32>
    tpu.vector_store %arg45[%c1_320, %c0_321], %381 {strides = array<i32>} : memref<3x1026xf32, #tpu.memory_space<vmem>>, vector<1x1026xf32>,
    %c0_322 = arith.constant 0 : index
    %c0_323 = arith.constant 0 : index
    %383 = vector.load %arg45[%c0_322, %c0_323] : memref<3x1026xf32, #tpu.memory_space<vmem>>, vector<3x1026xf32>
    %384 = vector.extract_strided_slice %383 {offsets = [0, 0], sizes = [3, 1024], strides = [1, 1]} : vector<3x1026xf32> to vector<3x1024xf32>
    %c0_324 = arith.constant 0 : index
    %c0_325 = arith.constant 0 : index
    %385 = vector.load %arg46[%c0_324, %c0_325] : memref<9x1024xf32, #tpu.memory_space<vmem>>, vector<3x1024xf32>
    tpu.vector_store %arg46[%c0_324, %c0_325], %384 {strides = array<i32>} : memref<9x1024xf32, #tpu.memory_space<vmem>>, vector<3x1024xf32>,
    %386 = vector.extract_strided_slice %383 {offsets = [0, 1], sizes = [3, 1024], strides = [1, 1]} : vector<3x1026xf32> to vector<3x1024xf32>
    %c3_326 = arith.constant 3 : index
    %c0_327 = arith.constant 0 : index
    %387 = vector.load %arg46[%c3_326, %c0_327] : memref<9x1024xf32, #tpu.memory_space<vmem>>, vector<3x1024xf32>
    tpu.vector_store %arg46[%c3_326, %c0_327], %386 {strides = array<i32>} : memref<9x1024xf32, #tpu.memory_space<vmem>>, vector<3x1024xf32>,
    %388 = vector.extract_strided_slice %383 {offsets = [0, 2], sizes = [3, 1024], strides = [1, 1]} : vector<3x1026xf32> to vector<3x1024xf32>
    %c6_328 = arith.constant 6 : index
    %c0_329 = arith.constant 0 : index
    %389 = vector.load %arg46[%c6_328, %c0_329] : memref<9x1024xf32, #tpu.memory_space<vmem>>, vector<3x1024xf32>
    tpu.vector_store %arg46[%c6_328, %c0_329], %388 {strides = array<i32>} : memref<9x1024xf32, #tpu.memory_space<vmem>>, vector<3x1024xf32>,
    %c0_330 = arith.constant 0 : index
    %c0_331 = arith.constant 0 : index
    %390 = vector.load %arg16[%c0_330, %c0_331] : memref<16x9xf32, #tpu.memory_space<vmem>>, vector<16x9xf32>
    %c0_332 = arith.constant 0 : index
    %c0_333 = arith.constant 0 : index
    %391 = vector.load %arg46[%c0_332, %c0_333] : memref<9x1024xf32, #tpu.memory_space<vmem>>, vector<9x1024xf32>
    %cst_334 = arith.constant dense<0.000000e+00> : vector<16x1024xf32>
    %392 = tpu.matmul %390, %391, %cst_334 {dimension_numbers = #tpu.dot_dimension_numbers<[1], [0], [0], [1], [0, 0, 1, 1], [], []>} : vector<16x9xf32>, vector<9x1024xf32>, vector<16x1024xf32> -> vector<16x1024xf32>
    %c0_335 = arith.constant 0 : index
    %c0_336 = arith.constant 0 : index
    %393 = vector.load %arg17[%c0_335, %c0_336] : memref<16x1xf32, #tpu.memory_space<vmem>>, vector<16x1xf32>
    %394 = vector.broadcast %393 : vector<16x1xf32> to vector<16x1024xf32>
    %395 = arith.addf %392, %394 : vector<16x1024xf32>
    %cst_337 = arith.constant 0.000000e+00 : f32
    %396 = vector.broadcast %cst_337 : f32 to vector<16x1024xf32>
    %397 = arith.cmpf oge, %395, %396 : vector<16x1024xf32>
    %cst_338 = arith.constant 2.000000e-01 : f32
    %398 = vector.broadcast %cst_338 : f32 to vector<16x1024xf32>
    %399 = arith.mulf %398, %395 : vector<16x1024xf32>
    %400 = arith.select %397, %395, %399 : vector<16x1024xi1>, vector<16x1024xf32>
    %cst_339 = arith.constant 0.000000e+00 : bf16
    %401 = vector.broadcast %cst_339 : bf16 to vector<16x3xbf16>
    %c0_340 = arith.constant 0 : index
    %c0_341 = arith.constant 0 : index
    %402 = vector.load %arg47[%c0_340, %c0_341] : memref<16x1030xbf16, #tpu.memory_space<vmem>>, vector<16x3xbf16>
    tpu.vector_store %arg47[%c0_340, %c0_341], %401 {strides = array<i32>} : memref<16x1030xbf16, #tpu.memory_space<vmem>>, vector<16x3xbf16>,
    %c0_342 = arith.constant 0 : index
    %c1027 = arith.constant 1027 : index
    %403 = vector.load %arg47[%c0_342, %c1027] : memref<16x1030xbf16, #tpu.memory_space<vmem>>, vector<16x3xbf16>
    tpu.vector_store %arg47[%c0_342, %c1027], %401 {strides = array<i32>} : memref<16x1030xbf16, #tpu.memory_space<vmem>>, vector<16x3xbf16>,
    %404 = arith.truncf %400 : vector<16x1024xf32> to vector<16x1024xbf16>
    %c0_343 = arith.constant 0 : index
    %c3_344 = arith.constant 3 : index
    %405 = vector.load %arg47[%c0_343, %c3_344] : memref<16x1030xbf16, #tpu.memory_space<vmem>>, vector<16x1024xbf16>
    tpu.vector_store %arg47[%c0_343, %c3_344], %404 {strides = array<i32>} : memref<16x1030xbf16, #tpu.memory_space<vmem>>, vector<16x1024xbf16>,
    %c0_345 = arith.constant 0 : index
    %c0_346 = arith.constant 0 : index
    %406 = vector.load %arg47[%c0_345, %c0_346] : memref<16x1030xbf16, #tpu.memory_space<vmem>>, vector<16x1030xbf16>
    %407 = vector.extract_strided_slice %406 {offsets = [0, 0], sizes = [16, 1024], strides = [1, 1]} : vector<16x1030xbf16> to vector<16x1024xbf16>
    %c0_347 = arith.constant 0 : index
    %c0_348 = arith.constant 0 : index
    %408 = vector.load %arg48[%c0_347, %c0_348] : memref<112x1024xbf16, #tpu.memory_space<vmem>>, vector<16x1024xbf16>
    tpu.vector_store %arg48[%c0_347, %c0_348], %407 {strides = array<i32>} : memref<112x1024xbf16, #tpu.memory_space<vmem>>, vector<16x1024xbf16>,
    %409 = vector.extract_strided_slice %406 {offsets = [0, 1], sizes = [16, 1024], strides = [1, 1]} : vector<16x1030xbf16> to vector<16x1024xbf16>
    %c16_349 = arith.constant 16 : index
    %c0_350 = arith.constant 0 : index
    %410 = vector.load %arg48[%c16_349, %c0_350] : memref<112x1024xbf16, #tpu.memory_space<vmem>>, vector<16x1024xbf16>
    tpu.vector_store %arg48[%c16_349, %c0_350], %409 {strides = array<i32>} : memref<112x1024xbf16, #tpu.memory_space<vmem>>, vector<16x1024xbf16>,
    %411 = vector.extract_strided_slice %406 {offsets = [0, 2], sizes = [16, 1024], strides = [1, 1]} : vector<16x1030xbf16> to vector<16x1024xbf16>
    %c32_351 = arith.constant 32 : index
    %c0_352 = arith.constant 0 : index
    %412 = vector.load %arg48[%c32_351, %c0_352] : memref<112x1024xbf16, #tpu.memory_space<vmem>>, vector<16x1024xbf16>
    tpu.vector_store %arg48[%c32_351, %c0_352], %411 {strides = array<i32>} : memref<112x1024xbf16, #tpu.memory_space<vmem>>, vector<16x1024xbf16>,
    %413 = vector.extract_strided_slice %406 {offsets = [0, 3], sizes = [16, 1024], strides = [1, 1]} : vector<16x1030xbf16> to vector<16x1024xbf16>
    %c48_353 = arith.constant 48 : index
    %c0_354 = arith.constant 0 : index
    %414 = vector.load %arg48[%c48_353, %c0_354] : memref<112x1024xbf16, #tpu.memory_space<vmem>>, vector<16x1024xbf16>
    tpu.vector_store %arg48[%c48_353, %c0_354], %413 {strides = array<i32>} : memref<112x1024xbf16, #tpu.memory_space<vmem>>, vector<16x1024xbf16>,
    %415 = vector.extract_strided_slice %406 {offsets = [0, 4], sizes = [16, 1024], strides = [1, 1]} : vector<16x1030xbf16> to vector<16x1024xbf16>
    %c64_355 = arith.constant 64 : index
    %c0_356 = arith.constant 0 : index
    %416 = vector.load %arg48[%c64_355, %c0_356] : memref<112x1024xbf16, #tpu.memory_space<vmem>>, vector<16x1024xbf16>
    tpu.vector_store %arg48[%c64_355, %c0_356], %415 {strides = array<i32>} : memref<112x1024xbf16, #tpu.memory_space<vmem>>, vector<16x1024xbf16>,
    %417 = vector.extract_strided_slice %406 {offsets = [0, 5], sizes = [16, 1024], strides = [1, 1]} : vector<16x1030xbf16> to vector<16x1024xbf16>
    %c80_357 = arith.constant 80 : index
    %c0_358 = arith.constant 0 : index
    %418 = vector.load %arg48[%c80_357, %c0_358] : memref<112x1024xbf16, #tpu.memory_space<vmem>>, vector<16x1024xbf16>
    tpu.vector_store %arg48[%c80_357, %c0_358], %417 {strides = array<i32>} : memref<112x1024xbf16, #tpu.memory_space<vmem>>, vector<16x1024xbf16>,
    %419 = vector.extract_strided_slice %406 {offsets = [0, 6], sizes = [16, 1024], strides = [1, 1]} : vector<16x1030xbf16> to vector<16x1024xbf16>
    %c96_359 = arith.constant 96 : index
    %c0_360 = arith.constant 0 : index
    %420 = vector.load %arg48[%c96_359, %c0_360] : memref<112x1024xbf16, #tpu.memory_space<vmem>>, vector<16x1024xbf16>
    tpu.vector_store %arg48[%c96_359, %c0_360], %419 {strides = array<i32>} : memref<112x1024xbf16, #tpu.memory_space<vmem>>, vector<16x1024xbf16>,
    %c0_361 = arith.constant 0 : index
    %c0_362 = arith.constant 0 : index
    %421 = vector.load %arg18[%c0_361, %c0_362] : memref<16x112xbf16, #tpu.memory_space<vmem>>, vector<16x112xbf16>
    %c0_363 = arith.constant 0 : index
    %c0_364 = arith.constant 0 : index
    %422 = vector.load %arg48[%c0_363, %c0_364] : memref<112x1024xbf16, #tpu.memory_space<vmem>>, vector<112x1024xbf16>
    %cst_365 = arith.constant dense<0.000000e+00> : vector<16x1024xf32>
    %423 = tpu.matmul %421, %422, %cst_365 {dimension_numbers = #tpu.dot_dimension_numbers<[1], [0], [0], [1], [0, 0, 1, 1], [], []>} : vector<16x112xbf16>, vector<112x1024xbf16>, vector<16x1024xf32> -> vector<16x1024xf32>
    %c0_366 = arith.constant 0 : index
    %c0_367 = arith.constant 0 : index
    %424 = vector.load %arg19[%c0_366, %c0_367] : memref<16x1xf32, #tpu.memory_space<vmem>>, vector<16x1xf32>
    %425 = vector.broadcast %424 : vector<16x1xf32> to vector<16x1024xf32>
    %426 = arith.addf %423, %425 : vector<16x1024xf32>
    %cst_368 = arith.constant 0.000000e+00 : f32
    %427 = vector.broadcast %cst_368 : f32 to vector<16x1024xf32>
    %428 = arith.cmpf oge, %426, %427 : vector<16x1024xf32>
    %cst_369 = arith.constant 2.000000e-01 : f32
    %429 = vector.broadcast %cst_369 : f32 to vector<16x1024xf32>
    %430 = arith.mulf %429, %426 : vector<16x1024xf32>
    %431 = arith.select %428, %426, %430 : vector<16x1024xi1>, vector<16x1024xf32>
    %432 = arith.truncf %431 : vector<16x1024xf32> to vector<16x1024xbf16>
    %c0_370 = arith.constant 0 : index
    %c0_371 = arith.constant 0 : index
    %433 = vector.load %arg26[%c0_370, %c0_371] : memref<1024x256xbf16, #tpu.memory_space<vmem>>, vector<1024x256xbf16>
    %cst_372 = arith.constant dense<0.000000e+00> : vector<16x256xf32>
    %434 = tpu.matmul %432, %433, %cst_372 {dimension_numbers = #tpu.dot_dimension_numbers<[1], [0], [0], [1], [0, 0, 1, 1], [], []>} : vector<16x1024xbf16>, vector<1024x256xbf16>, vector<16x256xf32> -> vector<16x256xf32>
    %cst_373 = arith.constant 0.000000e+00 : bf16
    %435 = vector.broadcast %cst_373 : bf16 to vector<16x3xbf16>
    %c0_374 = arith.constant 0 : index
    %c0_375 = arith.constant 0 : index
    %436 = vector.load %arg49[%c0_374, %c0_375] : memref<16x262xbf16, #tpu.memory_space<vmem>>, vector<16x3xbf16>
    tpu.vector_store %arg49[%c0_374, %c0_375], %435 {strides = array<i32>} : memref<16x262xbf16, #tpu.memory_space<vmem>>, vector<16x3xbf16>,
    %c0_376 = arith.constant 0 : index
    %c259_377 = arith.constant 259 : index
    %437 = vector.load %arg49[%c0_376, %c259_377] : memref<16x262xbf16, #tpu.memory_space<vmem>>, vector<16x3xbf16>
    tpu.vector_store %arg49[%c0_376, %c259_377], %435 {strides = array<i32>} : memref<16x262xbf16, #tpu.memory_space<vmem>>, vector<16x3xbf16>,
    %438 = arith.truncf %434 : vector<16x256xf32> to vector<16x256xbf16>
    %c0_378 = arith.constant 0 : index
    %c3_379 = arith.constant 3 : index
    %439 = vector.load %arg49[%c0_378, %c3_379] : memref<16x262xbf16, #tpu.memory_space<vmem>>, vector<16x256xbf16>
    tpu.vector_store %arg49[%c0_378, %c3_379], %438 {strides = array<i32>} : memref<16x262xbf16, #tpu.memory_space<vmem>>, vector<16x256xbf16>,
    %c0_380 = arith.constant 0 : index
    %c0_381 = arith.constant 0 : index
    %440 = vector.load %arg49[%c0_380, %c0_381] : memref<16x262xbf16, #tpu.memory_space<vmem>>, vector<16x262xbf16>
    %441 = vector.extract_strided_slice %440 {offsets = [0, 0], sizes = [16, 256], strides = [1, 1]} : vector<16x262xbf16> to vector<16x256xbf16>
    %c0_382 = arith.constant 0 : index
    %c0_383 = arith.constant 0 : index
    %442 = vector.load %arg50[%c0_382, %c0_383] : memref<112x256xbf16, #tpu.memory_space<vmem>>, vector<16x256xbf16>
    tpu.vector_store %arg50[%c0_382, %c0_383], %441 {strides = array<i32>} : memref<112x256xbf16, #tpu.memory_space<vmem>>, vector<16x256xbf16>,
    %443 = vector.extract_strided_slice %440 {offsets = [0, 1], sizes = [16, 256], strides = [1, 1]} : vector<16x262xbf16> to vector<16x256xbf16>
    %c16_384 = arith.constant 16 : index
    %c0_385 = arith.constant 0 : index
    %444 = vector.load %arg50[%c16_384, %c0_385] : memref<112x256xbf16, #tpu.memory_space<vmem>>, vector<16x256xbf16>
    tpu.vector_store %arg50[%c16_384, %c0_385], %443 {strides = array<i32>} : memref<112x256xbf16, #tpu.memory_space<vmem>>, vector<16x256xbf16>,
    %445 = vector.extract_strided_slice %440 {offsets = [0, 2], sizes = [16, 256], strides = [1, 1]} : vector<16x262xbf16> to vector<16x256xbf16>
    %c32_386 = arith.constant 32 : index
    %c0_387 = arith.constant 0 : index
    %446 = vector.load %arg50[%c32_386, %c0_387] : memref<112x256xbf16, #tpu.memory_space<vmem>>, vector<16x256xbf16>
    tpu.vector_store %arg50[%c32_386, %c0_387], %445 {strides = array<i32>} : memref<112x256xbf16, #tpu.memory_space<vmem>>, vector<16x256xbf16>,
    %447 = vector.extract_strided_slice %440 {offsets = [0, 3], sizes = [16, 256], strides = [1, 1]} : vector<16x262xbf16> to vector<16x256xbf16>
    %c48_388 = arith.constant 48 : index
    %c0_389 = arith.constant 0 : index
    %448 = vector.load %arg50[%c48_388, %c0_389] : memref<112x256xbf16, #tpu.memory_space<vmem>>, vector<16x256xbf16>
    tpu.vector_store %arg50[%c48_388, %c0_389], %447 {strides = array<i32>} : memref<112x256xbf16, #tpu.memory_space<vmem>>, vector<16x256xbf16>,
    %449 = vector.extract_strided_slice %440 {offsets = [0, 4], sizes = [16, 256], strides = [1, 1]} : vector<16x262xbf16> to vector<16x256xbf16>
    %c64_390 = arith.constant 64 : index
    %c0_391 = arith.constant 0 : index
    %450 = vector.load %arg50[%c64_390, %c0_391] : memref<112x256xbf16, #tpu.memory_space<vmem>>, vector<16x256xbf16>
    tpu.vector_store %arg50[%c64_390, %c0_391], %449 {strides = array<i32>} : memref<112x256xbf16, #tpu.memory_space<vmem>>, vector<16x256xbf16>,
    %451 = vector.extract_strided_slice %440 {offsets = [0, 5], sizes = [16, 256], strides = [1, 1]} : vector<16x262xbf16> to vector<16x256xbf16>
    %c80_392 = arith.constant 80 : index
    %c0_393 = arith.constant 0 : index
    %452 = vector.load %arg50[%c80_392, %c0_393] : memref<112x256xbf16, #tpu.memory_space<vmem>>, vector<16x256xbf16>
    tpu.vector_store %arg50[%c80_392, %c0_393], %451 {strides = array<i32>} : memref<112x256xbf16, #tpu.memory_space<vmem>>, vector<16x256xbf16>,
    %453 = vector.extract_strided_slice %440 {offsets = [0, 6], sizes = [16, 256], strides = [1, 1]} : vector<16x262xbf16> to vector<16x256xbf16>
    %c96_394 = arith.constant 96 : index
    %c0_395 = arith.constant 0 : index
    %454 = vector.load %arg50[%c96_394, %c0_395] : memref<112x256xbf16, #tpu.memory_space<vmem>>, vector<16x256xbf16>
    tpu.vector_store %arg50[%c96_394, %c0_395], %453 {strides = array<i32>} : memref<112x256xbf16, #tpu.memory_space<vmem>>, vector<16x256xbf16>,
    %c0_396 = arith.constant 0 : index
    %c0_397 = arith.constant 0 : index
    %455 = vector.load %arg20[%c0_396, %c0_397] : memref<16x112xbf16, #tpu.memory_space<vmem>>, vector<16x112xbf16>
    %c0_398 = arith.constant 0 : index
    %c0_399 = arith.constant 0 : index
    %456 = vector.load %arg50[%c0_398, %c0_399] : memref<112x256xbf16, #tpu.memory_space<vmem>>, vector<112x256xbf16>
    %cst_400 = arith.constant dense<0.000000e+00> : vector<16x256xf32>
    %457 = tpu.matmul %455, %456, %cst_400 {dimension_numbers = #tpu.dot_dimension_numbers<[1], [0], [0], [1], [0, 0, 1, 1], [], []>} : vector<16x112xbf16>, vector<112x256xbf16>, vector<16x256xf32> -> vector<16x256xf32>
    %c0_401 = arith.constant 0 : index
    %c0_402 = arith.constant 0 : index
    %458 = vector.load %arg21[%c0_401, %c0_402] : memref<16x1xf32, #tpu.memory_space<vmem>>, vector<16x1xf32>
    %459 = vector.broadcast %458 : vector<16x1xf32> to vector<16x256xf32>
    %460 = arith.addf %457, %459 : vector<16x256xf32>
    %cst_403 = arith.constant 0.000000e+00 : f32
    %461 = vector.broadcast %cst_403 : f32 to vector<16x256xf32>
    %462 = arith.cmpf oge, %460, %461 : vector<16x256xf32>
    %cst_404 = arith.constant 2.000000e-01 : f32
    %463 = vector.broadcast %cst_404 : f32 to vector<16x256xf32>
    %464 = arith.mulf %463, %460 : vector<16x256xf32>
    %465 = arith.select %462, %460, %464 : vector<16x256xi1>, vector<16x256xf32>
    %466 = arith.truncf %465 : vector<16x256xf32> to vector<16x256xbf16>
    %c0_405 = arith.constant 0 : index
    %c0_406 = arith.constant 0 : index
    %467 = vector.load %arg27[%c0_405, %c0_406] : memref<256x64xbf16, #tpu.memory_space<vmem>>, vector<256x64xbf16>
    %cst_407 = arith.constant dense<0.000000e+00> : vector<16x64xf32>
    %468 = tpu.matmul %466, %467, %cst_407 {dimension_numbers = #tpu.dot_dimension_numbers<[1], [0], [0], [1], [0, 0, 1, 1], [], []>} : vector<16x256xbf16>, vector<256x64xbf16>, vector<16x64xf32> -> vector<16x64xf32>
    %cst_408 = arith.constant 0.000000e+00 : bf16
    %469 = vector.broadcast %cst_408 : bf16 to vector<16x3xbf16>
    %c0_409 = arith.constant 0 : index
    %c0_410 = arith.constant 0 : index
    %470 = vector.load %arg51[%c0_409, %c0_410] : memref<16x70xbf16, #tpu.memory_space<vmem>>, vector<16x3xbf16>
    tpu.vector_store %arg51[%c0_409, %c0_410], %469 {strides = array<i32>} : memref<16x70xbf16, #tpu.memory_space<vmem>>, vector<16x3xbf16>,
    %c0_411 = arith.constant 0 : index
    %c67_412 = arith.constant 67 : index
    %471 = vector.load %arg51[%c0_411, %c67_412] : memref<16x70xbf16, #tpu.memory_space<vmem>>, vector<16x3xbf16>
    tpu.vector_store %arg51[%c0_411, %c67_412], %469 {strides = array<i32>} : memref<16x70xbf16, #tpu.memory_space<vmem>>, vector<16x3xbf16>,
    %472 = arith.truncf %468 : vector<16x64xf32> to vector<16x64xbf16>
    %c0_413 = arith.constant 0 : index
    %c3_414 = arith.constant 3 : index
    %473 = vector.load %arg51[%c0_413, %c3_414] : memref<16x70xbf16, #tpu.memory_space<vmem>>, vector<16x64xbf16>
    tpu.vector_store %arg51[%c0_413, %c3_414], %472 {strides = array<i32>} : memref<16x70xbf16, #tpu.memory_space<vmem>>, vector<16x64xbf16>,
    %c0_415 = arith.constant 0 : index
    %c0_416 = arith.constant 0 : index
    %474 = vector.load %arg51[%c0_415, %c0_416] : memref<16x70xbf16, #tpu.memory_space<vmem>>, vector<16x70xbf16>
    %475 = vector.extract_strided_slice %474 {offsets = [0, 0], sizes = [16, 64], strides = [1, 1]} : vector<16x70xbf16> to vector<16x64xbf16>
    %c0_417 = arith.constant 0 : index
    %c0_418 = arith.constant 0 : index
    %476 = vector.load %arg52[%c0_417, %c0_418] : memref<112x64xbf16, #tpu.memory_space<vmem>>, vector<16x64xbf16>
    tpu.vector_store %arg52[%c0_417, %c0_418], %475 {strides = array<i32>} : memref<112x64xbf16, #tpu.memory_space<vmem>>, vector<16x64xbf16>,
    %477 = vector.extract_strided_slice %474 {offsets = [0, 1], sizes = [16, 64], strides = [1, 1]} : vector<16x70xbf16> to vector<16x64xbf16>
    %c16_419 = arith.constant 16 : index
    %c0_420 = arith.constant 0 : index
    %478 = vector.load %arg52[%c16_419, %c0_420] : memref<112x64xbf16, #tpu.memory_space<vmem>>, vector<16x64xbf16>
    tpu.vector_store %arg52[%c16_419, %c0_420], %477 {strides = array<i32>} : memref<112x64xbf16, #tpu.memory_space<vmem>>, vector<16x64xbf16>,
    %479 = vector.extract_strided_slice %474 {offsets = [0, 2], sizes = [16, 64], strides = [1, 1]} : vector<16x70xbf16> to vector<16x64xbf16>
    %c32_421 = arith.constant 32 : index
    %c0_422 = arith.constant 0 : index
    %480 = vector.load %arg52[%c32_421, %c0_422] : memref<112x64xbf16, #tpu.memory_space<vmem>>, vector<16x64xbf16>
    tpu.vector_store %arg52[%c32_421, %c0_422], %479 {strides = array<i32>} : memref<112x64xbf16, #tpu.memory_space<vmem>>, vector<16x64xbf16>,
    %481 = vector.extract_strided_slice %474 {offsets = [0, 3], sizes = [16, 64], strides = [1, 1]} : vector<16x70xbf16> to vector<16x64xbf16>
    %c48_423 = arith.constant 48 : index
    %c0_424 = arith.constant 0 : index
    %482 = vector.load %arg52[%c48_423, %c0_424] : memref<112x64xbf16, #tpu.memory_space<vmem>>, vector<16x64xbf16>
    tpu.vector_store %arg52[%c48_423, %c0_424], %481 {strides = array<i32>} : memref<112x64xbf16, #tpu.memory_space<vmem>>, vector<16x64xbf16>,
    %483 = vector.extract_strided_slice %474 {offsets = [0, 4], sizes = [16, 64], strides = [1, 1]} : vector<16x70xbf16> to vector<16x64xbf16>
    %c64_425 = arith.constant 64 : index
    %c0_426 = arith.constant 0 : index
    %484 = vector.load %arg52[%c64_425, %c0_426] : memref<112x64xbf16, #tpu.memory_space<vmem>>, vector<16x64xbf16>
    tpu.vector_store %arg52[%c64_425, %c0_426], %483 {strides = array<i32>} : memref<112x64xbf16, #tpu.memory_space<vmem>>, vector<16x64xbf16>,
    %485 = vector.extract_strided_slice %474 {offsets = [0, 5], sizes = [16, 64], strides = [1, 1]} : vector<16x70xbf16> to vector<16x64xbf16>
    %c80_427 = arith.constant 80 : index
    %c0_428 = arith.constant 0 : index
    %486 = vector.load %arg52[%c80_427, %c0_428] : memref<112x64xbf16, #tpu.memory_space<vmem>>, vector<16x64xbf16>
    tpu.vector_store %arg52[%c80_427, %c0_428], %485 {strides = array<i32>} : memref<112x64xbf16, #tpu.memory_space<vmem>>, vector<16x64xbf16>,
    %487 = vector.extract_strided_slice %474 {offsets = [0, 6], sizes = [16, 64], strides = [1, 1]} : vector<16x70xbf16> to vector<16x64xbf16>
    %c96_429 = arith.constant 96 : index
    %c0_430 = arith.constant 0 : index
    %488 = vector.load %arg52[%c96_429, %c0_430] : memref<112x64xbf16, #tpu.memory_space<vmem>>, vector<16x64xbf16>
    tpu.vector_store %arg52[%c96_429, %c0_430], %487 {strides = array<i32>} : memref<112x64xbf16, #tpu.memory_space<vmem>>, vector<16x64xbf16>,
    %c0_431 = arith.constant 0 : index
    %c0_432 = arith.constant 0 : index
    %489 = vector.load %arg22[%c0_431, %c0_432] : memref<32x112xbf16, #tpu.memory_space<vmem>>, vector<32x112xbf16>
    %c0_433 = arith.constant 0 : index
    %c0_434 = arith.constant 0 : index
    %490 = vector.load %arg52[%c0_433, %c0_434] : memref<112x64xbf16, #tpu.memory_space<vmem>>, vector<112x64xbf16>
    %cst_435 = arith.constant dense<0.000000e+00> : vector<32x64xf32>
    %491 = tpu.matmul %489, %490, %cst_435 {dimension_numbers = #tpu.dot_dimension_numbers<[1], [0], [0], [1], [0, 0, 1, 1], [], []>} : vector<32x112xbf16>, vector<112x64xbf16>, vector<32x64xf32> -> vector<32x64xf32>
    %c0_436 = arith.constant 0 : index
    %c0_437 = arith.constant 0 : index
    %492 = vector.load %arg23[%c0_436, %c0_437] : memref<32x1xf32, #tpu.memory_space<vmem>>, vector<32x1xf32>
    %493 = vector.broadcast %492 : vector<32x1xf32> to vector<32x64xf32>
    %494 = arith.addf %491, %493 : vector<32x64xf32>
    %cst_438 = arith.constant 0.000000e+00 : f32
    %495 = vector.broadcast %cst_438 : f32 to vector<32x64xf32>
    %496 = arith.cmpf oge, %494, %495 : vector<32x64xf32>
    %cst_439 = arith.constant 2.000000e-01 : f32
    %497 = vector.broadcast %cst_439 : f32 to vector<32x64xf32>
    %498 = arith.mulf %497, %494 : vector<32x64xf32>
    %499 = arith.select %496, %494, %498 : vector<32x64xi1>, vector<32x64xf32>
    %500 = arith.truncf %499 : vector<32x64xf32> to vector<32x64xbf16>
    %c0_440 = arith.constant 0 : index
    %c0_441 = arith.constant 0 : index
    %501 = vector.load %arg28[%c0_440, %c0_441] : memref<64x32xbf16, #tpu.memory_space<vmem>>, vector<64x32xbf16>
    %cst_442 = arith.constant dense<0.000000e+00> : vector<32x32xf32>
    %502 = tpu.matmul %500, %501, %cst_442 {dimension_numbers = #tpu.dot_dimension_numbers<[1], [0], [0], [1], [0, 0, 1, 1], [], []>} : vector<32x64xbf16>, vector<64x32xbf16>, vector<32x32xf32> -> vector<32x32xf32>
    %c0_443 = arith.constant 0 : index
    %c0_444 = arith.constant 0 : index
    %c0_445 = arith.constant 0 : index
    %503 = vector.load %arg33[%c0_443, %c0_444, %c0_445] : memref<1x32x32xf32, #tpu.memory_space<vmem>>, vector<1x32x32xf32>
    %504 = vector.shape_cast %503 : vector<1x32x32xf32> to vector<32x32xf32>
    %505 = vector.shape_cast %502 : vector<32x32xf32> to vector<1x32x32xf32>
    tpu.vector_store %arg33[%c0_443, %c0_444, %c0_445], %505 {strides = array<i32>} : memref<1x32x32xf32, #tpu.memory_space<vmem>>, vector<1x32x32xf32>,
    %c0_446 = arith.constant 0 : index
    %c0_447 = arith.constant 0 : index
    %c0_448 = arith.constant 0 : index
    %506 = vector.load %arg24[%c0_446, %c0_447, %c0_448] : memref<2x32x32xf32, #tpu.memory_space<vmem>>, vector<2x32x32xf32>
    %507 = vector.shape_cast %502 : vector<32x32xf32> to vector<1x32x32xf32>
    %508 = vector.broadcast %507 : vector<1x32x32xf32> to vector<2x32x32xf32>
    %509 = arith.mulf %506, %508 : vector<2x32x32xf32>
    %cst_449 = arith.constant dense<0.000000e+00> : vector<2x32xf32>
    %510 = vector.multi_reduction <add>, %509, %cst_449 [2] : vector<2x32x32xf32> to vector<2x32xf32>
    %cst_450 = arith.constant dense<0.000000e+00> : vector<2xf32>
    %511 = vector.multi_reduction <add>, %510, %cst_450 [1] : vector<2x32xf32> to vector<2xf32>
    %512 = vector.shape_cast %511 : vector<2xf32> to vector<2x1xf32>
    %c0_451 = arith.constant 0 : index
    %c0_452 = arith.constant 0 : index
    %513 = vector.load %arg25[%c0_451, %c0_452] : memref<2x1xf32, #tpu.memory_space<vmem>>, vector<2x1xf32>
    %514 = arith.addf %512, %513 : vector<2x1xf32>
    %cst_453 = arith.constant dense<0xFF800000> : vector<1xf32>
    %515 = vector.multi_reduction <maximumf>, %514, %cst_453 [0] : vector<2x1xf32> to vector<1xf32>
    %516 = vector.shape_cast %515 : vector<1xf32> to vector<1x1xf32>
    %517 = vector.broadcast %516 : vector<1x1xf32> to vector<2x1xf32>
    %518 = arith.subf %514, %517 : vector<2x1xf32>
    %519 = math.exp %518 : vector<2x1xf32>
    %cst_454 = arith.constant dense<0.000000e+00> : vector<1xf32>
    %520 = vector.multi_reduction <add>, %519, %cst_454 [0] : vector<2x1xf32> to vector<1xf32>
    %521 = vector.shape_cast %520 : vector<1xf32> to vector<1x1xf32>
    %522 = vector.broadcast %521 : vector<1x1xf32> to vector<2x1xf32>
    %523 = arith.divf %519, %522 : vector<2x1xf32>
    %c0_455 = arith.constant 0 : index
    %c0_456 = arith.constant 0 : index
    %c0_457 = arith.constant 0 : index
    %524 = vector.load %arg30[%c0_455, %c0_456, %c0_457] : memref<1x2x1xf32, #tpu.memory_space<vmem>>, vector<1x2x1xf32>
    %525 = vector.shape_cast %524 : vector<1x2x1xf32> to vector<2x1xf32>
    %526 = vector.shape_cast %523 : vector<2x1xf32> to vector<1x2x1xf32>
    tpu.vector_store %arg30[%c0_455, %c0_456, %c0_457], %526 {strides = array<i32>} : memref<1x2x1xf32, #tpu.memory_space<vmem>>, vector<1x2x1xf32>,
    return
  }
  func.func @transform_0(%arg0: i32) -> (i32, i32, i32) {
    %c0_i32 = arith.constant 0 : i32
    %c0_i32_0 = arith.constant 0 : i32
    %c0_i32_1 = arith.constant 0 : i32
    return %arg0, %c0_i32, %c0_i32_0 : i32, i32, i32
  }
  func.func @transform_1(%arg0: i32) -> (i32, i32) {
    %c0_i32 = arith.constant 0 : i32
    %c0_i32_0 = arith.constant 0 : i32
    %c0_i32_1 = arith.constant 0 : i32
    return %c0_i32, %c0_i32_0 : i32, i32
  }
  func.func @transform_2(%arg0: i32) -> (i32, i32) {
    %c0_i32 = arith.constant 0 : i32
    %c0_i32_0 = arith.constant 0 : i32
    %c0_i32_1 = arith.constant 0 : i32
    return %c0_i32, %c0_i32_0 : i32, i32
  }
  func.func @transform_3(%arg0: i32) -> (i32, i32) {
    %c0_i32 = arith.constant 0 : i32
    %c0_i32_0 = arith.constant 0 : i32
    %c0_i32_1 = arith.constant 0 : i32
    return %c0_i32, %c0_i32_0 : i32, i32
  }
  func.func @transform_4(%arg0: i32) -> (i32, i32) {
    %c0_i32 = arith.constant 0 : i32
    %c0_i32_0 = arith.constant 0 : i32
    %c0_i32_1 = arith.constant 0 : i32
    return %c0_i32, %c0_i32_0 : i32, i32
  }
  func.func @transform_5(%arg0: i32) -> (i32, i32) {
    %c0_i32 = arith.constant 0 : i32
    %c0_i32_0 = arith.constant 0 : i32
    %c0_i32_1 = arith.constant 0 : i32
    return %c0_i32, %c0_i32_0 : i32, i32
  }
  func.func @transform_6(%arg0: i32) -> (i32, i32) {
    %c0_i32 = arith.constant 0 : i32
    %c0_i32_0 = arith.constant 0 : i32
    %c0_i32_1 = arith.constant 0 : i32
    return %c0_i32, %c0_i32_0 : i32, i32
  }
  func.func @transform_7(%arg0: i32) -> (i32, i32) {
    %c0_i32 = arith.constant 0 : i32
    %c0_i32_0 = arith.constant 0 : i32
    %c0_i32_1 = arith.constant 0 : i32
    return %c0_i32, %c0_i32_0 : i32, i32
  }
  func.func @transform_8(%arg0: i32) -> (i32, i32) {
    %c0_i32 = arith.constant 0 : i32
    %c0_i32_0 = arith.constant 0 : i32
    %c0_i32_1 = arith.constant 0 : i32
    return %c0_i32, %c0_i32_0 : i32, i32
  }
  func.func @transform_9(%arg0: i32) -> (i32, i32) {
    %c0_i32 = arith.constant 0 : i32
    %c0_i32_0 = arith.constant 0 : i32
    %c0_i32_1 = arith.constant 0 : i32
    return %c0_i32, %c0_i32_0 : i32, i32
  }
  func.func @transform_10(%arg0: i32) -> (i32, i32) {
    %c0_i32 = arith.constant 0 : i32
    %c0_i32_0 = arith.constant 0 : i32
    %c0_i32_1 = arith.constant 0 : i32
    return %c0_i32, %c0_i32_0 : i32, i32
  }
  func.func @transform_11(%arg0: i32) -> (i32, i32) {
    %c0_i32 = arith.constant 0 : i32
    %c0_i32_0 = arith.constant 0 : i32
    %c0_i32_1 = arith.constant 0 : i32
    return %c0_i32, %c0_i32_0 : i32, i32
  }
  func.func @transform_12(%arg0: i32) -> (i32, i32) {
    %c0_i32 = arith.constant 0 : i32
    %c0_i32_0 = arith.constant 0 : i32
    %c0_i32_1 = arith.constant 0 : i32
    return %c0_i32, %c0_i32_0 : i32, i32
  }
  func.func @transform_13(%arg0: i32) -> (i32, i32) {
    %c0_i32 = arith.constant 0 : i32
    %c0_i32_0 = arith.constant 0 : i32
    %c0_i32_1 = arith.constant 0 : i32
    return %c0_i32, %c0_i32_0 : i32, i32
  }
  func.func @transform_14(%arg0: i32) -> (i32, i32) {
    %c0_i32 = arith.constant 0 : i32
    %c0_i32_0 = arith.constant 0 : i32
    %c0_i32_1 = arith.constant 0 : i32
    return %c0_i32, %c0_i32_0 : i32, i32
  }
  func.func @transform_15(%arg0: i32) -> (i32, i32) {
    %c0_i32 = arith.constant 0 : i32
    %c0_i32_0 = arith.constant 0 : i32
    %c0_i32_1 = arith.constant 0 : i32
    return %c0_i32, %c0_i32_0 : i32, i32
  }
  func.func @transform_16(%arg0: i32) -> (i32, i32) {
    %c0_i32 = arith.constant 0 : i32
    %c0_i32_0 = arith.constant 0 : i32
    %c0_i32_1 = arith.constant 0 : i32
    return %c0_i32, %c0_i32_0 : i32, i32
  }
  func.func @transform_17(%arg0: i32) -> (i32, i32) {
    %c0_i32 = arith.constant 0 : i32
    %c0_i32_0 = arith.constant 0 : i32
    %c0_i32_1 = arith.constant 0 : i32
    return %c0_i32, %c0_i32_0 : i32, i32
  }
  func.func @transform_18(%arg0: i32) -> (i32, i32) {
    %c0_i32 = arith.constant 0 : i32
    %c0_i32_0 = arith.constant 0 : i32
    %c0_i32_1 = arith.constant 0 : i32
    return %c0_i32, %c0_i32_0 : i32, i32
  }
  func.func @transform_19(%arg0: i32) -> (i32, i32) {
    %c0_i32 = arith.constant 0 : i32
    %c0_i32_0 = arith.constant 0 : i32
    %c0_i32_1 = arith.constant 0 : i32
    return %c0_i32, %c0_i32_0 : i32, i32
  }
  func.func @transform_20(%arg0: i32) -> (i32, i32) {
    %c0_i32 = arith.constant 0 : i32
    %c0_i32_0 = arith.constant 0 : i32
    %c0_i32_1 = arith.constant 0 : i32
    return %c0_i32, %c0_i32_0 : i32, i32
  }
  func.func @transform_21(%arg0: i32) -> (i32, i32) {
    %c0_i32 = arith.constant 0 : i32
    %c0_i32_0 = arith.constant 0 : i32
    %c0_i32_1 = arith.constant 0 : i32
    return %c0_i32, %c0_i32_0 : i32, i32
  }
  func.func @transform_22(%arg0: i32) -> (i32, i32) {
    %c0_i32 = arith.constant 0 : i32
    %c0_i32_0 = arith.constant 0 : i32
    %c0_i32_1 = arith.constant 0 : i32
    return %c0_i32, %c0_i32_0 : i32, i32
  }
  func.func @transform_23(%arg0: i32) -> (i32, i32, i32) {
    %c0_i32 = arith.constant 0 : i32
    %c0_i32_0 = arith.constant 0 : i32
    %c0_i32_1 = arith.constant 0 : i32
    %c0_i32_2 = arith.constant 0 : i32
    return %c0_i32, %c0_i32_0, %c0_i32_1 : i32, i32, i32
  }
  func.func @transform_24(%arg0: i32) -> (i32, i32) {
    %c0_i32 = arith.constant 0 : i32
    %c0_i32_0 = arith.constant 0 : i32
    %c0_i32_1 = arith.constant 0 : i32
    return %c0_i32, %c0_i32_0 : i32, i32
  }
  func.func @transform_25(%arg0: i32) -> (i32, i32) {
    %c0_i32 = arith.constant 0 : i32
    %c0_i32_0 = arith.constant 0 : i32
    %c0_i32_1 = arith.constant 0 : i32
    return %c0_i32, %c0_i32_0 : i32, i32
  }
  func.func @transform_26(%arg0: i32) -> (i32, i32) {
    %c0_i32 = arith.constant 0 : i32
    %c0_i32_0 = arith.constant 0 : i32
    %c0_i32_1 = arith.constant 0 : i32
    return %c0_i32, %c0_i32_0 : i32, i32
  }
  func.func @transform_27(%arg0: i32) -> (i32, i32) {
    %c0_i32 = arith.constant 0 : i32
    %c0_i32_0 = arith.constant 0 : i32
    %c0_i32_1 = arith.constant 0 : i32
    return %c0_i32, %c0_i32_0 : i32, i32
  }
  func.func @transform_28(%arg0: i32) -> (i32, i32, i32) {
    %c0_i32 = arith.constant 0 : i32
    %c0_i32_0 = arith.constant 0 : i32
    %c0_i32_1 = arith.constant 0 : i32
    return %arg0, %c0_i32, %c0_i32_0 : i32, i32, i32
  }
  func.func @transform_29(%arg0: i32) -> (i32, i32, i32) {
    %c0_i32 = arith.constant 0 : i32
    %c0_i32_0 = arith.constant 0 : i32
    %c0_i32_1 = arith.constant 0 : i32
    return %arg0, %c0_i32, %c0_i32_0 : i32, i32, i32
  }
  func.func @transform_30(%arg0: i32) -> (i32, i32, i32) {
    %c0_i32 = arith.constant 0 : i32
    %c0_i32_0 = arith.constant 0 : i32
    %c0_i32_1 = arith.constant 0 : i32
    return %arg0, %c0_i32, %c0_i32_0 : i32, i32, i32
  }
  func.func @transform_31(%arg0: i32) -> (i32, i32, i32) {
    %c0_i32 = arith.constant 0 : i32
    %c0_i32_0 = arith.constant 0 : i32
    %c0_i32_1 = arith.constant 0 : i32
    return %arg0, %c0_i32, %c0_i32_0 : i32, i32, i32
  }
  func.func @transform_32(%arg0: i32) -> (i32, i32, i32) {
    %c0_i32 = arith.constant 0 : i32
    %c0_i32_0 = arith.constant 0 : i32
    %c0_i32_1 = arith.constant 0 : i32
    return %arg0, %c0_i32, %c0_i32_0 : i32, i32, i32
  }
}

</mosaic_0001>

<llo_original>
// kernel: forward.1
$region0: #{forward.1}
  #allocation0 [shape = 'u32[]', space=smem, size = 0x4, offset = 0x4, fixed_abs, tag = 'smem constant byte address 0x4 - core index']
  #allocation1 [shape = 'u32[72,128]{1,0:T(1,128)}', space=vmem, size = 0x9000, scoped, tag = 'internal scratch']
  #allocation2 [shape = 'f32[1,1034]{1,0:T(1,128)}', space=vmem, size = 0x1200, scoped, tag = 'scratch operand']
  #allocation3 [shape = 'f32[10,1024]{1,0:T(8,128)}', space=vmem, size = 0x10000, scoped, tag = 'scratch operand']
  #allocation4 [shape = 'bf16[8,270]{1,0:T(8,128)(2,1)}', space=vmem, size = 0x1800, scoped, tag = 'scratch operand']
  #allocation5 [shape = 'bf16[120,256]{1,0:T(8,128)(2,1)}', space=vmem, size = 0xf000, scoped, tag = 'scratch operand']
  #allocation6 [shape = 'bf16[16,78]{1,0:T(8,128)(2,1)}', space=vmem, size = 0x1000, scoped, tag = 'scratch operand']
  #allocation7 [shape = 'bf16[240,64]{1,0:T(8,128)(2,1)}', space=vmem, size = 0xf000, scoped, tag = 'scratch operand']
  #allocation8 [shape = 'f32[5,1024]{1,0:T(8,128)}', space=vmem, size = 0x8000, scoped, tag = 'scratch operand']
  #allocation9 [shape = 'bf16[8,262]{1,0:T(8,128)(2,1)}', space=vmem, size = 0x1800, scoped, tag = 'scratch operand']
  #allocation10 [shape = 'bf16[56,256]{1,0:T(8,128)(2,1)}', space=vmem, size = 0x7000, scoped, tag = 'scratch operand']
  #allocation11 [shape = 'bf16[16,70]{1,0:T(8,128)(2,1)}', space=vmem, size = 0x1000, scoped, tag = 'scratch operand']
  #allocation12 [shape = 'bf16[112,64]{1,0:T(8,128)(2,1)}', space=vmem, size = 0x7000, scoped, tag = 'scratch operand']
  #allocation13 [shape = 'f32[3,1026]{1,0:T(4,128)}', space=vmem, size = 0x4800, scoped, tag = 'scratch operand']
  #allocation14 [shape = 'f32[9,1024]{1,0:T(8,128)}', space=vmem, size = 0x10000, scoped, tag = 'scratch operand']
  #allocation15 [shape = 'bf16[16,1030]{1,0:T(8,128)(2,1)}', space=vmem, size = 0x9000, scoped, tag = 'scratch operand']
  #allocation16 [shape = 'bf16[112,1024]{1,0:T(8,128)(2,1)}', space=vmem, size = 0x38000, scoped, tag = 'scratch operand']
  #allocation17 [shape = 'bf16[16,262]{1,0:T(8,128)(2,1)}', space=vmem, size = 0x3000, scoped, tag = 'scratch operand']
  #allocation18 [shape = 'bf16[112,256]{1,0:T(8,128)(2,1)}', space=vmem, size = 0xe000, scoped, tag = 'scratch operand']
  #allocation19 [shape = 'bf16[16,70]{1,0:T(8,128)(2,1)}', space=vmem, size = 0x1000, scoped, tag = 'scratch operand']
  #allocation20 [shape = 'bf16[112,64]{1,0:T(8,128)(2,1)}', space=vmem, size = 0x7000, scoped, tag = 'scratch operand']
  #allocation21 [shape = 'f32[1,1]{1,0:T(1,128)S(1)}', space=vmem, size = 0x200, scoped, tag = 'scoped memory for forward.1']
  %s0 = inlined_call_operand.smem [shape: u32[33], index: -1, kind: input, shape index: {}]
  %s1 = sld [smem:[%s0]]
  %s2 = scalar_lea.smem %s0, 1
  %s3 = sld [smem:[%s2]]
  %s4 = scalar_lea.smem %s0, 2
  %s5 = sld [smem:[%s4]]
  %s6 = scalar_lea.smem %s0, 3
  %s7 = sld [smem:[%s6]]
  %s8 = scalar_lea.smem %s0, 4
  %s9 = sld [smem:[%s8]]
  %s10 = scalar_lea.smem %s0, 5
  %s11 = sld [smem:[%s10]]
  %s12 = scalar_lea.smem %s0, 6
  %s13 = sld [smem:[%s12]]
  %s14 = scalar_lea.smem %s0, 7
  %s15 = sld [smem:[%s14]]
  %s16 = scalar_lea.smem %s0, 8
  %s17 = sld [smem:[%s16]]
  %s18 = scalar_lea.smem %s0, 9
  %s19 = sld [smem:[%s18]]
  %s20 = scalar_lea.smem %s0, 10
  %s21 = sld [smem:[%s20]]
  %s22 = scalar_lea.smem %s0, 11
  %s23 = sld [smem:[%s22]]
  %s24 = scalar_lea.smem %s0, 12
  %s25 = sld [smem:[%s24]]
  %s26 = scalar_lea.smem %s0, 13
  %s27 = sld [smem:[%s26]]
  %s28 = scalar_lea.smem %s0, 14
  %s29 = sld [smem:[%s28]]
  %s30 = scalar_lea.smem %s0, 15
  %s31 = sld [smem:[%s30]]
  %s32 = scalar_lea.smem %s0, 16
  %s33 = sld [smem:[%s32]]
  %s34 = scalar_lea.smem %s0, 17
  %s35 = sld [smem:[%s34]]
  %s36 = scalar_lea.smem %s0, 18
  %s37 = sld [smem:[%s36]]
  %s38 = scalar_lea.smem %s0, 19
  %s39 = sld [smem:[%s38]]
  %s40 = scalar_lea.smem %s0, 20
  %s41 = sld [smem:[%s40]]
  %s42 = scalar_lea.smem %s0, 21
  %s43 = sld [smem:[%s42]]
  %s44 = scalar_lea.smem %s0, 22
  %s45 = sld [smem:[%s44]]
  %s46 = scalar_lea.smem %s0, 23
  %s47 = sld [smem:[%s46]]
  %s48 = scalar_lea.smem %s0, 24
  %s49 = sld [smem:[%s48]]
  %s50 = scalar_lea.smem %s0, 25
  %s51 = sld [smem:[%s50]]
  %s52 = scalar_lea.smem %s0, 26
  %s53 = sld [smem:[%s52]]
  %s54 = scalar_lea.smem %s0, 27
  %s55 = sld [smem:[%s54]]
  %s56 = scalar_lea.smem %s0, 28
  %s57 = sld [smem:[%s56]]
  %s58 = scalar_lea.smem %s0, 29
  %s59 = sld [smem:[%s58]]
  %s60 = scalar_lea.smem %s0, 30
  %s61 = sld [smem:[%s60]]
  %s62 = scalar_lea.smem %s0, 31
  %s63 = sld [smem:[%s62]]
  %s64 = scalar_lea.smem %s0, 32
  %s65 = sld [smem:[%s64]]
  %66 = xla_tuple %s57, %s59, %s61, %s63, %s65
  %s67 = sld [smem:[#allocation0]]
  $region181: #{forward.1} parent=0
    _
  %s69 = ssub.s32 1, %s67
  %s70 = scalar_select 0, %s69, %s67
  %v71 = vstv %s17
  %72 = vst [vmem:[#allocation21] sm:$0x1] %v71
  $region1: #{forward.1} parent=0
    #allocation22 [shape = 'u8[524288]{0}', space=vmem, size = 0x80000, scoped, tag = 'input window, operand 25, single buffered']
    #allocation23 [shape = 's32[2]{0}', space=sflag, size = 0x8, scoped, tag = 'scoped memory for forward.1']
    %73 = vsyncpa [#allocation23], 0
    loop: start=0, step=1, limit=4
    $region2: #{forward.1} parent=1 // loop_pre_header
      _
    $region3: #{forward.1} parent=1 // loop_header
      %s75 = sphi 0, %s79
      %p76 = scmp.ge.s32.totalorder %s75, 4
      %s85 = sphi 0, %s87
      %s88 = sphi 0, %s85
      %s89 = sphi 0, %s88
      %s105 = sphi 0, %s89
      %s109 = sphi 0, %s109
      %s111 = sphi 0, %s109
      %s112 = sphi 0, %s111
      %s126 = sphi 0, %s112
      %s130 = sphi 0, %s130
      %s132 = sphi 0, %s130
      %s133 = sphi 0, %s132
      %s147 = sphi 0, %s133
      %s151 = sphi 0, %s151
      %s153 = sphi 0, %s151
      %s154 = sphi 0, %s153
      %s168 = sphi 0, %s154
      %s172 = sphi 0, %s172
      %s174 = sphi 0, %s172
      %s175 = sphi 0, %s174
      %s189 = sphi 0, %s175
      %s193 = sphi 0, %s193
      %s195 = sphi 0, %s193
      %s196 = sphi 0, %s195
      %s210 = sphi 0, %s196
      %s214 = sphi 0, %s214
      %s216 = sphi 0, %s214
      %s217 = sphi 0, %s216
      %s231 = sphi 0, %s217
      %s235 = sphi 0, %s235
      %s237 = sphi 0, %s235
      %s238 = sphi 0, %s237
      %s252 = sphi 0, %s238
      %s256 = sphi 0, %s256
      %s258 = sphi 0, %s256
      %s259 = sphi 0, %s258
      %s273 = sphi 0, %s259
      %s277 = sphi 0, %s277
      %s279 = sphi 0, %s277
      %s280 = sphi 0, %s279
      %s294 = sphi 0, %s280
      %s298 = sphi 0, %s298
      %s300 = sphi 0, %s298
      %s301 = sphi 0, %s300
      %s315 = sphi 0, %s301
      %s319 = sphi 0, %s319
      %s321 = sphi 0, %s319
      %s322 = sphi 0, %s321
      %s336 = sphi 0, %s322
      %s340 = sphi 0, %s340
      %s342 = sphi 0, %s340
      %s343 = sphi 0, %s342
      %s357 = sphi 0, %s343
      %s361 = sphi 0, %s361
      %s363 = sphi 0, %s361
      %s364 = sphi 0, %s363
      %s378 = sphi 0, %s364
      %s382 = sphi 0, %s382
      %s384 = sphi 0, %s382
      %s385 = sphi 0, %s384
      %s399 = sphi 0, %s385
      %s403 = sphi 0, %s403
      %s405 = sphi 0, %s403
      %s406 = sphi 0, %s405
      %s420 = sphi 0, %s406
      %s424 = sphi 0, %s424
      %s426 = sphi 0, %s424
      %s427 = sphi 0, %s426
      %s441 = sphi 0, %s427
      %s445 = sphi 0, %s445
      %s447 = sphi 0, %s445
      %s448 = sphi 0, %s447
      %s462 = sphi 0, %s448
      %s466 = sphi 0, %s466
      %s468 = sphi 0, %s466
      %s469 = sphi 0, %s468
      %s483 = sphi 0, %s469
      %s487 = sphi 0, %s487
      %s489 = sphi 0, %s487
      %s490 = sphi 0, %s489
      %s504 = sphi 0, %s490
      %s508 = sphi 0, %s508
      %s510 = sphi 0, %s508
      %s511 = sphi 0, %s510
      %s525 = sphi 0, %s511
      %s529 = sphi 0, %s529
      %s531 = sphi 0, %s529
      %s532 = sphi 0, %s531
      %s546 = sphi 0, %s532
      %s550 = sphi 0, %s550
      %s552 = sphi 0, %s550
      %s553 = sphi 0, %s552
      %s567 = sphi 0, %s553
      %s571 = sphi 0, %s571
      %s573 = sphi 0, %s571
      %s574 = sphi 0, %s573
      %s588 = sphi 0, %s574
      %s592 = sphi 0, %s592
      %s594 = sphi 0, %s592
      %s595 = sphi 0, %s594
      %s609 = sphi 0, %s595
      %s613 = sphi 0, %s613
      %s615 = sphi 0, %s613
      %s616 = sphi 0, %s615
      %s630 = sphi 0, %s616
      %s634 = sphi 0, %s634
      %s636 = sphi 0, %s634
      %s637 = sphi 0, %s636
      %s651 = sphi 0, %s637
      %s655 = sphi 0, %s655
      %s657 = sphi 0, %s655
      %s658 = sphi 0, %s657
      %s672 = sphi 0, %s658
      %s678 = sphi 0, %s680
      %s681 = sphi 0, %s678
      %s682 = sphi 0, %s681
      %s698 = sphi 0, %s682
      %s704 = sphi 0, %s706
      %s707 = sphi 0, %s704
      %s708 = sphi 0, %s707
      %s724 = sphi 0, %s708
      %s730 = sphi 0, %s732
      %s733 = sphi 0, %s730
      %s734 = sphi 0, %s733
      %s750 = sphi 0, %s734
      %s756 = sphi 0, %s758
      %s759 = sphi 0, %s756
      %s760 = sphi 0, %s759
      %s776 = sphi 0, %s760
      %s782 = sphi 0, %s784
      %s785 = sphi 0, %s782
      %s786 = sphi 0, %s785
      %s802 = sphi 0, %s786
    $region4: #{forward.1} parent=1 // loop_header_branch
      %78 = sbr.rel (%p76) target = $region8
    $region5: #{forward.1} parent=1 // loop_body
      %s80 = ssub.s32 %s75, 1
      %s81 = ssub.s32 %s75, 2
      %s82 = sadd.s32 %s75, 1
      %s83 = ssub.s32 %s75, %s82
      %p84 = scmp.eq.s32.totalorder %s83, 0
      %s86 = sadd.s32 %s85, 1
      %s87 = scalar_select %p84, %s85, %s86
      %p90 = pneg %p84
      %p91 = scmp.eq.s32.totalorder %s75, 1
      %p92 = por %p90, %p91
      %p93 = scmp.ne.s32.totalorder %s85, %s88
      %p94 = scmp.eq.s32.totalorder %s75, 0
      %p95 = por %p93, %p94
      %p96 = scmp.ne.s32.totalorder %s85, %s88
      %p97 = scmp.eq.s32.totalorder %s80, 1
      %p98 = por %p96, %p97
      %p99 = scmp.ne.s32.totalorder %s88, %s89
      %p100 = scmp.eq.s32.totalorder %s80, 0
      %p101 = por %p99, %p100
      %p102 = scmp.ne.s32.totalorder %s88, %s89
      %p103 = scmp.eq.s32.totalorder %s81, 1
      %p104 = por %p102, %p103
      %p106 = scmp.ne.s32.totalorder %s89, %s105
      %p107 = scmp.eq.s32.totalorder %s81, 0
      %p108 = por %p106, %p107
      %s110 = sadd.s32 %s109, 1
      %p113 = scmp.eq.s32.totalorder %s75, 1
      %p114 = scmp.ne.s32.totalorder %s109, %s111
      %p115 = scmp.eq.s32.totalorder %s75, 0
      %p116 = por %p114, %p115
      %p117 = scmp.ne.s32.totalorder %s109, %s111
      %p118 = scmp.eq.s32.totalorder %s80, 1
      %p119 = por %p117, %p118
      %p120 = scmp.ne.s32.totalorder %s111, %s112
      %p121 = scmp.eq.s32.totalorder %s80, 0
      %p122 = por %p120, %p121
      %p123 = scmp.ne.s32.totalorder %s111, %s112
      %p124 = scmp.eq.s32.totalorder %s81, 1
      %p125 = por %p123, %p124
      %p127 = scmp.ne.s32.totalorder %s112, %s126
      %p128 = scmp.eq.s32.totalorder %s81, 0
      %p129 = por %p127, %p128
      %s131 = sadd.s32 %s130, 1
      %p134 = scmp.eq.s32.totalorder %s75, 1
      %p135 = scmp.ne.s32.totalorder %s130, %s132
      %p136 = scmp.eq.s32.totalorder %s75, 0
      %p137 = por %p135, %p136
      %p138 = scmp.ne.s32.totalorder %s130, %s132
      %p139 = scmp.eq.s32.totalorder %s80, 1
      %p140 = por %p138, %p139
      %p141 = scmp.ne.s32.totalorder %s132, %s133
      %p142 = scmp.eq.s32.totalorder %s80, 0
      %p143 = por %p141, %p142
      %p144 = scmp.ne.s32.totalorder %s132, %s133
      %p145 = scmp.eq.s32.totalorder %s81, 1
      %p146 = por %p144, %p145
      %p148 = scmp.ne.s32.totalorder %s133, %s147
      %p149 = scmp.eq.s32.totalorder %s81, 0
      %p150 = por %p148, %p149
      %s152 = sadd.s32 %s151, 1
      %p155 = scmp.eq.s32.totalorder %s75, 1
      %p156 = scmp.ne.s32.totalorder %s151, %s153
      %p157 = scmp.eq.s32.totalorder %s75, 0
      %p158 = por %p156, %p157
      %p159 = scmp.ne.s32.totalorder %s151, %s153
      %p160 = scmp.eq.s32.totalorder %s80, 1
      %p161 = por %p159, %p160
      %p162 = scmp.ne.s32.totalorder %s153, %s154
      %p163 = scmp.eq.s32.totalorder %s80, 0
      %p164 = por %p162, %p163
      %p165 = scmp.ne.s32.totalorder %s153, %s154
      %p166 = scmp.eq.s32.totalorder %s81, 1
      %p167 = por %p165, %p166
      %p169 = scmp.ne.s32.totalorder %s154, %s168
      %p170 = scmp.eq.s32.totalorder %s81, 0
      %p171 = por %p169, %p170
      %s173 = sadd.s32 %s172, 1
      %p176 = scmp.eq.s32.totalorder %s75, 1
      %p177 = scmp.ne.s32.totalorder %s172, %s174
      %p178 = scmp.eq.s32.totalorder %s75, 0
      %p179 = por %p177, %p178
      %p180 = scmp.ne.s32.totalorder %s172, %s174
      %p181 = scmp.eq.s32.totalorder %s80, 1
      %p182 = por %p180, %p181
      %p183 = scmp.ne.s32.totalorder %s174, %s175
      %p184 = scmp.eq.s32.totalorder %s80, 0
      %p185 = por %p183, %p184
      %p186 = scmp.ne.s32.totalorder %s174, %s175
      %p187 = scmp.eq.s32.totalorder %s81, 1
      %p188 = por %p186, %p187
      %p190 = scmp.ne.s32.totalorder %s175, %s189
      %p191 = scmp.eq.s32.totalorder %s81, 0
      %p192 = por %p190, %p191
      %s194 = sadd.s32 %s193, 1
      %p197 = scmp.eq.s32.totalorder %s75, 1
      %p198 = scmp.ne.s32.totalorder %s193, %s195
      %p199 = scmp.eq.s32.totalorder %s75, 0
      %p200 = por %p198, %p199
      %p201 = scmp.ne.s32.totalorder %s193, %s195
      %p202 = scmp.eq.s32.totalorder %s80, 1
      %p203 = por %p201, %p202
      %p204 = scmp.ne.s32.totalorder %s195, %s196
      %p205 = scmp.eq.s32.totalorder %s80, 0
      %p206 = por %p204, %p205
      %p207 = scmp.ne.s32.totalorder %s195, %s196
      %p208 = scmp.eq.s32.totalorder %s81, 1
      %p209 = por %p207, %p208
      %p211 = scmp.ne.s32.totalorder %s196, %s210
      %p212 = scmp.eq.s32.totalorder %s81, 0
      %p213 = por %p211, %p212
      %s215 = sadd.s32 %s214, 1
      %p218 = scmp.eq.s32.totalorder %s75, 1
      %p219 = scmp.ne.s32.totalorder %s214, %s216
      %p220 = scmp.eq.s32.totalorder %s75, 0
      %p221 = por %p219, %p220
      %p222 = scmp.ne.s32.totalorder %s214, %s216
      %p223 = scmp.eq.s32.totalorder %s80, 1
      %p224 = por %p222, %p223
      %p225 = scmp.ne.s32.totalorder %s216, %s217
      %p226 = scmp.eq.s32.totalorder %s80, 0
      %p227 = por %p225, %p226
      %p228 = scmp.ne.s32.totalorder %s216, %s217
      %p229 = scmp.eq.s32.totalorder %s81, 1
      %p230 = por %p228, %p229
      %p232 = scmp.ne.s32.totalorder %s217, %s231
      %p233 = scmp.eq.s32.totalorder %s81, 0
      %p234 = por %p232, %p233
      %s236 = sadd.s32 %s235, 1
      %p239 = scmp.eq.s32.totalorder %s75, 1
      %p240 = scmp.ne.s32.totalorder %s235, %s237
      %p241 = scmp.eq.s32.totalorder %s75, 0
      %p242 = por %p240, %p241
      %p243 = scmp.ne.s32.totalorder %s235, %s237
      %p244 = scmp.eq.s32.totalorder %s80, 1
      %p245 = por %p243, %p244
      %p246 = scmp.ne.s32.totalorder %s237, %s238
      %p247 = scmp.eq.s32.totalorder %s80, 0
      %p248 = por %p246, %p247
      %p249 = scmp.ne.s32.totalorder %s237, %s238
      %p250 = scmp.eq.s32.totalorder %s81, 1
      %p251 = por %p249, %p250
      %p253 = scmp.ne.s32.totalorder %s238, %s252
      %p254 = scmp.eq.s32.totalorder %s81, 0
      %p255 = por %p253, %p254
      %s257 = sadd.s32 %s256, 1
      %p260 = scmp.eq.s32.totalorder %s75, 1
      %p261 = scmp.ne.s32.totalorder %s256, %s258
      %p262 = scmp.eq.s32.totalorder %s75, 0
      %p263 = por %p261, %p262
      %p264 = scmp.ne.s32.totalorder %s256, %s258
      %p265 = scmp.eq.s32.totalorder %s80, 1
      %p266 = por %p264, %p265
      %p267 = scmp.ne.s32.totalorder %s258, %s259
      %p268 = scmp.eq.s32.totalorder %s80, 0
      %p269 = por %p267, %p268
      %p270 = scmp.ne.s32.totalorder %s258, %s259
      %p271 = scmp.eq.s32.totalorder %s81, 1
      %p272 = por %p270, %p271
      %p274 = scmp.ne.s32.totalorder %s259, %s273
      %p275 = scmp.eq.s32.totalorder %s81, 0
      %p276 = por %p274, %p275
      %s278 = sadd.s32 %s277, 1
      %p281 = scmp.eq.s32.totalorder %s75, 1
      %p282 = scmp.ne.s32.totalorder %s277, %s279
      %p283 = scmp.eq.s32.totalorder %s75, 0
      %p284 = por %p282, %p283
      %p285 = scmp.ne.s32.totalorder %s277, %s279
      %p286 = scmp.eq.s32.totalorder %s80, 1
      %p287 = por %p285, %p286
      %p288 = scmp.ne.s32.totalorder %s279, %s280
      %p289 = scmp.eq.s32.totalorder %s80, 0
      %p290 = por %p288, %p289
      %p291 = scmp.ne.s32.totalorder %s279, %s280
      %p292 = scmp.eq.s32.totalorder %s81, 1
      %p293 = por %p291, %p292
      %p295 = scmp.ne.s32.totalorder %s280, %s294
      %p296 = scmp.eq.s32.totalorder %s81, 0
      %p297 = por %p295, %p296
      %s299 = sadd.s32 %s298, 1
      %p302 = scmp.eq.s32.totalorder %s75, 1
      %p303 = scmp.ne.s32.totalorder %s298, %s300
      %p304 = scmp.eq.s32.totalorder %s75, 0
      %p305 = por %p303, %p304
      %p306 = scmp.ne.s32.totalorder %s298, %s300
      %p307 = scmp.eq.s32.totalorder %s80, 1
      %p308 = por %p306, %p307
      %p309 = scmp.ne.s32.totalorder %s300, %s301
      %p310 = scmp.eq.s32.totalorder %s80, 0
      %p311 = por %p309, %p310
      %p312 = scmp.ne.s32.totalorder %s300, %s301
      %p313 = scmp.eq.s32.totalorder %s81, 1
      %p314 = por %p312, %p313
      %p316 = scmp.ne.s32.totalorder %s301, %s315
      %p317 = scmp.eq.s32.totalorder %s81, 0
      %p318 = por %p316, %p317
      %s320 = sadd.s32 %s319, 1
      %p323 = scmp.eq.s32.totalorder %s75, 1
      %p324 = scmp.ne.s32.totalorder %s319, %s321
      %p325 = scmp.eq.s32.totalorder %s75, 0
      %p326 = por %p324, %p325
      %p327 = scmp.ne.s32.totalorder %s319, %s321
      %p328 = scmp.eq.s32.totalorder %s80, 1
      %p329 = por %p327, %p328
      %p330 = scmp.ne.s32.totalorder %s321, %s322
      %p331 = scmp.eq.s32.totalorder %s80, 0
      %p332 = por %p330, %p331
      %p333 = scmp.ne.s32.totalorder %s321, %s322
      %p334 = scmp.eq.s32.totalorder %s81, 1
      %p335 = por %p333, %p334
      %p337 = scmp.ne.s32.totalorder %s322, %s336
      %p338 = scmp.eq.s32.totalorder %s81, 0
      %p339 = por %p337, %p338
      %s341 = sadd.s32 %s340, 1
      %p344 = scmp.eq.s32.totalorder %s75, 1
      %p345 = scmp.ne.s32.totalorder %s340, %s342
      %p346 = scmp.eq.s32.totalorder %s75, 0
      %p347 = por %p345, %p346
      %p348 = scmp.ne.s32.totalorder %s340, %s342
      %p349 = scmp.eq.s32.totalorder %s80, 1
      %p350 = por %p348, %p349
      %p351 = scmp.ne.s32.totalorder %s342, %s343
      %p352 = scmp.eq.s32.totalorder %s80, 0
      %p353 = por %p351, %p352
      %p354 = scmp.ne.s32.totalorder %s342, %s343
      %p355 = scmp.eq.s32.totalorder %s81, 1
      %p356 = por %p354, %p355
      %p358 = scmp.ne.s32.totalorder %s343, %s357
      %p359 = scmp.eq.s32.totalorder %s81, 0
      %p360 = por %p358, %p359
      %s362 = sadd.s32 %s361, 1
      %p365 = scmp.eq.s32.totalorder %s75, 1
      %p366 = scmp.ne.s32.totalorder %s361, %s363
      %p367 = scmp.eq.s32.totalorder %s75, 0
      %p368 = por %p366, %p367
      %p369 = scmp.ne.s32.totalorder %s361, %s363
      %p370 = scmp.eq.s32.totalorder %s80, 1
      %p371 = por %p369, %p370
      %p372 = scmp.ne.s32.totalorder %s363, %s364
      %p373 = scmp.eq.s32.totalorder %s80, 0
      %p374 = por %p372, %p373
      %p375 = scmp.ne.s32.totalorder %s363, %s364
      %p376 = scmp.eq.s32.totalorder %s81, 1
      %p377 = por %p375, %p376
      %p379 = scmp.ne.s32.totalorder %s364, %s378
      %p380 = scmp.eq.s32.totalorder %s81, 0
      %p381 = por %p379, %p380
      %s383 = sadd.s32 %s382, 1
      %p386 = scmp.eq.s32.totalorder %s75, 1
      %p387 = scmp.ne.s32.totalorder %s382, %s384
      %p388 = scmp.eq.s32.totalorder %s75, 0
      %p389 = por %p387, %p388
      %p390 = scmp.ne.s32.totalorder %s382, %s384
      %p391 = scmp.eq.s32.totalorder %s80, 1
      %p392 = por %p390, %p391
      %p393 = scmp.ne.s32.totalorder %s384, %s385
      %p394 = scmp.eq.s32.totalorder %s80, 0
      %p395 = por %p393, %p394
      %p396 = scmp.ne.s32.totalorder %s384, %s385
      %p397 = scmp.eq.s32.totalorder %s81, 1
      %p398 = por %p396, %p397
      %p400 = scmp.ne.s32.totalorder %s385, %s399
      %p401 = scmp.eq.s32.totalorder %s81, 0
      %p402 = por %p400, %p401
      %s404 = sadd.s32 %s403, 1
      %p407 = scmp.eq.s32.totalorder %s75, 1
      %p408 = scmp.ne.s32.totalorder %s403, %s405
      %p409 = scmp.eq.s32.totalorder %s75, 0
      %p410 = por %p408, %p409
      %p411 = scmp.ne.s32.totalorder %s403, %s405
      %p412 = scmp.eq.s32.totalorder %s80, 1
      %p413 = por %p411, %p412
      %p414 = scmp.ne.s32.totalorder %s405, %s406
      %p415 = scmp.eq.s32.totalorder %s80, 0
      %p416 = por %p414, %p415
      %p417 = scmp.ne.s32.totalorder %s405, %s406
      %p418 = scmp.eq.s32.totalorder %s81, 1
      %p419 = por %p417, %p418
      %p421 = scmp.ne.s32.totalorder %s406, %s420
      %p422 = scmp.eq.s32.totalorder %s81, 0
      %p423 = por %p421, %p422
      %s425 = sadd.s32 %s424, 1
      %p428 = scmp.eq.s32.totalorder %s75, 1
      %p429 = scmp.ne.s32.totalorder %s424, %s426
      %p430 = scmp.eq.s32.totalorder %s75, 0
      %p431 = por %p429, %p430
      %p432 = scmp.ne.s32.totalorder %s424, %s426
      %p433 = scmp.eq.s32.totalorder %s80, 1
      %p434 = por %p432, %p433
      %p435 = scmp.ne.s32.totalorder %s426, %s427
      %p436 = scmp.eq.s32.totalorder %s80, 0
      %p437 = por %p435, %p436
      %p438 = scmp.ne.s32.totalorder %s426, %s427
      %p439 = scmp.eq.s32.totalorder %s81, 1
      %p440 = por %p438, %p439
      %p442 = scmp.ne.s32.totalorder %s427, %s441
      %p443 = scmp.eq.s32.totalorder %s81, 0
      %p444 = por %p442, %p443
      %s446 = sadd.s32 %s445, 1
      %p449 = scmp.eq.s32.totalorder %s75, 1
      %p450 = scmp.ne.s32.totalorder %s445, %s447
      %p451 = scmp.eq.s32.totalorder %s75, 0
      %p452 = por %p450, %p451
      %p453 = scmp.ne.s32.totalorder %s445, %s447
      %p454 = scmp.eq.s32.totalorder %s80, 1
      %p455 = por %p453, %p454
      %p456 = scmp.ne.s32.totalorder %s447, %s448
      %p457 = scmp.eq.s32.totalorder %s80, 0
      %p458 = por %p456, %p457
      %p459 = scmp.ne.s32.totalorder %s447, %s448
      %p460 = scmp.eq.s32.totalorder %s81, 1
      %p461 = por %p459, %p460
      %p463 = scmp.ne.s32.totalorder %s448, %s462
      %p464 = scmp.eq.s32.totalorder %s81, 0
      %p465 = por %p463, %p464
      %s467 = sadd.s32 %s466, 1
      %p470 = scmp.eq.s32.totalorder %s75, 1
      %p471 = scmp.ne.s32.totalorder %s466, %s468
      %p472 = scmp.eq.s32.totalorder %s75, 0
      %p473 = por %p471, %p472
      %p474 = scmp.ne.s32.totalorder %s466, %s468
      %p475 = scmp.eq.s32.totalorder %s80, 1
      %p476 = por %p474, %p475
      %p477 = scmp.ne.s32.totalorder %s468, %s469
      %p478 = scmp.eq.s32.totalorder %s80, 0
      %p479 = por %p477, %p478
      %p480 = scmp.ne.s32.totalorder %s468, %s469
      %p481 = scmp.eq.s32.totalorder %s81, 1
      %p482 = por %p480, %p481
      %p484 = scmp.ne.s32.totalorder %s469, %s483
      %p485 = scmp.eq.s32.totalorder %s81, 0
      %p486 = por %p484, %p485
      %s488 = sadd.s32 %s487, 1
      %p491 = scmp.eq.s32.totalorder %s75, 1
      %p492 = scmp.ne.s32.totalorder %s487, %s489
      %p493 = scmp.eq.s32.totalorder %s75, 0
      %p494 = por %p492, %p493
      %p495 = scmp.ne.s32.totalorder %s487, %s489
      %p496 = scmp.eq.s32.totalorder %s80, 1
      %p497 = por %p495, %p496
      %p498 = scmp.ne.s32.totalorder %s489, %s490
      %p499 = scmp.eq.s32.totalorder %s80, 0
      %p500 = por %p498, %p499
      %p501 = scmp.ne.s32.totalorder %s489, %s490
      %p502 = scmp.eq.s32.totalorder %s81, 1
      %p503 = por %p501, %p502
      %p505 = scmp.ne.s32.totalorder %s490, %s504
      %p506 = scmp.eq.s32.totalorder %s81, 0
      %p507 = por %p505, %p506
      %s509 = sadd.s32 %s508, 1
      %p512 = scmp.eq.s32.totalorder %s75, 1
      %p513 = scmp.ne.s32.totalorder %s508, %s510
      %p514 = scmp.eq.s32.totalorder %s75, 0
      %p515 = por %p513, %p514
      %p516 = scmp.ne.s32.totalorder %s508, %s510
      %p517 = scmp.eq.s32.totalorder %s80, 1
      %p518 = por %p516, %p517
      %p519 = scmp.ne.s32.totalorder %s510, %s511
      %p520 = scmp.eq.s32.totalorder %s80, 0
      %p521 = por %p519, %p520
      %p522 = scmp.ne.s32.totalorder %s510, %s511
      %p523 = scmp.eq.s32.totalorder %s81, 1
      %p524 = por %p522, %p523
      %p526 = scmp.ne.s32.totalorder %s511, %s525
      %p527 = scmp.eq.s32.totalorder %s81, 0
      %p528 = por %p526, %p527
      %s530 = sadd.s32 %s529, 1
      %p533 = scmp.eq.s32.totalorder %s75, 1
      %p534 = scmp.ne.s32.totalorder %s529, %s531
      %p535 = scmp.eq.s32.totalorder %s75, 0
      %p536 = por %p534, %p535
      %p537 = scmp.ne.s32.totalorder %s529, %s531
      %p538 = scmp.eq.s32.totalorder %s80, 1
      %p539 = por %p537, %p538
      %p540 = scmp.ne.s32.totalorder %s531, %s532
      %p541 = scmp.eq.s32.totalorder %s80, 0
      %p542 = por %p540, %p541
      %p543 = scmp.ne.s32.totalorder %s531, %s532
      %p544 = scmp.eq.s32.totalorder %s81, 1
      %p545 = por %p543, %p544
      %p547 = scmp.ne.s32.totalorder %s532, %s546
      %p548 = scmp.eq.s32.totalorder %s81, 0
      %p549 = por %p547, %p548
      %s551 = sadd.s32 %s550, 1
      %p554 = scmp.eq.s32.totalorder %s75, 1
      %p555 = scmp.ne.s32.totalorder %s550, %s552
      %p556 = scmp.eq.s32.totalorder %s75, 0
      %p557 = por %p555, %p556
      %p558 = scmp.ne.s32.totalorder %s550, %s552
      %p559 = scmp.eq.s32.totalorder %s80, 1
      %p560 = por %p558, %p559
      %p561 = scmp.ne.s32.totalorder %s552, %s553
      %p562 = scmp.eq.s32.totalorder %s80, 0
      %p563 = por %p561, %p562
      %p564 = scmp.ne.s32.totalorder %s552, %s553
      %p565 = scmp.eq.s32.totalorder %s81, 1
      %p566 = por %p564, %p565
      %p568 = scmp.ne.s32.totalorder %s553, %s567
      %p569 = scmp.eq.s32.totalorder %s81, 0
      %p570 = por %p568, %p569
      %s572 = sadd.s32 %s571, 1
      %p575 = scmp.eq.s32.totalorder %s75, 1
      %p576 = scmp.ne.s32.totalorder %s571, %s573
      %p577 = scmp.eq.s32.totalorder %s75, 0
      %p578 = por %p576, %p577
      %p579 = scmp.ne.s32.totalorder %s571, %s573
      %p580 = scmp.eq.s32.totalorder %s80, 1
      %p581 = por %p579, %p580
      %p582 = scmp.ne.s32.totalorder %s573, %s574
      %p583 = scmp.eq.s32.totalorder %s80, 0
      %p584 = por %p582, %p583
      %p585 = scmp.ne.s32.totalorder %s573, %s574
      %p586 = scmp.eq.s32.totalorder %s81, 1
      %p587 = por %p585, %p586
      %p589 = scmp.ne.s32.totalorder %s574, %s588
      %p590 = scmp.eq.s32.totalorder %s81, 0
      %p591 = por %p589, %p590
      %s593 = sadd.s32 %s592, 1
      %p596 = scmp.eq.s32.totalorder %s75, 1
      %p597 = scmp.ne.s32.totalorder %s592, %s594
      %p598 = scmp.eq.s32.totalorder %s75, 0
      %p599 = por %p597, %p598
      %p600 = scmp.ne.s32.totalorder %s592, %s594
      %p601 = scmp.eq.s32.totalorder %s80, 1
      %p602 = por %p600, %p601
      %p603 = scmp.ne.s32.totalorder %s594, %s595
      %p604 = scmp.eq.s32.totalorder %s80, 0
      %p605 = por %p603, %p604
      %p606 = scmp.ne.s32.totalorder %s594, %s595
      %p607 = scmp.eq.s32.totalorder %s81, 1
      %p608 = por %p606, %p607
      %p610 = scmp.ne.s32.totalorder %s595, %s609
      %p611 = scmp.eq.s32.totalorder %s81, 0
      %p612 = por %p610, %p611
      %s614 = sadd.s32 %s613, 1
      %p617 = scmp.eq.s32.totalorder %s75, 1
      %p618 = scmp.ne.s32.totalorder %s613, %s615
      %p619 = scmp.eq.s32.totalorder %s75, 0
      %p620 = por %p618, %p619
      %p621 = scmp.ne.s32.totalorder %s613, %s615
      %p622 = scmp.eq.s32.totalorder %s80, 1
      %p623 = por %p621, %p622
      %p624 = scmp.ne.s32.totalorder %s615, %s616
      %p625 = scmp.eq.s32.totalorder %s80, 0
      %p626 = por %p624, %p625
      %p627 = scmp.ne.s32.totalorder %s615, %s616
      %p628 = scmp.eq.s32.totalorder %s81, 1
      %p629 = por %p627, %p628
      %p631 = scmp.ne.s32.totalorder %s616, %s630
      %p632 = scmp.eq.s32.totalorder %s81, 0
      %p633 = por %p631, %p632
      %s635 = sadd.s32 %s634, 1
      %p638 = scmp.eq.s32.totalorder %s75, 1
      %p639 = scmp.ne.s32.totalorder %s634, %s636
      %p640 = scmp.eq.s32.totalorder %s75, 0
      %p641 = por %p639, %p640
      %p642 = scmp.ne.s32.totalorder %s634, %s636
      %p643 = scmp.eq.s32.totalorder %s80, 1
      %p644 = por %p642, %p643
      %p645 = scmp.ne.s32.totalorder %s636, %s637
      %p646 = scmp.eq.s32.totalorder %s80, 0
      %p647 = por %p645, %p646
      %p648 = scmp.ne.s32.totalorder %s636, %s637
      %p649 = scmp.eq.s32.totalorder %s81, 1
      %p650 = por %p648, %p649
      %p652 = scmp.ne.s32.totalorder %s637, %s651
      %p653 = scmp.eq.s32.totalorder %s81, 0
      %p654 = por %p652, %p653
      %s656 = sadd.s32 %s655, 1
      %p659 = scmp.eq.s32.totalorder %s75, 1
      %p660 = scmp.ne.s32.totalorder %s655, %s657
      %p661 = scmp.eq.s32.totalorder %s75, 0
      %p662 = por %p660, %p661
      %p663 = scmp.ne.s32.totalorder %s655, %s657
      %p664 = scmp.eq.s32.totalorder %s80, 1
      %p665 = por %p663, %p664
      %p666 = scmp.ne.s32.totalorder %s657, %s658
      %p667 = scmp.eq.s32.totalorder %s80, 0
      %p668 = por %p666, %p667
      %p669 = scmp.ne.s32.totalorder %s657, %s658
      %p670 = scmp.eq.s32.totalorder %s81, 1
      %p671 = por %p669, %p670
      %p673 = scmp.ne.s32.totalorder %s658, %s672
      %p674 = scmp.eq.s32.totalorder %s81, 0
      %p675 = por %p673, %p674
      %s676 = ssub.s32 %s75, %s82
      %p677 = scmp.eq.s32.totalorder %s676, 0
      %s679 = sadd.s32 %s678, 1
      %s680 = scalar_select %p677, %s678, %s679
      %p683 = pneg %p677
      %p684 = scmp.eq.s32.totalorder %s75, 1
      %p685 = por %p683, %p684
      %p686 = scmp.ne.s32.totalorder %s678, %s681
      %p687 = scmp.eq.s32.totalorder %s75, 0
      %p688 = por %p686, %p687
      %p689 = scmp.ne.s32.totalorder %s678, %s681
      %p690 = scmp.eq.s32.totalorder %s80, 1
      %p691 = por %p689, %p690
      %p692 = scmp.ne.s32.totalorder %s681, %s682
      %p693 = scmp.eq.s32.totalorder %s80, 0
      %p694 = por %p692, %p693
      %p695 = scmp.ne.s32.totalorder %s681, %s682
      %p696 = scmp.eq.s32.totalorder %s81, 1
      %p697 = por %p695, %p696
      %p699 = scmp.ne.s32.totalorder %s682, %s698
      %p700 = scmp.eq.s32.totalorder %s81, 0
      %p701 = por %p699, %p700
      %s702 = ssub.s32 %s75, %s82
      %p703 = scmp.eq.s32.totalorder %s702, 0
      %s705 = sadd.s32 %s704, 1
      %s706 = scalar_select %p703, %s704, %s705
      %p709 = pneg %p703
      %p710 = scmp.eq.s32.totalorder %s75, 1
      %p711 = por %p709, %p710
      %p712 = scmp.ne.s32.totalorder %s704, %s707
      %p713 = scmp.eq.s32.totalorder %s75, 0
      %p714 = por %p712, %p713
      %p715 = scmp.ne.s32.totalorder %s704, %s707
      %p716 = scmp.eq.s32.totalorder %s80, 1
      %p717 = por %p715, %p716
      %p718 = scmp.ne.s32.totalorder %s707, %s708
      %p719 = scmp.eq.s32.totalorder %s80, 0
      %p720 = por %p718, %p719
      %p721 = scmp.ne.s32.totalorder %s707, %s708
      %p722 = scmp.eq.s32.totalorder %s81, 1
      %p723 = por %p721, %p722
      %p725 = scmp.ne.s32.totalorder %s708, %s724
      %p726 = scmp.eq.s32.totalorder %s81, 0
      %p727 = por %p725, %p726
      %s728 = ssub.s32 %s75, %s82
      %p729 = scmp.eq.s32.totalorder %s728, 0
      %s731 = sadd.s32 %s730, 1
      %s732 = scalar_select %p729, %s730, %s731
      %p735 = pneg %p729
      %p736 = scmp.eq.s32.totalorder %s75, 1
      %p737 = por %p735, %p736
      %p738 = scmp.ne.s32.totalorder %s730, %s733
      %p739 = scmp.eq.s32.totalorder %s75, 0
      %p740 = por %p738, %p739
      %p741 = scmp.ne.s32.totalorder %s730, %s733
      %p742 = scmp.eq.s32.totalorder %s80, 1
      %p743 = por %p741, %p742
      %p744 = scmp.ne.s32.totalorder %s733, %s734
      %p745 = scmp.eq.s32.totalorder %s80, 0
      %p746 = por %p744, %p745
      %p747 = scmp.ne.s32.totalorder %s733, %s734
      %p748 = scmp.eq.s32.totalorder %s81, 1
      %p749 = por %p747, %p748
      %p751 = scmp.ne.s32.totalorder %s734, %s750
      %p752 = scmp.eq.s32.totalorder %s81, 0
      %p753 = por %p751, %p752
      %s754 = ssub.s32 %s75, %s82
      %p755 = scmp.eq.s32.totalorder %s754, 0
      %s757 = sadd.s32 %s756, 1
      %s758 = scalar_select %p755, %s756, %s757
      %p761 = pneg %p755
      %p762 = scmp.eq.s32.totalorder %s75, 1
      %p763 = por %p761, %p762
      %p764 = scmp.ne.s32.totalorder %s756, %s759
      %p765 = scmp.eq.s32.totalorder %s75, 0
      %p766 = por %p764, %p765
      %p767 = scmp.ne.s32.totalorder %s756, %s759
      %p768 = scmp.eq.s32.totalorder %s80, 1
      %p769 = por %p767, %p768
      %p770 = scmp.ne.s32.totalorder %s759, %s760
      %p771 = scmp.eq.s32.totalorder %s80, 0
      %p772 = por %p770, %p771
      %p773 = scmp.ne.s32.totalorder %s759, %s760
      %p774 = scmp.eq.s32.totalorder %s81, 1
      %p775 = por %p773, %p774
      %p777 = scmp.ne.s32.totalorder %s760, %s776
      %p778 = scmp.eq.s32.totalorder %s81, 0
      %p779 = por %p777, %p778
      %s780 = ssub.s32 %s75, %s82
      %p781 = scmp.eq.s32.totalorder %s780, 0
      %s783 = sadd.s32 %s782, 1
      %s784 = scalar_select %p781, %s782, %s783
      %p787 = pneg %p781
      %p788 = scmp.eq.s32.totalorder %s75, 1
      %p789 = por %p787, %p788
      %p790 = scmp.ne.s32.totalorder %s782, %s785
      %p791 = scmp.eq.s32.totalorder %s75, 0
      %p792 = por %p790, %p791
      %p793 = scmp.ne.s32.totalorder %s782, %s785
      %p794 = scmp.eq.s32.totalorder %s80, 1
      %p795 = por %p793, %p794
      %p796 = scmp.ne.s32.totalorder %s785, %s786
      %p797 = scmp.eq.s32.totalorder %s80, 0
      %p798 = por %p796, %p797
      %p799 = scmp.ne.s32.totalorder %s785, %s786
      %p800 = scmp.eq.s32.totalorder %s81, 1
      %p801 = por %p799, %p800
      %p803 = scmp.ne.s32.totalorder %s786, %s802
      %p804 = scmp.eq.s32.totalorder %s81, 0
      %p805 = por %p803, %p804
      %p806 = scmp.le.s32.totalorder 1, %s75
      %p807 = scmp.lt.s32.totalorder %s75, 3
      %p808 = pnand %p806, %p807
      %p809 = pneg %p808
      // Predicated region
      $region9: #{forward.1} parent=5 // pred_check
        _
      $region10: #{forward.1} parent=5 // pred_check_branch
        %811 = sbr.rel (%p808) target = $region12
      $region11: #{forward.1} parent=5 // pred_region
        %s812 = ssub.s32 %s75, 1
        // Predicated region
        $region13: #{forward.1} parent=11 // pred_check
          %p813 = pneg %p122
        $region14: #{forward.1} parent=11 // pred_check_branch
          %815 = sbr.rel (%p813) target = $region16
        $region15: #{forward.1} parent=11 // pred_region
          _
        $region16: #{forward.1} parent=11 // pred_fallthru
          _
        // Predicated region
        $region17: #{forward.1} parent=11 // pred_check
          %p816 = pneg %p143
        $region18: #{forward.1} parent=11 // pred_check_branch
          %818 = sbr.rel (%p816) target = $region20
        $region19: #{forward.1} parent=11 // pred_region
          _
        $region20: #{forward.1} parent=11 // pred_fallthru
          _
        // Predicated region
        $region21: #{forward.1} parent=11 // pred_check
          %p819 = pneg %p164
        $region22: #{forward.1} parent=11 // pred_check_branch
          %821 = sbr.rel (%p819) target = $region24
        $region23: #{forward.1} parent=11 // pred_region
          _
        $region24: #{forward.1} parent=11 // pred_fallthru
          _
        // Predicated region
        $region25: #{forward.1} parent=11 // pred_check
          %p822 = pneg %p185
        $region26: #{forward.1} parent=11 // pred_check_branch
          %824 = sbr.rel (%p822) target = $region28
        $region27: #{forward.1} parent=11 // pred_region
          _
        $region28: #{forward.1} parent=11 // pred_fallthru
          _
        // Predicated region
        $region29: #{forward.1} parent=11 // pred_check
          %p825 = pneg %p206
        $region30: #{forward.1} parent=11 // pred_check_branch
          %827 = sbr.rel (%p825) target = $region32
        $region31: #{forward.1} parent=11 // pred_region
          _
        $region32: #{forward.1} parent=11 // pred_fallthru
          _
        // Predicated region
        $region33: #{forward.1} parent=11 // pred_check
          %p828 = pneg %p227
        $region34: #{forward.1} parent=11 // pred_check_branch
          %830 = sbr.rel (%p828) target = $region36
        $region35: #{forward.1} parent=11 // pred_region
          _
        $region36: #{forward.1} parent=11 // pred_fallthru
          _
        // Predicated region
        $region37: #{forward.1} parent=11 // pred_check
          %p831 = pneg %p248
        $region38: #{forward.1} parent=11 // pred_check_branch
          %833 = sbr.rel (%p831) target = $region40
        $region39: #{forward.1} parent=11 // pred_region
          _
        $region40: #{forward.1} parent=11 // pred_fallthru
          _
        // Predicated region
        $region41: #{forward.1} parent=11 // pred_check
          %p834 = pneg %p269
        $region42: #{forward.1} parent=11 // pred_check_branch
          %836 = sbr.rel (%p834) target = $region44
        $region43: #{forward.1} parent=11 // pred_region
          _
        $region44: #{forward.1} parent=11 // pred_fallthru
          _
        // Predicated region
        $region45: #{forward.1} parent=11 // pred_check
          %p837 = pneg %p290
        $region46: #{forward.1} parent=11 // pred_check_branch
          %839 = sbr.rel (%p837) target = $region48
        $region47: #{forward.1} parent=11 // pred_region
          _
        $region48: #{forward.1} parent=11 // pred_fallthru
          _
        // Predicated region
        $region49: #{forward.1} parent=11 // pred_check
          %p840 = pneg %p311
        $region50: #{forward.1} parent=11 // pred_check_branch
          %842 = sbr.rel (%p840) target = $region52
        $region51: #{forward.1} parent=11 // pred_region
          _
        $region52: #{forward.1} parent=11 // pred_fallthru
          _
        // Predicated region
        $region53: #{forward.1} parent=11 // pred_check
          %p843 = pneg %p332
        $region54: #{forward.1} parent=11 // pred_check_branch
          %845 = sbr.rel (%p843) target = $region56
        $region55: #{forward.1} parent=11 // pred_region
          _
        $region56: #{forward.1} parent=11 // pred_fallthru
          _
        // Predicated region
        $region57: #{forward.1} parent=11 // pred_check
          %p846 = pneg %p353
        $region58: #{forward.1} parent=11 // pred_check_branch
          %848 = sbr.rel (%p846) target = $region60
        $region59: #{forward.1} parent=11 // pred_region
          _
        $region60: #{forward.1} parent=11 // pred_fallthru
          _
        // Predicated region
        $region61: #{forward.1} parent=11 // pred_check
          %p849 = pneg %p374
        $region62: #{forward.1} parent=11 // pred_check_branch
          %851 = sbr.rel (%p849) target = $region64
        $region63: #{forward.1} parent=11 // pred_region
          _
        $region64: #{forward.1} parent=11 // pred_fallthru
          _
        // Predicated region
        $region65: #{forward.1} parent=11 // pred_check
          %p852 = pneg %p395
        $region66: #{forward.1} parent=11 // pred_check_branch
          %854 = sbr.rel (%p852) target = $region68
        $region67: #{forward.1} parent=11 // pred_region
          _
        $region68: #{forward.1} parent=11 // pred_fallthru
          _
        // Predicated region
        $region69: #{forward.1} parent=11 // pred_check
          %p855 = pneg %p416
        $region70: #{forward.1} parent=11 // pred_check_branch
          %857 = sbr.rel (%p855) target = $region72
        $region71: #{forward.1} parent=11 // pred_region
          _
        $region72: #{forward.1} parent=11 // pred_fallthru
          _
        // Predicated region
        $region73: #{forward.1} parent=11 // pred_check
          %p858 = pneg %p437
        $region74: #{forward.1} parent=11 // pred_check_branch
          %860 = sbr.rel (%p858) target = $region76
        $region75: #{forward.1} parent=11 // pred_region
          _
        $region76: #{forward.1} parent=11 // pred_fallthru
          _
        // Predicated region
        $region77: #{forward.1} parent=11 // pred_check
          %p861 = pneg %p458
        $region78: #{forward.1} parent=11 // pred_check_branch
          %863 = sbr.rel (%p861) target = $region80
        $region79: #{forward.1} parent=11 // pred_region
          _
        $region80: #{forward.1} parent=11 // pred_fallthru
          _
        // Predicated region
        $region81: #{forward.1} parent=11 // pred_check
          %p864 = pneg %p479
        $region82: #{forward.1} parent=11 // pred_check_branch
          %866 = sbr.rel (%p864) target = $region84
        $region83: #{forward.1} parent=11 // pred_region
          _
        $region84: #{forward.1} parent=11 // pred_fallthru
          _
        // Predicated region
        $region85: #{forward.1} parent=11 // pred_check
          %p867 = pneg %p500
        $region86: #{forward.1} parent=11 // pred_check_branch
          %869 = sbr.rel (%p867) target = $region88
        $region87: #{forward.1} parent=11 // pred_region
          _
        $region88: #{forward.1} parent=11 // pred_fallthru
          _
        // Predicated region
        $region89: #{forward.1} parent=11 // pred_check
          %p870 = pneg %p521
        $region90: #{forward.1} parent=11 // pred_check_branch
          %872 = sbr.rel (%p870) target = $region92
        $region91: #{forward.1} parent=11 // pred_region
          _
        $region92: #{forward.1} parent=11 // pred_fallthru
          _
        // Predicated region
        $region93: #{forward.1} parent=11 // pred_check
          %p873 = pneg %p542
        $region94: #{forward.1} parent=11 // pred_check_branch
          %875 = sbr.rel (%p873) target = $region96
        $region95: #{forward.1} parent=11 // pred_region
          _
        $region96: #{forward.1} parent=11 // pred_fallthru
          _
        // Predicated region
        $region97: #{forward.1} parent=11 // pred_check
          %p876 = pneg %p563
        $region98: #{forward.1} parent=11 // pred_check_branch
          %878 = sbr.rel (%p876) target = $region100
        $region99: #{forward.1} parent=11 // pred_region
          _
        $region100: #{forward.1} parent=11 // pred_fallthru
          _
        // Predicated region
        $region101: #{forward.1} parent=11 // pred_check
          %p879 = pneg %p584
        $region102: #{forward.1} parent=11 // pred_check_branch
          %881 = sbr.rel (%p879) target = $region104
        $region103: #{forward.1} parent=11 // pred_region
          _
        $region104: #{forward.1} parent=11 // pred_fallthru
          _
        // Predicated region
        $region105: #{forward.1} parent=11 // pred_check
          %p882 = pneg %p605
        $region106: #{forward.1} parent=11 // pred_check_branch
          %884 = sbr.rel (%p882) target = $region108
        $region107: #{forward.1} parent=11 // pred_region
          _
        $region108: #{forward.1} parent=11 // pred_fallthru
          _
        // Predicated region
        $region109: #{forward.1} parent=11 // pred_check
          %p885 = pneg %p626
        $region110: #{forward.1} parent=11 // pred_check_branch
          %887 = sbr.rel (%p885) target = $region112
        $region111: #{forward.1} parent=11 // pred_region
          %889 = vsyncadd [#allocation23], 0
          %s890 = sshll.u32 %s51, 4
          %s891 = int_to_ptr.hbm [resolvable:$true] %s890
          %s892 = sshll.u32 [#allocation22], 4
          %s893 = int_to_ptr.vmem [resolvable:$true] %s892
          %898 = dma.hbm_to_vmem [thread:$0]  %s891, 16384, %s893, [#allocation23], 128, 128, 8
        $region112: #{forward.1} parent=11 // pred_fallthru
          _
        // Predicated region
        $region113: #{forward.1} parent=11 // pred_check
          %p899 = pneg %p647
        $region114: #{forward.1} parent=11 // pred_check_branch
          %901 = sbr.rel (%p899) target = $region116
        $region115: #{forward.1} parent=11 // pred_region
          _
        $region116: #{forward.1} parent=11 // pred_fallthru
          _
        // Predicated region
        $region117: #{forward.1} parent=11 // pred_check
          %p902 = pneg %p668
        $region118: #{forward.1} parent=11 // pred_check_branch
          %904 = sbr.rel (%p902) target = $region120
        $region119: #{forward.1} parent=11 // pred_region
          _
        $region120: #{forward.1} parent=11 // pred_fallthru
          _
      $region12: #{forward.1} parent=5 // pred_fallthru
        _
      %p905 = scmp.lt.s32.totalorder %s75, 2
      // Predicated region
      $region121: #{forward.1} parent=5 // pred_check
        %p906 = pneg %p905
      $region122: #{forward.1} parent=5 // pred_check_branch
        %908 = sbr.rel (%p906) target = $region124
      $region123: #{forward.1} parent=5 // pred_region
        // Predicated region
        $region125: #{forward.1} parent=123 // pred_check
          %p909 = pneg %p95
        $region126: #{forward.1} parent=123 // pred_check_branch
          %911 = sbr.rel (%p909) target = $region128
        $region127: #{forward.1} parent=123 // pred_region
          %p912 = scmp.lt.s32.totalorder %s75, 1
          %s913 = scalar_select %p912, %s75, 1
          %s914 = smul.addr %s913, 8
          %s915 = scalar_lea.vmem %s1, %s914
        $region128: #{forward.1} parent=123 // pred_fallthru
          _
      $region124: #{forward.1} parent=5 // pred_fallthru
        _
      %p916 = scmp.le.s32.totalorder 1, %s75
      %p917 = scmp.lt.s32.totalorder %s75, 3
      %p918 = pnand %p916, %p917
      %p919 = pneg %p918
      // Predicated region
      $region129: #{forward.1} parent=5 // pred_check
        _
      $region130: #{forward.1} parent=5 // pred_check_branch
        %921 = sbr.rel (%p918) target = $region132
      $region131: #{forward.1} parent=5 // pred_region
        %s922 = ssub.s32 %s75, 1
        // Predicated region
        $region133: #{forward.1} parent=131 // pred_check
          %p923 = pneg %p626
        $region134: #{forward.1} parent=131 // pred_check_branch
          %925 = sbr.rel (%p923) target = $region136
        $region135: #{forward.1} parent=131 // pred_region
          %927 = dma.done [#allocation23], 16384
        $region136: #{forward.1} parent=131 // pred_fallthru
          _
        %p928 = scmp.lt.s32.totalorder %s80, 1
        %s929 = scalar_select %p928, %s80, 1
        %s930 = smul.addr %s929, 8
        %s931 = scalar_lea.vmem %s1, %s930
        %p932 = pneg %p101
        %p933 = pneg %p98
        %p934 = pneg %p122
        %p935 = pneg %p119
        %p936 = pneg %p143
        %p937 = pneg %p140
        %p938 = pneg %p164
        %p939 = pneg %p161
        %p940 = pneg %p185
        %p941 = pneg %p182
        %p942 = pneg %p206
        %p943 = pneg %p203
        %p944 = pneg %p227
        %p945 = pneg %p224
        %p946 = pneg %p248
        %p947 = pneg %p245
        %p948 = pneg %p269
        %p949 = pneg %p266
        %p950 = pneg %p290
        %p951 = pneg %p287
        %p952 = pneg %p311
        %p953 = pneg %p308
        %p954 = pneg %p332
        %p955 = pneg %p329
        %p956 = pneg %p353
        %p957 = pneg %p350
        %p958 = pneg %p374
        %p959 = pneg %p371
        %p960 = pneg %p395
        %p961 = pneg %p392
        %p962 = pneg %p416
        %p963 = pneg %p413
        %p964 = pneg %p437
        %p965 = pneg %p434
        %p966 = pneg %p458
        %p967 = pneg %p455
        %p968 = pneg %p479
        %p969 = pneg %p476
        %p970 = pneg %p500
        %p971 = pneg %p497
        %p972 = pneg %p521
        %p973 = pneg %p518
        %p974 = pneg %p542
        %p975 = pneg %p539
        %p976 = pneg %p563
        %p977 = pneg %p560
        %p978 = pneg %p584
        %p979 = pneg %p581
        %p980 = pneg %p605
        %p981 = pneg %p602
        %p982 = pneg %p626
        %p983 = pneg %p623
        %p984 = pneg %p647
        %p985 = pneg %p644
        %p986 = pneg %p668
        %p987 = pneg %p665
        %p988 = pneg %p694
        %p989 = pneg %p691
        %p990 = scmp.lt.s32.totalorder %s80, 1
        %s991 = scalar_select %p990, %s80, 1
        %s992 = scalar_lea.vmem %s57, %s991
        %p993 = pneg %p720
        %p994 = pneg %p717
        %p995 = scmp.lt.s32.totalorder %s80, 1
        %s996 = scalar_select %p995, %s80, 1
        %s997 = smul.addr %s996, 2
        %s998 = scalar_lea.vmem %s59, %s997
        %p999 = pneg %p746
        %p1000 = pneg %p743
        %p1001 = scmp.lt.s32.totalorder %s80, 1
        %s1002 = scalar_select %p1001, %s80, 1
        %s1003 = smul.addr %s1002, 4
        %s1004 = smul.addr %s1003, 8
        %s1005 = scalar_lea.vmem %s61, %s1004
        %p1006 = pneg %p772
        %p1007 = pneg %p769
        %p1008 = scmp.lt.s32.totalorder %s80, 1
        %s1009 = scalar_select %p1008, %s80, 1
        %s1010 = smul.addr %s1009, 4
        %s1011 = smul.addr %s1010, 8
        %s1012 = scalar_lea.vmem %s63, %s1011
        %p1013 = pneg %p798
        %p1014 = pneg %p795
        %p1015 = scmp.lt.s32.totalorder %s80, 1
        %s1016 = scalar_select %p1015, %s80, 1
        %s1017 = smul.addr %s1016, 4
        %s1018 = smul.addr %s1017, 8
        %s1019 = scalar_lea.vmem %s65, %s1018
        %p1020 = scmp.lt.s32.totalorder %s80, 1
        %s1021 = scalar_select %p1020, %s80, 1
        %s1022 = smul.addr %s1021, 8
        %s1023 = scalar_lea.vmem %s1, %s1022
        %p1024 = scmp.lt.s32.totalorder %s80, 1
        %s1025 = scalar_select %p1024, %s80, 1
        %s1026 = scalar_lea.vmem %s57, %s1025
        %p1027 = scmp.lt.s32.totalorder %s80, 1
        %s1028 = scalar_select %p1027, %s80, 1
        %s1029 = smul.addr %s1028, 2
        %s1030 = scalar_lea.vmem %s59, %s1029
        %p1031 = scmp.lt.s32.totalorder %s80, 1
        %s1032 = scalar_select %p1031, %s80, 1
        %s1033 = smul.addr %s1032, 4
        %s1034 = smul.addr %s1033, 8
        %s1035 = scalar_lea.vmem %s61, %s1034
        %p1036 = scmp.lt.s32.totalorder %s80, 1
        %s1037 = scalar_select %p1036, %s80, 1
        %s1038 = smul.addr %s1037, 4
        %s1039 = smul.addr %s1038, 8
        %s1040 = scalar_lea.vmem %s63, %s1039
        %p1041 = scmp.lt.s32.totalorder %s80, 1
        %s1042 = scalar_select %p1041, %s80, 1
        %s1043 = smul.addr %s1042, 4
        %s1044 = smul.addr %s1043, 8
        %s1045 = scalar_lea.vmem %s65, %s1044
        %v1047 = vld [vmem:[%s1023] sm:$0xff]
        %v1048 = vlaneseq
        %vm1049 = vcmp.ge.s32.totalorder %v1048, 0
        %vm1050 = vcmp.lt.s32.totalorder %v1048, 5
        %vm1051 = vmand %vm1049, %vm1050
        %1052 = vst.msk [vmem:[#allocation2] sm:$0x1] %vm1051, 0.0
        %vm1053 = vcmp.ge.s32.totalorder %v1048, 5
        %vm1054 = vcmp.lt.s32.totalorder %v1048, 10
        %vm1055 = vmand %vm1053, %vm1054
        %1056 = vst.msk [vmem:[#allocation2 + $0x8] sm:$0x1] %vm1055, 0.0
        %1058 = vrot.lane.b32.xlu0 %v1047, 5
        %v1059 = vpop.permute.xlu0 %1058
        %v1060 = vrot.slane %v1059, 7
        %vm1061 = vcmask 39936
        %v1062 = vsel %vm1061, %v1060, %v1059
        %vm1065 = vcmp.lt.s32.totalorder %v1048, 1024
        %vm1066 = vmand %vm1053, %vm1065
        %1067 = vst.msk [vmem:[#allocation2] sm:$0xff] %vm1066, %v1062
        %1068 = vst.msk [vmem:[#allocation2 + $0x8] sm:$0x1] %vm1051, %v1060
        %v1069 = vld [vmem:[#allocation2] sm:$0xff]
        %v1070 = vld [vmem:[#allocation2 + $0x8] sm:$0x1]
        %1071 = vst [vmem:[#allocation3] ss:$8 sm:$0xf] %v1069
        %1072 = vst [vmem:[#allocation3] ss:$8 sm:$0xf0] %v1069
        %1075 = vrot.lane.b32.xlu0 %v1069, 127
        %v1076 = vpop.permute.xlu0 %1075
        %1077 = vrot.lane.b32.xlu0 %v1070, 127
        %v1078 = vpop.permute.xlu0 %1077
        %v1079 = vrot.slane %v1076, 1
        %v1080 = vrot.slane %v1078, 1
        %vm1081 = vcmask 1046528
        %v1082 = vsel %vm1081, %v1079, %v1080
        %vm1083 = vcmask 1039360
        %v1084 = vsel %vm1083, %v1076, %v1082
        %s1086 = scalar_lea.vmem [#allocation3], 1
        %1087 = vst [vmem:[%s1086] ss:$8 sm:$0xf] %v1084
        %1088 = vst [vmem:[%s1086] ss:$8 sm:$0xf0] %v1084
        %1089 = vrot.lane.b32.xlu0 %v1069, 126
        %v1090 = vpop.permute.xlu0 %1089
        %1091 = vrot.lane.b32.xlu0 %v1070, 126
        %v1092 = vpop.permute.xlu0 %1091
        %v1093 = vrot.slane %v1090, 1
        %v1094 = vrot.slane %v1092, 1
        %v1095 = vsel %vm1081, %v1093, %v1094
        %vm1096 = vcmask 1031168
        %v1097 = vsel %vm1096, %v1090, %v1095
        %s1099 = scalar_lea.vmem [#allocation3], 2
        %1100 = vst [vmem:[%s1099] ss:$8 sm:$0xf] %v1097
        %1101 = vst [vmem:[%s1099] ss:$8 sm:$0xf0] %v1097
        %1102 = vrot.lane.b32.xlu0 %v1069, 125
        %v1103 = vpop.permute.xlu0 %1102
        %1104 = vrot.lane.b32.xlu0 %v1070, 125
        %v1105 = vpop.permute.xlu0 %1104
        %v1106 = vrot.slane %v1103, 1
        %v1107 = vrot.slane %v1105, 1
        %v1108 = vsel %vm1081, %v1106, %v1107
        %vm1109 = vcmask 1022976
        %v1110 = vsel %vm1109, %v1103, %v1108
        %s1112 = scalar_lea.vmem [#allocation3], 3
        %1113 = vst [vmem:[%s1112] ss:$8 sm:$0xf] %v1110
        %1114 = vst [vmem:[%s1112] ss:$8 sm:$0xf0] %v1110
        %1115 = vrot.lane.b32.xlu0 %v1069, 124
        %v1116 = vpop.permute.xlu0 %1115
        %1117 = vrot.lane.b32.xlu0 %v1070, 124
        %v1118 = vpop.permute.xlu0 %1117
        %v1119 = vrot.slane %v1116, 1
        %v1120 = vrot.slane %v1118, 1
        %v1121 = vsel %vm1081, %v1119, %v1120
        %vm1122 = vcmask 1014784
        %v1123 = vsel %vm1122, %v1116, %v1121
        %s1125 = scalar_lea.vmem [#allocation3], 4
        %1126 = vst [vmem:[%s1125] ss:$8 sm:$0xf] %v1123
        %1127 = vst [vmem:[%s1125] ss:$8 sm:$0xf0] %v1123
        %1128 = vrot.lane.b32.xlu0 %v1069, 123
        %v1129 = vpop.permute.xlu0 %1128
        %1130 = vrot.lane.b32.xlu0 %v1070, 123
        %v1131 = vpop.permute.xlu0 %1130
        %v1132 = vrot.slane %v1129, 1
        %v1133 = vrot.slane %v1131, 1
        %v1134 = vsel %vm1081, %v1132, %v1133
        %vm1135 = vcmask 1006592
        %v1136 = vsel %vm1135, %v1129, %v1134
        %s1138 = scalar_lea.vmem [#allocation3], 5
        %1139 = vst [vmem:[%s1138] ss:$8 sm:$0xf] %v1136
        %1140 = vst [vmem:[%s1138] ss:$8 sm:$0xf0] %v1136
        %1141 = vrot.lane.b32.xlu0 %v1069, 122
        %v1142 = vpop.permute.xlu0 %1141
        %1143 = vrot.lane.b32.xlu0 %v1070, 122
        %v1144 = vpop.permute.xlu0 %1143
        %v1145 = vrot.slane %v1142, 1
        %v1146 = vrot.slane %v1144, 1
        %v1147 = vsel %vm1081, %v1145, %v1146
        %vm1148 = vcmask 998400
        %v1149 = vsel %vm1148, %v1142, %v1147
        %s1151 = scalar_lea.vmem [#allocation3], 6
        %1152 = vst [vmem:[%s1151] ss:$8 sm:$0xf] %v1149
        %1153 = vst [vmem:[%s1151] ss:$8 sm:$0xf0] %v1149
        %1154 = vrot.lane.b32.xlu0 %v1069, 121
        %v1155 = vpop.permute.xlu0 %1154
        %1156 = vrot.lane.b32.xlu0 %v1070, 121
        %v1157 = vpop.permute.xlu0 %1156
        %v1158 = vrot.slane %v1155, 1
        %v1159 = vrot.slane %v1157, 1
        %v1160 = vsel %vm1081, %v1158, %v1159
        %vm1161 = vcmask 990208
        %v1162 = vsel %vm1161, %v1155, %v1160
        %s1164 = scalar_lea.vmem [#allocation3], 7
        %1165 = vst [vmem:[%s1164] ss:$8 sm:$0xf] %v1162
        %1166 = vst [vmem:[%s1164] ss:$8 sm:$0xf0] %v1162
        %1167 = vrot.lane.b32.xlu0 %v1069, 120
        %v1168 = vpop.permute.xlu0 %1167
        %1169 = vrot.lane.b32.xlu0 %v1070, 120
        %v1170 = vpop.permute.xlu0 %1169
        %v1171 = vrot.slane %v1168, 1
        %v1172 = vrot.slane %v1170, 1
        %v1173 = vsel %vm1081, %v1171, %v1172
        %vm1174 = vcmask 982016
        %v1175 = vsel %vm1174, %v1168, %v1173
        %s1177 = scalar_lea.vmem [#allocation3], 64
        %1178 = vst [vmem:[%s1177] ss:$8 sm:$0xf] %v1175
        %1179 = vst [vmem:[%s1177] ss:$8 sm:$0xf0] %v1175
        %1180 = vrot.lane.b32.xlu0 %v1069, 119
        %v1181 = vpop.permute.xlu0 %1180
        %1182 = vrot.lane.b32.xlu0 %v1070, 119
        %v1183 = vpop.permute.xlu0 %1182
        %v1184 = vrot.slane %v1181, 1
        %v1185 = vrot.slane %v1183, 1
        %v1186 = vsel %vm1081, %v1184, %v1185
        %vm1187 = vcmask 973824
        %v1188 = vsel %vm1187, %v1181, %v1186
        %s1190 = scalar_lea.vmem [#allocation3], 65
        %1191 = vst [vmem:[%s1190] ss:$8 sm:$0xf] %v1188
        %1192 = vst [vmem:[%s1190] ss:$8 sm:$0xf0] %v1188
        %v1193 = vld [vmem:[%s3] sm:$0xff]
        %v1194 = vld [vmem:[#allocation3] sm:$0xff]
        %v1195 = vld [vmem:[#allocation3 + $0x8] sm:$0xff]
        %v1196 = vld [vmem:[#allocation3 + $0x10] sm:$0xff]
        %v1197 = vld [vmem:[#allocation3 + $0x18] sm:$0xff]
        %v1198 = vld [vmem:[#allocation3 + $0x20] sm:$0xff]
        %v1199 = vld [vmem:[#allocation3 + $0x28] sm:$0xff]
        %v1200 = vld [vmem:[#allocation3 + $0x30] sm:$0xff]
        %v1201 = vld [vmem:[#allocation3 + $0x38] sm:$0xff]
        %v1202 = vld [vmem:[#allocation3 + $0x40] sm:$0x3]
        %v1203 = vld [vmem:[#allocation3 + $0x48] sm:$0x3]
        %v1204 = vld [vmem:[#allocation3 + $0x50] sm:$0x3]
        %v1205 = vld [vmem:[#allocation3 + $0x58] sm:$0x3]
        %v1206 = vld [vmem:[#allocation3 + $0x60] sm:$0x3]
        %v1207 = vld [vmem:[#allocation3 + $0x68] sm:$0x3]
        %v1208 = vld [vmem:[#allocation3 + $0x70] sm:$0x3]
        %v1209 = vld [vmem:[#allocation3 + $0x78] sm:$0x3]
        %v1210 = vld [vmem:[%s5] sm:$0xff]
        %1212 = vset.pattern.permute.xlu0 0
        %1213 = vperm.xlu0 %1212, %v1210
        %v1214 = vpop.permute.xlu0 %1213
        %vm1216 = vcmask 80896
        %v1218 = vsel %vm1216, %v1193, 0
        %vm1220 = vcmask 1041408
        %v1222 = vsel %vm1220, %v1202, 0
        %v1225 = vsel %vm1220, %v1203, 0
        %v1228 = vsel %vm1220, %v1204, 0
        %v1231 = vsel %vm1220, %v1205, 0
        %v1234 = vsel %vm1220, %v1206, 0
        %v1237 = vsel %vm1220, %v1207, 0
        %v1240 = vsel %vm1220, %v1208, 0
        %v1243 = vsel %vm1220, %v1209, 0
        %1245 = vmatpush.msra.mxu0 0.0
        %1246 = vmatpush.msra.mxu0 0.0
        %1247 = vmatpush.msra.mxu0 0.0
        %1248 = vmatpush.msra.mxu0 0.0
        %1249 = vmatpush.msra.mxu0 0.0
        %1250 = vmatpush.msra.mxu0 0.0
        %1251 = vmatpush.msra.mxu0 0.0
        %1252 = vmatpush.msra.mxu0 0.0
        %1253 = vmatpush.msra.mxu0 0.0
        %1254 = vmatpush.msra.mxu0 0.0
        %1255 = vmatpush.msra.mxu0 0.0
        %1256 = vmatpush.msra.mxu0 0.0
        %1257 = vmatpush.msra.mxu0 0.0
        %1258 = vmatpush.msra.mxu0 0.0
        %1259 = vmatpush.msra.mxu0 %v1222
        %1260 = vmatpush.msra.mxu0 %v1194
        %1261 = vmatmul.f32.gmra.mxu0 %v1218
        %v1262 = vpop.f32.mrf.mxu0
        %v1263 = vadd.f32 %v1214, %v1262
        %1264 = vdwg.mxu0
        %1265 = vmatpush.msra.mxu0 0.0
        %1266 = vmatpush.msra.mxu0 0.0
        %1267 = vmatpush.msra.mxu0 0.0
        %1268 = vmatpush.msra.mxu0 0.0
        %1269 = vmatpush.msra.mxu0 0.0
        %1270 = vmatpush.msra.mxu0 0.0
        %1271 = vmatpush.msra.mxu0 0.0
        %1272 = vmatpush.msra.mxu0 0.0
        %1273 = vmatpush.msra.mxu0 0.0
        %1274 = vmatpush.msra.mxu0 0.0
        %1275 = vmatpush.msra.mxu0 0.0
        %1276 = vmatpush.msra.mxu0 0.0
        %1277 = vmatpush.msra.mxu0 0.0
        %1278 = vmatpush.msra.mxu0 0.0
        %1279 = vmatpush.msra.mxu0 %v1225
        %1280 = vmatpush.msra.mxu0 %v1195
        %1281 = vmatmul.f32.gmra.mxu0 %v1218
        %v1282 = vpop.f32.mrf.mxu0
        %v1283 = vadd.f32 %v1214, %v1282
        %1284 = vdwg.mxu0
        %1285 = vmatpush.msra.mxu0 0.0
        %1286 = vmatpush.msra.mxu0 0.0
        %1287 = vmatpush.msra.mxu0 0.0
        %1288 = vmatpush.msra.mxu0 0.0
        %1289 = vmatpush.msra.mxu0 0.0
        %1290 = vmatpush.msra.mxu0 0.0
        %1291 = vmatpush.msra.mxu0 0.0
        %1292 = vmatpush.msra.mxu0 0.0
        %1293 = vmatpush.msra.mxu0 0.0
        %1294 = vmatpush.msra.mxu0 0.0
        %1295 = vmatpush.msra.mxu0 0.0
        %1296 = vmatpush.msra.mxu0 0.0
        %1297 = vmatpush.msra.mxu0 0.0
        %1298 = vmatpush.msra.mxu0 0.0
        %1299 = vmatpush.msra.mxu0 %v1228
        %1300 = vmatpush.msra.mxu0 %v1196
        %1301 = vmatmul.f32.gmra.mxu0 %v1218
        %v1302 = vpop.f32.mrf.mxu0
        %v1303 = vadd.f32 %v1214, %v1302
        %1304 = vdwg.mxu0
        %1305 = vmatpush.msra.mxu0 0.0
        %1306 = vmatpush.msra.mxu0 0.0
        %1307 = vmatpush.msra.mxu0 0.0
        %1308 = vmatpush.msra.mxu0 0.0
        %1309 = vmatpush.msra.mxu0 0.0
        %1310 = vmatpush.msra.mxu0 0.0
        %1311 = vmatpush.msra.mxu0 0.0
        %1312 = vmatpush.msra.mxu0 0.0
        %1313 = vmatpush.msra.mxu0 0.0
        %1314 = vmatpush.msra.mxu0 0.0
        %1315 = vmatpush.msra.mxu0 0.0
        %1316 = vmatpush.msra.mxu0 0.0
        %1317 = vmatpush.msra.mxu0 0.0
        %1318 = vmatpush.msra.mxu0 0.0
        %1319 = vmatpush.msra.mxu0 %v1231
        %1320 = vmatpush.msra.mxu0 %v1197
        %1321 = vmatmul.f32.gmra.mxu0 %v1218
        %v1322 = vpop.f32.mrf.mxu0
        %v1323 = vadd.f32 %v1214, %v1322
        %1324 = vdwg.mxu0
        %1325 = vmatpush.msra.mxu0 0.0
        %1326 = vmatpush.msra.mxu0 0.0
        %1327 = vmatpush.msra.mxu0 0.0
        %1328 = vmatpush.msra.mxu0 0.0
        %1329 = vmatpush.msra.mxu0 0.0
        %1330 = vmatpush.msra.mxu0 0.0
        %1331 = vmatpush.msra.mxu0 0.0
        %1332 = vmatpush.msra.mxu0 0.0
        %1333 = vmatpush.msra.mxu0 0.0
        %1334 = vmatpush.msra.mxu0 0.0
        %1335 = vmatpush.msra.mxu0 0.0
        %1336 = vmatpush.msra.mxu0 0.0
        %1337 = vmatpush.msra.mxu0 0.0
        %1338 = vmatpush.msra.mxu0 0.0
        %1339 = vmatpush.msra.mxu0 %v1234
        %1340 = vmatpush.msra.mxu0 %v1198
        %1341 = vmatmul.f32.gmra.mxu0 %v1218
        %v1342 = vpop.f32.mrf.mxu0
        %v1343 = vadd.f32 %v1214, %v1342
        %1344 = vdwg.mxu0
        %1345 = vmatpush.msra.mxu0 0.0
        %1346 = vmatpush.msra.mxu0 0.0
        %1347 = vmatpush.msra.mxu0 0.0
        %1348 = vmatpush.msra.mxu0 0.0
        %1349 = vmatpush.msra.mxu0 0.0
        %1350 = vmatpush.msra.mxu0 0.0
        %1351 = vmatpush.msra.mxu0 0.0
        %1352 = vmatpush.msra.mxu0 0.0
        %1353 = vmatpush.msra.mxu0 0.0
        %1354 = vmatpush.msra.mxu0 0.0
        %1355 = vmatpush.msra.mxu0 0.0
        %1356 = vmatpush.msra.mxu0 0.0
        %1357 = vmatpush.msra.mxu0 0.0
        %1358 = vmatpush.msra.mxu0 0.0
        %1359 = vmatpush.msra.mxu0 %v1237
        %1360 = vmatpush.msra.mxu0 %v1199
        %1361 = vmatmul.f32.gmra.mxu0 %v1218
        %v1362 = vpop.f32.mrf.mxu0
        %v1363 = vadd.f32 %v1214, %v1362
        %1364 = vdwg.mxu0
        %1365 = vmatpush.msra.mxu0 0.0
        %1366 = vmatpush.msra.mxu0 0.0
        %1367 = vmatpush.msra.mxu0 0.0
        %1368 = vmatpush.msra.mxu0 0.0
        %1369 = vmatpush.msra.mxu0 0.0
        %1370 = vmatpush.msra.mxu0 0.0
        %1371 = vmatpush.msra.mxu0 0.0
        %1372 = vmatpush.msra.mxu0 0.0
        %1373 = vmatpush.msra.mxu0 0.0
        %1374 = vmatpush.msra.mxu0 0.0
        %1375 = vmatpush.msra.mxu0 0.0
        %1376 = vmatpush.msra.mxu0 0.0
        %1377 = vmatpush.msra.mxu0 0.0
        %1378 = vmatpush.msra.mxu0 0.0
        %1379 = vmatpush.msra.mxu0 %v1240
        %1380 = vmatpush.msra.mxu0 %v1200
        %1381 = vmatmul.f32.gmra.mxu0 %v1218
        %v1382 = vpop.f32.mrf.mxu0
        %v1383 = vadd.f32 %v1214, %v1382
        %1384 = vdwg.mxu0
        %1385 = vmatpush.msra.mxu0 0.0
        %1386 = vmatpush.msra.mxu0 0.0
        %1387 = vmatpush.msra.mxu0 0.0
        %1388 = vmatpush.msra.mxu0 0.0
        %1389 = vmatpush.msra.mxu0 0.0
        %1390 = vmatpush.msra.mxu0 0.0
        %1391 = vmatpush.msra.mxu0 0.0
        %1392 = vmatpush.msra.mxu0 0.0
        %1393 = vmatpush.msra.mxu0 0.0
        %1394 = vmatpush.msra.mxu0 0.0
        %1395 = vmatpush.msra.mxu0 0.0
        %1396 = vmatpush.msra.mxu0 0.0
        %1397 = vmatpush.msra.mxu0 0.0
        %1398 = vmatpush.msra.mxu0 0.0
        %1399 = vmatpush.msra.mxu0 %v1243
        %1400 = vmatpush.msra.mxu0 %v1201
        %1401 = vmatmul.f32.gmra.mxu0 %v1218
        %v1402 = vpop.f32.mrf.mxu0
        %v1403 = vadd.f32 %v1214, %v1402
        %1404 = vdwg.mxu0
        %vm1405 = vcmp.ge.f32.partialorder %v1263, 0.0
        %vm1406 = vcmp.ge.f32.partialorder %v1283, 0.0
        %vm1407 = vcmp.ge.f32.partialorder %v1303, 0.0
        %vm1408 = vcmp.ge.f32.partialorder %v1323, 0.0
        %vm1409 = vcmp.ge.f32.partialorder %v1343, 0.0
        %vm1410 = vcmp.ge.f32.partialorder %v1363, 0.0
        %vm1411 = vcmp.ge.f32.partialorder %v1383, 0.0
        %vm1412 = vcmp.ge.f32.partialorder %v1403, 0.0
        %v1413 = vmul.f32 %v1263, 0.2
        %v1414 = vmul.f32 %v1283, 0.2
        %v1415 = vmul.f32 %v1303, 0.2
        %v1416 = vmul.f32 %v1323, 0.2
        %v1417 = vmul.f32 %v1343, 0.2
        %v1418 = vmul.f32 %v1363, 0.2
        %v1419 = vmul.f32 %v1383, 0.2
        %v1420 = vmul.f32 %v1403, 0.2
        %v1421 = vsel %vm1405, %v1263, %v1413
        %v1422 = vsel %vm1406, %v1283, %v1414
        %v1423 = vsel %vm1407, %v1303, %v1415
        %v1424 = vsel %vm1408, %v1323, %v1416
        %v1425 = vsel %vm1409, %v1343, %v1417
        %v1426 = vsel %vm1410, %v1363, %v1418
        %v1427 = vsel %vm1411, %v1383, %v1419
        %v1428 = vsel %vm1412, %v1403, %v1420
        %v1429 = vpack.c.bf16 %v1421, %v1421
        %v1430 = vpack.c.bf16 %v1422, %v1422
        %v1431 = vpack.c.bf16 %v1423, %v1423
        %v1432 = vpack.c.bf16 %v1424, %v1424
        %v1433 = vpack.c.bf16 %v1425, %v1425
        %v1434 = vpack.c.bf16 %v1426, %v1426
        %v1435 = vpack.c.bf16 %v1427, %v1427
        %v1436 = vpack.c.bf16 %v1428, %v1428
        %v1437 = vld [vmem:[#allocation22] sm:$0xff]
        %v1438 = vld [vmem:[#allocation22 + $0x8] sm:$0xff]
        %v1439 = vld [vmem:[#allocation22 + $0x10] sm:$0xff]
        %v1440 = vld [vmem:[#allocation22 + $0x18] sm:$0xff]
        %v1441 = vld [vmem:[#allocation22 + $0x20] sm:$0xff]
        %v1442 = vld [vmem:[#allocation22 + $0x28] sm:$0xff]
        %v1443 = vld [vmem:[#allocation22 + $0x30] sm:$0xff]
        %v1444 = vld [vmem:[#allocation22 + $0x38] sm:$0xff]
        %v1445 = vld [vmem:[#allocation22 + $0x40] sm:$0xff]
        %v1446 = vld [vmem:[#allocation22 + $0x48] sm:$0xff]
        %v1447 = vld [vmem:[#allocation22 + $0x50] sm:$0xff]
        %v1448 = vld [vmem:[#allocation22 + $0x58] sm:$0xff]
        %v1449 = vld [vmem:[#allocation22 + $0x60] sm:$0xff]
        %v1450 = vld [vmem:[#allocation22 + $0x68] sm:$0xff]
        %v1451 = vld [vmem:[#allocation22 + $0x70] sm:$0xff]
        %v1452 = vld [vmem:[#allocation22 + $0x78] sm:$0xff]
        %v1453 = vld [vmem:[#allocation22 + $0x80] sm:$0xff]
        %v1454 = vld [vmem:[#allocation22 + $0x88] sm:$0xff]
        %v1455 = vld [vmem:[#allocation22 + $0x90] sm:$0xff]
        %v1456 = vld [vmem:[#allocation22 + $0x98] sm:$0xff]
        %v1457 = vld [vmem:[#allocation22 + $0xa0] sm:$0xff]
        %v1458 = vld [vmem:[#allocation22 + $0xa8] sm:$0xff]
        %v1459 = vld [vmem:[#allocation22 + $0xb0] sm:$0xff]
        %v1460 = vld [vmem:[#allocation22 + $0xb8] sm:$0xff]
        %v1461 = vld [vmem:[#allocation22 + $0xc0] sm:$0xff]
        %v1462 = vld [vmem:[#allocation22 + $0xc8] sm:$0xff]
        %v1463 = vld [vmem:[#allocation22 + $0xd0] sm:$0xff]
        %v1464 = vld [vmem:[#allocation22 + $0xd8] sm:$0xff]
        %v1465 = vld [vmem:[#allocation22 + $0xe0] sm:$0xff]
        %v1466 = vld [vmem:[#allocation22 + $0xe8] sm:$0xff]
        %v1467 = vld [vmem:[#allocation22 + $0xf0] sm:$0xff]
        %v1468 = vld [vmem:[#allocation22 + $0xf8] sm:$0xff]
        %v1469 = vld [vmem:[#allocation22 + $0x100] sm:$0xff]
        %v1470 = vld [vmem:[#allocation22 + $0x108] sm:$0xff]
        %v1471 = vld [vmem:[#allocation22 + $0x110] sm:$0xff]
        %v1472 = vld [vmem:[#allocation22 + $0x118] sm:$0xff]
        %v1473 = vld [vmem:[#allocation22 + $0x120] sm:$0xff]
        %v1474 = vld [vmem:[#allocation22 + $0x128] sm:$0xff]
        %v1475 = vld [vmem:[#allocation22 + $0x130] sm:$0xff]
        %v1476 = vld [vmem:[#allocation22 + $0x138] sm:$0xff]
        %v1477 = vld [vmem:[#allocation22 + $0x140] sm:$0xff]
        %v1478 = vld [vmem:[#allocation22 + $0x148] sm:$0xff]
        %v1479 = vld [vmem:[#allocation22 + $0x150] sm:$0xff]
        %v1480 = vld [vmem:[#allocation22 + $0x158] sm:$0xff]
        %v1481 = vld [vmem:[#allocation22 + $0x160] sm:$0xff]
        %v1482 = vld [vmem:[#allocation22 + $0x168] sm:$0xff]
        %v1483 = vld [vmem:[#allocation22 + $0x170] sm:$0xff]
        %v1484 = vld [vmem:[#allocation22 + $0x178] sm:$0xff]
        %v1485 = vld [vmem:[#allocation22 + $0x180] sm:$0xff]
        %v1486 = vld [vmem:[#allocation22 + $0x188] sm:$0xff]
        %v1487 = vld [vmem:[#allocation22 + $0x190] sm:$0xff]
        %v1488 = vld [vmem:[#allocation22 + $0x198] sm:$0xff]
        %v1489 = vld [vmem:[#allocation22 + $0x1a0] sm:$0xff]
        %v1490 = vld [vmem:[#allocation22 + $0x1a8] sm:$0xff]
        %v1491 = vld [vmem:[#allocation22 + $0x1b0] sm:$0xff]
        %v1492 = vld [vmem:[#allocation22 + $0x1b8] sm:$0xff]
        %v1493 = vld [vmem:[#allocation22 + $0x1c0] sm:$0xff]
        %v1494 = vld [vmem:[#allocation22 + $0x1c8] sm:$0xff]
        %v1495 = vld [vmem:[#allocation22 + $0x1d0] sm:$0xff]
        %v1496 = vld [vmem:[#allocation22 + $0x1d8] sm:$0xff]
        %v1497 = vld [vmem:[#allocation22 + $0x1e0] sm:$0xff]
        %v1498 = vld [vmem:[#allocation22 + $0x1e8] sm:$0xff]
        %v1499 = vld [vmem:[#allocation22 + $0x1f0] sm:$0xff]
        %v1500 = vld [vmem:[#allocation22 + $0x1f8] sm:$0xff]
        %v1501 = vld [vmem:[#allocation22 + $0x200] sm:$0xff]
        %v1502 = vld [vmem:[#allocation22 + $0x208] sm:$0xff]
        %v1503 = vld [vmem:[#allocation22 + $0x210] sm:$0xff]
        %v1504 = vld [vmem:[#allocation22 + $0x218] sm:$0xff]
        %v1505 = vld [vmem:[#allocation22 + $0x220] sm:$0xff]
        %v1506 = vld [vmem:[#allocation22 + $0x228] sm:$0xff]
        %v1507 = vld [vmem:[#allocation22 + $0x230] sm:$0xff]
        %v1508 = vld [vmem:[#allocation22 + $0x238] sm:$0xff]
        %v1509 = vld [vmem:[#allocation22 + $0x240] sm:$0xff]
        %v1510 = vld [vmem:[#allocation22 + $0x248] sm:$0xff]
        %v1511 = vld [vmem:[#allocation22 + $0x250] sm:$0xff]
        %v1512 = vld [vmem:[#allocation22 + $0x258] sm:$0xff]
        %v1513 = vld [vmem:[#allocation22 + $0x260] sm:$0xff]
        %v1514 = vld [vmem:[#allocation22 + $0x268] sm:$0xff]
        %v1515 = vld [vmem:[#allocation22 + $0x270] sm:$0xff]
        %v1516 = vld [vmem:[#allocation22 + $0x278] sm:$0xff]
        %v1517 = vld [vmem:[#allocation22 + $0x280] sm:$0xff]
        %v1518 = vld [vmem:[#allocation22 + $0x288] sm:$0xff]
        %v1519 = vld [vmem:[#allocation22 + $0x290] sm:$0xff]
        %v1520 = vld [vmem:[#allocation22 + $0x298] sm:$0xff]
        %v1521 = vld [vmem:[#allocation22 + $0x2a0] sm:$0xff]
        %v1522 = vld [vmem:[#allocation22 + $0x2a8] sm:$0xff]
        %v1523 = vld [vmem:[#allocation22 + $0x2b0] sm:$0xff]
        %v1524 = vld [vmem:[#allocation22 + $0x2b8] sm:$0xff]
        %v1525 = vld [vmem:[#allocation22 + $0x2c0] sm:$0xff]
        %v1526 = vld [vmem:[#allocation22 + $0x2c8] sm:$0xff]
        %v1527 = vld [vmem:[#allocation22 + $0x2d0] sm:$0xff]
        %v1528 = vld [vmem:[#allocation22 + $0x2d8] sm:$0xff]
        %v1529 = vld [vmem:[#allocation22 + $0x2e0] sm:$0xff]
        %v1530 = vld [vmem:[#allocation22 + $0x2e8] sm:$0xff]
        %v1531 = vld [vmem:[#allocation22 + $0x2f0] sm:$0xff]
        %v1532 = vld [vmem:[#allocation22 + $0x2f8] sm:$0xff]
        %v1533 = vld [vmem:[#allocation22 + $0x300] sm:$0xff]
        %v1534 = vld [vmem:[#allocation22 + $0x308] sm:$0xff]
        %v1535 = vld [vmem:[#allocation22 + $0x310] sm:$0xff]
        %v1536 = vld [vmem:[#allocation22 + $0x318] sm:$0xff]
        %v1537 = vld [vmem:[#allocation22 + $0x320] sm:$0xff]
        %v1538 = vld [vmem:[#allocation22 + $0x328] sm:$0xff]
        %v1539 = vld [vmem:[#allocation22 + $0x330] sm:$0xff]
        %v1540 = vld [vmem:[#allocation22 + $0x338] sm:$0xff]
        %v1541 = vld [vmem:[#allocation22 + $0x340] sm:$0xff]
        %v1542 = vld [vmem:[#allocation22 + $0x348] sm:$0xff]
        %v1543 = vld [vmem:[#allocation22 + $0x350] sm:$0xff]
        %v1544 = vld [vmem:[#allocation22 + $0x358] sm:$0xff]
        %v1545 = vld [vmem:[#allocation22 + $0x360] sm:$0xff]
        %v1546 = vld [vmem:[#allocation22 + $0x368] sm:$0xff]
        %v1547 = vld [vmem:[#allocation22 + $0x370] sm:$0xff]
        %v1548 = vld [vmem:[#allocation22 + $0x378] sm:$0xff]
        %v1549 = vld [vmem:[#allocation22 + $0x380] sm:$0xff]
        %v1550 = vld [vmem:[#allocation22 + $0x388] sm:$0xff]
        %v1551 = vld [vmem:[#allocation22 + $0x390] sm:$0xff]
        %v1552 = vld [vmem:[#allocation22 + $0x398] sm:$0xff]
        %v1553 = vld [vmem:[#allocation22 + $0x3a0] sm:$0xff]
        %v1554 = vld [vmem:[#allocation22 + $0x3a8] sm:$0xff]
        %v1555 = vld [vmem:[#allocation22 + $0x3b0] sm:$0xff]
        %v1556 = vld [vmem:[#allocation22 + $0x3b8] sm:$0xff]
        %v1557 = vld [vmem:[#allocation22 + $0x3c0] sm:$0xff]
        %v1558 = vld [vmem:[#allocation22 + $0x3c8] sm:$0xff]
        %v1559 = vld [vmem:[#allocation22 + $0x3d0] sm:$0xff]
        %v1560 = vld [vmem:[#allocation22 + $0x3d8] sm:$0xff]
        %v1561 = vld [vmem:[#allocation22 + $0x3e0] sm:$0xff]
        %v1562 = vld [vmem:[#allocation22 + $0x3e8] sm:$0xff]
        %v1563 = vld [vmem:[#allocation22 + $0x3f0] sm:$0xff]
        %v1564 = vld [vmem:[#allocation22 + $0x3f8] sm:$0xff]
        %v1693 = vunpack.c.l.b16 %v1437
        %v1694 = vunpack.c.h.b16 %v1437
        %v1695 = vunpack.c.l.b16 %v1438
        %v1696 = vunpack.c.h.b16 %v1438
        %v1697 = vunpack.c.l.b16 %v1439
        %v1698 = vunpack.c.h.b16 %v1439
        %v1699 = vunpack.c.l.b16 %v1440
        %v1700 = vunpack.c.h.b16 %v1440
        %v1701 = vunpack.c.l.b16 %v1441
        %v1702 = vunpack.c.h.b16 %v1441
        %v1703 = vunpack.c.l.b16 %v1442
        %v1704 = vunpack.c.h.b16 %v1442
        %v1705 = vunpack.c.l.b16 %v1443
        %v1706 = vunpack.c.h.b16 %v1443
        %v1707 = vunpack.c.l.b16 %v1444
        %v1708 = vunpack.c.h.b16 %v1444
        %v1709 = vunpack.c.l.b16 %v1445
        %v1710 = vunpack.c.h.b16 %v1445
        %v1711 = vunpack.c.l.b16 %v1446
        %v1712 = vunpack.c.h.b16 %v1446
        %v1713 = vunpack.c.l.b16 %v1447
        %v1714 = vunpack.c.h.b16 %v1447
        %v1715 = vunpack.c.l.b16 %v1448
        %v1716 = vunpack.c.h.b16 %v1448
        %v1717 = vunpack.c.l.b16 %v1449
        %v1718 = vunpack.c.h.b16 %v1449
        %v1719 = vunpack.c.l.b16 %v1450
        %v1720 = vunpack.c.h.b16 %v1450
        %v1721 = vunpack.c.l.b16 %v1451
        %v1722 = vunpack.c.h.b16 %v1451
        %v1723 = vunpack.c.l.b16 %v1452
        %v1724 = vunpack.c.h.b16 %v1452
        %v1725 = vunpack.c.l.b16 %v1453
        %v1726 = vunpack.c.h.b16 %v1453
        %v1727 = vunpack.c.l.b16 %v1454
        %v1728 = vunpack.c.h.b16 %v1454
        %v1729 = vunpack.c.l.b16 %v1455
        %v1730 = vunpack.c.h.b16 %v1455
        %v1731 = vunpack.c.l.b16 %v1456
        %v1732 = vunpack.c.h.b16 %v1456
        %v1733 = vunpack.c.l.b16 %v1457
        %v1734 = vunpack.c.h.b16 %v1457
        %v1735 = vunpack.c.l.b16 %v1458
        %v1736 = vunpack.c.h.b16 %v1458
        %v1737 = vunpack.c.l.b16 %v1459
        %v1738 = vunpack.c.h.b16 %v1459
        %v1739 = vunpack.c.l.b16 %v1460
        %v1740 = vunpack.c.h.b16 %v1460
        %v1741 = vunpack.c.l.b16 %v1461
        %v1742 = vunpack.c.h.b16 %v1461
        %v1743 = vunpack.c.l.b16 %v1462
        %v1744 = vunpack.c.h.b16 %v1462
        %v1745 = vunpack.c.l.b16 %v1463
        %v1746 = vunpack.c.h.b16 %v1463
        %v1747 = vunpack.c.l.b16 %v1464
        %v1748 = vunpack.c.h.b16 %v1464
        %v1749 = vunpack.c.l.b16 %v1465
        %v1750 = vunpack.c.h.b16 %v1465
        %v1751 = vunpack.c.l.b16 %v1466
        %v1752 = vunpack.c.h.b16 %v1466
        %v1753 = vunpack.c.l.b16 %v1467
        %v1754 = vunpack.c.h.b16 %v1467
        %v1755 = vunpack.c.l.b16 %v1468
        %v1756 = vunpack.c.h.b16 %v1468
        %v1757 = vunpack.c.l.b16 %v1469
        %v1758 = vunpack.c.h.b16 %v1469
        %v1759 = vunpack.c.l.b16 %v1470
        %v1760 = vunpack.c.h.b16 %v1470
        %v1761 = vunpack.c.l.b16 %v1471
        %v1762 = vunpack.c.h.b16 %v1471
        %v1763 = vunpack.c.l.b16 %v1472
        %v1764 = vunpack.c.h.b16 %v1472
        %v1765 = vunpack.c.l.b16 %v1473
        %v1766 = vunpack.c.h.b16 %v1473
        %v1767 = vunpack.c.l.b16 %v1474
        %v1768 = vunpack.c.h.b16 %v1474
        %v1769 = vunpack.c.l.b16 %v1475
        %v1770 = vunpack.c.h.b16 %v1475
        %v1771 = vunpack.c.l.b16 %v1476
        %v1772 = vunpack.c.h.b16 %v1476
        %v1773 = vunpack.c.l.b16 %v1477
        %v1774 = vunpack.c.h.b16 %v1477
        %v1775 = vunpack.c.l.b16 %v1478
        %v1776 = vunpack.c.h.b16 %v1478
        %v1777 = vunpack.c.l.b16 %v1479
        %v1778 = vunpack.c.h.b16 %v1479
        %v1779 = vunpack.c.l.b16 %v1480
        %v1780 = vunpack.c.h.b16 %v1480
        %v1781 = vunpack.c.l.b16 %v1481
        %v1782 = vunpack.c.h.b16 %v1481
        %v1783 = vunpack.c.l.b16 %v1482
        %v1784 = vunpack.c.h.b16 %v1482
        %v1785 = vunpack.c.l.b16 %v1483
        %v1786 = vunpack.c.h.b16 %v1483
        %v1787 = vunpack.c.l.b16 %v1484
        %v1788 = vunpack.c.h.b16 %v1484
        %v1789 = vunpack.c.l.b16 %v1485
        %v1790 = vunpack.c.h.b16 %v1485
        %v1791 = vunpack.c.l.b16 %v1486
        %v1792 = vunpack.c.h.b16 %v1486
        %v1793 = vunpack.c.l.b16 %v1487
        %v1794 = vunpack.c.h.b16 %v1487
        %v1795 = vunpack.c.l.b16 %v1488
        %v1796 = vunpack.c.h.b16 %v1488
        %v1797 = vunpack.c.l.b16 %v1489
        %v1798 = vunpack.c.h.b16 %v1489
        %v1799 = vunpack.c.l.b16 %v1490
        %v1800 = vunpack.c.h.b16 %v1490
        %v1801 = vunpack.c.l.b16 %v1491
        %v1802 = vunpack.c.h.b16 %v1491
        %v1803 = vunpack.c.l.b16 %v1492
        %v1804 = vunpack.c.h.b16 %v1492
        %v1805 = vunpack.c.l.b16 %v1493
        %v1806 = vunpack.c.h.b16 %v1493
        %v1807 = vunpack.c.l.b16 %v1494
        %v1808 = vunpack.c.h.b16 %v1494
        %v1809 = vunpack.c.l.b16 %v1495
        %v1810 = vunpack.c.h.b16 %v1495
        %v1811 = vunpack.c.l.b16 %v1496
        %v1812 = vunpack.c.h.b16 %v1496
        %v1813 = vunpack.c.l.b16 %v1497
        %v1814 = vunpack.c.h.b16 %v1497
        %v1815 = vunpack.c.l.b16 %v1498
        %v1816 = vunpack.c.h.b16 %v1498
        %v1817 = vunpack.c.l.b16 %v1499
        %v1818 = vunpack.c.h.b16 %v1499
        %v1819 = vunpack.c.l.b16 %v1500
        %v1820 = vunpack.c.h.b16 %v1500
        %v1821 = vunpack.c.l.b16 %v1501
        %v1822 = vunpack.c.h.b16 %v1501
        %v1823 = vunpack.c.l.b16 %v1502
        %v1824 = vunpack.c.h.b16 %v1502
        %v1825 = vunpack.c.l.b16 %v1503
        %v1826 = vunpack.c.h.b16 %v1503
        %v1827 = vunpack.c.l.b16 %v1504
        %v1828 = vunpack.c.h.b16 %v1504
        %v1829 = vunpack.c.l.b16 %v1505
        %v1830 = vunpack.c.h.b16 %v1505
        %v1831 = vunpack.c.l.b16 %v1506
        %v1832 = vunpack.c.h.b16 %v1506
        %v1833 = vunpack.c.l.b16 %v1507
        %v1834 = vunpack.c.h.b16 %v1507
        %v1835 = vunpack.c.l.b16 %v1508
        %v1836 = vunpack.c.h.b16 %v1508
        %v1837 = vunpack.c.l.b16 %v1509
        %v1838 = vunpack.c.h.b16 %v1509
        %v1839 = vunpack.c.l.b16 %v1510
        %v1840 = vunpack.c.h.b16 %v1510
        %v1841 = vunpack.c.l.b16 %v1511
        %v1842 = vunpack.c.h.b16 %v1511
        %v1843 = vunpack.c.l.b16 %v1512
        %v1844 = vunpack.c.h.b16 %v1512
        %v1845 = vunpack.c.l.b16 %v1513
        %v1846 = vunpack.c.h.b16 %v1513
        %v1847 = vunpack.c.l.b16 %v1514
        %v1848 = vunpack.c.h.b16 %v1514
        %v1849 = vunpack.c.l.b16 %v1515
        %v1850 = vunpack.c.h.b16 %v1515
        %v1851 = vunpack.c.l.b16 %v1516
        %v1852 = vunpack.c.h.b16 %v1516
        %v1853 = vunpack.c.l.b16 %v1517
        %v1854 = vunpack.c.h.b16 %v1517
        %v1855 = vunpack.c.l.b16 %v1518
        %v1856 = vunpack.c.h.b16 %v1518
        %v1857 = vunpack.c.l.b16 %v1519
        %v1858 = vunpack.c.h.b16 %v1519
        %v1859 = vunpack.c.l.b16 %v1520
        %v1860 = vunpack.c.h.b16 %v1520
        %v1861 = vunpack.c.l.b16 %v1521
        %v1862 = vunpack.c.h.b16 %v1521
        %v1863 = vunpack.c.l.b16 %v1522
        %v1864 = vunpack.c.h.b16 %v1522
        %v1865 = vunpack.c.l.b16 %v1523
        %v1866 = vunpack.c.h.b16 %v1523
        %v1867 = vunpack.c.l.b16 %v1524
        %v1868 = vunpack.c.h.b16 %v1524
        %v1869 = vunpack.c.l.b16 %v1525
        %v1870 = vunpack.c.h.b16 %v1525
        %v1871 = vunpack.c.l.b16 %v1526
        %v1872 = vunpack.c.h.b16 %v1526
        %v1873 = vunpack.c.l.b16 %v1527
        %v1874 = vunpack.c.h.b16 %v1527
        %v1875 = vunpack.c.l.b16 %v1528
        %v1876 = vunpack.c.h.b16 %v1528
        %v1877 = vunpack.c.l.b16 %v1529
        %v1878 = vunpack.c.h.b16 %v1529
        %v1879 = vunpack.c.l.b16 %v1530
        %v1880 = vunpack.c.h.b16 %v1530
        %v1881 = vunpack.c.l.b16 %v1531
        %v1882 = vunpack.c.h.b16 %v1531
        %v1883 = vunpack.c.l.b16 %v1532
        %v1884 = vunpack.c.h.b16 %v1532
        %v1885 = vunpack.c.l.b16 %v1533
        %v1886 = vunpack.c.h.b16 %v1533
        %v1887 = vunpack.c.l.b16 %v1534
        %v1888 = vunpack.c.h.b16 %v1534
        %v1889 = vunpack.c.l.b16 %v1535
        %v1890 = vunpack.c.h.b16 %v1535
        %v1891 = vunpack.c.l.b16 %v1536
        %v1892 = vunpack.c.h.b16 %v1536
        %v1893 = vunpack.c.l.b16 %v1537
        %v1894 = vunpack.c.h.b16 %v1537
        %v1895 = vunpack.c.l.b16 %v1538
        %v1896 = vunpack.c.h.b16 %v1538
        %v1897 = vunpack.c.l.b16 %v1539
        %v1898 = vunpack.c.h.b16 %v1539
        %v1899 = vunpack.c.l.b16 %v1540
        %v1900 = vunpack.c.h.b16 %v1540
        %v1901 = vunpack.c.l.b16 %v1541
        %v1902 = vunpack.c.h.b16 %v1541
        %v1903 = vunpack.c.l.b16 %v1542
        %v1904 = vunpack.c.h.b16 %v1542
        %v1905 = vunpack.c.l.b16 %v1543
        %v1906 = vunpack.c.h.b16 %v1543
        %v1907 = vunpack.c.l.b16 %v1544
        %v1908 = vunpack.c.h.b16 %v1544
        %v1909 = vunpack.c.l.b16 %v1545
        %v1910 = vunpack.c.h.b16 %v1545
        %v1911 = vunpack.c.l.b16 %v1546
        %v1912 = vunpack.c.h.b16 %v1546
        %v1913 = vunpack.c.l.b16 %v1547
        %v1914 = vunpack.c.h.b16 %v1547
        %v1915 = vunpack.c.l.b16 %v1548
        %v1916 = vunpack.c.h.b16 %v1548
        %v1917 = vunpack.c.l.b16 %v1549
        %v1918 = vunpack.c.h.b16 %v1549
        %v1919 = vunpack.c.l.b16 %v1550
        %v1920 = vunpack.c.h.b16 %v1550
        %v1921 = vunpack.c.l.b16 %v1551
        %v1922 = vunpack.c.h.b16 %v1551
        %v1923 = vunpack.c.l.b16 %v1552
        %v1924 = vunpack.c.h.b16 %v1552
        %v1925 = vunpack.c.l.b16 %v1553
        %v1926 = vunpack.c.h.b16 %v1553
        %v1927 = vunpack.c.l.b16 %v1554
        %v1928 = vunpack.c.h.b16 %v1554
        %v1929 = vunpack.c.l.b16 %v1555
        %v1930 = vunpack.c.h.b16 %v1555
        %v1931 = vunpack.c.l.b16 %v1556
        %v1932 = vunpack.c.h.b16 %v1556
        %v1933 = vunpack.c.l.b16 %v1557
        %v1934 = vunpack.c.h.b16 %v1557
        %v1935 = vunpack.c.l.b16 %v1558
        %v1936 = vunpack.c.h.b16 %v1558
        %v1937 = vunpack.c.l.b16 %v1559
        %v1938 = vunpack.c.h.b16 %v1559
        %v1939 = vunpack.c.l.b16 %v1560
        %v1940 = vunpack.c.h.b16 %v1560
        %v1941 = vunpack.c.l.b16 %v1561
        %v1942 = vunpack.c.h.b16 %v1561
        %v1943 = vunpack.c.l.b16 %v1562
        %v1944 = vunpack.c.h.b16 %v1562
        %v1945 = vunpack.c.l.b16 %v1563
        %v1946 = vunpack.c.h.b16 %v1563
        %v1947 = vunpack.c.l.b16 %v1564
        %v1948 = vunpack.c.h.b16 %v1564
        %v1949 = vpack.c.b16 %v1695, %v1693
        %v1950 = vpack.c.b16 %v1696, %v1694
        %v1951 = vpack.c.b16 %v1699, %v1697
        %v1952 = vpack.c.b16 %v1700, %v1698
        %v1953 = vpack.c.b16 %v1703, %v1701
        %v1954 = vpack.c.b16 %v1704, %v1702
        %v1955 = vpack.c.b16 %v1707, %v1705
        %v1956 = vpack.c.b16 %v1708, %v1706
        %v1957 = vpack.c.b16 %v1711, %v1709
        %v1958 = vpack.c.b16 %v1712, %v1710
        %v1959 = vpack.c.b16 %v1715, %v1713
        %v1960 = vpack.c.b16 %v1716, %v1714
        %v1961 = vpack.c.b16 %v1719, %v1717
        %v1962 = vpack.c.b16 %v1720, %v1718
        %v1963 = vpack.c.b16 %v1723, %v1721
        %v1964 = vpack.c.b16 %v1724, %v1722
        %v1965 = vpack.c.b16 %v1727, %v1725
        %v1966 = vpack.c.b16 %v1728, %v1726
        %v1967 = vpack.c.b16 %v1731, %v1729
        %v1968 = vpack.c.b16 %v1732, %v1730
        %v1969 = vpack.c.b16 %v1735, %v1733
        %v1970 = vpack.c.b16 %v1736, %v1734
        %v1971 = vpack.c.b16 %v1739, %v1737
        %v1972 = vpack.c.b16 %v1740, %v1738
        %v1973 = vpack.c.b16 %v1743, %v1741
        %v1974 = vpack.c.b16 %v1744, %v1742
        %v1975 = vpack.c.b16 %v1747, %v1745
        %v1976 = vpack.c.b16 %v1748, %v1746
        %v1977 = vpack.c.b16 %v1751, %v1749
        %v1978 = vpack.c.b16 %v1752, %v1750
        %v1979 = vpack.c.b16 %v1755, %v1753
        %v1980 = vpack.c.b16 %v1756, %v1754
        %v1981 = vpack.c.b16 %v1759, %v1757
        %v1982 = vpack.c.b16 %v1760, %v1758
        %v1983 = vpack.c.b16 %v1763, %v1761
        %v1984 = vpack.c.b16 %v1764, %v1762
        %v1985 = vpack.c.b16 %v1767, %v1765
        %v1986 = vpack.c.b16 %v1768, %v1766
        %v1987 = vpack.c.b16 %v1771, %v1769
        %v1988 = vpack.c.b16 %v1772, %v1770
        %v1989 = vpack.c.b16 %v1775, %v1773
        %v1990 = vpack.c.b16 %v1776, %v1774
        %v1991 = vpack.c.b16 %v1779, %v1777
        %v1992 = vpack.c.b16 %v1780, %v1778
        %v1993 = vpack.c.b16 %v1783, %v1781
        %v1994 = vpack.c.b16 %v1784, %v1782
        %v1995 = vpack.c.b16 %v1787, %v1785
        %v1996 = vpack.c.b16 %v1788, %v1786
        %v1997 = vpack.c.b16 %v1791, %v1789
        %v1998 = vpack.c.b16 %v1792, %v1790
        %v1999 = vpack.c.b16 %v1795, %v1793
        %v2000 = vpack.c.b16 %v1796, %v1794
        %v2001 = vpack.c.b16 %v1799, %v1797
        %v2002 = vpack.c.b16 %v1800, %v1798
        %v2003 = vpack.c.b16 %v1803, %v1801
        %v2004 = vpack.c.b16 %v1804, %v1802
        %v2005 = vpack.c.b16 %v1807, %v1805
        %v2006 = vpack.c.b16 %v1808, %v1806
        %v2007 = vpack.c.b16 %v1811, %v1809
        %v2008 = vpack.c.b16 %v1812, %v1810
        %v2009 = vpack.c.b16 %v1815, %v1813
        %v2010 = vpack.c.b16 %v1816, %v1814
        %v2011 = vpack.c.b16 %v1819, %v1817
        %v2012 = vpack.c.b16 %v1820, %v1818
        %v2013 = vpack.c.b16 %v1823, %v1821
        %v2014 = vpack.c.b16 %v1824, %v1822
        %v2015 = vpack.c.b16 %v1827, %v1825
        %v2016 = vpack.c.b16 %v1828, %v1826
        %v2017 = vpack.c.b16 %v1831, %v1829
        %v2018 = vpack.c.b16 %v1832, %v1830
        %v2019 = vpack.c.b16 %v1835, %v1833
        %v2020 = vpack.c.b16 %v1836, %v1834
        %v2021 = vpack.c.b16 %v1839, %v1837
        %v2022 = vpack.c.b16 %v1840, %v1838
        %v2023 = vpack.c.b16 %v1843, %v1841
        %v2024 = vpack.c.b16 %v1844, %v1842
        %v2025 = vpack.c.b16 %v1847, %v1845
        %v2026 = vpack.c.b16 %v1848, %v1846
        %v2027 = vpack.c.b16 %v1851, %v1849
        %v2028 = vpack.c.b16 %v1852, %v1850
        %v2029 = vpack.c.b16 %v1855, %v1853
        %v2030 = vpack.c.b16 %v1856, %v1854
        %v2031 = vpack.c.b16 %v1859, %v1857
        %v2032 = vpack.c.b16 %v1860, %v1858
        %v2033 = vpack.c.b16 %v1863, %v1861
        %v2034 = vpack.c.b16 %v1864, %v1862
        %v2035 = vpack.c.b16 %v1867, %v1865
        %v2036 = vpack.c.b16 %v1868, %v1866
        %v2037 = vpack.c.b16 %v1871, %v1869
        %v2038 = vpack.c.b16 %v1872, %v1870
        %v2039 = vpack.c.b16 %v1875, %v1873
        %v2040 = vpack.c.b16 %v1876, %v1874
        %v2041 = vpack.c.b16 %v1879, %v1877
        %v2042 = vpack.c.b16 %v1880, %v1878
        %v2043 = vpack.c.b16 %v1883, %v1881
        %v2044 = vpack.c.b16 %v1884, %v1882
        %v2045 = vpack.c.b16 %v1887, %v1885
        %v2046 = vpack.c.b16 %v1888, %v1886
        %v2047 = vpack.c.b16 %v1891, %v1889
        %v2048 = vpack.c.b16 %v1892, %v1890
        %v2049 = vpack.c.b16 %v1895, %v1893
        %v2050 = vpack.c.b16 %v1896, %v1894
        %v2051 = vpack.c.b16 %v1899, %v1897
        %v2052 = vpack.c.b16 %v1900, %v1898
        %v2053 = vpack.c.b16 %v1903, %v1901
        %v2054 = vpack.c.b16 %v1904, %v1902
        %v2055 = vpack.c.b16 %v1907, %v1905
        %v2056 = vpack.c.b16 %v1908, %v1906
        %v2057 = vpack.c.b16 %v1911, %v1909
        %v2058 = vpack.c.b16 %v1912, %v1910
        %v2059 = vpack.c.b16 %v1915, %v1913
        %v2060 = vpack.c.b16 %v1916, %v1914
        %v2061 = vpack.c.b16 %v1919, %v1917
        %v2062 = vpack.c.b16 %v1920, %v1918
        %v2063 = vpack.c.b16 %v1923, %v1921
        %v2064 = vpack.c.b16 %v1924, %v1922
        %v2065 = vpack.c.b16 %v1927, %v1925
        %v2066 = vpack.c.b16 %v1928, %v1926
        %v2067 = vpack.c.b16 %v1931, %v1929
        %v2068 = vpack.c.b16 %v1932, %v1930
        %v2069 = vpack.c.b16 %v1935, %v1933
        %v2070 = vpack.c.b16 %v1936, %v1934
        %v2071 = vpack.c.b16 %v1939, %v1937
        %v2072 = vpack.c.b16 %v1940, %v1938
        %v2073 = vpack.c.b16 %v1943, %v1941
        %v2074 = vpack.c.b16 %v1944, %v1942
        %v2075 = vpack.c.b16 %v1947, %v1945
        %v2076 = vpack.c.b16 %v1948, %v1946
        %2205 = vmatpush.bf16.msra.mxu0 %v1963
        %2206 = vmatpush.bf16.msra.mxu0 %v1961
        %2207 = vmatpush.bf16.msra.mxu0 %v1959
        %2208 = vmatpush.bf16.msra.mxu0 %v1957
        %2209 = vmatpush.bf16.msra.mxu0 %v1955
        %2210 = vmatpush.bf16.msra.mxu0 %v1953
        %2211 = vmatpush.bf16.msra.mxu0 %v1951
        %2212 = vmatpush.bf16.msra.mxu0 %v1949
        %2213 = vmatmul.bf16.gmra.mxu0 %v1429
        %v2214 = vpop.f32.mrf.mxu0
        %v2215 = vadd.f32 0.0, %v2214
        %v2216 = vpop.f32.mrf.mxu0
        %2217 = vdwg.mxu0
        %2218 = vmatpush.bf16.msra.mxu0 %v1979
        %2219 = vmatpush.bf16.msra.mxu0 %v1977
        %2220 = vmatpush.bf16.msra.mxu0 %v1975
        %2221 = vmatpush.bf16.msra.mxu0 %v1973
        %2222 = vmatpush.bf16.msra.mxu0 %v1971
        %2223 = vmatpush.bf16.msra.mxu0 %v1969
        %2224 = vmatpush.bf16.msra.mxu0 %v1967
        %2225 = vmatpush.bf16.msra.mxu0 %v1965
        %2226 = vmatmul.bf16.gmra.mxu0 %v1430
        %v2227 = vpop.f32.mrf.mxu0
        %v2228 = vadd.f32 %v2215, %v2227
        %v2229 = vpop.f32.mrf.mxu0
        %2230 = vdwg.mxu0
        %2231 = vmatpush.bf16.msra.mxu0 %v1995
        %2232 = vmatpush.bf16.msra.mxu0 %v1993
        %2233 = vmatpush.bf16.msra.mxu0 %v1991
        %2234 = vmatpush.bf16.msra.mxu0 %v1989
        %2235 = vmatpush.bf16.msra.mxu0 %v1987
        %2236 = vmatpush.bf16.msra.mxu0 %v1985
        %2237 = vmatpush.bf16.msra.mxu0 %v1983
        %2238 = vmatpush.bf16.msra.mxu0 %v1981
        %2239 = vmatmul.bf16.gmra.mxu0 %v1431
        %v2240 = vpop.f32.mrf.mxu0
        %v2241 = vadd.f32 %v2228, %v2240
        %v2242 = vpop.f32.mrf.mxu0
        %2243 = vdwg.mxu0
        %2244 = vmatpush.bf16.msra.mxu0 %v2011
        %2245 = vmatpush.bf16.msra.mxu0 %v2009
        %2246 = vmatpush.bf16.msra.mxu0 %v2007
        %2247 = vmatpush.bf16.msra.mxu0 %v2005
        %2248 = vmatpush.bf16.msra.mxu0 %v2003
        %2249 = vmatpush.bf16.msra.mxu0 %v2001
        %2250 = vmatpush.bf16.msra.mxu0 %v1999
        %2251 = vmatpush.bf16.msra.mxu0 %v1997
        %2252 = vmatmul.bf16.gmra.mxu0 %v1432
        %v2253 = vpop.f32.mrf.mxu0
        %v2254 = vadd.f32 %v2241, %v2253
        %v2255 = vpop.f32.mrf.mxu0
        %2256 = vdwg.mxu0
        %2257 = vmatpush.bf16.msra.mxu0 %v2027
        %2258 = vmatpush.bf16.msra.mxu0 %v2025
        %2259 = vmatpush.bf16.msra.mxu0 %v2023
        %2260 = vmatpush.bf16.msra.mxu0 %v2021
        %2261 = vmatpush.bf16.msra.mxu0 %v2019
        %2262 = vmatpush.bf16.msra.mxu0 %v2017
        %2263 = vmatpush.bf16.msra.mxu0 %v2015
        %2264 = vmatpush.bf16.msra.mxu0 %v2013
        %2265 = vmatmul.bf16.gmra.mxu0 %v1433
        %v2266 = vpop.f32.mrf.mxu0
        %v2267 = vadd.f32 %v2254, %v2266
        %v2268 = vpop.f32.mrf.mxu0
        %2269 = vdwg.mxu0
        %2270 = vmatpush.bf16.msra.mxu0 %v2043
        %2271 = vmatpush.bf16.msra.mxu0 %v2041
        %2272 = vmatpush.bf16.msra.mxu0 %v2039
        %2273 = vmatpush.bf16.msra.mxu0 %v2037
        %2274 = vmatpush.bf16.msra.mxu0 %v2035
        %2275 = vmatpush.bf16.msra.mxu0 %v2033
        %2276 = vmatpush.bf16.msra.mxu0 %v2031
        %2277 = vmatpush.bf16.msra.mxu0 %v2029
        %2278 = vmatmul.bf16.gmra.mxu0 %v1434
        %v2279 = vpop.f32.mrf.mxu0
        %v2280 = vadd.f32 %v2267, %v2279
        %v2281 = vpop.f32.mrf.mxu0
        %2282 = vdwg.mxu0
        %2283 = vmatpush.bf16.msra.mxu0 %v2059
        %2284 = vmatpush.bf16.msra.mxu0 %v2057
        %2285 = vmatpush.bf16.msra.mxu0 %v2055
        %2286 = vmatpush.bf16.msra.mxu0 %v2053
        %2287 = vmatpush.bf16.msra.mxu0 %v2051
        %2288 = vmatpush.bf16.msra.mxu0 %v2049
        %2289 = vmatpush.bf16.msra.mxu0 %v2047
        %2290 = vmatpush.bf16.msra.mxu0 %v2045
        %2291 = vmatmul.bf16.gmra.mxu0 %v1435
        %v2292 = vpop.f32.mrf.mxu0
        %v2293 = vadd.f32 %v2280, %v2292
        %v2294 = vpop.f32.mrf.mxu0
        %2295 = vdwg.mxu0
        %2296 = vmatpush.bf16.msra.mxu0 %v2075
        %2297 = vmatpush.bf16.msra.mxu0 %v2073
        %2298 = vmatpush.bf16.msra.mxu0 %v2071
        %2299 = vmatpush.bf16.msra.mxu0 %v2069
        %2300 = vmatpush.bf16.msra.mxu0 %v2067
        %2301 = vmatpush.bf16.msra.mxu0 %v2065
        %2302 = vmatpush.bf16.msra.mxu0 %v2063
        %2303 = vmatpush.bf16.msra.mxu0 %v2061
        %2304 = vmatmul.bf16.gmra.mxu0 %v1436
        %v2305 = vpop.f32.mrf.mxu0
        %v2306 = vadd.f32 %v2293, %v2305
        %v2307 = vpop.f32.mrf.mxu0
        %2308 = vdwg.mxu0
        %2309 = vmatpush.bf16.msra.mxu0 %v1964
        %2310 = vmatpush.bf16.msra.mxu0 %v1962
        %2311 = vmatpush.bf16.msra.mxu0 %v1960
        %2312 = vmatpush.bf16.msra.mxu0 %v1958
        %2313 = vmatpush.bf16.msra.mxu0 %v1956
        %2314 = vmatpush.bf16.msra.mxu0 %v1954
        %2315 = vmatpush.bf16.msra.mxu0 %v1952
        %2316 = vmatpush.bf16.msra.mxu0 %v1950
        %2317 = vmatmul.bf16.gmra.mxu0 %v1429
        %v2318 = vpop.f32.mrf.mxu0
        %v2319 = vadd.f32 0.0, %v2318
        %v2320 = vpop.f32.mrf.mxu0
        %2321 = vdwg.mxu0
        %2322 = vmatpush.bf16.msra.mxu0 %v1980
        %2323 = vmatpush.bf16.msra.mxu0 %v1978
        %2324 = vmatpush.bf16.msra.mxu0 %v1976
        %2325 = vmatpush.bf16.msra.mxu0 %v1974
        %2326 = vmatpush.bf16.msra.mxu0 %v1972
        %2327 = vmatpush.bf16.msra.mxu0 %v1970
        %2328 = vmatpush.bf16.msra.mxu0 %v1968
        %2329 = vmatpush.bf16.msra.mxu0 %v1966
        %2330 = vmatmul.bf16.gmra.mxu0 %v1430
        %v2331 = vpop.f32.mrf.mxu0
        %v2332 = vadd.f32 %v2319, %v2331
        %v2333 = vpop.f32.mrf.mxu0
        %2334 = vdwg.mxu0
        %2335 = vmatpush.bf16.msra.mxu0 %v1996
        %2336 = vmatpush.bf16.msra.mxu0 %v1994
        %2337 = vmatpush.bf16.msra.mxu0 %v1992
        %2338 = vmatpush.bf16.msra.mxu0 %v1990
        %2339 = vmatpush.bf16.msra.mxu0 %v1988
        %2340 = vmatpush.bf16.msra.mxu0 %v1986
        %2341 = vmatpush.bf16.msra.mxu0 %v1984
        %2342 = vmatpush.bf16.msra.mxu0 %v1982
        %2343 = vmatmul.bf16.gmra.mxu0 %v1431
        %v2344 = vpop.f32.mrf.mxu0
        %v2345 = vadd.f32 %v2332, %v2344
        %v2346 = vpop.f32.mrf.mxu0
        %2347 = vdwg.mxu0
        %2348 = vmatpush.bf16.msra.mxu0 %v2012
        %2349 = vmatpush.bf16.msra.mxu0 %v2010
        %2350 = vmatpush.bf16.msra.mxu0 %v2008
        %2351 = vmatpush.bf16.msra.mxu0 %v2006
        %2352 = vmatpush.bf16.msra.mxu0 %v2004
        %2353 = vmatpush.bf16.msra.mxu0 %v2002
        %2354 = vmatpush.bf16.msra.mxu0 %v2000
        %2355 = vmatpush.bf16.msra.mxu0 %v1998
        %2356 = vmatmul.bf16.gmra.mxu0 %v1432
        %v2357 = vpop.f32.mrf.mxu0
        %v2358 = vadd.f32 %v2345, %v2357
        %v2359 = vpop.f32.mrf.mxu0
        %2360 = vdwg.mxu0
        %2361 = vmatpush.bf16.msra.mxu0 %v2028
        %2362 = vmatpush.bf16.msra.mxu0 %v2026
        %2363 = vmatpush.bf16.msra.mxu0 %v2024
        %2364 = vmatpush.bf16.msra.mxu0 %v2022
        %2365 = vmatpush.bf16.msra.mxu0 %v2020
        %2366 = vmatpush.bf16.msra.mxu0 %v2018
        %2367 = vmatpush.bf16.msra.mxu0 %v2016
        %2368 = vmatpush.bf16.msra.mxu0 %v2014
        %2369 = vmatmul.bf16.gmra.mxu0 %v1433
        %v2370 = vpop.f32.mrf.mxu0
        %v2371 = vadd.f32 %v2358, %v2370
        %v2372 = vpop.f32.mrf.mxu0
        %2373 = vdwg.mxu0
        %2374 = vmatpush.bf16.msra.mxu0 %v2044
        %2375 = vmatpush.bf16.msra.mxu0 %v2042
        %2376 = vmatpush.bf16.msra.mxu0 %v2040
        %2377 = vmatpush.bf16.msra.mxu0 %v2038
        %2378 = vmatpush.bf16.msra.mxu0 %v2036
        %2379 = vmatpush.bf16.msra.mxu0 %v2034
        %2380 = vmatpush.bf16.msra.mxu0 %v2032
        %2381 = vmatpush.bf16.msra.mxu0 %v2030
        %2382 = vmatmul.bf16.gmra.mxu0 %v1434
        %v2383 = vpop.f32.mrf.mxu0
        %v2384 = vadd.f32 %v2371, %v2383
        %v2385 = vpop.f32.mrf.mxu0
        %2386 = vdwg.mxu0
        %2387 = vmatpush.bf16.msra.mxu0 %v2060
        %2388 = vmatpush.bf16.msra.mxu0 %v2058
        %2389 = vmatpush.bf16.msra.mxu0 %v2056
        %2390 = vmatpush.bf16.msra.mxu0 %v2054
        %2391 = vmatpush.bf16.msra.mxu0 %v2052
        %2392 = vmatpush.bf16.msra.mxu0 %v2050
        %2393 = vmatpush.bf16.msra.mxu0 %v2048
        %2394 = vmatpush.bf16.msra.mxu0 %v2046
        %2395 = vmatmul.bf16.gmra.mxu0 %v1435
        %v2396 = vpop.f32.mrf.mxu0
        %v2397 = vadd.f32 %v2384, %v2396
        %v2398 = vpop.f32.mrf.mxu0
        %2399 = vdwg.mxu0
        %2400 = vmatpush.bf16.msra.mxu0 %v2076
        %2401 = vmatpush.bf16.msra.mxu0 %v2074
        %2402 = vmatpush.bf16.msra.mxu0 %v2072
        %2403 = vmatpush.bf16.msra.mxu0 %v2070
        %2404 = vmatpush.bf16.msra.mxu0 %v2068
        %2405 = vmatpush.bf16.msra.mxu0 %v2066
        %2406 = vmatpush.bf16.msra.mxu0 %v2064
        %2407 = vmatpush.bf16.msra.mxu0 %v2062
        %2408 = vmatmul.bf16.gmra.mxu0 %v1436
        %v2409 = vpop.f32.mrf.mxu0
        %v2410 = vadd.f32 %v2397, %v2409
        %v2411 = vpop.f32.mrf.mxu0
        %2412 = vdwg.mxu0
        %vm2413 = vcmask 52224
        %2414 = vst.msk [vmem:[#allocation4] sm:$0xf] %vm2413, 0
        %vm2415 = vcmask 109624
        %2416 = vst.msk [vmem:[#allocation4 + $0x8] sm:$0xf] %vm2415, 0
        %v2417 = vpack.c.bf16 %v2410, %v2306
        %2419 = vrot.lane.b32.xlu0 %v2417, 7
        %v2420 = vpop.permute.xlu0 %2419
        %v2421 = vrot.slane %v2420, 4
        %vm2422 = vcmask 56320
        %v2423 = vsel %vm2422, %v2421, %v2420
        %vm2426 = vcmask 1043512
        %vm2427 = vcmask 1047556
        %vm2428 = vmor %vm2427, %vm2426
        %2429 = vst.msk [vmem:[#allocation4] sm:$0xff] %vm2428, %v2423
        %2430 = vst.msk [vmem:[#allocation4 + $0x8] sm:$0xf] %vm2413, %v2421
        %v2431 = vld [vmem:[#allocation4] sm:$0xff]
        %v2432 = vld [vmem:[#allocation4 + $0x8] sm:$0xf]
        %2433 = vst [vmem:[#allocation5] sm:$0xff] %v2431
        %2436 = vrot.lane.b32.xlu0 %v2431, 127
        %v2437 = vpop.permute.xlu0 %2436
        %2438 = vrot.lane.b32.xlu0 %v2432, 127
        %v2439 = vpop.permute.xlu0 %2438
        %v2440 = vrot.slane %v2437, 4
        %v2441 = vrot.slane %v2439, 4
        %vm2442 = vcmask 1043456
        %v2443 = vsel %vm2442, %v2440, %v2441
        %vm2444 = vcmask 1039360
        %v2445 = vsel %vm2444, %v2437, %v2443
        %2447 = vst [vmem:[#allocation5 + $0x8] sm:$0xff] %v2445
        %2448 = vrot.lane.b32.xlu0 %v2431, 126
        %v2449 = vpop.permute.xlu0 %2448
        %2450 = vrot.lane.b32.xlu0 %v2432, 126
        %v2451 = vpop.permute.xlu0 %2450
        %v2452 = vrot.slane %v2449, 4
        %v2453 = vrot.slane %v2451, 4
        %v2454 = vsel %vm2442, %v2452, %v2453
        %vm2455 = vcmask 1031168
        %v2456 = vsel %vm2455, %v2449, %v2454
        %2458 = vst [vmem:[#allocation5 + $0x10] sm:$0xff] %v2456
        %2459 = vrot.lane.b32.xlu0 %v2431, 125
        %v2460 = vpop.permute.xlu0 %2459
        %2461 = vrot.lane.b32.xlu0 %v2432, 125
        %v2462 = vpop.permute.xlu0 %2461
        %v2463 = vrot.slane %v2460, 4
        %v2464 = vrot.slane %v2462, 4
        %v2465 = vsel %vm2442, %v2463, %v2464
        %vm2466 = vcmask 1022976
        %v2467 = vsel %vm2466, %v2460, %v2465
        %2469 = vst [vmem:[#allocation5 + $0x18] sm:$0xff] %v2467
        %2470 = vrot.lane.b32.xlu0 %v2431, 124
        %v2471 = vpop.permute.xlu0 %2470
        %2472 = vrot.lane.b32.xlu0 %v2432, 124
        %v2473 = vpop.permute.xlu0 %2472
        %v2474 = vrot.slane %v2471, 4
        %v2475 = vrot.slane %v2473, 4
        %v2476 = vsel %vm2442, %v2474, %v2475
        %vm2477 = vcmask 1014784
        %v2478 = vsel %vm2477, %v2471, %v2476
        %2480 = vst [vmem:[#allocation5 + $0x20] sm:$0xff] %v2478
        %2481 = vrot.lane.b32.xlu0 %v2431, 123
        %v2482 = vpop.permute.xlu0 %2481
        %2483 = vrot.lane.b32.xlu0 %v2432, 123
        %v2484 = vpop.permute.xlu0 %2483
        %v2485 = vrot.slane %v2482, 4
        %v2486 = vrot.slane %v2484, 4
        %v2487 = vsel %vm2442, %v2485, %v2486
        %vm2488 = vcmask 1006592
        %v2489 = vsel %vm2488, %v2482, %v2487
        %2491 = vst [vmem:[#allocation5 + $0x28] sm:$0xff] %v2489
        %2492 = vrot.lane.b32.xlu0 %v2431, 122
        %v2493 = vpop.permute.xlu0 %2492
        %2494 = vrot.lane.b32.xlu0 %v2432, 122
        %v2495 = vpop.permute.xlu0 %2494
        %v2496 = vrot.slane %v2493, 4
        %v2497 = vrot.slane %v2495, 4
        %v2498 = vsel %vm2442, %v2496, %v2497
        %vm2499 = vcmask 998400
        %v2500 = vsel %vm2499, %v2493, %v2498
        %2502 = vst [vmem:[#allocation5 + $0x30] sm:$0xff] %v2500
        %2503 = vrot.lane.b32.xlu0 %v2431, 121
        %v2504 = vpop.permute.xlu0 %2503
        %2505 = vrot.lane.b32.xlu0 %v2432, 121
        %v2506 = vpop.permute.xlu0 %2505
        %v2507 = vrot.slane %v2504, 4
        %v2508 = vrot.slane %v2506, 4
        %v2509 = vsel %vm2442, %v2507, %v2508
        %vm2510 = vcmask 990208
        %v2511 = vsel %vm2510, %v2504, %v2509
        %2513 = vst [vmem:[#allocation5 + $0x38] sm:$0xff] %v2511
        %2514 = vrot.lane.b32.xlu0 %v2431, 120
        %v2515 = vpop.permute.xlu0 %2514
        %2516 = vrot.lane.b32.xlu0 %v2432, 120
        %v2517 = vpop.permute.xlu0 %2516
        %v2518 = vrot.slane %v2515, 4
        %v2519 = vrot.slane %v2517, 4
        %v2520 = vsel %vm2442, %v2518, %v2519
        %vm2521 = vcmask 982016
        %v2522 = vsel %vm2521, %v2515, %v2520
        %2524 = vst [vmem:[#allocation5 + $0x40] sm:$0xff] %v2522
        %2525 = vrot.lane.b32.xlu0 %v2431, 119
        %v2526 = vpop.permute.xlu0 %2525
        %2527 = vrot.lane.b32.xlu0 %v2432, 119
        %v2528 = vpop.permute.xlu0 %2527
        %v2529 = vrot.slane %v2526, 4
        %v2530 = vrot.slane %v2528, 4
        %v2531 = vsel %vm2442, %v2529, %v2530
        %vm2532 = vcmask 973824
        %v2533 = vsel %vm2532, %v2526, %v2531
        %2535 = vst [vmem:[#allocation5 + $0x48] sm:$0xff] %v2533
        %2536 = vrot.lane.b32.xlu0 %v2431, 118
        %v2537 = vpop.permute.xlu0 %2536
        %2538 = vrot.lane.b32.xlu0 %v2432, 118
        %v2539 = vpop.permute.xlu0 %2538
        %v2540 = vrot.slane %v2537, 4
        %v2541 = vrot.slane %v2539, 4
        %v2542 = vsel %vm2442, %v2540, %v2541
        %vm2543 = vcmask 965632
        %v2544 = vsel %vm2543, %v2537, %v2542
        %2546 = vst [vmem:[#allocation5 + $0x50] sm:$0xff] %v2544
        %2547 = vrot.lane.b32.xlu0 %v2431, 117
        %v2548 = vpop.permute.xlu0 %2547
        %2549 = vrot.lane.b32.xlu0 %v2432, 117
        %v2550 = vpop.permute.xlu0 %2549
        %v2551 = vrot.slane %v2548, 4
        %v2552 = vrot.slane %v2550, 4
        %v2553 = vsel %vm2442, %v2551, %v2552
        %vm2554 = vcmask 957440
        %v2555 = vsel %vm2554, %v2548, %v2553
        %2557 = vst [vmem:[#allocation5 + $0x58] sm:$0xff] %v2555
        %2558 = vrot.lane.b32.xlu0 %v2431, 116
        %v2559 = vpop.permute.xlu0 %2558
        %2560 = vrot.lane.b32.xlu0 %v2432, 116
        %v2561 = vpop.permute.xlu0 %2560
        %v2562 = vrot.slane %v2559, 4
        %v2563 = vrot.slane %v2561, 4
        %v2564 = vsel %vm2442, %v2562, %v2563
        %vm2565 = vcmask 949248
        %v2566 = vsel %vm2565, %v2559, %v2564
        %2568 = vst [vmem:[#allocation5 + $0x60] sm:$0xff] %v2566
        %2569 = vrot.lane.b32.xlu0 %v2431, 115
        %v2570 = vpop.permute.xlu0 %2569
        %2571 = vrot.lane.b32.xlu0 %v2432, 115
        %v2572 = vpop.permute.xlu0 %2571
        %v2573 = vrot.slane %v2570, 4
        %v2574 = vrot.slane %v2572, 4
        %v2575 = vsel %vm2442, %v2573, %v2574
        %vm2576 = vcmask 941056
        %v2577 = vsel %vm2576, %v2570, %v2575
        %2579 = vst [vmem:[#allocation5 + $0x68] sm:$0xff] %v2577
        %2580 = vrot.lane.b32.xlu0 %v2431, 114
        %v2581 = vpop.permute.xlu0 %2580
        %2582 = vrot.lane.b32.xlu0 %v2432, 114
        %v2583 = vpop.permute.xlu0 %2582
        %v2584 = vrot.slane %v2581, 4
        %v2585 = vrot.slane %v2583, 4
        %v2586 = vsel %vm2442, %v2584, %v2585
        %vm2587 = vcmask 932864
        %v2588 = vsel %vm2587, %v2581, %v2586
        %2590 = vst [vmem:[#allocation5 + $0x70] sm:$0xff] %v2588
        %v2591 = vld [vmem:[%s7] sm:$0xf]
        %v2592 = vld [vmem:[%s7 + $0x4] sm:$0xf]
        %v2593 = vld [vmem:[#allocation5] sm:$0xff]
        %v2594 = vld [vmem:[#allocation5 + $0x8] sm:$0xff]
        %v2595 = vld [vmem:[#allocation5 + $0x10] sm:$0xff]
        %v2596 = vld [vmem:[#allocation5 + $0x18] sm:$0xff]
        %v2597 = vld [vmem:[#allocation5 + $0x20] sm:$0xff]
        %v2598 = vld [vmem:[#allocation5 + $0x28] sm:$0xff]
        %v2599 = vld [vmem:[#allocation5 + $0x30] sm:$0xff]
        %v2600 = vld [vmem:[#allocation5 + $0x38] sm:$0xff]
        %v2601 = vld [vmem:[#allocation5 + $0x40] sm:$0xff]
        %v2602 = vld [vmem:[#allocation5 + $0x48] sm:$0xff]
        %v2603 = vld [vmem:[#allocation5 + $0x50] sm:$0xff]
        %v2604 = vld [vmem:[#allocation5 + $0x58] sm:$0xff]
        %v2605 = vld [vmem:[#allocation5 + $0x60] sm:$0xff]
        %v2606 = vld [vmem:[#allocation5 + $0x68] sm:$0xff]
        %v2607 = vld [vmem:[#allocation5 + $0x70] sm:$0xff]
        %v2608 = vld [vmem:[%s9] sm:$0xff]
        %v2609 = vld [vmem:[%s9 + $0x8] sm:$0xff]
        %2611 = vset.pattern.permute.xlu0 0
        %2612 = vperm.xlu0 %2611, %v2608
        %v2613 = vpop.permute.xlu0 %2612
        %2616 = vset.pattern.permute.xlu0 0
        %2617 = vperm.xlu0 %2616, %v2609
        %v2618 = vpop.permute.xlu0 %2617
        %v2622 = vunpack.c.l.b16 %v2591
        %v2623 = vunpack.c.l.b16 %v2592
        %v2624 = vpack.c.b16 %v2623, %v2622
        %v2640 = vunpack.c.l.b16 %v2593
        %v2641 = vunpack.c.h.b16 %v2593
        %v2642 = vunpack.c.l.b16 %v2594
        %v2643 = vunpack.c.h.b16 %v2594
        %v2644 = vunpack.c.l.b16 %v2595
        %v2645 = vunpack.c.h.b16 %v2595
        %v2646 = vunpack.c.l.b16 %v2596
        %v2647 = vunpack.c.h.b16 %v2596
        %v2648 = vunpack.c.l.b16 %v2597
        %v2649 = vunpack.c.h.b16 %v2597
        %v2650 = vunpack.c.l.b16 %v2598
        %v2651 = vunpack.c.h.b16 %v2598
        %v2652 = vunpack.c.l.b16 %v2599
        %v2653 = vunpack.c.h.b16 %v2599
        %v2654 = vunpack.c.l.b16 %v2600
        %v2655 = vunpack.c.h.b16 %v2600
        %v2656 = vunpack.c.l.b16 %v2601
        %v2657 = vunpack.c.h.b16 %v2601
        %v2658 = vunpack.c.l.b16 %v2602
        %v2659 = vunpack.c.h.b16 %v2602
        %v2660 = vunpack.c.l.b16 %v2603
        %v2661 = vunpack.c.h.b16 %v2603
        %v2662 = vunpack.c.l.b16 %v2604
        %v2663 = vunpack.c.h.b16 %v2604
        %v2664 = vunpack.c.l.b16 %v2605
        %v2665 = vunpack.c.h.b16 %v2605
        %v2666 = vunpack.c.l.b16 %v2606
        %v2667 = vunpack.c.h.b16 %v2606
        %v2668 = vunpack.c.l.b16 %v2607
        %v2669 = vunpack.c.h.b16 %v2607
        %v2670 = vpack.c.b16 %v2642, %v2640
        %v2671 = vpack.c.b16 %v2643, %v2641
        %v2672 = vpack.c.b16 %v2646, %v2644
        %v2673 = vpack.c.b16 %v2647, %v2645
        %v2674 = vpack.c.b16 %v2650, %v2648
        %v2675 = vpack.c.b16 %v2651, %v2649
        %v2676 = vpack.c.b16 %v2654, %v2652
        %v2677 = vpack.c.b16 %v2655, %v2653
        %v2678 = vpack.c.b16 %v2658, %v2656
        %v2679 = vpack.c.b16 %v2659, %v2657
        %v2680 = vpack.c.b16 %v2662, %v2660
        %v2681 = vpack.c.b16 %v2663, %v2661
        %v2682 = vpack.c.b16 %v2666, %v2664
        %v2683 = vpack.c.b16 %v2667, %v2665
        %v2684 = vpack.c.b16 %v2668, %v2668
        %v2685 = vpack.c.b16 %v2669, %v2669
        %v2701 = vsel %vm1174, %v2624, 0
        %vm2703 = vcmask 1043456
        %v2705 = vsel %vm2703, %v2684, 0
        %v2708 = vsel %vm2703, %v2685, 0
        %2710 = vmatpush.bf16.msra.mxu0 %v2705
        %2711 = vmatpush.bf16.msra.mxu0 %v2682
        %2712 = vmatpush.bf16.msra.mxu0 %v2680
        %2713 = vmatpush.bf16.msra.mxu0 %v2678
        %2714 = vmatpush.bf16.msra.mxu0 %v2676
        %2715 = vmatpush.bf16.msra.mxu0 %v2674
        %2716 = vmatpush.bf16.msra.mxu0 %v2672
        %2717 = vmatpush.bf16.msra.mxu0 %v2670
        %2718 = vmatmul.bf16.gmra.mxu0 %v2701
        %v2719 = vpop.f32.mrf.mxu0
        %v2720 = vadd.f32 %v2613, %v2719
        %v2721 = vpop.f32.mrf.mxu0
        %v2722 = vadd.f32 %v2618, %v2721
        %2723 = vdwg.mxu0
        %2724 = vmatpush.bf16.msra.mxu0 %v2708
        %2725 = vmatpush.bf16.msra.mxu0 %v2683
        %2726 = vmatpush.bf16.msra.mxu0 %v2681
        %2727 = vmatpush.bf16.msra.mxu0 %v2679
        %2728 = vmatpush.bf16.msra.mxu0 %v2677
        %2729 = vmatpush.bf16.msra.mxu0 %v2675
        %2730 = vmatpush.bf16.msra.mxu0 %v2673
        %2731 = vmatpush.bf16.msra.mxu0 %v2671
        %2732 = vmatmul.bf16.gmra.mxu0 %v2701
        %v2733 = vpop.f32.mrf.mxu0
        %v2734 = vadd.f32 %v2613, %v2733
        %v2735 = vpop.f32.mrf.mxu0
        %v2736 = vadd.f32 %v2618, %v2735
        %2737 = vdwg.mxu0
        %vm2738 = vcmp.ge.f32.partialorder %v2720, 0.0
        %vm2739 = vcmp.ge.f32.partialorder %v2734, 0.0
        %vm2740 = vcmp.ge.f32.partialorder %v2722, 0.0
        %vm2741 = vcmp.ge.f32.partialorder %v2736, 0.0
        %v2742 = vmul.f32 %v2720, 0.2
        %v2743 = vmul.f32 %v2734, 0.2
        %v2744 = vmul.f32 %v2722, 0.2
        %v2745 = vmul.f32 %v2736, 0.2
        %v2746 = vsel %vm2738, %v2720, %v2742
        %v2747 = vsel %vm2739, %v2734, %v2743
        %v2748 = vsel %vm2740, %v2722, %v2744
        %v2749 = vsel %vm2741, %v2736, %v2745
        %v2750 = vpack.c.bf16 %v2748, %v2746
        %v2751 = vpack.c.bf16 %v2749, %v2747
        %v2752 = vld [vmem:[%s53] sm:$0xf]
        %v2753 = vld [vmem:[%s53 + $0x4] sm:$0xf]
        %v2754 = vld [vmem:[%s53 + $0x8] sm:$0xf]
        %v2755 = vld [vmem:[%s53 + $0xc] sm:$0xf]
        %v2756 = vld [vmem:[%s53 + $0x10] sm:$0xf]
        %v2757 = vld [vmem:[%s53 + $0x14] sm:$0xf]
        %v2758 = vld [vmem:[%s53 + $0x18] sm:$0xf]
        %v2759 = vld [vmem:[%s53 + $0x1c] sm:$0xf]
        %v2760 = vld [vmem:[%s53 + $0x20] sm:$0xf]
        %v2761 = vld [vmem:[%s53 + $0x24] sm:$0xf]
        %v2762 = vld [vmem:[%s53 + $0x28] sm:$0xf]
        %v2763 = vld [vmem:[%s53 + $0x2c] sm:$0xf]
        %v2764 = vld [vmem:[%s53 + $0x30] sm:$0xf]
        %v2765 = vld [vmem:[%s53 + $0x34] sm:$0xf]
        %v2766 = vld [vmem:[%s53 + $0x38] sm:$0xf]
        %v2767 = vld [vmem:[%s53 + $0x3c] sm:$0xf]
        %v2768 = vld [vmem:[%s53 + $0x40] sm:$0xf]
        %v2769 = vld [vmem:[%s53 + $0x44] sm:$0xf]
        %v2770 = vld [vmem:[%s53 + $0x48] sm:$0xf]
        %v2771 = vld [vmem:[%s53 + $0x4c] sm:$0xf]
        %v2772 = vld [vmem:[%s53 + $0x50] sm:$0xf]
        %v2773 = vld [vmem:[%s53 + $0x54] sm:$0xf]
        %v2774 = vld [vmem:[%s53 + $0x58] sm:$0xf]
        %v2775 = vld [vmem:[%s53 + $0x5c] sm:$0xf]
        %v2776 = vld [vmem:[%s53 + $0x60] sm:$0xf]
        %v2777 = vld [vmem:[%s53 + $0x64] sm:$0xf]
        %v2778 = vld [vmem:[%s53 + $0x68] sm:$0xf]
        %v2779 = vld [vmem:[%s53 + $0x6c] sm:$0xf]
        %v2780 = vld [vmem:[%s53 + $0x70] sm:$0xf]
        %v2781 = vld [vmem:[%s53 + $0x74] sm:$0xf]
        %v2782 = vld [vmem:[%s53 + $0x78] sm:$0xf]
        %v2783 = vld [vmem:[%s53 + $0x7c] sm:$0xf]
        %v2816 = vunpack.c.l.b16 %v2752
        %v2817 = vunpack.c.l.b16 %v2753
        %v2818 = vunpack.c.l.b16 %v2754
        %v2819 = vunpack.c.l.b16 %v2755
        %v2820 = vunpack.c.l.b16 %v2756
        %v2821 = vunpack.c.l.b16 %v2757
        %v2822 = vunpack.c.l.b16 %v2758
        %v2823 = vunpack.c.l.b16 %v2759
        %v2824 = vunpack.c.l.b16 %v2760
        %v2825 = vunpack.c.l.b16 %v2761
        %v2826 = vunpack.c.l.b16 %v2762
        %v2827 = vunpack.c.l.b16 %v2763
        %v2828 = vunpack.c.l.b16 %v2764
        %v2829 = vunpack.c.l.b16 %v2765
        %v2830 = vunpack.c.l.b16 %v2766
        %v2831 = vunpack.c.l.b16 %v2767
        %v2832 = vunpack.c.l.b16 %v2768
        %v2833 = vunpack.c.l.b16 %v2769
        %v2834 = vunpack.c.l.b16 %v2770
        %v2835 = vunpack.c.l.b16 %v2771
        %v2836 = vunpack.c.l.b16 %v2772
        %v2837 = vunpack.c.l.b16 %v2773
        %v2838 = vunpack.c.l.b16 %v2774
        %v2839 = vunpack.c.l.b16 %v2775
        %v2840 = vunpack.c.l.b16 %v2776
        %v2841 = vunpack.c.l.b16 %v2777
        %v2842 = vunpack.c.l.b16 %v2778
        %v2843 = vunpack.c.l.b16 %v2779
        %v2844 = vunpack.c.l.b16 %v2780
        %v2845 = vunpack.c.l.b16 %v2781
        %v2846 = vunpack.c.l.b16 %v2782
        %v2847 = vunpack.c.l.b16 %v2783
        %v2848 = vpack.c.b16 %v2817, %v2816
        %v2849 = vpack.c.b16 %v2819, %v2818
        %v2850 = vpack.c.b16 %v2821, %v2820
        %v2851 = vpack.c.b16 %v2823, %v2822
        %v2852 = vpack.c.b16 %v2825, %v2824
        %v2853 = vpack.c.b16 %v2827, %v2826
        %v2854 = vpack.c.b16 %v2829, %v2828
        %v2855 = vpack.c.b16 %v2831, %v2830
        %v2856 = vpack.c.b16 %v2833, %v2832
        %v2857 = vpack.c.b16 %v2835, %v2834
        %v2858 = vpack.c.b16 %v2837, %v2836
        %v2859 = vpack.c.b16 %v2839, %v2838
        %v2860 = vpack.c.b16 %v2841, %v2840
        %v2861 = vpack.c.b16 %v2843, %v2842
        %v2862 = vpack.c.b16 %v2845, %v2844
        %v2863 = vpack.c.b16 %v2847, %v2846
        %2880 = vmatpush.bf16.msra.mxu0 %v2855
        %2881 = vmatpush.bf16.msra.mxu0 %v2854
        %2882 = vmatpush.bf16.msra.mxu0 %v2853
        %2883 = vmatpush.bf16.msra.mxu0 %v2852
        %2884 = vmatpush.bf16.msra.mxu0 %v2851
        %2885 = vmatpush.bf16.msra.mxu0 %v2850
        %2886 = vmatpush.bf16.msra.mxu0 %v2849
        %2887 = vmatpush.bf16.msra.mxu0 %v2848
        %2888 = vmatmul.bf16.gmra.mxu0 %v2750
        %v2889 = vpop.f32.mrf.mxu0
        %v2890 = vadd.f32 0.0, %v2889
        %v2891 = vpop.f32.mrf.mxu0
        %v2892 = vadd.f32 0.0, %v2891
        %2893 = vdwg.mxu0
        %2894 = vmatpush.bf16.msra.mxu0 %v2863
        %2895 = vmatpush.bf16.msra.mxu0 %v2862
        %2896 = vmatpush.bf16.msra.mxu0 %v2861
        %2897 = vmatpush.bf16.msra.mxu0 %v2860
        %2898 = vmatpush.bf16.msra.mxu0 %v2859
        %2899 = vmatpush.bf16.msra.mxu0 %v2858
        %2900 = vmatpush.bf16.msra.mxu0 %v2857
        %2901 = vmatpush.bf16.msra.mxu0 %v2856
        %2902 = vmatmul.bf16.gmra.mxu0 %v2751
        %v2903 = vpop.f32.mrf.mxu0
        %v2904 = vadd.f32 %v2890, %v2903
        %v2905 = vpop.f32.mrf.mxu0
        %v2906 = vadd.f32 %v2892, %v2905
        %2907 = vdwg.mxu0
        %2908 = vst.msk [vmem:[#allocation6] sm:$0xf] %vm2413, 0
        %2909 = vst.msk [vmem:[#allocation6 + $0x4] sm:$0xf] %vm2413, 0
        %vm2910 = vcmask 634424
        %2911 = vst.msk [vmem:[#allocation6] sm:$0xf] %vm2910, 0
        %2912 = vst.msk [vmem:[#allocation6 + $0x4] sm:$0xf] %vm2910, 0
        %v2913 = vpack.c.bf16 %v2904, %v2904
        %v2914 = vpack.c.bf16 %v2906, %v2906
        %2917 = vrot.lane.b32.xlu0 %v2913, 7
        %v2918 = vpop.permute.xlu0 %2917
        %2919 = vrot.lane.b32.xlu0 %v2914, 7
        %v2920 = vpop.permute.xlu0 %2919
        %vm2923 = vcmask 576568
        %2924 = vst.msk [vmem:[#allocation6] sm:$0xf] %vm2923, %v2918
        %2925 = vst.msk [vmem:[#allocation6 + $0x4] sm:$0xf] %vm2923, %v2920
        %v2926 = vld [vmem:[#allocation6] sm:$0xf]
        %v2927 = vld [vmem:[#allocation6 + $0x4] sm:$0xf]
        %vm2928 = vcmask 519168
        %2929 = vst.msk [vmem:[#allocation7] sm:$0xf] %vm2928, %v2926
        %2930 = vst.msk [vmem:[#allocation7 + $0x4] sm:$0xf] %vm2928, %v2927
        %2933 = vrot.lane.b32.xlu0 %v2926, 127
        %v2934 = vpop.permute.xlu0 %2933
        %2935 = vrot.lane.b32.xlu0 %v2927, 127
        %v2936 = vpop.permute.xlu0 %2935
        %2939 = vst.msk [vmem:[#allocation7 + $0x8] sm:$0xf] %vm2928, %v2934
        %2940 = vst.msk [vmem:[#allocation7 + $0xc] sm:$0xf] %vm2928, %v2936
        %2941 = vrot.lane.b32.xlu0 %v2926, 126
        %v2942 = vpop.permute.xlu0 %2941
        %2943 = vrot.lane.b32.xlu0 %v2927, 126
        %v2944 = vpop.permute.xlu0 %2943
        %2947 = vst.msk [vmem:[#allocation7 + $0x10] sm:$0xf] %vm2928, %v2942
        %2948 = vst.msk [vmem:[#allocation7 + $0x14] sm:$0xf] %vm2928, %v2944
        %2949 = vrot.lane.b32.xlu0 %v2926, 125
        %v2950 = vpop.permute.xlu0 %2949
        %2951 = vrot.lane.b32.xlu0 %v2927, 125
        %v2952 = vpop.permute.xlu0 %2951
        %2955 = vst.msk [vmem:[#allocation7 + $0x18] sm:$0xf] %vm2928, %v2950
        %2956 = vst.msk [vmem:[#allocation7 + $0x1c] sm:$0xf] %vm2928, %v2952
        %2957 = vrot.lane.b32.xlu0 %v2926, 124
        %v2958 = vpop.permute.xlu0 %2957
        %2959 = vrot.lane.b32.xlu0 %v2927, 124
        %v2960 = vpop.permute.xlu0 %2959
        %2963 = vst.msk [vmem:[#allocation7 + $0x20] sm:$0xf] %vm2928, %v2958
        %2964 = vst.msk [vmem:[#allocation7 + $0x24] sm:$0xf] %vm2928, %v2960
        %2965 = vrot.lane.b32.xlu0 %v2926, 123
        %v2966 = vpop.permute.xlu0 %2965
        %2967 = vrot.lane.b32.xlu0 %v2927, 123
        %v2968 = vpop.permute.xlu0 %2967
        %2971 = vst.msk [vmem:[#allocation7 + $0x28] sm:$0xf] %vm2928, %v2966
        %2972 = vst.msk [vmem:[#allocation7 + $0x2c] sm:$0xf] %vm2928, %v2968
        %2973 = vrot.lane.b32.xlu0 %v2926, 122
        %v2974 = vpop.permute.xlu0 %2973
        %2975 = vrot.lane.b32.xlu0 %v2927, 122
        %v2976 = vpop.permute.xlu0 %2975
        %2979 = vst.msk [vmem:[#allocation7 + $0x30] sm:$0xf] %vm2928, %v2974
        %2980 = vst.msk [vmem:[#allocation7 + $0x34] sm:$0xf] %vm2928, %v2976
        %2981 = vrot.lane.b32.xlu0 %v2926, 121
        %v2982 = vpop.permute.xlu0 %2981
        %2983 = vrot.lane.b32.xlu0 %v2927, 121
        %v2984 = vpop.permute.xlu0 %2983
        %2987 = vst.msk [vmem:[#allocation7 + $0x38] sm:$0xf] %vm2928, %v2982
        %2988 = vst.msk [vmem:[#allocation7 + $0x3c] sm:$0xf] %vm2928, %v2984
        %2989 = vrot.lane.b32.xlu0 %v2926, 120
        %v2990 = vpop.permute.xlu0 %2989
        %2991 = vrot.lane.b32.xlu0 %v2927, 120
        %v2992 = vpop.permute.xlu0 %2991
        %2995 = vst.msk [vmem:[#allocation7 + $0x40] sm:$0xf] %vm2928, %v2990
        %2996 = vst.msk [vmem:[#allocation7 + $0x44] sm:$0xf] %vm2928, %v2992
        %2997 = vrot.lane.b32.xlu0 %v2926, 119
        %v2998 = vpop.permute.xlu0 %2997
        %2999 = vrot.lane.b32.xlu0 %v2927, 119
        %v3000 = vpop.permute.xlu0 %2999
        %3003 = vst.msk [vmem:[#allocation7 + $0x48] sm:$0xf] %vm2928, %v2998
        %3004 = vst.msk [vmem:[#allocation7 + $0x4c] sm:$0xf] %vm2928, %v3000
        %3005 = vrot.lane.b32.xlu0 %v2926, 118
        %v3006 = vpop.permute.xlu0 %3005
        %3007 = vrot.lane.b32.xlu0 %v2927, 118
        %v3008 = vpop.permute.xlu0 %3007
        %3011 = vst.msk [vmem:[#allocation7 + $0x50] sm:$0xf] %vm2928, %v3006
        %3012 = vst.msk [vmem:[#allocation7 + $0x54] sm:$0xf] %vm2928, %v3008
        %3013 = vrot.lane.b32.xlu0 %v2926, 117
        %v3014 = vpop.permute.xlu0 %3013
        %3015 = vrot.lane.b32.xlu0 %v2927, 117
        %v3016 = vpop.permute.xlu0 %3015
        %3019 = vst.msk [vmem:[#allocation7 + $0x58] sm:$0xf] %vm2928, %v3014
        %3020 = vst.msk [vmem:[#allocation7 + $0x5c] sm:$0xf] %vm2928, %v3016
        %3021 = vrot.lane.b32.xlu0 %v2926, 116
        %v3022 = vpop.permute.xlu0 %3021
        %3023 = vrot.lane.b32.xlu0 %v2927, 116
        %v3024 = vpop.permute.xlu0 %3023
        %3027 = vst.msk [vmem:[#allocation7 + $0x60] sm:$0xf] %vm2928, %v3022
        %3028 = vst.msk [vmem:[#allocation7 + $0x64] sm:$0xf] %vm2928, %v3024
        %3029 = vrot.lane.b32.xlu0 %v2926, 115
        %v3030 = vpop.permute.xlu0 %3029
        %3031 = vrot.lane.b32.xlu0 %v2927, 115
        %v3032 = vpop.permute.xlu0 %3031
        %3035 = vst.msk [vmem:[#allocation7 + $0x68] sm:$0xf] %vm2928, %v3030
        %3036 = vst.msk [vmem:[#allocation7 + $0x6c] sm:$0xf] %vm2928, %v3032
        %3037 = vrot.lane.b32.xlu0 %v2926, 114
        %v3038 = vpop.permute.xlu0 %3037
        %3039 = vrot.lane.b32.xlu0 %v2927, 114
        %v3040 = vpop.permute.xlu0 %3039
        %3043 = vst.msk [vmem:[#allocation7 + $0x70] sm:$0xf] %vm2928, %v3038
        %3044 = vst.msk [vmem:[#allocation7 + $0x74] sm:$0xf] %vm2928, %v3040
        %v3045 = vld [vmem:[%s11] sm:$0xff]
        %v3046 = vld [vmem:[%s11 + $0x8] sm:$0xff]
        %v3047 = vld [vmem:[%s11 + $0x10] sm:$0xff]
        %v3048 = vld [vmem:[%s11 + $0x18] sm:$0xff]
        %v3049 = vld [vmem:[#allocation7] sm:$0xf]
        %v3050 = vld [vmem:[#allocation7 + $0x4] sm:$0xf]
        %v3051 = vld [vmem:[#allocation7 + $0x8] sm:$0xf]
        %v3052 = vld [vmem:[#allocation7 + $0xc] sm:$0xf]
        %v3053 = vld [vmem:[#allocation7 + $0x10] sm:$0xf]
        %v3054 = vld [vmem:[#allocation7 + $0x14] sm:$0xf]
        %v3055 = vld [vmem:[#allocation7 + $0x18] sm:$0xf]
        %v3056 = vld [vmem:[#allocation7 + $0x1c] sm:$0xf]
        %v3057 = vld [vmem:[#allocation7 + $0x20] sm:$0xf]
        %v3058 = vld [vmem:[#allocation7 + $0x24] sm:$0xf]
        %v3059 = vld [vmem:[#allocation7 + $0x28] sm:$0xf]
        %v3060 = vld [vmem:[#allocation7 + $0x2c] sm:$0xf]
        %v3061 = vld [vmem:[#allocation7 + $0x30] sm:$0xf]
        %v3062 = vld [vmem:[#allocation7 + $0x34] sm:$0xf]
        %v3063 = vld [vmem:[#allocation7 + $0x38] sm:$0xf]
        %v3064 = vld [vmem:[#allocation7 + $0x3c] sm:$0xf]
        %v3065 = vld [vmem:[#allocation7 + $0x40] sm:$0xf]
        %v3066 = vld [vmem:[#allocation7 + $0x44] sm:$0xf]
        %v3067 = vld [vmem:[#allocation7 + $0x48] sm:$0xf]
        %v3068 = vld [vmem:[#allocation7 + $0x4c] sm:$0xf]
        %v3069 = vld [vmem:[#allocation7 + $0x50] sm:$0xf]
        %v3070 = vld [vmem:[#allocation7 + $0x54] sm:$0xf]
        %v3071 = vld [vmem:[#allocation7 + $0x58] sm:$0xf]
        %v3072 = vld [vmem:[#allocation7 + $0x5c] sm:$0xf]
        %v3073 = vld [vmem:[#allocation7 + $0x60] sm:$0xf]
        %v3074 = vld [vmem:[#allocation7 + $0x64] sm:$0xf]
        %v3075 = vld [vmem:[#allocation7 + $0x68] sm:$0xf]
        %v3076 = vld [vmem:[#allocation7 + $0x6c] sm:$0xf]
        %v3077 = vld [vmem:[#allocation7 + $0x70] sm:$0xf]
        %v3078 = vld [vmem:[#allocation7 + $0x74] sm:$0xf]
        %v3079 = vld [vmem:[%s13] sm:$0xff]
        %v3080 = vld [vmem:[%s13 + $0x8] sm:$0xff]
        %v3081 = vld [vmem:[%s13 + $0x10] sm:$0xff]
        %v3082 = vld [vmem:[%s13 + $0x18] sm:$0xff]
        %3084 = vset.pattern.permute.xlu0 0
        %3085 = vperm.xlu0 %3084, %v3079
        %v3086 = vpop.permute.xlu0 %3085
        %3089 = vset.pattern.permute.xlu0 0
        %3090 = vperm.xlu0 %3089, %v3080
        %v3091 = vpop.permute.xlu0 %3090
        %3094 = vset.pattern.permute.xlu0 0
        %3095 = vperm.xlu0 %3094, %v3081
        %v3096 = vpop.permute.xlu0 %3095
        %3099 = vset.pattern.permute.xlu0 0
        %3100 = vperm.xlu0 %3099, %v3082
        %v3101 = vpop.permute.xlu0 %3100
        %v3107 = vunpack.c.l.b16 %v3045
        %v3108 = vunpack.c.h.b16 %v3045
        %v3109 = vunpack.c.l.b16 %v3046
        %v3110 = vunpack.c.h.b16 %v3046
        %v3111 = vunpack.c.l.b16 %v3047
        %v3112 = vunpack.c.h.b16 %v3047
        %v3113 = vunpack.c.l.b16 %v3048
        %v3114 = vunpack.c.h.b16 %v3048
        %v3115 = vpack.c.b16 %v3109, %v3107
        %v3116 = vpack.c.b16 %v3110, %v3108
        %v3117 = vpack.c.b16 %v3113, %v3111
        %v3118 = vpack.c.b16 %v3114, %v3112
        %v3151 = vunpack.c.l.b16 %v3049
        %v3152 = vunpack.c.l.b16 %v3050
        %v3153 = vunpack.c.l.b16 %v3051
        %v3154 = vunpack.c.l.b16 %v3052
        %v3155 = vunpack.c.l.b16 %v3053
        %v3156 = vunpack.c.l.b16 %v3054
        %v3157 = vunpack.c.l.b16 %v3055
        %v3158 = vunpack.c.l.b16 %v3056
        %v3159 = vunpack.c.l.b16 %v3057
        %v3160 = vunpack.c.l.b16 %v3058
        %v3161 = vunpack.c.l.b16 %v3059
        %v3162 = vunpack.c.l.b16 %v3060
        %v3163 = vunpack.c.l.b16 %v3061
        %v3164 = vunpack.c.l.b16 %v3062
        %v3165 = vunpack.c.l.b16 %v3063
        %v3166 = vunpack.c.l.b16 %v3064
        %v3167 = vunpack.c.l.b16 %v3065
        %v3168 = vunpack.c.l.b16 %v3066
        %v3169 = vunpack.c.l.b16 %v3067
        %v3170 = vunpack.c.l.b16 %v3068
        %v3171 = vunpack.c.l.b16 %v3069
        %v3172 = vunpack.c.l.b16 %v3070
        %v3173 = vunpack.c.l.b16 %v3071
        %v3174 = vunpack.c.l.b16 %v3072
        %v3175 = vunpack.c.l.b16 %v3073
        %v3176 = vunpack.c.l.b16 %v3074
        %v3177 = vunpack.c.l.b16 %v3075
        %v3178 = vunpack.c.l.b16 %v3076
        %v3179 = vunpack.c.l.b16 %v3077
        %v3180 = vunpack.c.l.b16 %v3078
        %v3181 = vpack.c.b16 %v3152, %v3151
        %v3182 = vpack.c.b16 %v3154, %v3153
        %v3183 = vpack.c.b16 %v3156, %v3155
        %v3184 = vpack.c.b16 %v3158, %v3157
        %v3185 = vpack.c.b16 %v3160, %v3159
        %v3186 = vpack.c.b16 %v3162, %v3161
        %v3187 = vpack.c.b16 %v3164, %v3163
        %v3188 = vpack.c.b16 %v3166, %v3165
        %v3189 = vpack.c.b16 %v3168, %v3167
        %v3190 = vpack.c.b16 %v3170, %v3169
        %v3191 = vpack.c.b16 %v3172, %v3171
        %v3192 = vpack.c.b16 %v3174, %v3173
        %v3193 = vpack.c.b16 %v3176, %v3175
        %v3194 = vpack.c.b16 %v3178, %v3177
        %v3195 = vpack.c.b16 %v3180, %v3179
        %vm3211 = vcmask 916480
        %v3213 = vsel %vm3211, %v3116, 0
        %v3216 = vsel %vm3211, %v3118, 0
        %3218 = vmatpush.bf16.msra.mxu0 %v3188
        %3219 = vmatpush.bf16.msra.mxu0 %v3187
        %3220 = vmatpush.bf16.msra.mxu0 %v3186
        %3221 = vmatpush.bf16.msra.mxu0 %v3185
        %3222 = vmatpush.bf16.msra.mxu0 %v3184
        %3223 = vmatpush.bf16.msra.mxu0 %v3183
        %3224 = vmatpush.bf16.msra.mxu0 %v3182
        %3225 = vmatpush.bf16.msra.mxu0 %v3181
        %3226 = vmatmul.bf16.gmra.mxu0 %v3115
        %v3227 = vpop.f32.mrf.mxu0
        %v3228 = vadd.f32 %v3086, %v3227
        %v3229 = vpop.f32.mrf.mxu0
        %v3230 = vadd.f32 %v3091, %v3229
        %3231 = vmatmul.bf16.gmra.mxu0 %v3117
        %v3232 = vpop.f32.mrf.mxu0
        %v3233 = vadd.f32 %v3096, %v3232
        %v3234 = vpop.f32.mrf.mxu0
        %v3235 = vadd.f32 %v3101, %v3234
        %3236 = vdwg.mxu0
        %3237 = vmatpush.bf16.msra.mxu0 0
        %3238 = vmatpush.bf16.msra.mxu0 %v3195
        %3239 = vmatpush.bf16.msra.mxu0 %v3194
        %3240 = vmatpush.bf16.msra.mxu0 %v3193
        %3241 = vmatpush.bf16.msra.mxu0 %v3192
        %3242 = vmatpush.bf16.msra.mxu0 %v3191
        %3243 = vmatpush.bf16.msra.mxu0 %v3190
        %3244 = vmatpush.bf16.msra.mxu0 %v3189
        %3245 = vmatmul.bf16.gmra.mxu0 %v3213
        %v3246 = vpop.f32.mrf.mxu0
        %v3247 = vadd.f32 %v3228, %v3246
        %v3248 = vpop.f32.mrf.mxu0
        %v3249 = vadd.f32 %v3230, %v3248
        %3250 = vmatmul.bf16.gmra.mxu0 %v3216
        %v3251 = vpop.f32.mrf.mxu0
        %v3252 = vadd.f32 %v3233, %v3251
        %v3253 = vpop.f32.mrf.mxu0
        %v3254 = vadd.f32 %v3235, %v3253
        %3255 = vdwg.mxu0
        %vm3256 = vcmp.ge.f32.partialorder %v3247, 0.0
        %vm3257 = vcmp.ge.f32.partialorder %v3249, 0.0
        %vm3258 = vcmp.ge.f32.partialorder %v3252, 0.0
        %vm3259 = vcmp.ge.f32.partialorder %v3254, 0.0
        %v3260 = vmul.f32 %v3247, 0.2
        %v3261 = vmul.f32 %v3249, 0.2
        %v3262 = vmul.f32 %v3252, 0.2
        %v3263 = vmul.f32 %v3254, 0.2
        %v3264 = vsel %vm3256, %v3247, %v3260
        %v3265 = vsel %vm3257, %v3249, %v3261
        %v3266 = vsel %vm3258, %v3252, %v3262
        %v3267 = vsel %vm3259, %v3254, %v3263
        %v3268 = vpack.c.bf16 %v3265, %v3264
        %v3269 = vpack.c.bf16 %v3267, %v3266
        %v3270 = vld [vmem:[%s55] sm:$0xf]
        %v3271 = vld [vmem:[%s55 + $0x4] sm:$0xf]
        %v3272 = vld [vmem:[%s55 + $0x8] sm:$0xf]
        %v3273 = vld [vmem:[%s55 + $0xc] sm:$0xf]
        %v3274 = vld [vmem:[%s55 + $0x10] sm:$0xf]
        %v3275 = vld [vmem:[%s55 + $0x14] sm:$0xf]
        %v3276 = vld [vmem:[%s55 + $0x18] sm:$0xf]
        %v3277 = vld [vmem:[%s55 + $0x1c] sm:$0xf]
        %v3286 = vunpack.c.l.b16 %v3270
        %v3287 = vunpack.c.l.b16 %v3271
        %v3288 = vunpack.c.l.b16 %v3272
        %v3289 = vunpack.c.l.b16 %v3273
        %v3290 = vunpack.c.l.b16 %v3274
        %v3291 = vunpack.c.l.b16 %v3275
        %v3292 = vunpack.c.l.b16 %v3276
        %v3293 = vunpack.c.l.b16 %v3277
        %v3294 = vpack.c.b16 %v3287, %v3286
        %v3295 = vpack.c.b16 %v3289, %v3288
        %v3296 = vpack.c.b16 %v3291, %v3290
        %v3297 = vpack.c.b16 %v3293, %v3292
        %vm3302 = vcmask 523264
        %v3304 = vsel %vm3302, %v3268, 0
        %v3307 = vsel %vm3302, %v3269, 0
        %3309 = vmatpush.bf16.msra.mxu0 0
        %3310 = vmatpush.bf16.msra.mxu0 0
        %3311 = vmatpush.bf16.msra.mxu0 0
        %3312 = vmatpush.bf16.msra.mxu0 0
        %3313 = vmatpush.bf16.msra.mxu0 %v3297
        %3314 = vmatpush.bf16.msra.mxu0 %v3296
        %3315 = vmatpush.bf16.msra.mxu0 %v3295
        %3316 = vmatpush.bf16.msra.mxu0 %v3294
        %3317 = vmatmul.bf16.gmra.mxu0 %v3304
        %v3318 = vpop.f32.mrf.mxu0
        %v3319 = vadd.f32 0.0, %v3318
        %v3320 = vpop.f32.mrf.mxu0
        %v3321 = vadd.f32 0.0, %v3320
        %3322 = vmatmul.bf16.gmra.mxu0 %v3307
        %v3323 = vpop.f32.mrf.mxu0
        %v3324 = vadd.f32 0.0, %v3323
        %v3325 = vpop.f32.mrf.mxu0
        %v3326 = vadd.f32 0.0, %v3325
        %3327 = vdwg.mxu0
        %vm3328 = vcmask 261120
        %3329 = vst.msk [vmem:[%s1035] sm:$0xff] %vm3328, %v3319
        %3330 = vst.msk [vmem:[%s1035 + $0x8] sm:$0xff] %vm3328, %v3321
        %3331 = vst.msk [vmem:[%s1035 + $0x10] sm:$0xff] %vm3328, %v3324
        %3332 = vst.msk [vmem:[%s1035 + $0x18] sm:$0xff] %vm3328, %v3326
        %v3333 = vld [vmem:[%s15] sm:$0xff]
        %v3334 = vld [vmem:[%s15 + $0x8] sm:$0xff]
        %v3335 = vld [vmem:[%s15 + $0x10] sm:$0xff]
        %v3336 = vld [vmem:[%s15 + $0x18] sm:$0xff]
        %v3337 = vld [vmem:[#allocation21] sm:$0x1]
        %v3338 = vmul.f32 %v3319, %v3333
        %v3339 = vmul.f32 %v3321, %v3334
        %v3340 = vmul.f32 %v3324, %v3335
        %v3341 = vmul.f32 %v3326, %v3336
        %v3342 = vsel %vm3328, %v3338, 0.0
        %3343 = vadd.xlane.f32.xlu0 %v3342
        %v3344 = vpop.xlane.xlu0 %3343
        %v3345 = vsel %vm3328, %v3339, 0.0
        %3346 = vadd.xlane.f32.xlu0 %v3345
        %v3347 = vpop.xlane.xlu0 %3346
        %v3348 = vsel %vm3328, %v3340, 0.0
        %3349 = vadd.xlane.f32.xlu0 %v3348
        %v3350 = vpop.xlane.xlu0 %3349
        %v3351 = vsel %vm3328, %v3341, 0.0
        %3352 = vadd.xlane.f32.xlu0 %v3351
        %v3353 = vpop.xlane.xlu0 %3352
        %v3354 = vadd.f32 %v3344, %v3347
        %v3355 = vadd.f32 %v3354, %v3350
        %v3356 = vadd.f32 %v3355, %v3353
        %v3357 = vrot.slane %v3356, 4
        %v3358 = vadd.f32 %v3356, %v3357
        %v3359 = vrot.slane %v3358, 2
        %v3360 = vadd.f32 %v3358, %v3359
        %v3361 = vrot.slane %v3360, 1
        %v3362 = vadd.f32 %v3360, %v3361
        %v3363 = vadd.f32 %v3362, %v3337
        %vm3364 = vcmask 0
        %3365 = vst.msk [vmem:[%s1026] sm:$0x1] %vm3364, %v3363
        %3366 = vst [vmem:[#allocation8] ss:$8 sm:$0xf] %v1110
        %3367 = vst [vmem:[#allocation8] ss:$8 sm:$0xf0] %v1110
        %s3368 = scalar_lea.vmem [#allocation8], 1
        %3369 = vst [vmem:[%s3368] ss:$8 sm:$0xf] %v1123
        %3370 = vst [vmem:[%s3368] ss:$8 sm:$0xf0] %v1123
        %s3371 = scalar_lea.vmem [#allocation8], 2
        %3372 = vst [vmem:[%s3371] ss:$8 sm:$0xf] %v1136
        %3373 = vst [vmem:[%s3371] ss:$8 sm:$0xf0] %v1136
        %s3374 = scalar_lea.vmem [#allocation8], 3
        %3375 = vst [vmem:[%s3374] ss:$8 sm:$0xf] %v1149
        %3376 = vst [vmem:[%s3374] ss:$8 sm:$0xf0] %v1149
        %s3377 = scalar_lea.vmem [#allocation8], 4
        %3378 = vst [vmem:[%s3377] ss:$8 sm:$0xf] %v1162
        %3379 = vst [vmem:[%s3377] ss:$8 sm:$0xf0] %v1162
        %v3380 = vld [vmem:[%s19] sm:$0xff]
        %v3381 = vld [vmem:[#allocation8] sm:$0x1f]
        %v3382 = vld [vmem:[#allocation8 + $0x8] sm:$0x1f]
        %v3383 = vld [vmem:[#allocation8 + $0x10] sm:$0x1f]
        %v3384 = vld [vmem:[#allocation8 + $0x18] sm:$0x1f]
        %v3385 = vld [vmem:[#allocation8 + $0x20] sm:$0x1f]
        %v3386 = vld [vmem:[#allocation8 + $0x28] sm:$0x1f]
        %v3387 = vld [vmem:[#allocation8 + $0x30] sm:$0x1f]
        %v3388 = vld [vmem:[#allocation8 + $0x38] sm:$0x1f]
        %v3389 = vld [vmem:[%s21] sm:$0xff]
        %3391 = vset.pattern.permute.xlu0 0
        %3392 = vperm.xlu0 %3391, %v3389
        %v3393 = vpop.permute.xlu0 %3392
        %v3396 = vsel %vm1061, %v3380, 0
        %vm3398 = vcmask 1044480
        %v3400 = vsel %vm3398, %v3381, 0
        %v3403 = vsel %vm3398, %v3382, 0
        %v3406 = vsel %vm3398, %v3383, 0
        %v3409 = vsel %vm3398, %v3384, 0
        %v3412 = vsel %vm3398, %v3385, 0
        %v3415 = vsel %vm3398, %v3386, 0
        %v3418 = vsel %vm3398, %v3387, 0
        %v3421 = vsel %vm3398, %v3388, 0
        %3423 = vmatpush.msra.mxu0 0.0
        %3424 = vmatpush.msra.mxu0 0.0
        %3425 = vmatpush.msra.mxu0 0.0
        %3426 = vmatpush.msra.mxu0 0.0
        %3427 = vmatpush.msra.mxu0 0.0
        %3428 = vmatpush.msra.mxu0 0.0
        %3429 = vmatpush.msra.mxu0 0.0
        %3430 = vmatpush.msra.mxu0 0.0
        %3431 = vmatpush.msra.mxu0 0.0
        %3432 = vmatpush.msra.mxu0 0.0
        %3433 = vmatpush.msra.mxu0 0.0
        %3434 = vmatpush.msra.mxu0 0.0
        %3435 = vmatpush.msra.mxu0 0.0
        %3436 = vmatpush.msra.mxu0 0.0
        %3437 = vmatpush.msra.mxu0 0.0
        %3438 = vmatpush.msra.mxu0 %v3400
        %3439 = vmatmul.f32.gmra.mxu0 %v3396
        %v3440 = vpop.f32.mrf.mxu0
        %v3441 = vadd.f32 %v3393, %v3440
        %3442 = vdwg.mxu0
        %3443 = vmatpush.msra.mxu0 0.0
        %3444 = vmatpush.msra.mxu0 0.0
        %3445 = vmatpush.msra.mxu0 0.0
        %3446 = vmatpush.msra.mxu0 0.0
        %3447 = vmatpush.msra.mxu0 0.0
        %3448 = vmatpush.msra.mxu0 0.0
        %3449 = vmatpush.msra.mxu0 0.0
        %3450 = vmatpush.msra.mxu0 0.0
        %3451 = vmatpush.msra.mxu0 0.0
        %3452 = vmatpush.msra.mxu0 0.0
        %3453 = vmatpush.msra.mxu0 0.0
        %3454 = vmatpush.msra.mxu0 0.0
        %3455 = vmatpush.msra.mxu0 0.0
        %3456 = vmatpush.msra.mxu0 0.0
        %3457 = vmatpush.msra.mxu0 0.0
        %3458 = vmatpush.msra.mxu0 %v3403
        %3459 = vmatmul.f32.gmra.mxu0 %v3396
        %v3460 = vpop.f32.mrf.mxu0
        %v3461 = vadd.f32 %v3393, %v3460
        %3462 = vdwg.mxu0
        %3463 = vmatpush.msra.mxu0 0.0
        %3464 = vmatpush.msra.mxu0 0.0
        %3465 = vmatpush.msra.mxu0 0.0
        %3466 = vmatpush.msra.mxu0 0.0
        %3467 = vmatpush.msra.mxu0 0.0
        %3468 = vmatpush.msra.mxu0 0.0
        %3469 = vmatpush.msra.mxu0 0.0
        %3470 = vmatpush.msra.mxu0 0.0
        %3471 = vmatpush.msra.mxu0 0.0
        %3472 = vmatpush.msra.mxu0 0.0
        %3473 = vmatpush.msra.mxu0 0.0
        %3474 = vmatpush.msra.mxu0 0.0
        %3475 = vmatpush.msra.mxu0 0.0
        %3476 = vmatpush.msra.mxu0 0.0
        %3477 = vmatpush.msra.mxu0 0.0
        %3478 = vmatpush.msra.mxu0 %v3406
        %3479 = vmatmul.f32.gmra.mxu0 %v3396
        %v3480 = vpop.f32.mrf.mxu0
        %v3481 = vadd.f32 %v3393, %v3480
        %3482 = vdwg.mxu0
        %3483 = vmatpush.msra.mxu0 0.0
        %3484 = vmatpush.msra.mxu0 0.0
        %3485 = vmatpush.msra.mxu0 0.0
        %3486 = vmatpush.msra.mxu0 0.0
        %3487 = vmatpush.msra.mxu0 0.0
        %3488 = vmatpush.msra.mxu0 0.0
        %3489 = vmatpush.msra.mxu0 0.0
        %3490 = vmatpush.msra.mxu0 0.0
        %3491 = vmatpush.msra.mxu0 0.0
        %3492 = vmatpush.msra.mxu0 0.0
        %3493 = vmatpush.msra.mxu0 0.0
        %3494 = vmatpush.msra.mxu0 0.0
        %3495 = vmatpush.msra.mxu0 0.0
        %3496 = vmatpush.msra.mxu0 0.0
        %3497 = vmatpush.msra.mxu0 0.0
        %3498 = vmatpush.msra.mxu0 %v3409
        %3499 = vmatmul.f32.gmra.mxu0 %v3396
        %v3500 = vpop.f32.mrf.mxu0
        %v3501 = vadd.f32 %v3393, %v3500
        %3502 = vdwg.mxu0
        %3503 = vmatpush.msra.mxu0 0.0
        %3504 = vmatpush.msra.mxu0 0.0
        %3505 = vmatpush.msra.mxu0 0.0
        %3506 = vmatpush.msra.mxu0 0.0
        %3507 = vmatpush.msra.mxu0 0.0
        %3508 = vmatpush.msra.mxu0 0.0
        %3509 = vmatpush.msra.mxu0 0.0
        %3510 = vmatpush.msra.mxu0 0.0
        %3511 = vmatpush.msra.mxu0 0.0
        %3512 = vmatpush.msra.mxu0 0.0
        %3513 = vmatpush.msra.mxu0 0.0
        %3514 = vmatpush.msra.mxu0 0.0
        %3515 = vmatpush.msra.mxu0 0.0
        %3516 = vmatpush.msra.mxu0 0.0
        %3517 = vmatpush.msra.mxu0 0.0
        %3518 = vmatpush.msra.mxu0 %v3412
        %3519 = vmatmul.f32.gmra.mxu0 %v3396
        %v3520 = vpop.f32.mrf.mxu0
        %v3521 = vadd.f32 %v3393, %v3520
        %3522 = vdwg.mxu0
        %3523 = vmatpush.msra.mxu0 0.0
        %3524 = vmatpush.msra.mxu0 0.0
        %3525 = vmatpush.msra.mxu0 0.0
        %3526 = vmatpush.msra.mxu0 0.0
        %3527 = vmatpush.msra.mxu0 0.0
        %3528 = vmatpush.msra.mxu0 0.0
        %3529 = vmatpush.msra.mxu0 0.0
        %3530 = vmatpush.msra.mxu0 0.0
        %3531 = vmatpush.msra.mxu0 0.0
        %3532 = vmatpush.msra.mxu0 0.0
        %3533 = vmatpush.msra.mxu0 0.0
        %3534 = vmatpush.msra.mxu0 0.0
        %3535 = vmatpush.msra.mxu0 0.0
        %3536 = vmatpush.msra.mxu0 0.0
        %3537 = vmatpush.msra.mxu0 0.0
        %3538 = vmatpush.msra.mxu0 %v3415
        %3539 = vmatmul.f32.gmra.mxu0 %v3396
        %v3540 = vpop.f32.mrf.mxu0
        %v3541 = vadd.f32 %v3393, %v3540
        %3542 = vdwg.mxu0
        %3543 = vmatpush.msra.mxu0 0.0
        %3544 = vmatpush.msra.mxu0 0.0
        %3545 = vmatpush.msra.mxu0 0.0
        %3546 = vmatpush.msra.mxu0 0.0
        %3547 = vmatpush.msra.mxu0 0.0
        %3548 = vmatpush.msra.mxu0 0.0
        %3549 = vmatpush.msra.mxu0 0.0
        %3550 = vmatpush.msra.mxu0 0.0
        %3551 = vmatpush.msra.mxu0 0.0
        %3552 = vmatpush.msra.mxu0 0.0
        %3553 = vmatpush.msra.mxu0 0.0
        %3554 = vmatpush.msra.mxu0 0.0
        %3555 = vmatpush.msra.mxu0 0.0
        %3556 = vmatpush.msra.mxu0 0.0
        %3557 = vmatpush.msra.mxu0 0.0
        %3558 = vmatpush.msra.mxu0 %v3418
        %3559 = vmatmul.f32.gmra.mxu0 %v3396
        %v3560 = vpop.f32.mrf.mxu0
        %v3561 = vadd.f32 %v3393, %v3560
        %3562 = vdwg.mxu0
        %3563 = vmatpush.msra.mxu0 0.0
        %3564 = vmatpush.msra.mxu0 0.0
        %3565 = vmatpush.msra.mxu0 0.0
        %3566 = vmatpush.msra.mxu0 0.0
        %3567 = vmatpush.msra.mxu0 0.0
        %3568 = vmatpush.msra.mxu0 0.0
        %3569 = vmatpush.msra.mxu0 0.0
        %3570 = vmatpush.msra.mxu0 0.0
        %3571 = vmatpush.msra.mxu0 0.0
        %3572 = vmatpush.msra.mxu0 0.0
        %3573 = vmatpush.msra.mxu0 0.0
        %3574 = vmatpush.msra.mxu0 0.0
        %3575 = vmatpush.msra.mxu0 0.0
        %3576 = vmatpush.msra.mxu0 0.0
        %3577 = vmatpush.msra.mxu0 0.0
        %3578 = vmatpush.msra.mxu0 %v3421
        %3579 = vmatmul.f32.gmra.mxu0 %v3396
        %v3580 = vpop.f32.mrf.mxu0
        %v3581 = vadd.f32 %v3393, %v3580
        %3582 = vdwg.mxu0
        %vm3583 = vcmp.ge.f32.partialorder %v3441, 0.0
        %vm3584 = vcmp.ge.f32.partialorder %v3461, 0.0
        %vm3585 = vcmp.ge.f32.partialorder %v3481, 0.0
        %vm3586 = vcmp.ge.f32.partialorder %v3501, 0.0
        %vm3587 = vcmp.ge.f32.partialorder %v3521, 0.0
        %vm3588 = vcmp.ge.f32.partialorder %v3541, 0.0
        %vm3589 = vcmp.ge.f32.partialorder %v3561, 0.0
        %vm3590 = vcmp.ge.f32.partialorder %v3581, 0.0
        %v3591 = vmul.f32 %v3441, 0.2
        %v3592 = vmul.f32 %v3461, 0.2
        %v3593 = vmul.f32 %v3481, 0.2
        %v3594 = vmul.f32 %v3501, 0.2
        %v3595 = vmul.f32 %v3521, 0.2
        %v3596 = vmul.f32 %v3541, 0.2
        %v3597 = vmul.f32 %v3561, 0.2
        %v3598 = vmul.f32 %v3581, 0.2
        %v3599 = vsel %vm3583, %v3441, %v3591
        %v3600 = vsel %vm3584, %v3461, %v3592
        %v3601 = vsel %vm3585, %v3481, %v3593
        %v3602 = vsel %vm3586, %v3501, %v3594
        %v3603 = vsel %vm3587, %v3521, %v3595
        %v3604 = vsel %vm3588, %v3541, %v3596
        %v3605 = vsel %vm3589, %v3561, %v3597
        %v3606 = vsel %vm3590, %v3581, %v3598
        %v3607 = vpack.c.bf16 %v3599, %v3599
        %v3608 = vpack.c.bf16 %v3600, %v3600
        %v3609 = vpack.c.bf16 %v3601, %v3601
        %v3610 = vpack.c.bf16 %v3602, %v3602
        %v3611 = vpack.c.bf16 %v3603, %v3603
        %v3612 = vpack.c.bf16 %v3604, %v3604
        %v3613 = vpack.c.bf16 %v3605, %v3605
        %v3614 = vpack.c.bf16 %v3606, %v3606
        %v3615 = vld [vmem:[#allocation22] sm:$0xff]
        %v3616 = vld [vmem:[#allocation22 + $0x8] sm:$0xff]
        %v3617 = vld [vmem:[#allocation22 + $0x10] sm:$0xff]
        %v3618 = vld [vmem:[#allocation22 + $0x18] sm:$0xff]
        %v3619 = vld [vmem:[#allocation22 + $0x20] sm:$0xff]
        %v3620 = vld [vmem:[#allocation22 + $0x28] sm:$0xff]
        %v3621 = vld [vmem:[#allocation22 + $0x30] sm:$0xff]
        %v3622 = vld [vmem:[#allocation22 + $0x38] sm:$0xff]
        %v3623 = vld [vmem:[#allocation22 + $0x40] sm:$0xff]
        %v3624 = vld [vmem:[#allocation22 + $0x48] sm:$0xff]
        %v3625 = vld [vmem:[#allocation22 + $0x50] sm:$0xff]
        %v3626 = vld [vmem:[#allocation22 + $0x58] sm:$0xff]
        %v3627 = vld [vmem:[#allocation22 + $0x60] sm:$0xff]
        %v3628 = vld [vmem:[#allocation22 + $0x68] sm:$0xff]
        %v3629 = vld [vmem:[#allocation22 + $0x70] sm:$0xff]
        %v3630 = vld [vmem:[#allocation22 + $0x78] sm:$0xff]
        %v3631 = vld [vmem:[#allocation22 + $0x80] sm:$0xff]
        %v3632 = vld [vmem:[#allocation22 + $0x88] sm:$0xff]
        %v3633 = vld [vmem:[#allocation22 + $0x90] sm:$0xff]
        %v3634 = vld [vmem:[#allocation22 + $0x98] sm:$0xff]
        %v3635 = vld [vmem:[#allocation22 + $0xa0] sm:$0xff]
        %v3636 = vld [vmem:[#allocation22 + $0xa8] sm:$0xff]
        %v3637 = vld [vmem:[#allocation22 + $0xb0] sm:$0xff]
        %v3638 = vld [vmem:[#allocation22 + $0xb8] sm:$0xff]
        %v3639 = vld [vmem:[#allocation22 + $0xc0] sm:$0xff]
        %v3640 = vld [vmem:[#allocation22 + $0xc8] sm:$0xff]
        %v3641 = vld [vmem:[#allocation22 + $0xd0] sm:$0xff]
        %v3642 = vld [vmem:[#allocation22 + $0xd8] sm:$0xff]
        %v3643 = vld [vmem:[#allocation22 + $0xe0] sm:$0xff]
        %v3644 = vld [vmem:[#allocation22 + $0xe8] sm:$0xff]
        %v3645 = vld [vmem:[#allocation22 + $0xf0] sm:$0xff]
        %v3646 = vld [vmem:[#allocation22 + $0xf8] sm:$0xff]
        %v3647 = vld [vmem:[#allocation22 + $0x100] sm:$0xff]
        %v3648 = vld [vmem:[#allocation22 + $0x108] sm:$0xff]
        %v3649 = vld [vmem:[#allocation22 + $0x110] sm:$0xff]
        %v3650 = vld [vmem:[#allocation22 + $0x118] sm:$0xff]
        %v3651 = vld [vmem:[#allocation22 + $0x120] sm:$0xff]
        %v3652 = vld [vmem:[#allocation22 + $0x128] sm:$0xff]
        %v3653 = vld [vmem:[#allocation22 + $0x130] sm:$0xff]
        %v3654 = vld [vmem:[#allocation22 + $0x138] sm:$0xff]
        %v3655 = vld [vmem:[#allocation22 + $0x140] sm:$0xff]
        %v3656 = vld [vmem:[#allocation22 + $0x148] sm:$0xff]
        %v3657 = vld [vmem:[#allocation22 + $0x150] sm:$0xff]
        %v3658 = vld [vmem:[#allocation22 + $0x158] sm:$0xff]
        %v3659 = vld [vmem:[#allocation22 + $0x160] sm:$0xff]
        %v3660 = vld [vmem:[#allocation22 + $0x168] sm:$0xff]
        %v3661 = vld [vmem:[#allocation22 + $0x170] sm:$0xff]
        %v3662 = vld [vmem:[#allocation22 + $0x178] sm:$0xff]
        %v3663 = vld [vmem:[#allocation22 + $0x180] sm:$0xff]
        %v3664 = vld [vmem:[#allocation22 + $0x188] sm:$0xff]
        %v3665 = vld [vmem:[#allocation22 + $0x190] sm:$0xff]
        %v3666 = vld [vmem:[#allocation22 + $0x198] sm:$0xff]
        %v3667 = vld [vmem:[#allocation22 + $0x1a0] sm:$0xff]
        %v3668 = vld [vmem:[#allocation22 + $0x1a8] sm:$0xff]
        %v3669 = vld [vmem:[#allocation22 + $0x1b0] sm:$0xff]
        %v3670 = vld [vmem:[#allocation22 + $0x1b8] sm:$0xff]
        %v3671 = vld [vmem:[#allocation22 + $0x1c0] sm:$0xff]
        %v3672 = vld [vmem:[#allocation22 + $0x1c8] sm:$0xff]
        %v3673 = vld [vmem:[#allocation22 + $0x1d0] sm:$0xff]
        %v3674 = vld [vmem:[#allocation22 + $0x1d8] sm:$0xff]
        %v3675 = vld [vmem:[#allocation22 + $0x1e0] sm:$0xff]
        %v3676 = vld [vmem:[#allocation22 + $0x1e8] sm:$0xff]
        %v3677 = vld [vmem:[#allocation22 + $0x1f0] sm:$0xff]
        %v3678 = vld [vmem:[#allocation22 + $0x1f8] sm:$0xff]
        %v3679 = vld [vmem:[#allocation22 + $0x200] sm:$0xff]
        %v3680 = vld [vmem:[#allocation22 + $0x208] sm:$0xff]
        %v3681 = vld [vmem:[#allocation22 + $0x210] sm:$0xff]
        %v3682 = vld [vmem:[#allocation22 + $0x218] sm:$0xff]
        %v3683 = vld [vmem:[#allocation22 + $0x220] sm:$0xff]
        %v3684 = vld [vmem:[#allocation22 + $0x228] sm:$0xff]
        %v3685 = vld [vmem:[#allocation22 + $0x230] sm:$0xff]
        %v3686 = vld [vmem:[#allocation22 + $0x238] sm:$0xff]
        %v3687 = vld [vmem:[#allocation22 + $0x240] sm:$0xff]
        %v3688 = vld [vmem:[#allocation22 + $0x248] sm:$0xff]
        %v3689 = vld [vmem:[#allocation22 + $0x250] sm:$0xff]
        %v3690 = vld [vmem:[#allocation22 + $0x258] sm:$0xff]
        %v3691 = vld [vmem:[#allocation22 + $0x260] sm:$0xff]
        %v3692 = vld [vmem:[#allocation22 + $0x268] sm:$0xff]
        %v3693 = vld [vmem:[#allocation22 + $0x270] sm:$0xff]
        %v3694 = vld [vmem:[#allocation22 + $0x278] sm:$0xff]
        %v3695 = vld [vmem:[#allocation22 + $0x280] sm:$0xff]
        %v3696 = vld [vmem:[#allocation22 + $0x288] sm:$0xff]
        %v3697 = vld [vmem:[#allocation22 + $0x290] sm:$0xff]
        %v3698 = vld [vmem:[#allocation22 + $0x298] sm:$0xff]
        %v3699 = vld [vmem:[#allocation22 + $0x2a0] sm:$0xff]
        %v3700 = vld [vmem:[#allocation22 + $0x2a8] sm:$0xff]
        %v3701 = vld [vmem:[#allocation22 + $0x2b0] sm:$0xff]
        %v3702 = vld [vmem:[#allocation22 + $0x2b8] sm:$0xff]
        %v3703 = vld [vmem:[#allocation22 + $0x2c0] sm:$0xff]
        %v3704 = vld [vmem:[#allocation22 + $0x2c8] sm:$0xff]
        %v3705 = vld [vmem:[#allocation22 + $0x2d0] sm:$0xff]
        %v3706 = vld [vmem:[#allocation22 + $0x2d8] sm:$0xff]
        %v3707 = vld [vmem:[#allocation22 + $0x2e0] sm:$0xff]
        %v3708 = vld [vmem:[#allocation22 + $0x2e8] sm:$0xff]
        %v3709 = vld [vmem:[#allocation22 + $0x2f0] sm:$0xff]
        %v3710 = vld [vmem:[#allocation22 + $0x2f8] sm:$0xff]
        %v3711 = vld [vmem:[#allocation22 + $0x300] sm:$0xff]
        %v3712 = vld [vmem:[#allocation22 + $0x308] sm:$0xff]
        %v3713 = vld [vmem:[#allocation22 + $0x310] sm:$0xff]
        %v3714 = vld [vmem:[#allocation22 + $0x318] sm:$0xff]
        %v3715 = vld [vmem:[#allocation22 + $0x320] sm:$0xff]
        %v3716 = vld [vmem:[#allocation22 + $0x328] sm:$0xff]
        %v3717 = vld [vmem:[#allocation22 + $0x330] sm:$0xff]
        %v3718 = vld [vmem:[#allocation22 + $0x338] sm:$0xff]
        %v3719 = vld [vmem:[#allocation22 + $0x340] sm:$0xff]
        %v3720 = vld [vmem:[#allocation22 + $0x348] sm:$0xff]
        %v3721 = vld [vmem:[#allocation22 + $0x350] sm:$0xff]
        %v3722 = vld [vmem:[#allocation22 + $0x358] sm:$0xff]
        %v3723 = vld [vmem:[#allocation22 + $0x360] sm:$0xff]
        %v3724 = vld [vmem:[#allocation22 + $0x368] sm:$0xff]
        %v3725 = vld [vmem:[#allocation22 + $0x370] sm:$0xff]
        %v3726 = vld [vmem:[#allocation22 + $0x378] sm:$0xff]
        %v3727 = vld [vmem:[#allocation22 + $0x380] sm:$0xff]
        %v3728 = vld [vmem:[#allocation22 + $0x388] sm:$0xff]
        %v3729 = vld [vmem:[#allocation22 + $0x390] sm:$0xff]
        %v3730 = vld [vmem:[#allocation22 + $0x398] sm:$0xff]
        %v3731 = vld [vmem:[#allocation22 + $0x3a0] sm:$0xff]
        %v3732 = vld [vmem:[#allocation22 + $0x3a8] sm:$0xff]
        %v3733 = vld [vmem:[#allocation22 + $0x3b0] sm:$0xff]
        %v3734 = vld [vmem:[#allocation22 + $0x3b8] sm:$0xff]
        %v3735 = vld [vmem:[#allocation22 + $0x3c0] sm:$0xff]
        %v3736 = vld [vmem:[#allocation22 + $0x3c8] sm:$0xff]
        %v3737 = vld [vmem:[#allocation22 + $0x3d0] sm:$0xff]
        %v3738 = vld [vmem:[#allocation22 + $0x3d8] sm:$0xff]
        %v3739 = vld [vmem:[#allocation22 + $0x3e0] sm:$0xff]
        %v3740 = vld [vmem:[#allocation22 + $0x3e8] sm:$0xff]
        %v3741 = vld [vmem:[#allocation22 + $0x3f0] sm:$0xff]
        %v3742 = vld [vmem:[#allocation22 + $0x3f8] sm:$0xff]
        %v3871 = vunpack.c.l.b16 %v3615
        %v3872 = vunpack.c.h.b16 %v3615
        %v3873 = vunpack.c.l.b16 %v3616
        %v3874 = vunpack.c.h.b16 %v3616
        %v3875 = vunpack.c.l.b16 %v3617
        %v3876 = vunpack.c.h.b16 %v3617
        %v3877 = vunpack.c.l.b16 %v3618
        %v3878 = vunpack.c.h.b16 %v3618
        %v3879 = vunpack.c.l.b16 %v3619
        %v3880 = vunpack.c.h.b16 %v3619
        %v3881 = vunpack.c.l.b16 %v3620
        %v3882 = vunpack.c.h.b16 %v3620
        %v3883 = vunpack.c.l.b16 %v3621
        %v3884 = vunpack.c.h.b16 %v3621
        %v3885 = vunpack.c.l.b16 %v3622
        %v3886 = vunpack.c.h.b16 %v3622
        %v3887 = vunpack.c.l.b16 %v3623
        %v3888 = vunpack.c.h.b16 %v3623
        %v3889 = vunpack.c.l.b16 %v3624
        %v3890 = vunpack.c.h.b16 %v3624
        %v3891 = vunpack.c.l.b16 %v3625
        %v3892 = vunpack.c.h.b16 %v3625
        %v3893 = vunpack.c.l.b16 %v3626
        %v3894 = vunpack.c.h.b16 %v3626
        %v3895 = vunpack.c.l.b16 %v3627
        %v3896 = vunpack.c.h.b16 %v3627
        %v3897 = vunpack.c.l.b16 %v3628
        %v3898 = vunpack.c.h.b16 %v3628
        %v3899 = vunpack.c.l.b16 %v3629
        %v3900 = vunpack.c.h.b16 %v3629
        %v3901 = vunpack.c.l.b16 %v3630
        %v3902 = vunpack.c.h.b16 %v3630
        %v3903 = vunpack.c.l.b16 %v3631
        %v3904 = vunpack.c.h.b16 %v3631
        %v3905 = vunpack.c.l.b16 %v3632
        %v3906 = vunpack.c.h.b16 %v3632
        %v3907 = vunpack.c.l.b16 %v3633
        %v3908 = vunpack.c.h.b16 %v3633
        %v3909 = vunpack.c.l.b16 %v3634
        %v3910 = vunpack.c.h.b16 %v3634
        %v3911 = vunpack.c.l.b16 %v3635
        %v3912 = vunpack.c.h.b16 %v3635
        %v3913 = vunpack.c.l.b16 %v3636
        %v3914 = vunpack.c.h.b16 %v3636
        %v3915 = vunpack.c.l.b16 %v3637
        %v3916 = vunpack.c.h.b16 %v3637
        %v3917 = vunpack.c.l.b16 %v3638
        %v3918 = vunpack.c.h.b16 %v3638
        %v3919 = vunpack.c.l.b16 %v3639
        %v3920 = vunpack.c.h.b16 %v3639
        %v3921 = vunpack.c.l.b16 %v3640
        %v3922 = vunpack.c.h.b16 %v3640
        %v3923 = vunpack.c.l.b16 %v3641
        %v3924 = vunpack.c.h.b16 %v3641
        %v3925 = vunpack.c.l.b16 %v3642
        %v3926 = vunpack.c.h.b16 %v3642
        %v3927 = vunpack.c.l.b16 %v3643
        %v3928 = vunpack.c.h.b16 %v3643
        %v3929 = vunpack.c.l.b16 %v3644
        %v3930 = vunpack.c.h.b16 %v3644
        %v3931 = vunpack.c.l.b16 %v3645
        %v3932 = vunpack.c.h.b16 %v3645
        %v3933 = vunpack.c.l.b16 %v3646
        %v3934 = vunpack.c.h.b16 %v3646
        %v3935 = vunpack.c.l.b16 %v3647
        %v3936 = vunpack.c.h.b16 %v3647
        %v3937 = vunpack.c.l.b16 %v3648
        %v3938 = vunpack.c.h.b16 %v3648
        %v3939 = vunpack.c.l.b16 %v3649
        %v3940 = vunpack.c.h.b16 %v3649
        %v3941 = vunpack.c.l.b16 %v3650
        %v3942 = vunpack.c.h.b16 %v3650
        %v3943 = vunpack.c.l.b16 %v3651
        %v3944 = vunpack.c.h.b16 %v3651
        %v3945 = vunpack.c.l.b16 %v3652
        %v3946 = vunpack.c.h.b16 %v3652
        %v3947 = vunpack.c.l.b16 %v3653
        %v3948 = vunpack.c.h.b16 %v3653
        %v3949 = vunpack.c.l.b16 %v3654
        %v3950 = vunpack.c.h.b16 %v3654
        %v3951 = vunpack.c.l.b16 %v3655
        %v3952 = vunpack.c.h.b16 %v3655
        %v3953 = vunpack.c.l.b16 %v3656
        %v3954 = vunpack.c.h.b16 %v3656
        %v3955 = vunpack.c.l.b16 %v3657
        %v3956 = vunpack.c.h.b16 %v3657
        %v3957 = vunpack.c.l.b16 %v3658
        %v3958 = vunpack.c.h.b16 %v3658
        %v3959 = vunpack.c.l.b16 %v3659
        %v3960 = vunpack.c.h.b16 %v3659
        %v3961 = vunpack.c.l.b16 %v3660
        %v3962 = vunpack.c.h.b16 %v3660
        %v3963 = vunpack.c.l.b16 %v3661
        %v3964 = vunpack.c.h.b16 %v3661
        %v3965 = vunpack.c.l.b16 %v3662
        %v3966 = vunpack.c.h.b16 %v3662
        %v3967 = vunpack.c.l.b16 %v3663
        %v3968 = vunpack.c.h.b16 %v3663
        %v3969 = vunpack.c.l.b16 %v3664
        %v3970 = vunpack.c.h.b16 %v3664
        %v3971 = vunpack.c.l.b16 %v3665
        %v3972 = vunpack.c.h.b16 %v3665
        %v3973 = vunpack.c.l.b16 %v3666
        %v3974 = vunpack.c.h.b16 %v3666
        %v3975 = vunpack.c.l.b16 %v3667
        %v3976 = vunpack.c.h.b16 %v3667
        %v3977 = vunpack.c.l.b16 %v3668
        %v3978 = vunpack.c.h.b16 %v3668
        %v3979 = vunpack.c.l.b16 %v3669
        %v3980 = vunpack.c.h.b16 %v3669
        %v3981 = vunpack.c.l.b16 %v3670
        %v3982 = vunpack.c.h.b16 %v3670
        %v3983 = vunpack.c.l.b16 %v3671
        %v3984 = vunpack.c.h.b16 %v3671
        %v3985 = vunpack.c.l.b16 %v3672
        %v3986 = vunpack.c.h.b16 %v3672
        %v3987 = vunpack.c.l.b16 %v3673
        %v3988 = vunpack.c.h.b16 %v3673
        %v3989 = vunpack.c.l.b16 %v3674
        %v3990 = vunpack.c.h.b16 %v3674
        %v3991 = vunpack.c.l.b16 %v3675
        %v3992 = vunpack.c.h.b16 %v3675
        %v3993 = vunpack.c.l.b16 %v3676
        %v3994 = vunpack.c.h.b16 %v3676
        %v3995 = vunpack.c.l.b16 %v3677
        %v3996 = vunpack.c.h.b16 %v3677
        %v3997 = vunpack.c.l.b16 %v3678
        %v3998 = vunpack.c.h.b16 %v3678
        %v3999 = vunpack.c.l.b16 %v3679
        %v4000 = vunpack.c.h.b16 %v3679
        %v4001 = vunpack.c.l.b16 %v3680
        %v4002 = vunpack.c.h.b16 %v3680
        %v4003 = vunpack.c.l.b16 %v3681
        %v4004 = vunpack.c.h.b16 %v3681
        %v4005 = vunpack.c.l.b16 %v3682
        %v4006 = vunpack.c.h.b16 %v3682
        %v4007 = vunpack.c.l.b16 %v3683
        %v4008 = vunpack.c.h.b16 %v3683
        %v4009 = vunpack.c.l.b16 %v3684
        %v4010 = vunpack.c.h.b16 %v3684
        %v4011 = vunpack.c.l.b16 %v3685
        %v4012 = vunpack.c.h.b16 %v3685
        %v4013 = vunpack.c.l.b16 %v3686
        %v4014 = vunpack.c.h.b16 %v3686
        %v4015 = vunpack.c.l.b16 %v3687
        %v4016 = vunpack.c.h.b16 %v3687
        %v4017 = vunpack.c.l.b16 %v3688
        %v4018 = vunpack.c.h.b16 %v3688
        %v4019 = vunpack.c.l.b16 %v3689
        %v4020 = vunpack.c.h.b16 %v3689
        %v4021 = vunpack.c.l.b16 %v3690
        %v4022 = vunpack.c.h.b16 %v3690
        %v4023 = vunpack.c.l.b16 %v3691
        %v4024 = vunpack.c.h.b16 %v3691
        %v4025 = vunpack.c.l.b16 %v3692
        %v4026 = vunpack.c.h.b16 %v3692
        %v4027 = vunpack.c.l.b16 %v3693
        %v4028 = vunpack.c.h.b16 %v3693
        %v4029 = vunpack.c.l.b16 %v3694
        %v4030 = vunpack.c.h.b16 %v3694
        %v4031 = vunpack.c.l.b16 %v3695
        %v4032 = vunpack.c.h.b16 %v3695
        %v4033 = vunpack.c.l.b16 %v3696
        %v4034 = vunpack.c.h.b16 %v3696
        %v4035 = vunpack.c.l.b16 %v3697
        %v4036 = vunpack.c.h.b16 %v3697
        %v4037 = vunpack.c.l.b16 %v3698
        %v4038 = vunpack.c.h.b16 %v3698
        %v4039 = vunpack.c.l.b16 %v3699
        %v4040 = vunpack.c.h.b16 %v3699
        %v4041 = vunpack.c.l.b16 %v3700
        %v4042 = vunpack.c.h.b16 %v3700
        %v4043 = vunpack.c.l.b16 %v3701
        %v4044 = vunpack.c.h.b16 %v3701
        %v4045 = vunpack.c.l.b16 %v3702
        %v4046 = vunpack.c.h.b16 %v3702
        %v4047 = vunpack.c.l.b16 %v3703
        %v4048 = vunpack.c.h.b16 %v3703
        %v4049 = vunpack.c.l.b16 %v3704
        %v4050 = vunpack.c.h.b16 %v3704
        %v4051 = vunpack.c.l.b16 %v3705
        %v4052 = vunpack.c.h.b16 %v3705
        %v4053 = vunpack.c.l.b16 %v3706
        %v4054 = vunpack.c.h.b16 %v3706
        %v4055 = vunpack.c.l.b16 %v3707
        %v4056 = vunpack.c.h.b16 %v3707
        %v4057 = vunpack.c.l.b16 %v3708
        %v4058 = vunpack.c.h.b16 %v3708
        %v4059 = vunpack.c.l.b16 %v3709
        %v4060 = vunpack.c.h.b16 %v3709
        %v4061 = vunpack.c.l.b16 %v3710
        %v4062 = vunpack.c.h.b16 %v3710
        %v4063 = vunpack.c.l.b16 %v3711
        %v4064 = vunpack.c.h.b16 %v3711
        %v4065 = vunpack.c.l.b16 %v3712
        %v4066 = vunpack.c.h.b16 %v3712
        %v4067 = vunpack.c.l.b16 %v3713
        %v4068 = vunpack.c.h.b16 %v3713
        %v4069 = vunpack.c.l.b16 %v3714
        %v4070 = vunpack.c.h.b16 %v3714
        %v4071 = vunpack.c.l.b16 %v3715
        %v4072 = vunpack.c.h.b16 %v3715
        %v4073 = vunpack.c.l.b16 %v3716
        %v4074 = vunpack.c.h.b16 %v3716
        %v4075 = vunpack.c.l.b16 %v3717
        %v4076 = vunpack.c.h.b16 %v3717
        %v4077 = vunpack.c.l.b16 %v3718
        %v4078 = vunpack.c.h.b16 %v3718
        %v4079 = vunpack.c.l.b16 %v3719
        %v4080 = vunpack.c.h.b16 %v3719
        %v4081 = vunpack.c.l.b16 %v3720
        %v4082 = vunpack.c.h.b16 %v3720
        %v4083 = vunpack.c.l.b16 %v3721
        %v4084 = vunpack.c.h.b16 %v3721
        %v4085 = vunpack.c.l.b16 %v3722
        %v4086 = vunpack.c.h.b16 %v3722
        %v4087 = vunpack.c.l.b16 %v3723
        %v4088 = vunpack.c.h.b16 %v3723
        %v4089 = vunpack.c.l.b16 %v3724
        %v4090 = vunpack.c.h.b16 %v3724
        %v4091 = vunpack.c.l.b16 %v3725
        %v4092 = vunpack.c.h.b16 %v3725
        %v4093 = vunpack.c.l.b16 %v3726
        %v4094 = vunpack.c.h.b16 %v3726
        %v4095 = vunpack.c.l.b16 %v3727
        %v4096 = vunpack.c.h.b16 %v3727
        %v4097 = vunpack.c.l.b16 %v3728
        %v4098 = vunpack.c.h.b16 %v3728
        %v4099 = vunpack.c.l.b16 %v3729
        %v4100 = vunpack.c.h.b16 %v3729
        %v4101 = vunpack.c.l.b16 %v3730
        %v4102 = vunpack.c.h.b16 %v3730
        %v4103 = vunpack.c.l.b16 %v3731
        %v4104 = vunpack.c.h.b16 %v3731
        %v4105 = vunpack.c.l.b16 %v3732
        %v4106 = vunpack.c.h.b16 %v3732
        %v4107 = vunpack.c.l.b16 %v3733
        %v4108 = vunpack.c.h.b16 %v3733
        %v4109 = vunpack.c.l.b16 %v3734
        %v4110 = vunpack.c.h.b16 %v3734
        %v4111 = vunpack.c.l.b16 %v3735
        %v4112 = vunpack.c.h.b16 %v3735
        %v4113 = vunpack.c.l.b16 %v3736
        %v4114 = vunpack.c.h.b16 %v3736
        %v4115 = vunpack.c.l.b16 %v3737
        %v4116 = vunpack.c.h.b16 %v3737
        %v4117 = vunpack.c.l.b16 %v3738
        %v4118 = vunpack.c.h.b16 %v3738
        %v4119 = vunpack.c.l.b16 %v3739
        %v4120 = vunpack.c.h.b16 %v3739
        %v4121 = vunpack.c.l.b16 %v3740
        %v4122 = vunpack.c.h.b16 %v3740
        %v4123 = vunpack.c.l.b16 %v3741
        %v4124 = vunpack.c.h.b16 %v3741
        %v4125 = vunpack.c.l.b16 %v3742
        %v4126 = vunpack.c.h.b16 %v3742
        %v4127 = vpack.c.b16 %v3873, %v3871
        %v4128 = vpack.c.b16 %v3874, %v3872
        %v4129 = vpack.c.b16 %v3877, %v3875
        %v4130 = vpack.c.b16 %v3878, %v3876
        %v4131 = vpack.c.b16 %v3881, %v3879
        %v4132 = vpack.c.b16 %v3882, %v3880
        %v4133 = vpack.c.b16 %v3885, %v3883
        %v4134 = vpack.c.b16 %v3886, %v3884
        %v4135 = vpack.c.b16 %v3889, %v3887
        %v4136 = vpack.c.b16 %v3890, %v3888
        %v4137 = vpack.c.b16 %v3893, %v3891
        %v4138 = vpack.c.b16 %v3894, %v3892
        %v4139 = vpack.c.b16 %v3897, %v3895
        %v4140 = vpack.c.b16 %v3898, %v3896
        %v4141 = vpack.c.b16 %v3901, %v3899
        %v4142 = vpack.c.b16 %v3902, %v3900
        %v4143 = vpack.c.b16 %v3905, %v3903
        %v4144 = vpack.c.b16 %v3906, %v3904
        %v4145 = vpack.c.b16 %v3909, %v3907
        %v4146 = vpack.c.b16 %v3910, %v3908
        %v4147 = vpack.c.b16 %v3913, %v3911
        %v4148 = vpack.c.b16 %v3914, %v3912
        %v4149 = vpack.c.b16 %v3917, %v3915
        %v4150 = vpack.c.b16 %v3918, %v3916
        %v4151 = vpack.c.b16 %v3921, %v3919
        %v4152 = vpack.c.b16 %v3922, %v3920
        %v4153 = vpack.c.b16 %v3925, %v3923
        %v4154 = vpack.c.b16 %v3926, %v3924
        %v4155 = vpack.c.b16 %v3929, %v3927
        %v4156 = vpack.c.b16 %v3930, %v3928
        %v4157 = vpack.c.b16 %v3933, %v3931
        %v4158 = vpack.c.b16 %v3934, %v3932
        %v4159 = vpack.c.b16 %v3937, %v3935
        %v4160 = vpack.c.b16 %v3938, %v3936
        %v4161 = vpack.c.b16 %v3941, %v3939
        %v4162 = vpack.c.b16 %v3942, %v3940
        %v4163 = vpack.c.b16 %v3945, %v3943
        %v4164 = vpack.c.b16 %v3946, %v3944
        %v4165 = vpack.c.b16 %v3949, %v3947
        %v4166 = vpack.c.b16 %v3950, %v3948
        %v4167 = vpack.c.b16 %v3953, %v3951
        %v4168 = vpack.c.b16 %v3954, %v3952
        %v4169 = vpack.c.b16 %v3957, %v3955
        %v4170 = vpack.c.b16 %v3958, %v3956
        %v4171 = vpack.c.b16 %v3961, %v3959
        %v4172 = vpack.c.b16 %v3962, %v3960
        %v4173 = vpack.c.b16 %v3965, %v3963
        %v4174 = vpack.c.b16 %v3966, %v3964
        %v4175 = vpack.c.b16 %v3969, %v3967
        %v4176 = vpack.c.b16 %v3970, %v3968
        %v4177 = vpack.c.b16 %v3973, %v3971
        %v4178 = vpack.c.b16 %v3974, %v3972
        %v4179 = vpack.c.b16 %v3977, %v3975
        %v4180 = vpack.c.b16 %v3978, %v3976
        %v4181 = vpack.c.b16 %v3981, %v3979
        %v4182 = vpack.c.b16 %v3982, %v3980
        %v4183 = vpack.c.b16 %v3985, %v3983
        %v4184 = vpack.c.b16 %v3986, %v3984
        %v4185 = vpack.c.b16 %v3989, %v3987
        %v4186 = vpack.c.b16 %v3990, %v3988
        %v4187 = vpack.c.b16 %v3993, %v3991
        %v4188 = vpack.c.b16 %v3994, %v3992
        %v4189 = vpack.c.b16 %v3997, %v3995
        %v4190 = vpack.c.b16 %v3998, %v3996
        %v4191 = vpack.c.b16 %v4001, %v3999
        %v4192 = vpack.c.b16 %v4002, %v4000
        %v4193 = vpack.c.b16 %v4005, %v4003
        %v4194 = vpack.c.b16 %v4006, %v4004
        %v4195 = vpack.c.b16 %v4009, %v4007
        %v4196 = vpack.c.b16 %v4010, %v4008
        %v4197 = vpack.c.b16 %v4013, %v4011
        %v4198 = vpack.c.b16 %v4014, %v4012
        %v4199 = vpack.c.b16 %v4017, %v4015
        %v4200 = vpack.c.b16 %v4018, %v4016
        %v4201 = vpack.c.b16 %v4021, %v4019
        %v4202 = vpack.c.b16 %v4022, %v4020
        %v4203 = vpack.c.b16 %v4025, %v4023
        %v4204 = vpack.c.b16 %v4026, %v4024
        %v4205 = vpack.c.b16 %v4029, %v4027
        %v4206 = vpack.c.b16 %v4030, %v4028
        %v4207 = vpack.c.b16 %v4033, %v4031
        %v4208 = vpack.c.b16 %v4034, %v4032
        %v4209 = vpack.c.b16 %v4037, %v4035
        %v4210 = vpack.c.b16 %v4038, %v4036
        %v4211 = vpack.c.b16 %v4041, %v4039
        %v4212 = vpack.c.b16 %v4042, %v4040
        %v4213 = vpack.c.b16 %v4045, %v4043
        %v4214 = vpack.c.b16 %v4046, %v4044
        %v4215 = vpack.c.b16 %v4049, %v4047
        %v4216 = vpack.c.b16 %v4050, %v4048
        %v4217 = vpack.c.b16 %v4053, %v4051
        %v4218 = vpack.c.b16 %v4054, %v4052
        %v4219 = vpack.c.b16 %v4057, %v4055
        %v4220 = vpack.c.b16 %v4058, %v4056
        %v4221 = vpack.c.b16 %v4061, %v4059
        %v4222 = vpack.c.b16 %v4062, %v4060
        %v4223 = vpack.c.b16 %v4065, %v4063
        %v4224 = vpack.c.b16 %v4066, %v4064
        %v4225 = vpack.c.b16 %v4069, %v4067
        %v4226 = vpack.c.b16 %v4070, %v4068
        %v4227 = vpack.c.b16 %v4073, %v4071
        %v4228 = vpack.c.b16 %v4074, %v4072
        %v4229 = vpack.c.b16 %v4077, %v4075
        %v4230 = vpack.c.b16 %v4078, %v4076
        %v4231 = vpack.c.b16 %v4081, %v4079
        %v4232 = vpack.c.b16 %v4082, %v4080
        %v4233 = vpack.c.b16 %v4085, %v4083
        %v4234 = vpack.c.b16 %v4086, %v4084
        %v4235 = vpack.c.b16 %v4089, %v4087
        %v4236 = vpack.c.b16 %v4090, %v4088
        %v4237 = vpack.c.b16 %v4093, %v4091
        %v4238 = vpack.c.b16 %v4094, %v4092
        %v4239 = vpack.c.b16 %v4097, %v4095
        %v4240 = vpack.c.b16 %v4098, %v4096
        %v4241 = vpack.c.b16 %v4101, %v4099
        %v4242 = vpack.c.b16 %v4102, %v4100
        %v4243 = vpack.c.b16 %v4105, %v4103
        %v4244 = vpack.c.b16 %v4106, %v4104
        %v4245 = vpack.c.b16 %v4109, %v4107
        %v4246 = vpack.c.b16 %v4110, %v4108
        %v4247 = vpack.c.b16 %v4113, %v4111
        %v4248 = vpack.c.b16 %v4114, %v4112
        %v4249 = vpack.c.b16 %v4117, %v4115
        %v4250 = vpack.c.b16 %v4118, %v4116
        %v4251 = vpack.c.b16 %v4121, %v4119
        %v4252 = vpack.c.b16 %v4122, %v4120
        %v4253 = vpack.c.b16 %v4125, %v4123
        %v4254 = vpack.c.b16 %v4126, %v4124
        %4383 = vmatpush.bf16.msra.mxu0 %v4141
        %4384 = vmatpush.bf16.msra.mxu0 %v4139
        %4385 = vmatpush.bf16.msra.mxu0 %v4137
        %4386 = vmatpush.bf16.msra.mxu0 %v4135
        %4387 = vmatpush.bf16.msra.mxu0 %v4133
        %4388 = vmatpush.bf16.msra.mxu0 %v4131
        %4389 = vmatpush.bf16.msra.mxu0 %v4129
        %4390 = vmatpush.bf16.msra.mxu0 %v4127
        %4391 = vmatmul.bf16.gmra.mxu0 %v3607
        %v4392 = vpop.f32.mrf.mxu0
        %v4393 = vadd.f32 0.0, %v4392
        %v4394 = vpop.f32.mrf.mxu0
        %4395 = vdwg.mxu0
        %4396 = vmatpush.bf16.msra.mxu0 %v4157
        %4397 = vmatpush.bf16.msra.mxu0 %v4155
        %4398 = vmatpush.bf16.msra.mxu0 %v4153
        %4399 = vmatpush.bf16.msra.mxu0 %v4151
        %4400 = vmatpush.bf16.msra.mxu0 %v4149
        %4401 = vmatpush.bf16.msra.mxu0 %v4147
        %4402 = vmatpush.bf16.msra.mxu0 %v4145
        %4403 = vmatpush.bf16.msra.mxu0 %v4143
        %4404 = vmatmul.bf16.gmra.mxu0 %v3608
        %v4405 = vpop.f32.mrf.mxu0
        %v4406 = vadd.f32 %v4393, %v4405
        %v4407 = vpop.f32.mrf.mxu0
        %4408 = vdwg.mxu0
        %4409 = vmatpush.bf16.msra.mxu0 %v4173
        %4410 = vmatpush.bf16.msra.mxu0 %v4171
        %4411 = vmatpush.bf16.msra.mxu0 %v4169
        %4412 = vmatpush.bf16.msra.mxu0 %v4167
        %4413 = vmatpush.bf16.msra.mxu0 %v4165
        %4414 = vmatpush.bf16.msra.mxu0 %v4163
        %4415 = vmatpush.bf16.msra.mxu0 %v4161
        %4416 = vmatpush.bf16.msra.mxu0 %v4159
        %4417 = vmatmul.bf16.gmra.mxu0 %v3609
        %v4418 = vpop.f32.mrf.mxu0
        %v4419 = vadd.f32 %v4406, %v4418
        %v4420 = vpop.f32.mrf.mxu0
        %4421 = vdwg.mxu0
        %4422 = vmatpush.bf16.msra.mxu0 %v4189
        %4423 = vmatpush.bf16.msra.mxu0 %v4187
        %4424 = vmatpush.bf16.msra.mxu0 %v4185
        %4425 = vmatpush.bf16.msra.mxu0 %v4183
        %4426 = vmatpush.bf16.msra.mxu0 %v4181
        %4427 = vmatpush.bf16.msra.mxu0 %v4179
        %4428 = vmatpush.bf16.msra.mxu0 %v4177
        %4429 = vmatpush.bf16.msra.mxu0 %v4175
        %4430 = vmatmul.bf16.gmra.mxu0 %v3610
        %v4431 = vpop.f32.mrf.mxu0
        %v4432 = vadd.f32 %v4419, %v4431
        %v4433 = vpop.f32.mrf.mxu0
        %4434 = vdwg.mxu0
        %4435 = vmatpush.bf16.msra.mxu0 %v4205
        %4436 = vmatpush.bf16.msra.mxu0 %v4203
        %4437 = vmatpush.bf16.msra.mxu0 %v4201
        %4438 = vmatpush.bf16.msra.mxu0 %v4199
        %4439 = vmatpush.bf16.msra.mxu0 %v4197
        %4440 = vmatpush.bf16.msra.mxu0 %v4195
        %4441 = vmatpush.bf16.msra.mxu0 %v4193
        %4442 = vmatpush.bf16.msra.mxu0 %v4191
        %4443 = vmatmul.bf16.gmra.mxu0 %v3611
        %v4444 = vpop.f32.mrf.mxu0
        %v4445 = vadd.f32 %v4432, %v4444
        %v4446 = vpop.f32.mrf.mxu0
        %4447 = vdwg.mxu0
        %4448 = vmatpush.bf16.msra.mxu0 %v4221
        %4449 = vmatpush.bf16.msra.mxu0 %v4219
        %4450 = vmatpush.bf16.msra.mxu0 %v4217
        %4451 = vmatpush.bf16.msra.mxu0 %v4215
        %4452 = vmatpush.bf16.msra.mxu0 %v4213
        %4453 = vmatpush.bf16.msra.mxu0 %v4211
        %4454 = vmatpush.bf16.msra.mxu0 %v4209
        %4455 = vmatpush.bf16.msra.mxu0 %v4207
        %4456 = vmatmul.bf16.gmra.mxu0 %v3612
        %v4457 = vpop.f32.mrf.mxu0
        %v4458 = vadd.f32 %v4445, %v4457
        %v4459 = vpop.f32.mrf.mxu0
        %4460 = vdwg.mxu0
        %4461 = vmatpush.bf16.msra.mxu0 %v4237
        %4462 = vmatpush.bf16.msra.mxu0 %v4235
        %4463 = vmatpush.bf16.msra.mxu0 %v4233
        %4464 = vmatpush.bf16.msra.mxu0 %v4231
        %4465 = vmatpush.bf16.msra.mxu0 %v4229
        %4466 = vmatpush.bf16.msra.mxu0 %v4227
        %4467 = vmatpush.bf16.msra.mxu0 %v4225
        %4468 = vmatpush.bf16.msra.mxu0 %v4223
        %4469 = vmatmul.bf16.gmra.mxu0 %v3613
        %v4470 = vpop.f32.mrf.mxu0
        %v4471 = vadd.f32 %v4458, %v4470
        %v4472 = vpop.f32.mrf.mxu0
        %4473 = vdwg.mxu0
        %4474 = vmatpush.bf16.msra.mxu0 %v4253
        %4475 = vmatpush.bf16.msra.mxu0 %v4251
        %4476 = vmatpush.bf16.msra.mxu0 %v4249
        %4477 = vmatpush.bf16.msra.mxu0 %v4247
        %4478 = vmatpush.bf16.msra.mxu0 %v4245
        %4479 = vmatpush.bf16.msra.mxu0 %v4243
        %4480 = vmatpush.bf16.msra.mxu0 %v4241
        %4481 = vmatpush.bf16.msra.mxu0 %v4239
        %4482 = vmatmul.bf16.gmra.mxu0 %v3614
        %v4483 = vpop.f32.mrf.mxu0
        %v4484 = vadd.f32 %v4471, %v4483
        %v4485 = vpop.f32.mrf.mxu0
        %4486 = vdwg.mxu0
        %4487 = vmatpush.bf16.msra.mxu0 %v4142
        %4488 = vmatpush.bf16.msra.mxu0 %v4140
        %4489 = vmatpush.bf16.msra.mxu0 %v4138
        %4490 = vmatpush.bf16.msra.mxu0 %v4136
        %4491 = vmatpush.bf16.msra.mxu0 %v4134
        %4492 = vmatpush.bf16.msra.mxu0 %v4132
        %4493 = vmatpush.bf16.msra.mxu0 %v4130
        %4494 = vmatpush.bf16.msra.mxu0 %v4128
        %4495 = vmatmul.bf16.gmra.mxu0 %v3607
        %v4496 = vpop.f32.mrf.mxu0
        %v4497 = vadd.f32 0.0, %v4496
        %v4498 = vpop.f32.mrf.mxu0
        %4499 = vdwg.mxu0
        %4500 = vmatpush.bf16.msra.mxu0 %v4158
        %4501 = vmatpush.bf16.msra.mxu0 %v4156
        %4502 = vmatpush.bf16.msra.mxu0 %v4154
        %4503 = vmatpush.bf16.msra.mxu0 %v4152
        %4504 = vmatpush.bf16.msra.mxu0 %v4150
        %4505 = vmatpush.bf16.msra.mxu0 %v4148
        %4506 = vmatpush.bf16.msra.mxu0 %v4146
        %4507 = vmatpush.bf16.msra.mxu0 %v4144
        %4508 = vmatmul.bf16.gmra.mxu0 %v3608
        %v4509 = vpop.f32.mrf.mxu0
        %v4510 = vadd.f32 %v4497, %v4509
        %v4511 = vpop.f32.mrf.mxu0
        %4512 = vdwg.mxu0
        %4513 = vmatpush.bf16.msra.mxu0 %v4174
        %4514 = vmatpush.bf16.msra.mxu0 %v4172
        %4515 = vmatpush.bf16.msra.mxu0 %v4170
        %4516 = vmatpush.bf16.msra.mxu0 %v4168
        %4517 = vmatpush.bf16.msra.mxu0 %v4166
        %4518 = vmatpush.bf16.msra.mxu0 %v4164
        %4519 = vmatpush.bf16.msra.mxu0 %v4162
        %4520 = vmatpush.bf16.msra.mxu0 %v4160
        %4521 = vmatmul.bf16.gmra.mxu0 %v3609
        %v4522 = vpop.f32.mrf.mxu0
        %v4523 = vadd.f32 %v4510, %v4522
        %v4524 = vpop.f32.mrf.mxu0
        %4525 = vdwg.mxu0
        %4526 = vmatpush.bf16.msra.mxu0 %v4190
        %4527 = vmatpush.bf16.msra.mxu0 %v4188
        %4528 = vmatpush.bf16.msra.mxu0 %v4186
        %4529 = vmatpush.bf16.msra.mxu0 %v4184
        %4530 = vmatpush.bf16.msra.mxu0 %v4182
        %4531 = vmatpush.bf16.msra.mxu0 %v4180
        %4532 = vmatpush.bf16.msra.mxu0 %v4178
        %4533 = vmatpush.bf16.msra.mxu0 %v4176
        %4534 = vmatmul.bf16.gmra.mxu0 %v3610
        %v4535 = vpop.f32.mrf.mxu0
        %v4536 = vadd.f32 %v4523, %v4535
        %v4537 = vpop.f32.mrf.mxu0
        %4538 = vdwg.mxu0
        %4539 = vmatpush.bf16.msra.mxu0 %v4206
        %4540 = vmatpush.bf16.msra.mxu0 %v4204
        %4541 = vmatpush.bf16.msra.mxu0 %v4202
        %4542 = vmatpush.bf16.msra.mxu0 %v4200
        %4543 = vmatpush.bf16.msra.mxu0 %v4198
        %4544 = vmatpush.bf16.msra.mxu0 %v4196
        %4545 = vmatpush.bf16.msra.mxu0 %v4194
        %4546 = vmatpush.bf16.msra.mxu0 %v4192
        %4547 = vmatmul.bf16.gmra.mxu0 %v3611
        %v4548 = vpop.f32.mrf.mxu0
        %v4549 = vadd.f32 %v4536, %v4548
        %v4550 = vpop.f32.mrf.mxu0
        %4551 = vdwg.mxu0
        %4552 = vmatpush.bf16.msra.mxu0 %v4222
        %4553 = vmatpush.bf16.msra.mxu0 %v4220
        %4554 = vmatpush.bf16.msra.mxu0 %v4218
        %4555 = vmatpush.bf16.msra.mxu0 %v4216
        %4556 = vmatpush.bf16.msra.mxu0 %v4214
        %4557 = vmatpush.bf16.msra.mxu0 %v4212
        %4558 = vmatpush.bf16.msra.mxu0 %v4210
        %4559 = vmatpush.bf16.msra.mxu0 %v4208
        %4560 = vmatmul.bf16.gmra.mxu0 %v3612
        %v4561 = vpop.f32.mrf.mxu0
        %v4562 = vadd.f32 %v4549, %v4561
        %v4563 = vpop.f32.mrf.mxu0
        %4564 = vdwg.mxu0
        %4565 = vmatpush.bf16.msra.mxu0 %v4238
        %4566 = vmatpush.bf16.msra.mxu0 %v4236
        %4567 = vmatpush.bf16.msra.mxu0 %v4234
        %4568 = vmatpush.bf16.msra.mxu0 %v4232
        %4569 = vmatpush.bf16.msra.mxu0 %v4230
        %4570 = vmatpush.bf16.msra.mxu0 %v4228
        %4571 = vmatpush.bf16.msra.mxu0 %v4226
        %4572 = vmatpush.bf16.msra.mxu0 %v4224
        %4573 = vmatmul.bf16.gmra.mxu0 %v3613
        %v4574 = vpop.f32.mrf.mxu0
        %v4575 = vadd.f32 %v4562, %v4574
        %v4576 = vpop.f32.mrf.mxu0
        %4577 = vdwg.mxu0
        %4578 = vmatpush.bf16.msra.mxu0 %v4254
        %4579 = vmatpush.bf16.msra.mxu0 %v4252
        %4580 = vmatpush.bf16.msra.mxu0 %v4250
        %4581 = vmatpush.bf16.msra.mxu0 %v4248
        %4582 = vmatpush.bf16.msra.mxu0 %v4246
        %4583 = vmatpush.bf16.msra.mxu0 %v4244
        %4584 = vmatpush.bf16.msra.mxu0 %v4242
        %4585 = vmatpush.bf16.msra.mxu0 %v4240
        %4586 = vmatmul.bf16.gmra.mxu0 %v3614
        %v4587 = vpop.f32.mrf.mxu0
        %v4588 = vadd.f32 %v4575, %v4587
        %v4589 = vpop.f32.mrf.mxu0
        %4590 = vdwg.mxu0
        %vm4591 = vcmask 19456
        %4592 = vst.msk [vmem:[#allocation9] sm:$0xf] %vm4591, 0
        %vm4593 = vcmask 44056
        %4594 = vst.msk [vmem:[#allocation9 + $0x8] sm:$0xf] %vm4593, 0
        %v4595 = vpack.c.bf16 %v4588, %v4484
        %4597 = vrot.lane.b32.xlu0 %v4595, 3
        %v4598 = vpop.permute.xlu0 %4597
        %v4599 = vrot.slane %v4598, 4
        %vm4600 = vcmask 23552
        %v4601 = vsel %vm4600, %v4599, %v4598
        %vm4604 = vcmask 1043480
        %vm4605 = vmor %vm2427, %vm4604
        %4606 = vst.msk [vmem:[#allocation9] sm:$0xff] %vm4605, %v4601
        %4607 = vst.msk [vmem:[#allocation9 + $0x8] sm:$0xf] %vm4591, %v4599
        %v4608 = vld [vmem:[#allocation9] sm:$0xff]
        %v4609 = vld [vmem:[#allocation9 + $0x8] sm:$0xf]
        %4610 = vst [vmem:[#allocation10] sm:$0xff] %v4608
        %4613 = vrot.lane.b32.xlu0 %v4608, 127
        %v4614 = vpop.permute.xlu0 %4613
        %4615 = vrot.lane.b32.xlu0 %v4609, 127
        %v4616 = vpop.permute.xlu0 %4615
        %v4617 = vrot.slane %v4614, 4
        %v4618 = vrot.slane %v4616, 4
        %v4619 = vsel %vm2442, %v4617, %v4618
        %v4620 = vsel %vm2444, %v4614, %v4619
        %4622 = vst [vmem:[#allocation10 + $0x8] sm:$0xff] %v4620
        %4623 = vrot.lane.b32.xlu0 %v4608, 126
        %v4624 = vpop.permute.xlu0 %4623
        %4625 = vrot.lane.b32.xlu0 %v4609, 126
        %v4626 = vpop.permute.xlu0 %4625
        %v4627 = vrot.slane %v4624, 4
        %v4628 = vrot.slane %v4626, 4
        %v4629 = vsel %vm2442, %v4627, %v4628
        %v4630 = vsel %vm2455, %v4624, %v4629
        %4632 = vst [vmem:[#allocation10 + $0x10] sm:$0xff] %v4630
        %4633 = vrot.lane.b32.xlu0 %v4608, 125
        %v4634 = vpop.permute.xlu0 %4633
        %4635 = vrot.lane.b32.xlu0 %v4609, 125
        %v4636 = vpop.permute.xlu0 %4635
        %v4637 = vrot.slane %v4634, 4
        %v4638 = vrot.slane %v4636, 4
        %v4639 = vsel %vm2442, %v4637, %v4638
        %v4640 = vsel %vm2466, %v4634, %v4639
        %4642 = vst [vmem:[#allocation10 + $0x18] sm:$0xff] %v4640
        %4643 = vrot.lane.b32.xlu0 %v4608, 124
        %v4644 = vpop.permute.xlu0 %4643
        %4645 = vrot.lane.b32.xlu0 %v4609, 124
        %v4646 = vpop.permute.xlu0 %4645
        %v4647 = vrot.slane %v4644, 4
        %v4648 = vrot.slane %v4646, 4
        %v4649 = vsel %vm2442, %v4647, %v4648
        %v4650 = vsel %vm2477, %v4644, %v4649
        %4652 = vst [vmem:[#allocation10 + $0x20] sm:$0xff] %v4650
        %4653 = vrot.lane.b32.xlu0 %v4608, 123
        %v4654 = vpop.permute.xlu0 %4653
        %4655 = vrot.lane.b32.xlu0 %v4609, 123
        %v4656 = vpop.permute.xlu0 %4655
        %v4657 = vrot.slane %v4654, 4
        %v4658 = vrot.slane %v4656, 4
        %v4659 = vsel %vm2442, %v4657, %v4658
        %v4660 = vsel %vm2488, %v4654, %v4659
        %4662 = vst [vmem:[#allocation10 + $0x28] sm:$0xff] %v4660
        %4663 = vrot.lane.b32.xlu0 %v4608, 122
        %v4664 = vpop.permute.xlu0 %4663
        %4665 = vrot.lane.b32.xlu0 %v4609, 122
        %v4666 = vpop.permute.xlu0 %4665
        %v4667 = vrot.slane %v4664, 4
        %v4668 = vrot.slane %v4666, 4
        %v4669 = vsel %vm2442, %v4667, %v4668
        %v4670 = vsel %vm2499, %v4664, %v4669
        %4672 = vst [vmem:[#allocation10 + $0x30] sm:$0xff] %v4670
        %v4673 = vld [vmem:[%s23] sm:$0xf]
        %v4674 = vld [vmem:[%s23 + $0x4] sm:$0xf]
        %v4675 = vld [vmem:[#allocation10] sm:$0xff]
        %v4676 = vld [vmem:[#allocation10 + $0x8] sm:$0xff]
        %v4677 = vld [vmem:[#allocation10 + $0x10] sm:$0xff]
        %v4678 = vld [vmem:[#allocation10 + $0x18] sm:$0xff]
        %v4679 = vld [vmem:[#allocation10 + $0x20] sm:$0xff]
        %v4680 = vld [vmem:[#allocation10 + $0x28] sm:$0xff]
        %v4681 = vld [vmem:[#allocation10 + $0x30] sm:$0xff]
        %v4682 = vld [vmem:[%s25] sm:$0xff]
        %v4683 = vld [vmem:[%s25 + $0x8] sm:$0xff]
        %4685 = vset.pattern.permute.xlu0 0
        %4686 = vperm.xlu0 %4685, %v4682
        %v4687 = vpop.permute.xlu0 %4686
        %4690 = vset.pattern.permute.xlu0 0
        %4691 = vperm.xlu0 %4690, %v4683
        %v4692 = vpop.permute.xlu0 %4691
        %v4696 = vunpack.c.l.b16 %v4673
        %v4697 = vunpack.c.l.b16 %v4674
        %v4698 = vpack.c.b16 %v4697, %v4696
        %v4706 = vunpack.c.l.b16 %v4675
        %v4707 = vunpack.c.h.b16 %v4675
        %v4708 = vunpack.c.l.b16 %v4676
        %v4709 = vunpack.c.h.b16 %v4676
        %v4710 = vunpack.c.l.b16 %v4677
        %v4711 = vunpack.c.h.b16 %v4677
        %v4712 = vunpack.c.l.b16 %v4678
        %v4713 = vunpack.c.h.b16 %v4678
        %v4714 = vunpack.c.l.b16 %v4679
        %v4715 = vunpack.c.h.b16 %v4679
        %v4716 = vunpack.c.l.b16 %v4680
        %v4717 = vunpack.c.h.b16 %v4680
        %v4718 = vunpack.c.l.b16 %v4681
        %v4719 = vunpack.c.h.b16 %v4681
        %v4720 = vpack.c.b16 %v4708, %v4706
        %v4721 = vpack.c.b16 %v4709, %v4707
        %v4722 = vpack.c.b16 %v4712, %v4710
        %v4723 = vpack.c.b16 %v4713, %v4711
        %v4724 = vpack.c.b16 %v4716, %v4714
        %v4725 = vpack.c.b16 %v4717, %v4715
        %v4726 = vpack.c.b16 %v4718, %v4718
        %v4727 = vpack.c.b16 %v4719, %v4719
        %vm4734 = vcmask 457728
        %v4736 = vsel %vm4734, %v4698, 0
        %v4739 = vsel %vm2703, %v4726, 0
        %v4742 = vsel %vm2703, %v4727, 0
        %4744 = vmatpush.bf16.msra.mxu0 0
        %4745 = vmatpush.bf16.msra.mxu0 0
        %4746 = vmatpush.bf16.msra.mxu0 0
        %4747 = vmatpush.bf16.msra.mxu0 0
        %4748 = vmatpush.bf16.msra.mxu0 %v4739
        %4749 = vmatpush.bf16.msra.mxu0 %v4724
        %4750 = vmatpush.bf16.msra.mxu0 %v4722
        %4751 = vmatpush.bf16.msra.mxu0 %v4720
        %4752 = vmatmul.bf16.gmra.mxu0 %v4736
        %v4753 = vpop.f32.mrf.mxu0
        %v4754 = vadd.f32 %v4687, %v4753
        %v4755 = vpop.f32.mrf.mxu0
        %v4756 = vadd.f32 %v4692, %v4755
        %4757 = vdwg.mxu0
        %4758 = vmatpush.bf16.msra.mxu0 0
        %4759 = vmatpush.bf16.msra.mxu0 0
        %4760 = vmatpush.bf16.msra.mxu0 0
        %4761 = vmatpush.bf16.msra.mxu0 0
        %4762 = vmatpush.bf16.msra.mxu0 %v4742
        %4763 = vmatpush.bf16.msra.mxu0 %v4725
        %4764 = vmatpush.bf16.msra.mxu0 %v4723
        %4765 = vmatpush.bf16.msra.mxu0 %v4721
        %4766 = vmatmul.bf16.gmra.mxu0 %v4736
        %v4767 = vpop.f32.mrf.mxu0
        %v4768 = vadd.f32 %v4687, %v4767
        %v4769 = vpop.f32.mrf.mxu0
        %v4770 = vadd.f32 %v4692, %v4769
        %4771 = vdwg.mxu0
        %vm4772 = vcmp.ge.f32.partialorder %v4754, 0.0
        %vm4773 = vcmp.ge.f32.partialorder %v4768, 0.0
        %vm4774 = vcmp.ge.f32.partialorder %v4756, 0.0
        %vm4775 = vcmp.ge.f32.partialorder %v4770, 0.0
        %v4776 = vmul.f32 %v4754, 0.2
        %v4777 = vmul.f32 %v4768, 0.2
        %v4778 = vmul.f32 %v4756, 0.2
        %v4779 = vmul.f32 %v4770, 0.2
        %v4780 = vsel %vm4772, %v4754, %v4776
        %v4781 = vsel %vm4773, %v4768, %v4777
        %v4782 = vsel %vm4774, %v4756, %v4778
        %v4783 = vsel %vm4775, %v4770, %v4779
        %v4784 = vpack.c.bf16 %v4782, %v4780
        %v4785 = vpack.c.bf16 %v4783, %v4781
        %v4786 = vld [vmem:[%s53] sm:$0xf]
        %v4787 = vld [vmem:[%s53 + $0x4] sm:$0xf]
        %v4788 = vld [vmem:[%s53 + $0x8] sm:$0xf]
        %v4789 = vld [vmem:[%s53 + $0xc] sm:$0xf]
        %v4790 = vld [vmem:[%s53 + $0x10] sm:$0xf]
        %v4791 = vld [vmem:[%s53 + $0x14] sm:$0xf]
        %v4792 = vld [vmem:[%s53 + $0x18] sm:$0xf]
        %v4793 = vld [vmem:[%s53 + $0x1c] sm:$0xf]
        %v4794 = vld [vmem:[%s53 + $0x20] sm:$0xf]
        %v4795 = vld [vmem:[%s53 + $0x24] sm:$0xf]
        %v4796 = vld [vmem:[%s53 + $0x28] sm:$0xf]
        %v4797 = vld [vmem:[%s53 + $0x2c] sm:$0xf]
        %v4798 = vld [vmem:[%s53 + $0x30] sm:$0xf]
        %v4799 = vld [vmem:[%s53 + $0x34] sm:$0xf]
        %v4800 = vld [vmem:[%s53 + $0x38] sm:$0xf]
        %v4801 = vld [vmem:[%s53 + $0x3c] sm:$0xf]
        %v4802 = vld [vmem:[%s53 + $0x40] sm:$0xf]
        %v4803 = vld [vmem:[%s53 + $0x44] sm:$0xf]
        %v4804 = vld [vmem:[%s53 + $0x48] sm:$0xf]
        %v4805 = vld [vmem:[%s53 + $0x4c] sm:$0xf]
        %v4806 = vld [vmem:[%s53 + $0x50] sm:$0xf]
        %v4807 = vld [vmem:[%s53 + $0x54] sm:$0xf]
        %v4808 = vld [vmem:[%s53 + $0x58] sm:$0xf]
        %v4809 = vld [vmem:[%s53 + $0x5c] sm:$0xf]
        %v4810 = vld [vmem:[%s53 + $0x60] sm:$0xf]
        %v4811 = vld [vmem:[%s53 + $0x64] sm:$0xf]
        %v4812 = vld [vmem:[%s53 + $0x68] sm:$0xf]
        %v4813 = vld [vmem:[%s53 + $0x6c] sm:$0xf]
        %v4814 = vld [vmem:[%s53 + $0x70] sm:$0xf]
        %v4815 = vld [vmem:[%s53 + $0x74] sm:$0xf]
        %v4816 = vld [vmem:[%s53 + $0x78] sm:$0xf]
        %v4817 = vld [vmem:[%s53 + $0x7c] sm:$0xf]
        %v4850 = vunpack.c.l.b16 %v4786
        %v4851 = vunpack.c.l.b16 %v4787
        %v4852 = vunpack.c.l.b16 %v4788
        %v4853 = vunpack.c.l.b16 %v4789
        %v4854 = vunpack.c.l.b16 %v4790
        %v4855 = vunpack.c.l.b16 %v4791
        %v4856 = vunpack.c.l.b16 %v4792
        %v4857 = vunpack.c.l.b16 %v4793
        %v4858 = vunpack.c.l.b16 %v4794
        %v4859 = vunpack.c.l.b16 %v4795
        %v4860 = vunpack.c.l.b16 %v4796
        %v4861 = vunpack.c.l.b16 %v4797
        %v4862 = vunpack.c.l.b16 %v4798
        %v4863 = vunpack.c.l.b16 %v4799
        %v4864 = vunpack.c.l.b16 %v4800
        %v4865 = vunpack.c.l.b16 %v4801
        %v4866 = vunpack.c.l.b16 %v4802
        %v4867 = vunpack.c.l.b16 %v4803
        %v4868 = vunpack.c.l.b16 %v4804
        %v4869 = vunpack.c.l.b16 %v4805
        %v4870 = vunpack.c.l.b16 %v4806
        %v4871 = vunpack.c.l.b16 %v4807
        %v4872 = vunpack.c.l.b16 %v4808
        %v4873 = vunpack.c.l.b16 %v4809
        %v4874 = vunpack.c.l.b16 %v4810
        %v4875 = vunpack.c.l.b16 %v4811
        %v4876 = vunpack.c.l.b16 %v4812
        %v4877 = vunpack.c.l.b16 %v4813
        %v4878 = vunpack.c.l.b16 %v4814
        %v4879 = vunpack.c.l.b16 %v4815
        %v4880 = vunpack.c.l.b16 %v4816
        %v4881 = vunpack.c.l.b16 %v4817
        %v4882 = vpack.c.b16 %v4851, %v4850
        %v4883 = vpack.c.b16 %v4853, %v4852
        %v4884 = vpack.c.b16 %v4855, %v4854
        %v4885 = vpack.c.b16 %v4857, %v4856
        %v4886 = vpack.c.b16 %v4859, %v4858
        %v4887 = vpack.c.b16 %v4861, %v4860
        %v4888 = vpack.c.b16 %v4863, %v4862
        %v4889 = vpack.c.b16 %v4865, %v4864
        %v4890 = vpack.c.b16 %v4867, %v4866
        %v4891 = vpack.c.b16 %v4869, %v4868
        %v4892 = vpack.c.b16 %v4871, %v4870
        %v4893 = vpack.c.b16 %v4873, %v4872
        %v4894 = vpack.c.b16 %v4875, %v4874
        %v4895 = vpack.c.b16 %v4877, %v4876
        %v4896 = vpack.c.b16 %v4879, %v4878
        %v4897 = vpack.c.b16 %v4881, %v4880
        %4914 = vmatpush.bf16.msra.mxu0 %v4889
        %4915 = vmatpush.bf16.msra.mxu0 %v4888
        %4916 = vmatpush.bf16.msra.mxu0 %v4887
        %4917 = vmatpush.bf16.msra.mxu0 %v4886
        %4918 = vmatpush.bf16.msra.mxu0 %v4885
        %4919 = vmatpush.bf16.msra.mxu0 %v4884
        %4920 = vmatpush.bf16.msra.mxu0 %v4883
        %4921 = vmatpush.bf16.msra.mxu0 %v4882
        %4922 = vmatmul.bf16.gmra.mxu0 %v4784
        %v4923 = vpop.f32.mrf.mxu0
        %v4924 = vadd.f32 0.0, %v4923
        %v4925 = vpop.f32.mrf.mxu0
        %v4926 = vadd.f32 0.0, %v4925
        %4927 = vdwg.mxu0
        %4928 = vmatpush.bf16.msra.mxu0 %v4897
        %4929 = vmatpush.bf16.msra.mxu0 %v4896
        %4930 = vmatpush.bf16.msra.mxu0 %v4895
        %4931 = vmatpush.bf16.msra.mxu0 %v4894
        %4932 = vmatpush.bf16.msra.mxu0 %v4893
        %4933 = vmatpush.bf16.msra.mxu0 %v4892
        %4934 = vmatpush.bf16.msra.mxu0 %v4891
        %4935 = vmatpush.bf16.msra.mxu0 %v4890
        %4936 = vmatmul.bf16.gmra.mxu0 %v4785
        %v4937 = vpop.f32.mrf.mxu0
        %v4938 = vadd.f32 %v4924, %v4937
        %v4939 = vpop.f32.mrf.mxu0
        %v4940 = vadd.f32 %v4926, %v4939
        %4941 = vdwg.mxu0
        %4942 = vst.msk [vmem:[#allocation11] sm:$0xf] %vm4591, 0
        %4943 = vst.msk [vmem:[#allocation11 + $0x4] sm:$0xf] %vm4591, 0
        %vm4944 = vcmask 568856
        %4945 = vst.msk [vmem:[#allocation11] sm:$0xf] %vm4944, 0
        %4946 = vst.msk [vmem:[#allocation11 + $0x4] sm:$0xf] %vm4944, 0
        %v4947 = vpack.c.bf16 %v4938, %v4938
        %v4948 = vpack.c.bf16 %v4940, %v4940
        %4951 = vrot.lane.b32.xlu0 %v4947, 3
        %v4952 = vpop.permute.xlu0 %4951
        %4953 = vrot.lane.b32.xlu0 %v4948, 3
        %v4954 = vpop.permute.xlu0 %4953
        %vm4957 = vcmask 543768
        %4958 = vst.msk [vmem:[#allocation11] sm:$0xf] %vm4957, %v4952
        %4959 = vst.msk [vmem:[#allocation11 + $0x4] sm:$0xf] %vm4957, %v4954
        %v4960 = vld [vmem:[#allocation11] sm:$0xf]
        %v4961 = vld [vmem:[#allocation11 + $0x4] sm:$0xf]
        %4962 = vst.msk [vmem:[#allocation12] sm:$0xf] %vm2928, %v4960
        %4963 = vst.msk [vmem:[#allocation12 + $0x4] sm:$0xf] %vm2928, %v4961
        %4966 = vrot.lane.b32.xlu0 %v4960, 127
        %v4967 = vpop.permute.xlu0 %4966
        %4968 = vrot.lane.b32.xlu0 %v4961, 127
        %v4969 = vpop.permute.xlu0 %4968
        %4972 = vst.msk [vmem:[#allocation12 + $0x8] sm:$0xf] %vm2928, %v4967
        %4973 = vst.msk [vmem:[#allocation12 + $0xc] sm:$0xf] %vm2928, %v4969
        %4974 = vrot.lane.b32.xlu0 %v4960, 126
        %v4975 = vpop.permute.xlu0 %4974
        %4976 = vrot.lane.b32.xlu0 %v4961, 126
        %v4977 = vpop.permute.xlu0 %4976
        %4980 = vst.msk [vmem:[#allocation12 + $0x10] sm:$0xf] %vm2928, %v4975
        %4981 = vst.msk [vmem:[#allocation12 + $0x14] sm:$0xf] %vm2928, %v4977
        %4982 = vrot.lane.b32.xlu0 %v4960, 125
        %v4983 = vpop.permute.xlu0 %4982
        %4984 = vrot.lane.b32.xlu0 %v4961, 125
        %v4985 = vpop.permute.xlu0 %4984
        %4988 = vst.msk [vmem:[#allocation12 + $0x18] sm:$0xf] %vm2928, %v4983
        %4989 = vst.msk [vmem:[#allocation12 + $0x1c] sm:$0xf] %vm2928, %v4985
        %4990 = vrot.lane.b32.xlu0 %v4960, 124
        %v4991 = vpop.permute.xlu0 %4990
        %4992 = vrot.lane.b32.xlu0 %v4961, 124
        %v4993 = vpop.permute.xlu0 %4992
        %4996 = vst.msk [vmem:[#allocation12 + $0x20] sm:$0xf] %vm2928, %v4991
        %4997 = vst.msk [vmem:[#allocation12 + $0x24] sm:$0xf] %vm2928, %v4993
        %4998 = vrot.lane.b32.xlu0 %v4960, 123
        %v4999 = vpop.permute.xlu0 %4998
        %5000 = vrot.lane.b32.xlu0 %v4961, 123
        %v5001 = vpop.permute.xlu0 %5000
        %5004 = vst.msk [vmem:[#allocation12 + $0x28] sm:$0xf] %vm2928, %v4999
        %5005 = vst.msk [vmem:[#allocation12 + $0x2c] sm:$0xf] %vm2928, %v5001
        %5006 = vrot.lane.b32.xlu0 %v4960, 122
        %v5007 = vpop.permute.xlu0 %5006
        %5008 = vrot.lane.b32.xlu0 %v4961, 122
        %v5009 = vpop.permute.xlu0 %5008
        %5012 = vst.msk [vmem:[#allocation12 + $0x30] sm:$0xf] %vm2928, %v5007
        %5013 = vst.msk [vmem:[#allocation12 + $0x34] sm:$0xf] %vm2928, %v5009
        %v5014 = vld [vmem:[%s27] sm:$0xf]
        %v5015 = vld [vmem:[%s27 + $0x4] sm:$0xf]
        %v5016 = vld [vmem:[%s27 + $0x8] sm:$0xf]
        %v5017 = vld [vmem:[%s27 + $0xc] sm:$0xf]
        %v5018 = vld [vmem:[#allocation12] sm:$0xf]
        %v5019 = vld [vmem:[#allocation12 + $0x4] sm:$0xf]
        %v5020 = vld [vmem:[#allocation12 + $0x8] sm:$0xf]
        %v5021 = vld [vmem:[#allocation12 + $0xc] sm:$0xf]
        %v5022 = vld [vmem:[#allocation12 + $0x10] sm:$0xf]
        %v5023 = vld [vmem:[#allocation12 + $0x14] sm:$0xf]
        %v5024 = vld [vmem:[#allocation12 + $0x18] sm:$0xf]
        %v5025 = vld [vmem:[#allocation12 + $0x1c] sm:$0xf]
        %v5026 = vld [vmem:[#allocation12 + $0x20] sm:$0xf]
        %v5027 = vld [vmem:[#allocation12 + $0x24] sm:$0xf]
        %v5028 = vld [vmem:[#allocation12 + $0x28] sm:$0xf]
        %v5029 = vld [vmem:[#allocation12 + $0x2c] sm:$0xf]
        %v5030 = vld [vmem:[#allocation12 + $0x30] sm:$0xf]
        %v5031 = vld [vmem:[#allocation12 + $0x34] sm:$0xf]
        %v5032 = vld [vmem:[%s29] sm:$0xff]
        %v5033 = vld [vmem:[%s29 + $0x8] sm:$0xff]
        %v5034 = vld [vmem:[%s29 + $0x10] sm:$0xff]
        %v5035 = vld [vmem:[%s29 + $0x18] sm:$0xff]
        %5037 = vset.pattern.permute.xlu0 0
        %5038 = vperm.xlu0 %5037, %v5032
        %v5039 = vpop.permute.xlu0 %5038
        %5042 = vset.pattern.permute.xlu0 0
        %5043 = vperm.xlu0 %5042, %v5033
        %v5044 = vpop.permute.xlu0 %5043
        %5047 = vset.pattern.permute.xlu0 0
        %5048 = vperm.xlu0 %5047, %v5034
        %v5049 = vpop.permute.xlu0 %5048
        %5052 = vset.pattern.permute.xlu0 0
        %5053 = vperm.xlu0 %5052, %v5035
        %v5054 = vpop.permute.xlu0 %5053
        %v5060 = vunpack.c.l.b16 %v5014
        %v5061 = vunpack.c.l.b16 %v5015
        %v5062 = vunpack.c.l.b16 %v5016
        %v5063 = vunpack.c.l.b16 %v5017
        %v5064 = vpack.c.b16 %v5061, %v5060
        %v5065 = vpack.c.b16 %v5063, %v5062
        %v5080 = vunpack.c.l.b16 %v5018
        %v5081 = vunpack.c.l.b16 %v5019
        %v5082 = vunpack.c.l.b16 %v5020
        %v5083 = vunpack.c.l.b16 %v5021
        %v5084 = vunpack.c.l.b16 %v5022
        %v5085 = vunpack.c.l.b16 %v5023
        %v5086 = vunpack.c.l.b16 %v5024
        %v5087 = vunpack.c.l.b16 %v5025
        %v5088 = vunpack.c.l.b16 %v5026
        %v5089 = vunpack.c.l.b16 %v5027
        %v5090 = vunpack.c.l.b16 %v5028
        %v5091 = vunpack.c.l.b16 %v5029
        %v5092 = vunpack.c.l.b16 %v5030
        %v5093 = vunpack.c.l.b16 %v5031
        %v5094 = vpack.c.b16 %v5081, %v5080
        %v5095 = vpack.c.b16 %v5083, %v5082
        %v5096 = vpack.c.b16 %v5085, %v5084
        %v5097 = vpack.c.b16 %v5087, %v5086
        %v5098 = vpack.c.b16 %v5089, %v5088
        %v5099 = vpack.c.b16 %v5091, %v5090
        %v5100 = vpack.c.b16 %v5093, %v5092
        %v5109 = vsel %vm3211, %v5064, 0
        %v5112 = vsel %vm3211, %v5065, 0
        %5114 = vmatpush.bf16.msra.mxu0 0
        %5115 = vmatpush.bf16.msra.mxu0 %v5100
        %5116 = vmatpush.bf16.msra.mxu0 %v5099
        %5117 = vmatpush.bf16.msra.mxu0 %v5098
        %5118 = vmatpush.bf16.msra.mxu0 %v5097
        %5119 = vmatpush.bf16.msra.mxu0 %v5096
        %5120 = vmatpush.bf16.msra.mxu0 %v5095
        %5121 = vmatpush.bf16.msra.mxu0 %v5094
        %5122 = vmatmul.bf16.gmra.mxu0 %v5109
        %v5123 = vpop.f32.mrf.mxu0
        %v5124 = vadd.f32 %v5039, %v5123
        %v5125 = vpop.f32.mrf.mxu0
        %v5126 = vadd.f32 %v5044, %v5125
        %5127 = vmatmul.bf16.gmra.mxu0 %v5112
        %v5128 = vpop.f32.mrf.mxu0
        %v5129 = vadd.f32 %v5049, %v5128
        %v5130 = vpop.f32.mrf.mxu0
        %v5131 = vadd.f32 %v5054, %v5130
        %5132 = vdwg.mxu0
        %vm5133 = vcmp.ge.f32.partialorder %v5124, 0.0
        %vm5134 = vcmp.ge.f32.partialorder %v5126, 0.0
        %vm5135 = vcmp.ge.f32.partialorder %v5129, 0.0
        %vm5136 = vcmp.ge.f32.partialorder %v5131, 0.0
        %v5137 = vmul.f32 %v5124, 0.2
        %v5138 = vmul.f32 %v5126, 0.2
        %v5139 = vmul.f32 %v5129, 0.2
        %v5140 = vmul.f32 %v5131, 0.2
        %v5141 = vsel %vm5133, %v5124, %v5137
        %v5142 = vsel %vm5134, %v5126, %v5138
        %v5143 = vsel %vm5135, %v5129, %v5139
        %v5144 = vsel %vm5136, %v5131, %v5140
        %v5145 = vpack.c.bf16 %v5142, %v5141
        %v5146 = vpack.c.bf16 %v5144, %v5143
        %v5147 = vld [vmem:[%s55] sm:$0xf]
        %v5148 = vld [vmem:[%s55 + $0x4] sm:$0xf]
        %v5149 = vld [vmem:[%s55 + $0x8] sm:$0xf]
        %v5150 = vld [vmem:[%s55 + $0xc] sm:$0xf]
        %v5151 = vld [vmem:[%s55 + $0x10] sm:$0xf]
        %v5152 = vld [vmem:[%s55 + $0x14] sm:$0xf]
        %v5153 = vld [vmem:[%s55 + $0x18] sm:$0xf]
        %v5154 = vld [vmem:[%s55 + $0x1c] sm:$0xf]
        %v5163 = vunpack.c.l.b16 %v5147
        %v5164 = vunpack.c.l.b16 %v5148
        %v5165 = vunpack.c.l.b16 %v5149
        %v5166 = vunpack.c.l.b16 %v5150
        %v5167 = vunpack.c.l.b16 %v5151
        %v5168 = vunpack.c.l.b16 %v5152
        %v5169 = vunpack.c.l.b16 %v5153
        %v5170 = vunpack.c.l.b16 %v5154
        %v5171 = vpack.c.b16 %v5164, %v5163
        %v5172 = vpack.c.b16 %v5166, %v5165
        %v5173 = vpack.c.b16 %v5168, %v5167
        %v5174 = vpack.c.b16 %v5170, %v5169
        %v5180 = vsel %vm3302, %v5145, 0
        %v5183 = vsel %vm3302, %v5146, 0
        %5185 = vmatpush.bf16.msra.mxu0 0
        %5186 = vmatpush.bf16.msra.mxu0 0
        %5187 = vmatpush.bf16.msra.mxu0 0
        %5188 = vmatpush.bf16.msra.mxu0 0
        %5189 = vmatpush.bf16.msra.mxu0 %v5174
        %5190 = vmatpush.bf16.msra.mxu0 %v5173
        %5191 = vmatpush.bf16.msra.mxu0 %v5172
        %5192 = vmatpush.bf16.msra.mxu0 %v5171
        %5193 = vmatmul.bf16.gmra.mxu0 %v5180
        %v5194 = vpop.f32.mrf.mxu0
        %v5195 = vadd.f32 0.0, %v5194
        %v5196 = vpop.f32.mrf.mxu0
        %v5197 = vadd.f32 0.0, %v5196
        %5198 = vmatmul.bf16.gmra.mxu0 %v5183
        %v5199 = vpop.f32.mrf.mxu0
        %v5200 = vadd.f32 0.0, %v5199
        %v5201 = vpop.f32.mrf.mxu0
        %v5202 = vadd.f32 0.0, %v5201
        %5203 = vdwg.mxu0
        %5204 = vst.msk [vmem:[%s1040] sm:$0xff] %vm3328, %v5195
        %5205 = vst.msk [vmem:[%s1040 + $0x8] sm:$0xff] %vm3328, %v5197
        %5206 = vst.msk [vmem:[%s1040 + $0x10] sm:$0xff] %vm3328, %v5200
        %5207 = vst.msk [vmem:[%s1040 + $0x18] sm:$0xff] %vm3328, %v5202
        %vm5208 = vcmask 2048
        %5209 = vst.msk [vmem:[#allocation13] sm:$0x7] %vm5208, 0.0
        %vm5210 = vcmask 10248
        %5211 = vst.msk [vmem:[#allocation13 + $0x20] sm:$0x7] %vm5210, 0.0
        %5213 = vrot.lane.b32.xlu0 %v5195, 1
        %v5214 = vpop.permute.xlu0 %5213
        %vm5216 = vcmask 262152
        %5217 = vst.msk [vmem:[#allocation13] sm:$0x1] %vm5216, %v5214
        %5219 = vrot.lane.b32.xlu0 %v3319, 1
        %v5220 = vpop.permute.xlu0 %5219
        %5222 = vst.msk [vmem:[#allocation13 + $0x2] sm:$0x1] %vm5216, %v5220
        %v5223 = vrot.slane %v5195, 5
        %v5224 = vrot.slane %v5223, 4
        %5225 = vrot.lane.b32.xlu0 %v5224, 33
        %v5226 = vpop.permute.xlu0 %5225
        %vm5228 = vcmask 524552
        %5229 = vst.msk [vmem:[#allocation13] sm:$0x1] %vm5228, %v5226
        %v5230 = vrot.slane %v3319, 5
        %v5231 = vrot.slane %v5230, 4
        %5232 = vrot.lane.b32.xlu0 %v5231, 33
        %v5233 = vpop.permute.xlu0 %5232
        %5235 = vst.msk [vmem:[#allocation13 + $0x2] sm:$0x1] %vm5228, %v5233
        %v5236 = vrot.slane %v5195, 6
        %v5237 = vrot.slane %v5236, 4
        %5238 = vrot.lane.b32.xlu0 %v5237, 65
        %v5239 = vpop.permute.xlu0 %5238
        %vm5241 = vcmask 786952
        %5242 = vst.msk [vmem:[#allocation13] sm:$0x1] %vm5241, %v5239
        %v5243 = vrot.slane %v3319, 6
        %v5244 = vrot.slane %v5243, 4
        %5245 = vrot.lane.b32.xlu0 %v5244, 65
        %v5246 = vpop.permute.xlu0 %5245
        %5248 = vst.msk [vmem:[#allocation13 + $0x2] sm:$0x1] %vm5241, %v5246
        %v5249 = vrot.slane %v5195, 7
        %v5250 = vrot.slane %v5249, 4
        %5251 = vrot.lane.b32.xlu0 %v5250, 97
        %v5252 = vpop.permute.xlu0 %5251
        %v5253 = vrot.slane %v5252, 4
        %vm5254 = vcmask 793600
        %v5255 = vsel %vm5254, %v5253, %v5252
        %vm5257 = vcmask 1041160
        %vm5258 = vcmask 4100
        %vm5259 = vmor %vm5258, %vm5257
        %5260 = vst.msk [vmem:[#allocation13] sm:$0x11] %vm5259, %v5255
        %v5261 = vrot.slane %v3319, 7
        %v5262 = vrot.slane %v5261, 4
        %5263 = vrot.lane.b32.xlu0 %v5262, 97
        %v5264 = vpop.permute.xlu0 %5263
        %v5265 = vrot.slane %v5264, 4
        %v5266 = vsel %vm5254, %v5265, %v5264
        %5268 = vst.msk [vmem:[#allocation13 + $0x2] sm:$0x11] %vm5259, %v5266
        %5269 = vst.sshfl [vmem:[#allocation1] sm:$0xff pattern:$0x75316420] %v5195
        %s5270 = scalar_lea.vmem [#allocation1], 1
        %v5271 = vld [vmem:[%s5270] ss:$2 sm:$0xff]
        %5272 = vrot.lane.b32.xlu0 %v5271, 1
        %v5273 = vpop.permute.xlu0 %5272
        %5275 = vst.msk [vmem:[#allocation13 + $0x4] sm:$0x1] %vm5216, %v5273
        %5276 = vst.sshfl [vmem:[#allocation1] sm:$0xff pattern:$0x75316420] %v3319
        %s5277 = scalar_lea.vmem [#allocation1], 1
        %v5278 = vld [vmem:[%s5277] ss:$2 sm:$0xff]
        %5279 = vrot.lane.b32.xlu0 %v5278, 1
        %v5280 = vpop.permute.xlu0 %5279
        %5282 = vst.msk [vmem:[#allocation13 + $0x6] sm:$0x1] %vm5216, %v5280
        %5283 = vst.sshfl [vmem:[#allocation1] sm:$0xff pattern:$0x75316420] %v5195
        %s5284 = scalar_lea.vmem [#allocation1], 1
        %v5285 = vld [vmem:[%s5284] ss:$2 sm:$0xff]
        %v5286 = vrot.slane %v5285, 5
        %v5287 = vrot.slane %v5286, 4
        %5288 = vrot.lane.b32.xlu0 %v5287, 33
        %v5289 = vpop.permute.xlu0 %5288
        %5291 = vst.msk [vmem:[#allocation13 + $0x4] sm:$0x1] %vm5228, %v5289
        %5292 = vst.sshfl [vmem:[#allocation1] sm:$0xff pattern:$0x75316420] %v3319
        %s5293 = scalar_lea.vmem [#allocation1], 1
        %v5294 = vld [vmem:[%s5293] ss:$2 sm:$0xff]
        %v5295 = vrot.slane %v5294, 5
        %v5296 = vrot.slane %v5295, 4
        %5297 = vrot.lane.b32.xlu0 %v5296, 33
        %v5298 = vpop.permute.xlu0 %5297
        %5300 = vst.msk [vmem:[#allocation13 + $0x6] sm:$0x1] %vm5228, %v5298
        %5301 = vst.sshfl [vmem:[#allocation1] sm:$0xff pattern:$0x75316420] %v5195
        %s5302 = scalar_lea.vmem [#allocation1], 1
        %v5303 = vld [vmem:[%s5302] ss:$2 sm:$0xff]
        %v5304 = vrot.slane %v5303, 6
        %v5305 = vrot.slane %v5304, 4
        %5306 = vrot.lane.b32.xlu0 %v5305, 65
        %v5307 = vpop.permute.xlu0 %5306
        %5309 = vst.msk [vmem:[#allocation13 + $0x4] sm:$0x1] %vm5241, %v5307
        %5310 = vst.sshfl [vmem:[#allocation1] sm:$0xff pattern:$0x75316420] %v3319
        %s5311 = scalar_lea.vmem [#allocation1], 1
        %v5312 = vld [vmem:[%s5311] ss:$2 sm:$0xff]
        %v5313 = vrot.slane %v5312, 6
        %v5314 = vrot.slane %v5313, 4
        %5315 = vrot.lane.b32.xlu0 %v5314, 65
        %v5316 = vpop.permute.xlu0 %5315
        %5318 = vst.msk [vmem:[#allocation13 + $0x6] sm:$0x1] %vm5241, %v5316
        %5319 = vst.sshfl [vmem:[#allocation1] sm:$0xff pattern:$0x75316420] %v5195
        %s5320 = scalar_lea.vmem [#allocation1], 1
        %v5321 = vld [vmem:[%s5320] ss:$2 sm:$0xff]
        %v5322 = vrot.slane %v5321, 7
        %v5323 = vrot.slane %v5322, 4
        %5324 = vrot.lane.b32.xlu0 %v5323, 97
        %v5325 = vpop.permute.xlu0 %5324
        %v5326 = vrot.slane %v5325, 4
        %v5327 = vsel %vm5254, %v5326, %v5325
        %5329 = vst.msk [vmem:[#allocation13 + $0x4] sm:$0x11] %vm5259, %v5327
        %5330 = vst.sshfl [vmem:[#allocation1] sm:$0xff pattern:$0x75316420] %v3319
        %s5331 = scalar_lea.vmem [#allocation1], 1
        %v5332 = vld [vmem:[%s5331] ss:$2 sm:$0xff]
        %v5333 = vrot.slane %v5332, 7
        %v5334 = vrot.slane %v5333, 4
        %5335 = vrot.lane.b32.xlu0 %v5334, 97
        %v5336 = vpop.permute.xlu0 %5335
        %v5337 = vrot.slane %v5336, 4
        %v5338 = vsel %vm5254, %v5337, %v5336
        %5340 = vst.msk [vmem:[#allocation13 + $0x6] sm:$0x11] %vm5259, %v5338
        %5342 = vrot.lane.b32.xlu0 %v5197, 1
        %v5343 = vpop.permute.xlu0 %5342
        %5345 = vst.msk [vmem:[#allocation13 + $0x8] sm:$0x1] %vm5216, %v5343
        %5347 = vrot.lane.b32.xlu0 %v3321, 1
        %v5348 = vpop.permute.xlu0 %5347
        %5350 = vst.msk [vmem:[#allocation13 + $0xa] sm:$0x1] %vm5216, %v5348
        %v5351 = vrot.slane %v5197, 5
        %v5352 = vrot.slane %v5351, 4
        %5353 = vrot.lane.b32.xlu0 %v5352, 33
        %v5354 = vpop.permute.xlu0 %5353
        %5356 = vst.msk [vmem:[#allocation13 + $0x8] sm:$0x1] %vm5228, %v5354
        %v5357 = vrot.slane %v3321, 5
        %v5358 = vrot.slane %v5357, 4
        %5359 = vrot.lane.b32.xlu0 %v5358, 33
        %v5360 = vpop.permute.xlu0 %5359
        %5362 = vst.msk [vmem:[#allocation13 + $0xa] sm:$0x1] %vm5228, %v5360
        %v5363 = vrot.slane %v5197, 6
        %v5364 = vrot.slane %v5363, 4
        %5365 = vrot.lane.b32.xlu0 %v5364, 65
        %v5366 = vpop.permute.xlu0 %5365
        %5368 = vst.msk [vmem:[#allocation13 + $0x8] sm:$0x1] %vm5241, %v5366
        %v5369 = vrot.slane %v3321, 6
        %v5370 = vrot.slane %v5369, 4
        %5371 = vrot.lane.b32.xlu0 %v5370, 65
        %v5372 = vpop.permute.xlu0 %5371
        %5374 = vst.msk [vmem:[#allocation13 + $0xa] sm:$0x1] %vm5241, %v5372
        %v5375 = vrot.slane %v5197, 7
        %v5376 = vrot.slane %v5375, 4
        %5377 = vrot.lane.b32.xlu0 %v5376, 97
        %v5378 = vpop.permute.xlu0 %5377
        %v5379 = vrot.slane %v5378, 4
        %v5380 = vsel %vm5254, %v5379, %v5378
        %5382 = vst.msk [vmem:[#allocation13 + $0x8] sm:$0x11] %vm5259, %v5380
        %v5383 = vrot.slane %v3321, 7
        %v5384 = vrot.slane %v5383, 4
        %5385 = vrot.lane.b32.xlu0 %v5384, 97
        %v5386 = vpop.permute.xlu0 %5385
        %v5387 = vrot.slane %v5386, 4
        %v5388 = vsel %vm5254, %v5387, %v5386
        %5390 = vst.msk [vmem:[#allocation13 + $0xa] sm:$0x11] %vm5259, %v5388
        %5391 = vst.sshfl [vmem:[#allocation1] sm:$0xff pattern:$0x75316420] %v5197
        %s5392 = scalar_lea.vmem [#allocation1], 1
        %v5393 = vld [vmem:[%s5392] ss:$2 sm:$0xff]
        %5394 = vrot.lane.b32.xlu0 %v5393, 1
        %v5395 = vpop.permute.xlu0 %5394
        %5397 = vst.msk [vmem:[#allocation13 + $0xc] sm:$0x1] %vm5216, %v5395
        %5398 = vst.sshfl [vmem:[#allocation1] sm:$0xff pattern:$0x75316420] %v3321
        %s5399 = scalar_lea.vmem [#allocation1], 1
        %v5400 = vld [vmem:[%s5399] ss:$2 sm:$0xff]
        %5401 = vrot.lane.b32.xlu0 %v5400, 1
        %v5402 = vpop.permute.xlu0 %5401
        %5404 = vst.msk [vmem:[#allocation13 + $0xe] sm:$0x1] %vm5216, %v5402
        %5405 = vst.sshfl [vmem:[#allocation1] sm:$0xff pattern:$0x75316420] %v5197
        %s5406 = scalar_lea.vmem [#allocation1], 1
        %v5407 = vld [vmem:[%s5406] ss:$2 sm:$0xff]
        %v5408 = vrot.slane %v5407, 5
        %v5409 = vrot.slane %v5408, 4
        %5410 = vrot.lane.b32.xlu0 %v5409, 33
        %v5411 = vpop.permute.xlu0 %5410
        %5413 = vst.msk [vmem:[#allocation13 + $0xc] sm:$0x1] %vm5228, %v5411
        %5414 = vst.sshfl [vmem:[#allocation1] sm:$0xff pattern:$0x75316420] %v3321
        %s5415 = scalar_lea.vmem [#allocation1], 1
        %v5416 = vld [vmem:[%s5415] ss:$2 sm:$0xff]
        %v5417 = vrot.slane %v5416, 5
        %v5418 = vrot.slane %v5417, 4
        %5419 = vrot.lane.b32.xlu0 %v5418, 33
        %v5420 = vpop.permute.xlu0 %5419
        %5422 = vst.msk [vmem:[#allocation13 + $0xe] sm:$0x1] %vm5228, %v5420
        %5423 = vst.sshfl [vmem:[#allocation1] sm:$0xff pattern:$0x75316420] %v5197
        %s5424 = scalar_lea.vmem [#allocation1], 1
        %v5425 = vld [vmem:[%s5424] ss:$2 sm:$0xff]
        %v5426 = vrot.slane %v5425, 6
        %v5427 = vrot.slane %v5426, 4
        %5428 = vrot.lane.b32.xlu0 %v5427, 65
        %v5429 = vpop.permute.xlu0 %5428
        %5431 = vst.msk [vmem:[#allocation13 + $0xc] sm:$0x1] %vm5241, %v5429
        %5432 = vst.sshfl [vmem:[#allocation1] sm:$0xff pattern:$0x75316420] %v3321
        %s5433 = scalar_lea.vmem [#allocation1], 1
        %v5434 = vld [vmem:[%s5433] ss:$2 sm:$0xff]
        %v5435 = vrot.slane %v5434, 6
        %v5436 = vrot.slane %v5435, 4
        %5437 = vrot.lane.b32.xlu0 %v5436, 65
        %v5438 = vpop.permute.xlu0 %5437
        %5440 = vst.msk [vmem:[#allocation13 + $0xe] sm:$0x1] %vm5241, %v5438
        %5441 = vst.sshfl [vmem:[#allocation1] sm:$0xff pattern:$0x75316420] %v5197
        %s5442 = scalar_lea.vmem [#allocation1], 1
        %v5443 = vld [vmem:[%s5442] ss:$2 sm:$0xff]
        %v5444 = vrot.slane %v5443, 7
        %v5445 = vrot.slane %v5444, 4
        %5446 = vrot.lane.b32.xlu0 %v5445, 97
        %v5447 = vpop.permute.xlu0 %5446
        %v5448 = vrot.slane %v5447, 4
        %v5449 = vsel %vm5254, %v5448, %v5447
        %5451 = vst.msk [vmem:[#allocation13 + $0xc] sm:$0x11] %vm5259, %v5449
        %5452 = vst.sshfl [vmem:[#allocation1] sm:$0xff pattern:$0x75316420] %v3321
        %s5453 = scalar_lea.vmem [#allocation1], 1
        %v5454 = vld [vmem:[%s5453] ss:$2 sm:$0xff]
        %v5455 = vrot.slane %v5454, 7
        %v5456 = vrot.slane %v5455, 4
        %5457 = vrot.lane.b32.xlu0 %v5456, 97
        %v5458 = vpop.permute.xlu0 %5457
        %v5459 = vrot.slane %v5458, 4
        %v5460 = vsel %vm5254, %v5459, %v5458
        %5462 = vst.msk [vmem:[#allocation13 + $0xe] sm:$0x11] %vm5259, %v5460
        %5464 = vrot.lane.b32.xlu0 %v5200, 1
        %v5465 = vpop.permute.xlu0 %5464
        %5467 = vst.msk [vmem:[#allocation13 + $0x10] sm:$0x1] %vm5216, %v5465
        %5469 = vrot.lane.b32.xlu0 %v3324, 1
        %v5470 = vpop.permute.xlu0 %5469
        %5472 = vst.msk [vmem:[#allocation13 + $0x12] sm:$0x1] %vm5216, %v5470
        %v5473 = vrot.slane %v5200, 5
        %v5474 = vrot.slane %v5473, 4
        %5475 = vrot.lane.b32.xlu0 %v5474, 33
        %v5476 = vpop.permute.xlu0 %5475
        %5478 = vst.msk [vmem:[#allocation13 + $0x10] sm:$0x1] %vm5228, %v5476
        %v5479 = vrot.slane %v3324, 5
        %v5480 = vrot.slane %v5479, 4
        %5481 = vrot.lane.b32.xlu0 %v5480, 33
        %v5482 = vpop.permute.xlu0 %5481
        %5484 = vst.msk [vmem:[#allocation13 + $0x12] sm:$0x1] %vm5228, %v5482
        %v5485 = vrot.slane %v5200, 6
        %v5486 = vrot.slane %v5485, 4
        %5487 = vrot.lane.b32.xlu0 %v5486, 65
        %v5488 = vpop.permute.xlu0 %5487
        %5490 = vst.msk [vmem:[#allocation13 + $0x10] sm:$0x1] %vm5241, %v5488
        %v5491 = vrot.slane %v3324, 6
        %v5492 = vrot.slane %v5491, 4
        %5493 = vrot.lane.b32.xlu0 %v5492, 65
        %v5494 = vpop.permute.xlu0 %5493
        %5496 = vst.msk [vmem:[#allocation13 + $0x12] sm:$0x1] %vm5241, %v5494
        %v5497 = vrot.slane %v5200, 7
        %v5498 = vrot.slane %v5497, 4
        %5499 = vrot.lane.b32.xlu0 %v5498, 97
        %v5500 = vpop.permute.xlu0 %5499
        %v5501 = vrot.slane %v5500, 4
        %v5502 = vsel %vm5254, %v5501, %v5500
        %5504 = vst.msk [vmem:[#allocation13 + $0x10] sm:$0x11] %vm5259, %v5502
        %v5505 = vrot.slane %v3324, 7
        %v5506 = vrot.slane %v5505, 4
        %5507 = vrot.lane.b32.xlu0 %v5506, 97
        %v5508 = vpop.permute.xlu0 %5507
        %v5509 = vrot.slane %v5508, 4
        %v5510 = vsel %vm5254, %v5509, %v5508
        %5512 = vst.msk [vmem:[#allocation13 + $0x12] sm:$0x11] %vm5259, %v5510
        %5513 = vst.sshfl [vmem:[#allocation1] sm:$0xff pattern:$0x75316420] %v5200
        %s5514 = scalar_lea.vmem [#allocation1], 1
        %v5515 = vld [vmem:[%s5514] ss:$2 sm:$0xff]
        %5516 = vrot.lane.b32.xlu0 %v5515, 1
        %v5517 = vpop.permute.xlu0 %5516
        %5519 = vst.msk [vmem:[#allocation13 + $0x14] sm:$0x1] %vm5216, %v5517
        %5520 = vst.sshfl [vmem:[#allocation1] sm:$0xff pattern:$0x75316420] %v3324
        %s5521 = scalar_lea.vmem [#allocation1], 1
        %v5522 = vld [vmem:[%s5521] ss:$2 sm:$0xff]
        %5523 = vrot.lane.b32.xlu0 %v5522, 1
        %v5524 = vpop.permute.xlu0 %5523
        %5526 = vst.msk [vmem:[#allocation13 + $0x16] sm:$0x1] %vm5216, %v5524
        %5527 = vst.sshfl [vmem:[#allocation1] sm:$0xff pattern:$0x75316420] %v5200
        %s5528 = scalar_lea.vmem [#allocation1], 1
        %v5529 = vld [vmem:[%s5528] ss:$2 sm:$0xff]
        %v5530 = vrot.slane %v5529, 5
        %v5531 = vrot.slane %v5530, 4
        %5532 = vrot.lane.b32.xlu0 %v5531, 33
        %v5533 = vpop.permute.xlu0 %5532
        %5535 = vst.msk [vmem:[#allocation13 + $0x14] sm:$0x1] %vm5228, %v5533
        %5536 = vst.sshfl [vmem:[#allocation1] sm:$0xff pattern:$0x75316420] %v3324
        %s5537 = scalar_lea.vmem [#allocation1], 1
        %v5538 = vld [vmem:[%s5537] ss:$2 sm:$0xff]
        %v5539 = vrot.slane %v5538, 5
        %v5540 = vrot.slane %v5539, 4
        %5541 = vrot.lane.b32.xlu0 %v5540, 33
        %v5542 = vpop.permute.xlu0 %5541
        %5544 = vst.msk [vmem:[#allocation13 + $0x16] sm:$0x1] %vm5228, %v5542
        %5545 = vst.sshfl [vmem:[#allocation1] sm:$0xff pattern:$0x75316420] %v5200
        %s5546 = scalar_lea.vmem [#allocation1], 1
        %v5547 = vld [vmem:[%s5546] ss:$2 sm:$0xff]
        %v5548 = vrot.slane %v5547, 6
        %v5549 = vrot.slane %v5548, 4
        %5550 = vrot.lane.b32.xlu0 %v5549, 65
        %v5551 = vpop.permute.xlu0 %5550
        %5553 = vst.msk [vmem:[#allocation13 + $0x14] sm:$0x1] %vm5241, %v5551
        %5554 = vst.sshfl [vmem:[#allocation1] sm:$0xff pattern:$0x75316420] %v3324
        %s5555 = scalar_lea.vmem [#allocation1], 1
        %v5556 = vld [vmem:[%s5555] ss:$2 sm:$0xff]
        %v5557 = vrot.slane %v5556, 6
        %v5558 = vrot.slane %v5557, 4
        %5559 = vrot.lane.b32.xlu0 %v5558, 65
        %v5560 = vpop.permute.xlu0 %5559
        %5562 = vst.msk [vmem:[#allocation13 + $0x16] sm:$0x1] %vm5241, %v5560
        %5563 = vst.sshfl [vmem:[#allocation1] sm:$0xff pattern:$0x75316420] %v5200
        %s5564 = scalar_lea.vmem [#allocation1], 1
        %v5565 = vld [vmem:[%s5564] ss:$2 sm:$0xff]
        %v5566 = vrot.slane %v5565, 7
        %v5567 = vrot.slane %v5566, 4
        %5568 = vrot.lane.b32.xlu0 %v5567, 97
        %v5569 = vpop.permute.xlu0 %5568
        %v5570 = vrot.slane %v5569, 4
        %v5571 = vsel %vm5254, %v5570, %v5569
        %5573 = vst.msk [vmem:[#allocation13 + $0x14] sm:$0x11] %vm5259, %v5571
        %5574 = vst.sshfl [vmem:[#allocation1] sm:$0xff pattern:$0x75316420] %v3324
        %s5575 = scalar_lea.vmem [#allocation1], 1
        %v5576 = vld [vmem:[%s5575] ss:$2 sm:$0xff]
        %v5577 = vrot.slane %v5576, 7
        %v5578 = vrot.slane %v5577, 4
        %5579 = vrot.lane.b32.xlu0 %v5578, 97
        %v5580 = vpop.permute.xlu0 %5579
        %v5581 = vrot.slane %v5580, 4
        %v5582 = vsel %vm5254, %v5581, %v5580
        %5584 = vst.msk [vmem:[#allocation13 + $0x16] sm:$0x11] %vm5259, %v5582
        %5586 = vrot.lane.b32.xlu0 %v5202, 1
        %v5587 = vpop.permute.xlu0 %5586
        %5589 = vst.msk [vmem:[#allocation13 + $0x18] sm:$0x1] %vm5216, %v5587
        %5591 = vrot.lane.b32.xlu0 %v3326, 1
        %v5592 = vpop.permute.xlu0 %5591
        %5594 = vst.msk [vmem:[#allocation13 + $0x1a] sm:$0x1] %vm5216, %v5592
        %v5595 = vrot.slane %v5202, 5
        %v5596 = vrot.slane %v5595, 4
        %5597 = vrot.lane.b32.xlu0 %v5596, 33
        %v5598 = vpop.permute.xlu0 %5597
        %5600 = vst.msk [vmem:[#allocation13 + $0x18] sm:$0x1] %vm5228, %v5598
        %v5601 = vrot.slane %v3326, 5
        %v5602 = vrot.slane %v5601, 4
        %5603 = vrot.lane.b32.xlu0 %v5602, 33
        %v5604 = vpop.permute.xlu0 %5603
        %5606 = vst.msk [vmem:[#allocation13 + $0x1a] sm:$0x1] %vm5228, %v5604
        %v5607 = vrot.slane %v5202, 6
        %v5608 = vrot.slane %v5607, 4
        %5609 = vrot.lane.b32.xlu0 %v5608, 65
        %v5610 = vpop.permute.xlu0 %5609
        %5612 = vst.msk [vmem:[#allocation13 + $0x18] sm:$0x1] %vm5241, %v5610
        %v5613 = vrot.slane %v3326, 6
        %v5614 = vrot.slane %v5613, 4
        %5615 = vrot.lane.b32.xlu0 %v5614, 65
        %v5616 = vpop.permute.xlu0 %5615
        %5618 = vst.msk [vmem:[#allocation13 + $0x1a] sm:$0x1] %vm5241, %v5616
        %v5619 = vrot.slane %v5202, 7
        %v5620 = vrot.slane %v5619, 4
        %5621 = vrot.lane.b32.xlu0 %v5620, 97
        %v5622 = vpop.permute.xlu0 %5621
        %v5623 = vrot.slane %v5622, 4
        %v5624 = vsel %vm5254, %v5623, %v5622
        %5626 = vst.msk [vmem:[#allocation13 + $0x18] sm:$0x11] %vm5259, %v5624
        %v5627 = vrot.slane %v3326, 7
        %v5628 = vrot.slane %v5627, 4
        %5629 = vrot.lane.b32.xlu0 %v5628, 97
        %v5630 = vpop.permute.xlu0 %5629
        %v5631 = vrot.slane %v5630, 4
        %v5632 = vsel %vm5254, %v5631, %v5630
        %5634 = vst.msk [vmem:[#allocation13 + $0x1a] sm:$0x11] %vm5259, %v5632
        %5635 = vst.sshfl [vmem:[#allocation1] sm:$0xff pattern:$0x75316420] %v5202
        %s5636 = scalar_lea.vmem [#allocation1], 1
        %v5637 = vld [vmem:[%s5636] ss:$2 sm:$0xff]
        %5638 = vrot.lane.b32.xlu0 %v5637, 1
        %v5639 = vpop.permute.xlu0 %5638
        %5641 = vst.msk [vmem:[#allocation13 + $0x1c] sm:$0x1] %vm5216, %v5639
        %5642 = vst.sshfl [vmem:[#allocation1] sm:$0xff pattern:$0x75316420] %v3326
        %s5643 = scalar_lea.vmem [#allocation1], 1
        %v5644 = vld [vmem:[%s5643] ss:$2 sm:$0xff]
        %5645 = vrot.lane.b32.xlu0 %v5644, 1
        %v5646 = vpop.permute.xlu0 %5645
        %5648 = vst.msk [vmem:[#allocation13 + $0x1e] sm:$0x1] %vm5216, %v5646
        %5649 = vst.sshfl [vmem:[#allocation1] sm:$0xff pattern:$0x75316420] %v5202
        %s5650 = scalar_lea.vmem [#allocation1], 1
        %v5651 = vld [vmem:[%s5650] ss:$2 sm:$0xff]
        %v5652 = vrot.slane %v5651, 5
        %v5653 = vrot.slane %v5652, 4
        %5654 = vrot.lane.b32.xlu0 %v5653, 33
        %v5655 = vpop.permute.xlu0 %5654
        %5657 = vst.msk [vmem:[#allocation13 + $0x1c] sm:$0x1] %vm5228, %v5655
        %5658 = vst.sshfl [vmem:[#allocation1] sm:$0xff pattern:$0x75316420] %v3326
        %s5659 = scalar_lea.vmem [#allocation1], 1
        %v5660 = vld [vmem:[%s5659] ss:$2 sm:$0xff]
        %v5661 = vrot.slane %v5660, 5
        %v5662 = vrot.slane %v5661, 4
        %5663 = vrot.lane.b32.xlu0 %v5662, 33
        %v5664 = vpop.permute.xlu0 %5663
        %5666 = vst.msk [vmem:[#allocation13 + $0x1e] sm:$0x1] %vm5228, %v5664
        %5667 = vst.sshfl [vmem:[#allocation1] sm:$0xff pattern:$0x75316420] %v5202
        %s5668 = scalar_lea.vmem [#allocation1], 1
        %v5669 = vld [vmem:[%s5668] ss:$2 sm:$0xff]
        %v5670 = vrot.slane %v5669, 6
        %v5671 = vrot.slane %v5670, 4
        %5672 = vrot.lane.b32.xlu0 %v5671, 65
        %v5673 = vpop.permute.xlu0 %5672
        %5675 = vst.msk [vmem:[#allocation13 + $0x1c] sm:$0x1] %vm5241, %v5673
        %5676 = vst.sshfl [vmem:[#allocation1] sm:$0xff pattern:$0x75316420] %v3326
        %s5677 = scalar_lea.vmem [#allocation1], 1
        %v5678 = vld [vmem:[%s5677] ss:$2 sm:$0xff]
        %v5679 = vrot.slane %v5678, 6
        %v5680 = vrot.slane %v5679, 4
        %5681 = vrot.lane.b32.xlu0 %v5680, 65
        %v5682 = vpop.permute.xlu0 %5681
        %5684 = vst.msk [vmem:[#allocation13 + $0x1e] sm:$0x1] %vm5241, %v5682
        %5685 = vst.sshfl [vmem:[#allocation1] sm:$0xff pattern:$0x75316420] %v5202
        %s5686 = scalar_lea.vmem [#allocation1], 1
        %v5687 = vld [vmem:[%s5686] ss:$2 sm:$0xff]
        %v5688 = vrot.slane %v5687, 7
        %v5689 = vrot.slane %v5688, 4
        %5690 = vrot.lane.b32.xlu0 %v5689, 97
        %v5691 = vpop.permute.xlu0 %5690
        %v5692 = vrot.slane %v5691, 4
        %v5693 = vsel %vm5254, %v5692, %v5691
        %5695 = vst.msk [vmem:[#allocation13 + $0x1c] sm:$0x11] %vm5259, %v5693
        %5696 = vst.sshfl [vmem:[#allocation1] sm:$0xff pattern:$0x75316420] %v3326
        %s5697 = scalar_lea.vmem [#allocation1], 1
        %v5698 = vld [vmem:[%s5697] ss:$2 sm:$0xff]
        %v5699 = vrot.slane %v5698, 7
        %v5700 = vrot.slane %v5699, 4
        %5701 = vrot.lane.b32.xlu0 %v5700, 97
        %v5702 = vpop.permute.xlu0 %5701
        %v5703 = vrot.slane %v5702, 4
        %v5704 = vsel %vm5254, %v5703, %v5702
        %5706 = vst.msk [vmem:[#allocation13 + $0x1e] sm:$0x11] %vm5259, %v5704
        %v5707 = vld [vmem:[#allocation13] ss:$4 sm:$0xff]
        %s5708 = scalar_lea.vmem [#allocation13], 32
        %v5709 = vld [vmem:[%s5708] ss:$4 sm:$0x1]
        %s5710 = scalar_lea.vmem [#allocation13], 1
        %5711 = vst [vmem:[%s5710] ss:$4 sm:$0xff] %v5707
        %vm5712 = vcmp.lt.s32.totalorder %v1048, 2
        %vm5713 = vmand %vm1049, %vm5712
        %s5714 = scalar_lea.vmem [#allocation13], 33
        %5715 = vst.msk [vmem:[%s5714] ss:$4 sm:$0x1] %vm5713, %v5709
        %v5716 = vld [vmem:[#allocation13] sm:$0x77]
        %v5717 = vld [vmem:[#allocation13 + $0x8] sm:$0x77]
        %v5718 = vld [vmem:[#allocation13 + $0x10] sm:$0x77]
        %v5719 = vld [vmem:[#allocation13 + $0x18] sm:$0x77]
        %v5720 = vld [vmem:[#allocation13 + $0x20] sm:$0x7]
        %5725 = vst [vmem:[#allocation1] ss:$2 sm:$0xff] %v5716
        %s5726 = scalar_lea.vmem [#allocation1], 16
        %5727 = vst [vmem:[%s5726] ss:$2 sm:$0xff] %v5717
        %s5728 = scalar_lea.vmem [#allocation1], 32
        %5729 = vst [vmem:[%s5728] ss:$2 sm:$0xff] %v5718
        %s5730 = scalar_lea.vmem [#allocation1], 48
        %5731 = vst [vmem:[%s5730] ss:$2 sm:$0xff] %v5719
        %v5732 = vld.sshfl [vmem:[#allocation1] sm:$0xff pattern:$0x75316420]
        %v5733 = vld.sshfl [vmem:[#allocation1 + $0x8] sm:$0xff pattern:$0x75316420]
        %v5734 = vld.sshfl [vmem:[#allocation1 + $0x10] sm:$0xff pattern:$0x75316420]
        %v5735 = vld.sshfl [vmem:[#allocation1 + $0x18] sm:$0xff pattern:$0x75316420]
        %v5736 = vld.sshfl [vmem:[#allocation1 + $0x20] sm:$0xff pattern:$0x75316420]
        %v5737 = vld.sshfl [vmem:[#allocation1 + $0x28] sm:$0xff pattern:$0x75316420]
        %v5738 = vld.sshfl [vmem:[#allocation1 + $0x30] sm:$0xff pattern:$0x75316420]
        %v5739 = vld.sshfl [vmem:[#allocation1 + $0x38] sm:$0xff pattern:$0x75316420]
        %5748 = vst [vmem:[#allocation14] sm:$0x7] %v5732
        %5749 = vst [vmem:[#allocation14 + $0x8] sm:$0x7] %v5733
        %5750 = vst [vmem:[#allocation14 + $0x10] sm:$0x7] %v5734
        %5751 = vst [vmem:[#allocation14 + $0x18] sm:$0x7] %v5735
        %5752 = vst [vmem:[#allocation14 + $0x20] sm:$0x7] %v5736
        %5753 = vst [vmem:[#allocation14 + $0x28] sm:$0x7] %v5737
        %5754 = vst [vmem:[#allocation14 + $0x30] sm:$0x7] %v5738
        %5755 = vst [vmem:[#allocation14 + $0x38] sm:$0x7] %v5739
        %5757 = vst [vmem:[#allocation1] ss:$2 sm:$0xff] %v5716
        %s5758 = scalar_lea.vmem [#allocation1], 16
        %5759 = vst [vmem:[%s5758] ss:$2 sm:$0xff] %v5717
        %s5760 = scalar_lea.vmem [#allocation1], 32
        %5761 = vst [vmem:[%s5760] ss:$2 sm:$0xff] %v5718
        %s5762 = scalar_lea.vmem [#allocation1], 48
        %5763 = vst [vmem:[%s5762] ss:$2 sm:$0xff] %v5719
        %v5764 = vld.sshfl [vmem:[#allocation1] sm:$0xff pattern:$0x75316420]
        %v5765 = vld.sshfl [vmem:[#allocation1 + $0x8] sm:$0xff pattern:$0x75316420]
        %v5766 = vld.sshfl [vmem:[#allocation1 + $0x10] sm:$0xff pattern:$0x75316420]
        %v5767 = vld.sshfl [vmem:[#allocation1 + $0x18] sm:$0xff pattern:$0x75316420]
        %v5768 = vld.sshfl [vmem:[#allocation1 + $0x20] sm:$0xff pattern:$0x75316420]
        %v5769 = vld.sshfl [vmem:[#allocation1 + $0x28] sm:$0xff pattern:$0x75316420]
        %v5770 = vld.sshfl [vmem:[#allocation1 + $0x30] sm:$0xff pattern:$0x75316420]
        %v5771 = vld.sshfl [vmem:[#allocation1 + $0x38] sm:$0xff pattern:$0x75316420]
        %5772 = vst [vmem:[#allocation1] ss:$2 sm:$0xff] %v5720
        %v5773 = vld.sshfl [vmem:[#allocation1] sm:$0xff pattern:$0x75316420]
        %v5774 = vrot.slane %v5764, 5
        %v5775 = vrot.slane %v5765, 5
        %v5776 = vrot.slane %v5766, 5
        %v5777 = vrot.slane %v5767, 5
        %v5778 = vrot.slane %v5768, 5
        %v5779 = vrot.slane %v5769, 5
        %v5780 = vrot.slane %v5770, 5
        %v5781 = vrot.slane %v5771, 5
        %v5782 = vrot.slane %v5773, 5
        %5783 = vrot.lane.b32.xlu0 %v5774, 127
        %v5784 = vpop.permute.xlu0 %5783
        %5785 = vrot.lane.b32.xlu0 %v5775, 127
        %v5786 = vpop.permute.xlu0 %5785
        %5787 = vrot.lane.b32.xlu0 %v5776, 127
        %v5788 = vpop.permute.xlu0 %5787
        %5789 = vrot.lane.b32.xlu0 %v5777, 127
        %v5790 = vpop.permute.xlu0 %5789
        %5791 = vrot.lane.b32.xlu0 %v5778, 127
        %v5792 = vpop.permute.xlu0 %5791
        %5793 = vrot.lane.b32.xlu0 %v5779, 127
        %v5794 = vpop.permute.xlu0 %5793
        %5795 = vrot.lane.b32.xlu0 %v5780, 127
        %v5796 = vpop.permute.xlu0 %5795
        %5797 = vrot.lane.b32.xlu0 %v5781, 127
        %v5798 = vpop.permute.xlu0 %5797
        %5799 = vrot.lane.b32.xlu0 %v5782, 127
        %v5800 = vpop.permute.xlu0 %5799
        %v5801 = vsel %vm1083, %v5784, %v5786
        %v5802 = vsel %vm1083, %v5786, %v5788
        %v5803 = vsel %vm1083, %v5788, %v5790
        %v5804 = vsel %vm1083, %v5790, %v5792
        %v5805 = vsel %vm1083, %v5792, %v5794
        %v5806 = vsel %vm1083, %v5794, %v5796
        %v5807 = vsel %vm1083, %v5796, %v5798
        %v5808 = vsel %vm1083, %v5798, %v5800
        %5817 = vst [vmem:[#allocation14] sm:$0x38] %v5801
        %5818 = vst [vmem:[#allocation14 + $0x8] sm:$0x38] %v5802
        %5819 = vst [vmem:[#allocation14 + $0x10] sm:$0x38] %v5803
        %5820 = vst [vmem:[#allocation14 + $0x18] sm:$0x38] %v5804
        %5821 = vst [vmem:[#allocation14 + $0x20] sm:$0x38] %v5805
        %5822 = vst [vmem:[#allocation14 + $0x28] sm:$0x38] %v5806
        %5823 = vst [vmem:[#allocation14 + $0x30] sm:$0x38] %v5807
        %5824 = vst [vmem:[#allocation14 + $0x38] sm:$0x38] %v5808
        %5825 = vst [vmem:[#allocation1] ss:$2 sm:$0xff] %v5716
        %s5826 = scalar_lea.vmem [#allocation1], 16
        %5827 = vst [vmem:[%s5826] ss:$2 sm:$0xff] %v5717
        %s5828 = scalar_lea.vmem [#allocation1], 32
        %5829 = vst [vmem:[%s5828] ss:$2 sm:$0xff] %v5718
        %s5830 = scalar_lea.vmem [#allocation1], 48
        %5831 = vst [vmem:[%s5830] ss:$2 sm:$0xff] %v5719
        %v5832 = vld.sshfl [vmem:[#allocation1] sm:$0xff pattern:$0x75316420]
        %v5833 = vld.sshfl [vmem:[#allocation1 + $0x8] sm:$0xff pattern:$0x75316420]
        %v5834 = vld.sshfl [vmem:[#allocation1 + $0x10] sm:$0xff pattern:$0x75316420]
        %v5835 = vld.sshfl [vmem:[#allocation1 + $0x18] sm:$0xff pattern:$0x75316420]
        %v5836 = vld.sshfl [vmem:[#allocation1 + $0x20] sm:$0xff pattern:$0x75316420]
        %v5837 = vld.sshfl [vmem:[#allocation1 + $0x28] sm:$0xff pattern:$0x75316420]
        %v5838 = vld.sshfl [vmem:[#allocation1 + $0x30] sm:$0xff pattern:$0x75316420]
        %v5839 = vld.sshfl [vmem:[#allocation1 + $0x38] sm:$0xff pattern:$0x75316420]
        %5840 = vst [vmem:[#allocation1] ss:$2 sm:$0xff] %v5720
        %v5841 = vld.sshfl [vmem:[#allocation1] sm:$0xff pattern:$0x75316420]
        %v5842 = vrot.slane %v5832, 2
        %v5843 = vrot.slane %v5833, 2
        %v5844 = vrot.slane %v5834, 2
        %v5845 = vrot.slane %v5835, 2
        %v5846 = vrot.slane %v5836, 2
        %v5847 = vrot.slane %v5837, 2
        %v5848 = vrot.slane %v5838, 2
        %v5849 = vrot.slane %v5839, 2
        %v5850 = vrot.slane %v5841, 2
        %5851 = vrot.lane.b32.xlu0 %v5842, 126
        %v5852 = vpop.permute.xlu0 %5851
        %5853 = vrot.lane.b32.xlu0 %v5843, 126
        %v5854 = vpop.permute.xlu0 %5853
        %5855 = vrot.lane.b32.xlu0 %v5844, 126
        %v5856 = vpop.permute.xlu0 %5855
        %5857 = vrot.lane.b32.xlu0 %v5845, 126
        %v5858 = vpop.permute.xlu0 %5857
        %5859 = vrot.lane.b32.xlu0 %v5846, 126
        %v5860 = vpop.permute.xlu0 %5859
        %5861 = vrot.lane.b32.xlu0 %v5847, 126
        %v5862 = vpop.permute.xlu0 %5861
        %5863 = vrot.lane.b32.xlu0 %v5848, 126
        %v5864 = vpop.permute.xlu0 %5863
        %5865 = vrot.lane.b32.xlu0 %v5849, 126
        %v5866 = vpop.permute.xlu0 %5865
        %5867 = vrot.lane.b32.xlu0 %v5850, 126
        %v5868 = vpop.permute.xlu0 %5867
        %v5869 = vsel %vm1096, %v5852, %v5854
        %v5870 = vsel %vm1096, %v5854, %v5856
        %v5871 = vsel %vm1096, %v5856, %v5858
        %v5872 = vsel %vm1096, %v5858, %v5860
        %v5873 = vsel %vm1096, %v5860, %v5862
        %v5874 = vsel %vm1096, %v5862, %v5864
        %v5875 = vsel %vm1096, %v5864, %v5866
        %v5876 = vsel %vm1096, %v5866, %v5868
        %5885 = vst [vmem:[#allocation14] sm:$0xc0] %v5869
        %5886 = vst [vmem:[#allocation14 + $0x8] sm:$0xc0] %v5870
        %5887 = vst [vmem:[#allocation14 + $0x10] sm:$0xc0] %v5871
        %5888 = vst [vmem:[#allocation14 + $0x18] sm:$0xc0] %v5872
        %5889 = vst [vmem:[#allocation14 + $0x20] sm:$0xc0] %v5873
        %5890 = vst [vmem:[#allocation14 + $0x28] sm:$0xc0] %v5874
        %5891 = vst [vmem:[#allocation14 + $0x30] sm:$0xc0] %v5875
        %5892 = vst [vmem:[#allocation14 + $0x38] sm:$0xc0] %v5876
        %5893 = vst [vmem:[#allocation14 + $0x40] sm:$0x1] %v5869
        %5894 = vst [vmem:[#allocation14 + $0x48] sm:$0x1] %v5870
        %5895 = vst [vmem:[#allocation14 + $0x50] sm:$0x1] %v5871
        %5896 = vst [vmem:[#allocation14 + $0x58] sm:$0x1] %v5872
        %5897 = vst [vmem:[#allocation14 + $0x60] sm:$0x1] %v5873
        %5898 = vst [vmem:[#allocation14 + $0x68] sm:$0x1] %v5874
        %5899 = vst [vmem:[#allocation14 + $0x70] sm:$0x1] %v5875
        %5900 = vst [vmem:[#allocation14 + $0x78] sm:$0x1] %v5876
        %v5901 = vld [vmem:[%s31] sm:$0xff]
        %v5902 = vld [vmem:[%s31 + $0x8] sm:$0xff]
        %v5903 = vld [vmem:[#allocation14] sm:$0xff]
        %v5904 = vld [vmem:[#allocation14 + $0x8] sm:$0xff]
        %v5905 = vld [vmem:[#allocation14 + $0x10] sm:$0xff]
        %v5906 = vld [vmem:[#allocation14 + $0x18] sm:$0xff]
        %v5907 = vld [vmem:[#allocation14 + $0x20] sm:$0xff]
        %v5908 = vld [vmem:[#allocation14 + $0x28] sm:$0xff]
        %v5909 = vld [vmem:[#allocation14 + $0x30] sm:$0xff]
        %v5910 = vld [vmem:[#allocation14 + $0x38] sm:$0xff]
        %v5911 = vld [vmem:[#allocation14 + $0x40] sm:$0x1]
        %v5912 = vld [vmem:[#allocation14 + $0x48] sm:$0x1]
        %v5913 = vld [vmem:[#allocation14 + $0x50] sm:$0x1]
        %v5914 = vld [vmem:[#allocation14 + $0x58] sm:$0x1]
        %v5915 = vld [vmem:[#allocation14 + $0x60] sm:$0x1]
        %v5916 = vld [vmem:[#allocation14 + $0x68] sm:$0x1]
        %v5917 = vld [vmem:[#allocation14 + $0x70] sm:$0x1]
        %v5918 = vld [vmem:[#allocation14 + $0x78] sm:$0x1]
        %v5919 = vld [vmem:[%s33] sm:$0xff]
        %v5920 = vld [vmem:[%s33 + $0x8] sm:$0xff]
        %5922 = vset.pattern.permute.xlu0 0
        %5923 = vperm.xlu0 %5922, %v5919
        %v5924 = vpop.permute.xlu0 %5923
        %5927 = vset.pattern.permute.xlu0 0
        %5928 = vperm.xlu0 %5927, %v5920
        %v5929 = vpop.permute.xlu0 %5928
        %vm5931 = vcmask 72704
        %v5933 = vsel %vm5931, %v5901, 0
        %v5936 = vsel %vm5931, %v5902, 0
        %vm5938 = vcmask 1040384
        %v5940 = vsel %vm5938, %v5911, 0
        %v5943 = vsel %vm5938, %v5912, 0
        %v5946 = vsel %vm5938, %v5913, 0
        %v5949 = vsel %vm5938, %v5914, 0
        %v5952 = vsel %vm5938, %v5915, 0
        %v5955 = vsel %vm5938, %v5916, 0
        %v5958 = vsel %vm5938, %v5917, 0
        %v5961 = vsel %vm5938, %v5918, 0
        %5963 = vmatpush.msra.mxu0 0.0
        %5964 = vmatpush.msra.mxu0 0.0
        %5965 = vmatpush.msra.mxu0 0.0
        %5966 = vmatpush.msra.mxu0 0.0
        %5967 = vmatpush.msra.mxu0 0.0
        %5968 = vmatpush.msra.mxu0 0.0
        %5969 = vmatpush.msra.mxu0 0.0
        %5970 = vmatpush.msra.mxu0 0.0
        %5971 = vmatpush.msra.mxu0 0.0
        %5972 = vmatpush.msra.mxu0 0.0
        %5973 = vmatpush.msra.mxu0 0.0
        %5974 = vmatpush.msra.mxu0 0.0
        %5975 = vmatpush.msra.mxu0 0.0
        %5976 = vmatpush.msra.mxu0 0.0
        %5977 = vmatpush.msra.mxu0 %v5940
        %5978 = vmatpush.msra.mxu0 %v5903
        %5979 = vmatmul.f32.gmra.mxu0 %v5933
        %v5980 = vpop.f32.mrf.mxu0
        %v5981 = vadd.f32 %v5924, %v5980
        %5982 = vmatmul.f32.gmra.mxu0 %v5936
        %v5983 = vpop.f32.mrf.mxu0
        %v5984 = vadd.f32 %v5929, %v5983
        %5985 = vdwg.mxu0
        %5986 = vmatpush.msra.mxu0 0.0
        %5987 = vmatpush.msra.mxu0 0.0
        %5988 = vmatpush.msra.mxu0 0.0
        %5989 = vmatpush.msra.mxu0 0.0
        %5990 = vmatpush.msra.mxu0 0.0
        %5991 = vmatpush.msra.mxu0 0.0
        %5992 = vmatpush.msra.mxu0 0.0
        %5993 = vmatpush.msra.mxu0 0.0
        %5994 = vmatpush.msra.mxu0 0.0
        %5995 = vmatpush.msra.mxu0 0.0
        %5996 = vmatpush.msra.mxu0 0.0
        %5997 = vmatpush.msra.mxu0 0.0
        %5998 = vmatpush.msra.mxu0 0.0
        %5999 = vmatpush.msra.mxu0 0.0
        %6000 = vmatpush.msra.mxu0 %v5943
        %6001 = vmatpush.msra.mxu0 %v5904
        %6002 = vmatmul.f32.gmra.mxu0 %v5933
        %v6003 = vpop.f32.mrf.mxu0
        %v6004 = vadd.f32 %v5924, %v6003
        %6005 = vmatmul.f32.gmra.mxu0 %v5936
        %v6006 = vpop.f32.mrf.mxu0
        %v6007 = vadd.f32 %v5929, %v6006
        %6008 = vdwg.mxu0
        %6009 = vmatpush.msra.mxu0 0.0
        %6010 = vmatpush.msra.mxu0 0.0
        %6011 = vmatpush.msra.mxu0 0.0
        %6012 = vmatpush.msra.mxu0 0.0
        %6013 = vmatpush.msra.mxu0 0.0
        %6014 = vmatpush.msra.mxu0 0.0
        %6015 = vmatpush.msra.mxu0 0.0
        %6016 = vmatpush.msra.mxu0 0.0
        %6017 = vmatpush.msra.mxu0 0.0
        %6018 = vmatpush.msra.mxu0 0.0
        %6019 = vmatpush.msra.mxu0 0.0
        %6020 = vmatpush.msra.mxu0 0.0
        %6021 = vmatpush.msra.mxu0 0.0
        %6022 = vmatpush.msra.mxu0 0.0
        %6023 = vmatpush.msra.mxu0 %v5946
        %6024 = vmatpush.msra.mxu0 %v5905
        %6025 = vmatmul.f32.gmra.mxu0 %v5933
        %v6026 = vpop.f32.mrf.mxu0
        %v6027 = vadd.f32 %v5924, %v6026
        %6028 = vmatmul.f32.gmra.mxu0 %v5936
        %v6029 = vpop.f32.mrf.mxu0
        %v6030 = vadd.f32 %v5929, %v6029
        %6031 = vdwg.mxu0
        %6032 = vmatpush.msra.mxu0 0.0
        %6033 = vmatpush.msra.mxu0 0.0
        %6034 = vmatpush.msra.mxu0 0.0
        %6035 = vmatpush.msra.mxu0 0.0
        %6036 = vmatpush.msra.mxu0 0.0
        %6037 = vmatpush.msra.mxu0 0.0
        %6038 = vmatpush.msra.mxu0 0.0
        %6039 = vmatpush.msra.mxu0 0.0
        %6040 = vmatpush.msra.mxu0 0.0
        %6041 = vmatpush.msra.mxu0 0.0
        %6042 = vmatpush.msra.mxu0 0.0
        %6043 = vmatpush.msra.mxu0 0.0
        %6044 = vmatpush.msra.mxu0 0.0
        %6045 = vmatpush.msra.mxu0 0.0
        %6046 = vmatpush.msra.mxu0 %v5949
        %6047 = vmatpush.msra.mxu0 %v5906
        %6048 = vmatmul.f32.gmra.mxu0 %v5933
        %v6049 = vpop.f32.mrf.mxu0
        %v6050 = vadd.f32 %v5924, %v6049
        %6051 = vmatmul.f32.gmra.mxu0 %v5936
        %v6052 = vpop.f32.mrf.mxu0
        %v6053 = vadd.f32 %v5929, %v6052
        %6054 = vdwg.mxu0
        %6055 = vmatpush.msra.mxu0 0.0
        %6056 = vmatpush.msra.mxu0 0.0
        %6057 = vmatpush.msra.mxu0 0.0
        %6058 = vmatpush.msra.mxu0 0.0
        %6059 = vmatpush.msra.mxu0 0.0
        %6060 = vmatpush.msra.mxu0 0.0
        %6061 = vmatpush.msra.mxu0 0.0
        %6062 = vmatpush.msra.mxu0 0.0
        %6063 = vmatpush.msra.mxu0 0.0
        %6064 = vmatpush.msra.mxu0 0.0
        %6065 = vmatpush.msra.mxu0 0.0
        %6066 = vmatpush.msra.mxu0 0.0
        %6067 = vmatpush.msra.mxu0 0.0
        %6068 = vmatpush.msra.mxu0 0.0
        %6069 = vmatpush.msra.mxu0 %v5952
        %6070 = vmatpush.msra.mxu0 %v5907
        %6071 = vmatmul.f32.gmra.mxu0 %v5933
        %v6072 = vpop.f32.mrf.mxu0
        %v6073 = vadd.f32 %v5924, %v6072
        %6074 = vmatmul.f32.gmra.mxu0 %v5936
        %v6075 = vpop.f32.mrf.mxu0
        %v6076 = vadd.f32 %v5929, %v6075
        %6077 = vdwg.mxu0
        %6078 = vmatpush.msra.mxu0 0.0
        %6079 = vmatpush.msra.mxu0 0.0
        %6080 = vmatpush.msra.mxu0 0.0
        %6081 = vmatpush.msra.mxu0 0.0
        %6082 = vmatpush.msra.mxu0 0.0
        %6083 = vmatpush.msra.mxu0 0.0
        %6084 = vmatpush.msra.mxu0 0.0
        %6085 = vmatpush.msra.mxu0 0.0
        %6086 = vmatpush.msra.mxu0 0.0
        %6087 = vmatpush.msra.mxu0 0.0
        %6088 = vmatpush.msra.mxu0 0.0
        %6089 = vmatpush.msra.mxu0 0.0
        %6090 = vmatpush.msra.mxu0 0.0
        %6091 = vmatpush.msra.mxu0 0.0
        %6092 = vmatpush.msra.mxu0 %v5955
        %6093 = vmatpush.msra.mxu0 %v5908
        %6094 = vmatmul.f32.gmra.mxu0 %v5933
        %v6095 = vpop.f32.mrf.mxu0
        %v6096 = vadd.f32 %v5924, %v6095
        %6097 = vmatmul.f32.gmra.mxu0 %v5936
        %v6098 = vpop.f32.mrf.mxu0
        %v6099 = vadd.f32 %v5929, %v6098
        %6100 = vdwg.mxu0
        %6101 = vmatpush.msra.mxu0 0.0
        %6102 = vmatpush.msra.mxu0 0.0
        %6103 = vmatpush.msra.mxu0 0.0
        %6104 = vmatpush.msra.mxu0 0.0
        %6105 = vmatpush.msra.mxu0 0.0
        %6106 = vmatpush.msra.mxu0 0.0
        %6107 = vmatpush.msra.mxu0 0.0
        %6108 = vmatpush.msra.mxu0 0.0
        %6109 = vmatpush.msra.mxu0 0.0
        %6110 = vmatpush.msra.mxu0 0.0
        %6111 = vmatpush.msra.mxu0 0.0
        %6112 = vmatpush.msra.mxu0 0.0
        %6113 = vmatpush.msra.mxu0 0.0
        %6114 = vmatpush.msra.mxu0 0.0
        %6115 = vmatpush.msra.mxu0 %v5958
        %6116 = vmatpush.msra.mxu0 %v5909
        %6117 = vmatmul.f32.gmra.mxu0 %v5933
        %v6118 = vpop.f32.mrf.mxu0
        %v6119 = vadd.f32 %v5924, %v6118
        %6120 = vmatmul.f32.gmra.mxu0 %v5936
        %v6121 = vpop.f32.mrf.mxu0
        %v6122 = vadd.f32 %v5929, %v6121
        %6123 = vdwg.mxu0
        %6124 = vmatpush.msra.mxu0 0.0
        %6125 = vmatpush.msra.mxu0 0.0
        %6126 = vmatpush.msra.mxu0 0.0
        %6127 = vmatpush.msra.mxu0 0.0
        %6128 = vmatpush.msra.mxu0 0.0
        %6129 = vmatpush.msra.mxu0 0.0
        %6130 = vmatpush.msra.mxu0 0.0
        %6131 = vmatpush.msra.mxu0 0.0
        %6132 = vmatpush.msra.mxu0 0.0
        %6133 = vmatpush.msra.mxu0 0.0
        %6134 = vmatpush.msra.mxu0 0.0
        %6135 = vmatpush.msra.mxu0 0.0
        %6136 = vmatpush.msra.mxu0 0.0
        %6137 = vmatpush.msra.mxu0 0.0
        %6138 = vmatpush.msra.mxu0 %v5961
        %6139 = vmatpush.msra.mxu0 %v5910
        %6140 = vmatmul.f32.gmra.mxu0 %v5933
        %v6141 = vpop.f32.mrf.mxu0
        %v6142 = vadd.f32 %v5924, %v6141
        %6143 = vmatmul.f32.gmra.mxu0 %v5936
        %v6144 = vpop.f32.mrf.mxu0
        %v6145 = vadd.f32 %v5929, %v6144
        %6146 = vdwg.mxu0
        %vm6147 = vcmp.ge.f32.partialorder %v5981, 0.0
        %vm6148 = vcmp.ge.f32.partialorder %v6004, 0.0
        %vm6149 = vcmp.ge.f32.partialorder %v6027, 0.0
        %vm6150 = vcmp.ge.f32.partialorder %v6050, 0.0
        %vm6151 = vcmp.ge.f32.partialorder %v6073, 0.0
        %vm6152 = vcmp.ge.f32.partialorder %v6096, 0.0
        %vm6153 = vcmp.ge.f32.partialorder %v6119, 0.0
        %vm6154 = vcmp.ge.f32.partialorder %v6142, 0.0
        %vm6155 = vcmp.ge.f32.partialorder %v5984, 0.0
        %vm6156 = vcmp.ge.f32.partialorder %v6007, 0.0
        %vm6157 = vcmp.ge.f32.partialorder %v6030, 0.0
        %vm6158 = vcmp.ge.f32.partialorder %v6053, 0.0
        %vm6159 = vcmp.ge.f32.partialorder %v6076, 0.0
        %vm6160 = vcmp.ge.f32.partialorder %v6099, 0.0
        %vm6161 = vcmp.ge.f32.partialorder %v6122, 0.0
        %vm6162 = vcmp.ge.f32.partialorder %v6145, 0.0
        %v6163 = vmul.f32 %v5981, 0.2
        %v6164 = vmul.f32 %v6004, 0.2
        %v6165 = vmul.f32 %v6027, 0.2
        %v6166 = vmul.f32 %v6050, 0.2
        %v6167 = vmul.f32 %v6073, 0.2
        %v6168 = vmul.f32 %v6096, 0.2
        %v6169 = vmul.f32 %v6119, 0.2
        %v6170 = vmul.f32 %v6142, 0.2
        %v6171 = vmul.f32 %v5984, 0.2
        %v6172 = vmul.f32 %v6007, 0.2
        %v6173 = vmul.f32 %v6030, 0.2
        %v6174 = vmul.f32 %v6053, 0.2
        %v6175 = vmul.f32 %v6076, 0.2
        %v6176 = vmul.f32 %v6099, 0.2
        %v6177 = vmul.f32 %v6122, 0.2
        %v6178 = vmul.f32 %v6145, 0.2
        %v6179 = vsel %vm6147, %v5981, %v6163
        %v6180 = vsel %vm6148, %v6004, %v6164
        %v6181 = vsel %vm6149, %v6027, %v6165
        %v6182 = vsel %vm6150, %v6050, %v6166
        %v6183 = vsel %vm6151, %v6073, %v6167
        %v6184 = vsel %vm6152, %v6096, %v6168
        %v6185 = vsel %vm6153, %v6119, %v6169
        %v6186 = vsel %vm6154, %v6142, %v6170
        %v6187 = vsel %vm6155, %v5984, %v6171
        %v6188 = vsel %vm6156, %v6007, %v6172
        %v6189 = vsel %vm6157, %v6030, %v6173
        %v6190 = vsel %vm6158, %v6053, %v6174
        %v6191 = vsel %vm6159, %v6076, %v6175
        %v6192 = vsel %vm6160, %v6099, %v6176
        %v6193 = vsel %vm6161, %v6122, %v6177
        %v6194 = vsel %vm6162, %v6145, %v6178
        %6195 = vst.msk [vmem:[#allocation15] sm:$0xf] %vm4591, 0
        %6196 = vst.msk [vmem:[#allocation15 + $0x24] sm:$0xf] %vm4591, 0
        %6197 = vst.msk [vmem:[#allocation15 + $0x20] sm:$0xf] %vm4593, 0
        %6198 = vst.msk [vmem:[#allocation15 + $0x44] sm:$0xf] %vm4593, 0
        %v6199 = vpack.c.bf16 %v6180, %v6179
        %v6200 = vpack.c.bf16 %v6182, %v6181
        %v6201 = vpack.c.bf16 %v6184, %v6183
        %v6202 = vpack.c.bf16 %v6186, %v6185
        %v6203 = vpack.c.bf16 %v6188, %v6187
        %v6204 = vpack.c.bf16 %v6190, %v6189
        %v6205 = vpack.c.bf16 %v6192, %v6191
        %v6206 = vpack.c.bf16 %v6194, %v6193
        %6215 = vrot.lane.b32.xlu0 %v6199, 3
        %v6216 = vpop.permute.xlu0 %6215
        %6217 = vrot.lane.b32.xlu0 %v6200, 3
        %v6218 = vpop.permute.xlu0 %6217
        %6219 = vrot.lane.b32.xlu0 %v6201, 3
        %v6220 = vpop.permute.xlu0 %6219
        %6221 = vrot.lane.b32.xlu0 %v6202, 3
        %v6222 = vpop.permute.xlu0 %6221
        %6223 = vrot.lane.b32.xlu0 %v6203, 3
        %v6224 = vpop.permute.xlu0 %6223
        %6225 = vrot.lane.b32.xlu0 %v6204, 3
        %v6226 = vpop.permute.xlu0 %6225
        %6227 = vrot.lane.b32.xlu0 %v6205, 3
        %v6228 = vpop.permute.xlu0 %6227
        %6229 = vrot.lane.b32.xlu0 %v6206, 3
        %v6230 = vpop.permute.xlu0 %6229
        %v6231 = vrot.slane %v6216, 4
        %v6232 = vrot.slane %v6218, 4
        %v6233 = vrot.slane %v6220, 4
        %v6234 = vrot.slane %v6222, 4
        %v6235 = vrot.slane %v6224, 4
        %v6236 = vrot.slane %v6226, 4
        %v6237 = vrot.slane %v6228, 4
        %v6238 = vrot.slane %v6230, 4
        %v6239 = vsel %vm4600, %v6231, %v6216
        %v6240 = vsel %vm2442, %v6231, %v6232
        %v6241 = vsel %vm4600, %v6240, %v6218
        %v6242 = vsel %vm2442, %v6232, %v6233
        %v6243 = vsel %vm4600, %v6242, %v6220
        %v6244 = vsel %vm2442, %v6233, %v6234
        %v6245 = vsel %vm4600, %v6244, %v6222
        %v6246 = vsel %vm4600, %v6235, %v6224
        %v6247 = vsel %vm2442, %v6235, %v6236
        %v6248 = vsel %vm4600, %v6247, %v6226
        %v6249 = vsel %vm2442, %v6236, %v6237
        %v6250 = vsel %vm4600, %v6249, %v6228
        %v6251 = vsel %vm2442, %v6237, %v6238
        %v6252 = vsel %vm4600, %v6251, %v6230
        %6263 = vst.msk [vmem:[#allocation15] sm:$0xff] %vm4605, %v6239
        %6264 = vst [vmem:[#allocation15 + $0x8] sm:$0xff] %v6241
        %6265 = vst [vmem:[#allocation15 + $0x10] sm:$0xff] %v6243
        %6266 = vst [vmem:[#allocation15 + $0x18] sm:$0xff] %v6245
        %6267 = vst.msk [vmem:[#allocation15 + $0x20] sm:$0xf] %vm4591, %v6234
        %6268 = vst.msk [vmem:[#allocation15 + $0x24] sm:$0xff] %vm4605, %v6246
        %6269 = vst [vmem:[#allocation15 + $0x2c] sm:$0xff] %v6248
        %6270 = vst [vmem:[#allocation15 + $0x34] sm:$0xff] %v6250
        %6271 = vst [vmem:[#allocation15 + $0x3c] sm:$0xff] %v6252
        %6272 = vst.msk [vmem:[#allocation15 + $0x44] sm:$0xf] %vm4591, %v6238
        %v6273 = vld [vmem:[#allocation15] sm:$0xff]
        %v6274 = vld [vmem:[#allocation15 + $0x8] sm:$0xff]
        %v6275 = vld [vmem:[#allocation15 + $0x10] sm:$0xff]
        %v6276 = vld [vmem:[#allocation15 + $0x18] sm:$0xff]
        %v6277 = vld [vmem:[#allocation15 + $0x20] sm:$0xf]
        %v6278 = vld [vmem:[#allocation15 + $0x24] sm:$0xff]
        %v6279 = vld [vmem:[#allocation15 + $0x2c] sm:$0xff]
        %v6280 = vld [vmem:[#allocation15 + $0x34] sm:$0xff]
        %v6281 = vld [vmem:[#allocation15 + $0x3c] sm:$0xff]
        %v6282 = vld [vmem:[#allocation15 + $0x44] sm:$0xf]
        %6283 = vst [vmem:[#allocation16] sm:$0xff] %v6273
        %6284 = vst [vmem:[#allocation16 + $0x8] sm:$0xff] %v6274
        %6285 = vst [vmem:[#allocation16 + $0x10] sm:$0xff] %v6275
        %6286 = vst [vmem:[#allocation16 + $0x18] sm:$0xff] %v6276
        %6287 = vst [vmem:[#allocation16 + $0x20] sm:$0xff] %v6278
        %6288 = vst [vmem:[#allocation16 + $0x28] sm:$0xff] %v6279
        %6289 = vst [vmem:[#allocation16 + $0x30] sm:$0xff] %v6280
        %6290 = vst [vmem:[#allocation16 + $0x38] sm:$0xff] %v6281
        %6301 = vrot.lane.b32.xlu0 %v6273, 127
        %v6302 = vpop.permute.xlu0 %6301
        %6303 = vrot.lane.b32.xlu0 %v6274, 127
        %v6304 = vpop.permute.xlu0 %6303
        %6305 = vrot.lane.b32.xlu0 %v6275, 127
        %v6306 = vpop.permute.xlu0 %6305
        %6307 = vrot.lane.b32.xlu0 %v6276, 127
        %v6308 = vpop.permute.xlu0 %6307
        %6309 = vrot.lane.b32.xlu0 %v6277, 127
        %v6310 = vpop.permute.xlu0 %6309
        %6311 = vrot.lane.b32.xlu0 %v6278, 127
        %v6312 = vpop.permute.xlu0 %6311
        %6313 = vrot.lane.b32.xlu0 %v6279, 127
        %v6314 = vpop.permute.xlu0 %6313
        %6315 = vrot.lane.b32.xlu0 %v6280, 127
        %v6316 = vpop.permute.xlu0 %6315
        %6317 = vrot.lane.b32.xlu0 %v6281, 127
        %v6318 = vpop.permute.xlu0 %6317
        %6319 = vrot.lane.b32.xlu0 %v6282, 127
        %v6320 = vpop.permute.xlu0 %6319
        %v6321 = vrot.slane %v6302, 4
        %v6322 = vrot.slane %v6304, 4
        %v6323 = vrot.slane %v6306, 4
        %v6324 = vrot.slane %v6308, 4
        %v6325 = vrot.slane %v6310, 4
        %v6326 = vrot.slane %v6312, 4
        %v6327 = vrot.slane %v6314, 4
        %v6328 = vrot.slane %v6316, 4
        %v6329 = vrot.slane %v6318, 4
        %v6330 = vrot.slane %v6320, 4
        %v6331 = vsel %vm2442, %v6321, %v6322
        %v6332 = vsel %vm2444, %v6302, %v6331
        %v6333 = vsel %vm2442, %v6322, %v6323
        %v6334 = vsel %vm2444, %v6304, %v6333
        %v6335 = vsel %vm2442, %v6323, %v6324
        %v6336 = vsel %vm2444, %v6306, %v6335
        %v6337 = vsel %vm2442, %v6324, %v6325
        %v6338 = vsel %vm2444, %v6308, %v6337
        %v6339 = vsel %vm2442, %v6326, %v6327
        %v6340 = vsel %vm2444, %v6312, %v6339
        %v6341 = vsel %vm2442, %v6327, %v6328
        %v6342 = vsel %vm2444, %v6314, %v6341
        %v6343 = vsel %vm2442, %v6328, %v6329
        %v6344 = vsel %vm2444, %v6316, %v6343
        %v6345 = vsel %vm2442, %v6329, %v6330
        %v6346 = vsel %vm2444, %v6318, %v6345
        %6355 = vst [vmem:[#allocation16 + $0x40] sm:$0xff] %v6332
        %6356 = vst [vmem:[#allocation16 + $0x48] sm:$0xff] %v6334
        %6357 = vst [vmem:[#allocation16 + $0x50] sm:$0xff] %v6336
        %6358 = vst [vmem:[#allocation16 + $0x58] sm:$0xff] %v6338
        %6359 = vst [vmem:[#allocation16 + $0x60] sm:$0xff] %v6340
        %6360 = vst [vmem:[#allocation16 + $0x68] sm:$0xff] %v6342
        %6361 = vst [vmem:[#allocation16 + $0x70] sm:$0xff] %v6344
        %6362 = vst [vmem:[#allocation16 + $0x78] sm:$0xff] %v6346
        %6363 = vrot.lane.b32.xlu0 %v6273, 126
        %v6364 = vpop.permute.xlu0 %6363
        %6365 = vrot.lane.b32.xlu0 %v6274, 126
        %v6366 = vpop.permute.xlu0 %6365
        %6367 = vrot.lane.b32.xlu0 %v6275, 126
        %v6368 = vpop.permute.xlu0 %6367
        %6369 = vrot.lane.b32.xlu0 %v6276, 126
        %v6370 = vpop.permute.xlu0 %6369
        %6371 = vrot.lane.b32.xlu0 %v6277, 126
        %v6372 = vpop.permute.xlu0 %6371
        %6373 = vrot.lane.b32.xlu0 %v6278, 126
        %v6374 = vpop.permute.xlu0 %6373
        %6375 = vrot.lane.b32.xlu0 %v6279, 126
        %v6376 = vpop.permute.xlu0 %6375
        %6377 = vrot.lane.b32.xlu0 %v6280, 126
        %v6378 = vpop.permute.xlu0 %6377
        %6379 = vrot.lane.b32.xlu0 %v6281, 126
        %v6380 = vpop.permute.xlu0 %6379
        %6381 = vrot.lane.b32.xlu0 %v6282, 126
        %v6382 = vpop.permute.xlu0 %6381
        %v6383 = vrot.slane %v6364, 4
        %v6384 = vrot.slane %v6366, 4
        %v6385 = vrot.slane %v6368, 4
        %v6386 = vrot.slane %v6370, 4
        %v6387 = vrot.slane %v6372, 4
        %v6388 = vrot.slane %v6374, 4
        %v6389 = vrot.slane %v6376, 4
        %v6390 = vrot.slane %v6378, 4
        %v6391 = vrot.slane %v6380, 4
        %v6392 = vrot.slane %v6382, 4
        %v6393 = vsel %vm2442, %v6383, %v6384
        %v6394 = vsel %vm2455, %v6364, %v6393
        %v6395 = vsel %vm2442, %v6384, %v6385
        %v6396 = vsel %vm2455, %v6366, %v6395
        %v6397 = vsel %vm2442, %v6385, %v6386
        %v6398 = vsel %vm2455, %v6368, %v6397
        %v6399 = vsel %vm2442, %v6386, %v6387
        %v6400 = vsel %vm2455, %v6370, %v6399
        %v6401 = vsel %vm2442, %v6388, %v6389
        %v6402 = vsel %vm2455, %v6374, %v6401
        %v6403 = vsel %vm2442, %v6389, %v6390
        %v6404 = vsel %vm2455, %v6376, %v6403
        %v6405 = vsel %vm2442, %v6390, %v6391
        %v6406 = vsel %vm2455, %v6378, %v6405
        %v6407 = vsel %vm2442, %v6391, %v6392
        %v6408 = vsel %vm2455, %v6380, %v6407
        %6417 = vst [vmem:[#allocation16 + $0x80] sm:$0xff] %v6394
        %6418 = vst [vmem:[#allocation16 + $0x88] sm:$0xff] %v6396
        %6419 = vst [vmem:[#allocation16 + $0x90] sm:$0xff] %v6398
        %6420 = vst [vmem:[#allocation16 + $0x98] sm:$0xff] %v6400
        %6421 = vst [vmem:[#allocation16 + $0xa0] sm:$0xff] %v6402
        %6422 = vst [vmem:[#allocation16 + $0xa8] sm:$0xff] %v6404
        %6423 = vst [vmem:[#allocation16 + $0xb0] sm:$0xff] %v6406
        %6424 = vst [vmem:[#allocation16 + $0xb8] sm:$0xff] %v6408
        %6425 = vrot.lane.b32.xlu0 %v6273, 125
        %v6426 = vpop.permute.xlu0 %6425
        %6427 = vrot.lane.b32.xlu0 %v6274, 125
        %v6428 = vpop.permute.xlu0 %6427
        %6429 = vrot.lane.b32.xlu0 %v6275, 125
        %v6430 = vpop.permute.xlu0 %6429
        %6431 = vrot.lane.b32.xlu0 %v6276, 125
        %v6432 = vpop.permute.xlu0 %6431
        %6433 = vrot.lane.b32.xlu0 %v6277, 125
        %v6434 = vpop.permute.xlu0 %6433
        %6435 = vrot.lane.b32.xlu0 %v6278, 125
        %v6436 = vpop.permute.xlu0 %6435
        %6437 = vrot.lane.b32.xlu0 %v6279, 125
        %v6438 = vpop.permute.xlu0 %6437
        %6439 = vrot.lane.b32.xlu0 %v6280, 125
        %v6440 = vpop.permute.xlu0 %6439
        %6441 = vrot.lane.b32.xlu0 %v6281, 125
        %v6442 = vpop.permute.xlu0 %6441
        %6443 = vrot.lane.b32.xlu0 %v6282, 125
        %v6444 = vpop.permute.xlu0 %6443
        %v6445 = vrot.slane %v6426, 4
        %v6446 = vrot.slane %v6428, 4
        %v6447 = vrot.slane %v6430, 4
        %v6448 = vrot.slane %v6432, 4
        %v6449 = vrot.slane %v6434, 4
        %v6450 = vrot.slane %v6436, 4
        %v6451 = vrot.slane %v6438, 4
        %v6452 = vrot.slane %v6440, 4
        %v6453 = vrot.slane %v6442, 4
        %v6454 = vrot.slane %v6444, 4
        %v6455 = vsel %vm2442, %v6445, %v6446
        %v6456 = vsel %vm2466, %v6426, %v6455
        %v6457 = vsel %vm2442, %v6446, %v6447
        %v6458 = vsel %vm2466, %v6428, %v6457
        %v6459 = vsel %vm2442, %v6447, %v6448
        %v6460 = vsel %vm2466, %v6430, %v6459
        %v6461 = vsel %vm2442, %v6448, %v6449
        %v6462 = vsel %vm2466, %v6432, %v6461
        %v6463 = vsel %vm2442, %v6450, %v6451
        %v6464 = vsel %vm2466, %v6436, %v6463
        %v6465 = vsel %vm2442, %v6451, %v6452
        %v6466 = vsel %vm2466, %v6438, %v6465
        %v6467 = vsel %vm2442, %v6452, %v6453
        %v6468 = vsel %vm2466, %v6440, %v6467
        %v6469 = vsel %vm2442, %v6453, %v6454
        %v6470 = vsel %vm2466, %v6442, %v6469
        %6479 = vst [vmem:[#allocation16 + $0xc0] sm:$0xff] %v6456
        %6480 = vst [vmem:[#allocation16 + $0xc8] sm:$0xff] %v6458
        %6481 = vst [vmem:[#allocation16 + $0xd0] sm:$0xff] %v6460
        %6482 = vst [vmem:[#allocation16 + $0xd8] sm:$0xff] %v6462
        %6483 = vst [vmem:[#allocation16 + $0xe0] sm:$0xff] %v6464
        %6484 = vst [vmem:[#allocation16 + $0xe8] sm:$0xff] %v6466
        %6485 = vst [vmem:[#allocation16 + $0xf0] sm:$0xff] %v6468
        %6486 = vst [vmem:[#allocation16 + $0xf8] sm:$0xff] %v6470
        %6487 = vrot.lane.b32.xlu0 %v6273, 124
        %v6488 = vpop.permute.xlu0 %6487
        %6489 = vrot.lane.b32.xlu0 %v6274, 124
        %v6490 = vpop.permute.xlu0 %6489
        %6491 = vrot.lane.b32.xlu0 %v6275, 124
        %v6492 = vpop.permute.xlu0 %6491
        %6493 = vrot.lane.b32.xlu0 %v6276, 124
        %v6494 = vpop.permute.xlu0 %6493
        %6495 = vrot.lane.b32.xlu0 %v6277, 124
        %v6496 = vpop.permute.xlu0 %6495
        %6497 = vrot.lane.b32.xlu0 %v6278, 124
        %v6498 = vpop.permute.xlu0 %6497
        %6499 = vrot.lane.b32.xlu0 %v6279, 124
        %v6500 = vpop.permute.xlu0 %6499
        %6501 = vrot.lane.b32.xlu0 %v6280, 124
        %v6502 = vpop.permute.xlu0 %6501
        %6503 = vrot.lane.b32.xlu0 %v6281, 124
        %v6504 = vpop.permute.xlu0 %6503
        %6505 = vrot.lane.b32.xlu0 %v6282, 124
        %v6506 = vpop.permute.xlu0 %6505
        %v6507 = vrot.slane %v6488, 4
        %v6508 = vrot.slane %v6490, 4
        %v6509 = vrot.slane %v6492, 4
        %v6510 = vrot.slane %v6494, 4
        %v6511 = vrot.slane %v6496, 4
        %v6512 = vrot.slane %v6498, 4
        %v6513 = vrot.slane %v6500, 4
        %v6514 = vrot.slane %v6502, 4
        %v6515 = vrot.slane %v6504, 4
        %v6516 = vrot.slane %v6506, 4
        %v6517 = vsel %vm2442, %v6507, %v6508
        %v6518 = vsel %vm2477, %v6488, %v6517
        %v6519 = vsel %vm2442, %v6508, %v6509
        %v6520 = vsel %vm2477, %v6490, %v6519
        %v6521 = vsel %vm2442, %v6509, %v6510
        %v6522 = vsel %vm2477, %v6492, %v6521
        %v6523 = vsel %vm2442, %v6510, %v6511
        %v6524 = vsel %vm2477, %v6494, %v6523
        %v6525 = vsel %vm2442, %v6512, %v6513
        %v6526 = vsel %vm2477, %v6498, %v6525
        %v6527 = vsel %vm2442, %v6513, %v6514
        %v6528 = vsel %vm2477, %v6500, %v6527
        %v6529 = vsel %vm2442, %v6514, %v6515
        %v6530 = vsel %vm2477, %v6502, %v6529
        %v6531 = vsel %vm2442, %v6515, %v6516
        %v6532 = vsel %vm2477, %v6504, %v6531
        %6541 = vst [vmem:[#allocation16 + $0x100] sm:$0xff] %v6518
        %6542 = vst [vmem:[#allocation16 + $0x108] sm:$0xff] %v6520
        %6543 = vst [vmem:[#allocation16 + $0x110] sm:$0xff] %v6522
        %6544 = vst [vmem:[#allocation16 + $0x118] sm:$0xff] %v6524
        %6545 = vst [vmem:[#allocation16 + $0x120] sm:$0xff] %v6526
        %6546 = vst [vmem:[#allocation16 + $0x128] sm:$0xff] %v6528
        %6547 = vst [vmem:[#allocation16 + $0x130] sm:$0xff] %v6530
        %6548 = vst [vmem:[#allocation16 + $0x138] sm:$0xff] %v6532
        %6549 = vrot.lane.b32.xlu0 %v6273, 123
        %v6550 = vpop.permute.xlu0 %6549
        %6551 = vrot.lane.b32.xlu0 %v6274, 123
        %v6552 = vpop.permute.xlu0 %6551
        %6553 = vrot.lane.b32.xlu0 %v6275, 123
        %v6554 = vpop.permute.xlu0 %6553
        %6555 = vrot.lane.b32.xlu0 %v6276, 123
        %v6556 = vpop.permute.xlu0 %6555
        %6557 = vrot.lane.b32.xlu0 %v6277, 123
        %v6558 = vpop.permute.xlu0 %6557
        %6559 = vrot.lane.b32.xlu0 %v6278, 123
        %v6560 = vpop.permute.xlu0 %6559
        %6561 = vrot.lane.b32.xlu0 %v6279, 123
        %v6562 = vpop.permute.xlu0 %6561
        %6563 = vrot.lane.b32.xlu0 %v6280, 123
        %v6564 = vpop.permute.xlu0 %6563
        %6565 = vrot.lane.b32.xlu0 %v6281, 123
        %v6566 = vpop.permute.xlu0 %6565
        %6567 = vrot.lane.b32.xlu0 %v6282, 123
        %v6568 = vpop.permute.xlu0 %6567
        %v6569 = vrot.slane %v6550, 4
        %v6570 = vrot.slane %v6552, 4
        %v6571 = vrot.slane %v6554, 4
        %v6572 = vrot.slane %v6556, 4
        %v6573 = vrot.slane %v6558, 4
        %v6574 = vrot.slane %v6560, 4
        %v6575 = vrot.slane %v6562, 4
        %v6576 = vrot.slane %v6564, 4
        %v6577 = vrot.slane %v6566, 4
        %v6578 = vrot.slane %v6568, 4
        %v6579 = vsel %vm2442, %v6569, %v6570
        %v6580 = vsel %vm2488, %v6550, %v6579
        %v6581 = vsel %vm2442, %v6570, %v6571
        %v6582 = vsel %vm2488, %v6552, %v6581
        %v6583 = vsel %vm2442, %v6571, %v6572
        %v6584 = vsel %vm2488, %v6554, %v6583
        %v6585 = vsel %vm2442, %v6572, %v6573
        %v6586 = vsel %vm2488, %v6556, %v6585
        %v6587 = vsel %vm2442, %v6574, %v6575
        %v6588 = vsel %vm2488, %v6560, %v6587
        %v6589 = vsel %vm2442, %v6575, %v6576
        %v6590 = vsel %vm2488, %v6562, %v6589
        %v6591 = vsel %vm2442, %v6576, %v6577
        %v6592 = vsel %vm2488, %v6564, %v6591
        %v6593 = vsel %vm2442, %v6577, %v6578
        %v6594 = vsel %vm2488, %v6566, %v6593
        %6603 = vst [vmem:[#allocation16 + $0x140] sm:$0xff] %v6580
        %6604 = vst [vmem:[#allocation16 + $0x148] sm:$0xff] %v6582
        %6605 = vst [vmem:[#allocation16 + $0x150] sm:$0xff] %v6584
        %6606 = vst [vmem:[#allocation16 + $0x158] sm:$0xff] %v6586
        %6607 = vst [vmem:[#allocation16 + $0x160] sm:$0xff] %v6588
        %6608 = vst [vmem:[#allocation16 + $0x168] sm:$0xff] %v6590
        %6609 = vst [vmem:[#allocation16 + $0x170] sm:$0xff] %v6592
        %6610 = vst [vmem:[#allocation16 + $0x178] sm:$0xff] %v6594
        %6611 = vrot.lane.b32.xlu0 %v6273, 122
        %v6612 = vpop.permute.xlu0 %6611
        %6613 = vrot.lane.b32.xlu0 %v6274, 122
        %v6614 = vpop.permute.xlu0 %6613
        %6615 = vrot.lane.b32.xlu0 %v6275, 122
        %v6616 = vpop.permute.xlu0 %6615
        %6617 = vrot.lane.b32.xlu0 %v6276, 122
        %v6618 = vpop.permute.xlu0 %6617
        %6619 = vrot.lane.b32.xlu0 %v6277, 122
        %v6620 = vpop.permute.xlu0 %6619
        %6621 = vrot.lane.b32.xlu0 %v6278, 122
        %v6622 = vpop.permute.xlu0 %6621
        %6623 = vrot.lane.b32.xlu0 %v6279, 122
        %v6624 = vpop.permute.xlu0 %6623
        %6625 = vrot.lane.b32.xlu0 %v6280, 122
        %v6626 = vpop.permute.xlu0 %6625
        %6627 = vrot.lane.b32.xlu0 %v6281, 122
        %v6628 = vpop.permute.xlu0 %6627
        %6629 = vrot.lane.b32.xlu0 %v6282, 122
        %v6630 = vpop.permute.xlu0 %6629
        %v6631 = vrot.slane %v6612, 4
        %v6632 = vrot.slane %v6614, 4
        %v6633 = vrot.slane %v6616, 4
        %v6634 = vrot.slane %v6618, 4
        %v6635 = vrot.slane %v6620, 4
        %v6636 = vrot.slane %v6622, 4
        %v6637 = vrot.slane %v6624, 4
        %v6638 = vrot.slane %v6626, 4
        %v6639 = vrot.slane %v6628, 4
        %v6640 = vrot.slane %v6630, 4
        %v6641 = vsel %vm2442, %v6631, %v6632
        %v6642 = vsel %vm2499, %v6612, %v6641
        %v6643 = vsel %vm2442, %v6632, %v6633
        %v6644 = vsel %vm2499, %v6614, %v6643
        %v6645 = vsel %vm2442, %v6633, %v6634
        %v6646 = vsel %vm2499, %v6616, %v6645
        %v6647 = vsel %vm2442, %v6634, %v6635
        %v6648 = vsel %vm2499, %v6618, %v6647
        %v6649 = vsel %vm2442, %v6636, %v6637
        %v6650 = vsel %vm2499, %v6622, %v6649
        %v6651 = vsel %vm2442, %v6637, %v6638
        %v6652 = vsel %vm2499, %v6624, %v6651
        %v6653 = vsel %vm2442, %v6638, %v6639
        %v6654 = vsel %vm2499, %v6626, %v6653
        %v6655 = vsel %vm2442, %v6639, %v6640
        %v6656 = vsel %vm2499, %v6628, %v6655
        %6665 = vst [vmem:[#allocation16 + $0x180] sm:$0xff] %v6642
        %6666 = vst [vmem:[#allocation16 + $0x188] sm:$0xff] %v6644
        %6667 = vst [vmem:[#allocation16 + $0x190] sm:$0xff] %v6646
        %6668 = vst [vmem:[#allocation16 + $0x198] sm:$0xff] %v6648
        %6669 = vst [vmem:[#allocation16 + $0x1a0] sm:$0xff] %v6650
        %6670 = vst [vmem:[#allocation16 + $0x1a8] sm:$0xff] %v6652
        %6671 = vst [vmem:[#allocation16 + $0x1b0] sm:$0xff] %v6654
        %6672 = vst [vmem:[#allocation16 + $0x1b8] sm:$0xff] %v6656
        %v6673 = vld [vmem:[%s35] sm:$0xf]
        %v6674 = vld [vmem:[%s35 + $0x4] sm:$0xf]
        %v6675 = vld [vmem:[#allocation16] sm:$0xff]
        %v6676 = vld [vmem:[#allocation16 + $0x8] sm:$0xff]
        %v6677 = vld [vmem:[#allocation16 + $0x10] sm:$0xff]
        %v6678 = vld [vmem:[#allocation16 + $0x18] sm:$0xff]
        %v6679 = vld [vmem:[#allocation16 + $0x20] sm:$0xff]
        %v6680 = vld [vmem:[#allocation16 + $0x28] sm:$0xff]
        %v6681 = vld [vmem:[#allocation16 + $0x30] sm:$0xff]
        %v6682 = vld [vmem:[#allocation16 + $0x38] sm:$0xff]
        %v6683 = vld [vmem:[#allocation16 + $0x40] sm:$0xff]
        %v6684 = vld [vmem:[#allocation16 + $0x48] sm:$0xff]
        %v6685 = vld [vmem:[#allocation16 + $0x50] sm:$0xff]
        %v6686 = vld [vmem:[#allocation16 + $0x58] sm:$0xff]
        %v6687 = vld [vmem:[#allocation16 + $0x60] sm:$0xff]
        %v6688 = vld [vmem:[#allocation16 + $0x68] sm:$0xff]
        %v6689 = vld [vmem:[#allocation16 + $0x70] sm:$0xff]
        %v6690 = vld [vmem:[#allocation16 + $0x78] sm:$0xff]
        %v6691 = vld [vmem:[#allocation16 + $0x80] sm:$0xff]
        %v6692 = vld [vmem:[#allocation16 + $0x88] sm:$0xff]
        %v6693 = vld [vmem:[#allocation16 + $0x90] sm:$0xff]
        %v6694 = vld [vmem:[#allocation16 + $0x98] sm:$0xff]
        %v6695 = vld [vmem:[#allocation16 + $0xa0] sm:$0xff]
        %v6696 = vld [vmem:[#allocation16 + $0xa8] sm:$0xff]
        %v6697 = vld [vmem:[#allocation16 + $0xb0] sm:$0xff]
        %v6698 = vld [vmem:[#allocation16 + $0xb8] sm:$0xff]
        %v6699 = vld [vmem:[#allocation16 + $0xc0] sm:$0xff]
        %v6700 = vld [vmem:[#allocation16 + $0xc8] sm:$0xff]
        %v6701 = vld [vmem:[#allocation16 + $0xd0] sm:$0xff]
        %v6702 = vld [vmem:[#allocation16 + $0xd8] sm:$0xff]
        %v6703 = vld [vmem:[#allocation16 + $0xe0] sm:$0xff]
        %v6704 = vld [vmem:[#allocation16 + $0xe8] sm:$0xff]
        %v6705 = vld [vmem:[#allocation16 + $0xf0] sm:$0xff]
        %v6706 = vld [vmem:[#allocation16 + $0xf8] sm:$0xff]
        %v6707 = vld [vmem:[#allocation16 + $0x100] sm:$0xff]
        %v6708 = vld [vmem:[#allocation16 + $0x108] sm:$0xff]
        %v6709 = vld [vmem:[#allocation16 + $0x110] sm:$0xff]
        %v6710 = vld [vmem:[#allocation16 + $0x118] sm:$0xff]
        %v6711 = vld [vmem:[#allocation16 + $0x120] sm:$0xff]
        %v6712 = vld [vmem:[#allocation16 + $0x128] sm:$0xff]
        %v6713 = vld [vmem:[#allocation16 + $0x130] sm:$0xff]
        %v6714 = vld [vmem:[#allocation16 + $0x138] sm:$0xff]
        %v6715 = vld [vmem:[#allocation16 + $0x140] sm:$0xff]
        %v6716 = vld [vmem:[#allocation16 + $0x148] sm:$0xff]
        %v6717 = vld [vmem:[#allocation16 + $0x150] sm:$0xff]
        %v6718 = vld [vmem:[#allocation16 + $0x158] sm:$0xff]
        %v6719 = vld [vmem:[#allocation16 + $0x160] sm:$0xff]
        %v6720 = vld [vmem:[#allocation16 + $0x168] sm:$0xff]
        %v6721 = vld [vmem:[#allocation16 + $0x170] sm:$0xff]
        %v6722 = vld [vmem:[#allocation16 + $0x178] sm:$0xff]
        %v6723 = vld [vmem:[#allocation16 + $0x180] sm:$0xff]
        %v6724 = vld [vmem:[#allocation16 + $0x188] sm:$0xff]
        %v6725 = vld [vmem:[#allocation16 + $0x190] sm:$0xff]
        %v6726 = vld [vmem:[#allocation16 + $0x198] sm:$0xff]
        %v6727 = vld [vmem:[#allocation16 + $0x1a0] sm:$0xff]
        %v6728 = vld [vmem:[#allocation16 + $0x1a8] sm:$0xff]
        %v6729 = vld [vmem:[#allocation16 + $0x1b0] sm:$0xff]
        %v6730 = vld [vmem:[#allocation16 + $0x1b8] sm:$0xff]
        %v6731 = vld [vmem:[%s37] sm:$0xff]
        %v6732 = vld [vmem:[%s37 + $0x8] sm:$0xff]
        %6734 = vset.pattern.permute.xlu0 0
        %6735 = vperm.xlu0 %6734, %v6731
        %v6736 = vpop.permute.xlu0 %6735
        %6739 = vset.pattern.permute.xlu0 0
        %6740 = vperm.xlu0 %6739, %v6732
        %v6741 = vpop.permute.xlu0 %6740
        %v6745 = vunpack.c.l.b16 %v6673
        %v6746 = vunpack.c.l.b16 %v6674
        %v6747 = vpack.c.b16 %v6746, %v6745
        %v6804 = vunpack.c.l.b16 %v6675
        %v6805 = vunpack.c.h.b16 %v6675
        %v6806 = vunpack.c.l.b16 %v6676
        %v6807 = vunpack.c.h.b16 %v6676
        %v6808 = vunpack.c.l.b16 %v6677
        %v6809 = vunpack.c.h.b16 %v6677
        %v6810 = vunpack.c.l.b16 %v6678
        %v6811 = vunpack.c.h.b16 %v6678
        %v6812 = vunpack.c.l.b16 %v6679
        %v6813 = vunpack.c.h.b16 %v6679
        %v6814 = vunpack.c.l.b16 %v6680
        %v6815 = vunpack.c.h.b16 %v6680
        %v6816 = vunpack.c.l.b16 %v6681
        %v6817 = vunpack.c.h.b16 %v6681
        %v6818 = vunpack.c.l.b16 %v6682
        %v6819 = vunpack.c.h.b16 %v6682
        %v6820 = vunpack.c.l.b16 %v6683
        %v6821 = vunpack.c.h.b16 %v6683
        %v6822 = vunpack.c.l.b16 %v6684
        %v6823 = vunpack.c.h.b16 %v6684
        %v6824 = vunpack.c.l.b16 %v6685
        %v6825 = vunpack.c.h.b16 %v6685
        %v6826 = vunpack.c.l.b16 %v6686
        %v6827 = vunpack.c.h.b16 %v6686
        %v6828 = vunpack.c.l.b16 %v6687
        %v6829 = vunpack.c.h.b16 %v6687
        %v6830 = vunpack.c.l.b16 %v6688
        %v6831 = vunpack.c.h.b16 %v6688
        %v6832 = vunpack.c.l.b16 %v6689
        %v6833 = vunpack.c.h.b16 %v6689
        %v6834 = vunpack.c.l.b16 %v6690
        %v6835 = vunpack.c.h.b16 %v6690
        %v6836 = vunpack.c.l.b16 %v6691
        %v6837 = vunpack.c.h.b16 %v6691
        %v6838 = vunpack.c.l.b16 %v6692
        %v6839 = vunpack.c.h.b16 %v6692
        %v6840 = vunpack.c.l.b16 %v6693
        %v6841 = vunpack.c.h.b16 %v6693
        %v6842 = vunpack.c.l.b16 %v6694
        %v6843 = vunpack.c.h.b16 %v6694
        %v6844 = vunpack.c.l.b16 %v6695
        %v6845 = vunpack.c.h.b16 %v6695
        %v6846 = vunpack.c.l.b16 %v6696
        %v6847 = vunpack.c.h.b16 %v6696
        %v6848 = vunpack.c.l.b16 %v6697
        %v6849 = vunpack.c.h.b16 %v6697
        %v6850 = vunpack.c.l.b16 %v6698
        %v6851 = vunpack.c.h.b16 %v6698
        %v6852 = vunpack.c.l.b16 %v6699
        %v6853 = vunpack.c.h.b16 %v6699
        %v6854 = vunpack.c.l.b16 %v6700
        %v6855 = vunpack.c.h.b16 %v6700
        %v6856 = vunpack.c.l.b16 %v6701
        %v6857 = vunpack.c.h.b16 %v6701
        %v6858 = vunpack.c.l.b16 %v6702
        %v6859 = vunpack.c.h.b16 %v6702
        %v6860 = vunpack.c.l.b16 %v6703
        %v6861 = vunpack.c.h.b16 %v6703
        %v6862 = vunpack.c.l.b16 %v6704
        %v6863 = vunpack.c.h.b16 %v6704
        %v6864 = vunpack.c.l.b16 %v6705
        %v6865 = vunpack.c.h.b16 %v6705
        %v6866 = vunpack.c.l.b16 %v6706
        %v6867 = vunpack.c.h.b16 %v6706
        %v6868 = vunpack.c.l.b16 %v6707
        %v6869 = vunpack.c.h.b16 %v6707
        %v6870 = vunpack.c.l.b16 %v6708
        %v6871 = vunpack.c.h.b16 %v6708
        %v6872 = vunpack.c.l.b16 %v6709
        %v6873 = vunpack.c.h.b16 %v6709
        %v6874 = vunpack.c.l.b16 %v6710
        %v6875 = vunpack.c.h.b16 %v6710
        %v6876 = vunpack.c.l.b16 %v6711
        %v6877 = vunpack.c.h.b16 %v6711
        %v6878 = vunpack.c.l.b16 %v6712
        %v6879 = vunpack.c.h.b16 %v6712
        %v6880 = vunpack.c.l.b16 %v6713
        %v6881 = vunpack.c.h.b16 %v6713
        %v6882 = vunpack.c.l.b16 %v6714
        %v6883 = vunpack.c.h.b16 %v6714
        %v6884 = vunpack.c.l.b16 %v6715
        %v6885 = vunpack.c.h.b16 %v6715
        %v6886 = vunpack.c.l.b16 %v6716
        %v6887 = vunpack.c.h.b16 %v6716
        %v6888 = vunpack.c.l.b16 %v6717
        %v6889 = vunpack.c.h.b16 %v6717
        %v6890 = vunpack.c.l.b16 %v6718
        %v6891 = vunpack.c.h.b16 %v6718
        %v6892 = vunpack.c.l.b16 %v6719
        %v6893 = vunpack.c.h.b16 %v6719
        %v6894 = vunpack.c.l.b16 %v6720
        %v6895 = vunpack.c.h.b16 %v6720
        %v6896 = vunpack.c.l.b16 %v6721
        %v6897 = vunpack.c.h.b16 %v6721
        %v6898 = vunpack.c.l.b16 %v6722
        %v6899 = vunpack.c.h.b16 %v6722
        %v6900 = vunpack.c.l.b16 %v6723
        %v6901 = vunpack.c.h.b16 %v6723
        %v6902 = vunpack.c.l.b16 %v6724
        %v6903 = vunpack.c.h.b16 %v6724
        %v6904 = vunpack.c.l.b16 %v6725
        %v6905 = vunpack.c.h.b16 %v6725
        %v6906 = vunpack.c.l.b16 %v6726
        %v6907 = vunpack.c.h.b16 %v6726
        %v6908 = vunpack.c.l.b16 %v6727
        %v6909 = vunpack.c.h.b16 %v6727
        %v6910 = vunpack.c.l.b16 %v6728
        %v6911 = vunpack.c.h.b16 %v6728
        %v6912 = vunpack.c.l.b16 %v6729
        %v6913 = vunpack.c.h.b16 %v6729
        %v6914 = vunpack.c.l.b16 %v6730
        %v6915 = vunpack.c.h.b16 %v6730
        %v6916 = vpack.c.b16 %v6812, %v6804
        %v6917 = vpack.c.b16 %v6813, %v6805
        %v6918 = vpack.c.b16 %v6814, %v6806
        %v6919 = vpack.c.b16 %v6815, %v6807
        %v6920 = vpack.c.b16 %v6816, %v6808
        %v6921 = vpack.c.b16 %v6817, %v6809
        %v6922 = vpack.c.b16 %v6818, %v6810
        %v6923 = vpack.c.b16 %v6819, %v6811
        %v6924 = vpack.c.b16 %v6828, %v6820
        %v6925 = vpack.c.b16 %v6829, %v6821
        %v6926 = vpack.c.b16 %v6830, %v6822
        %v6927 = vpack.c.b16 %v6831, %v6823
        %v6928 = vpack.c.b16 %v6832, %v6824
        %v6929 = vpack.c.b16 %v6833, %v6825
        %v6930 = vpack.c.b16 %v6834, %v6826
        %v6931 = vpack.c.b16 %v6835, %v6827
        %v6932 = vpack.c.b16 %v6844, %v6836
        %v6933 = vpack.c.b16 %v6845, %v6837
        %v6934 = vpack.c.b16 %v6846, %v6838
        %v6935 = vpack.c.b16 %v6847, %v6839
        %v6936 = vpack.c.b16 %v6848, %v6840
        %v6937 = vpack.c.b16 %v6849, %v6841
        %v6938 = vpack.c.b16 %v6850, %v6842
        %v6939 = vpack.c.b16 %v6851, %v6843
        %v6940 = vpack.c.b16 %v6860, %v6852
        %v6941 = vpack.c.b16 %v6861, %v6853
        %v6942 = vpack.c.b16 %v6862, %v6854
        %v6943 = vpack.c.b16 %v6863, %v6855
        %v6944 = vpack.c.b16 %v6864, %v6856
        %v6945 = vpack.c.b16 %v6865, %v6857
        %v6946 = vpack.c.b16 %v6866, %v6858
        %v6947 = vpack.c.b16 %v6867, %v6859
        %v6948 = vpack.c.b16 %v6876, %v6868
        %v6949 = vpack.c.b16 %v6877, %v6869
        %v6950 = vpack.c.b16 %v6878, %v6870
        %v6951 = vpack.c.b16 %v6879, %v6871
        %v6952 = vpack.c.b16 %v6880, %v6872
        %v6953 = vpack.c.b16 %v6881, %v6873
        %v6954 = vpack.c.b16 %v6882, %v6874
        %v6955 = vpack.c.b16 %v6883, %v6875
        %v6956 = vpack.c.b16 %v6892, %v6884
        %v6957 = vpack.c.b16 %v6893, %v6885
        %v6958 = vpack.c.b16 %v6894, %v6886
        %v6959 = vpack.c.b16 %v6895, %v6887
        %v6960 = vpack.c.b16 %v6896, %v6888
        %v6961 = vpack.c.b16 %v6897, %v6889
        %v6962 = vpack.c.b16 %v6898, %v6890
        %v6963 = vpack.c.b16 %v6899, %v6891
        %v6964 = vpack.c.b16 %v6908, %v6900
        %v6965 = vpack.c.b16 %v6909, %v6901
        %v6966 = vpack.c.b16 %v6910, %v6902
        %v6967 = vpack.c.b16 %v6911, %v6903
        %v6968 = vpack.c.b16 %v6912, %v6904
        %v6969 = vpack.c.b16 %v6913, %v6905
        %v6970 = vpack.c.b16 %v6914, %v6906
        %v6971 = vpack.c.b16 %v6915, %v6907
        %v7029 = vsel %vm3211, %v6747, 0
        %7031 = vmatpush.bf16.msra.mxu0 0
        %7032 = vmatpush.bf16.msra.mxu0 %v6964
        %7033 = vmatpush.bf16.msra.mxu0 %v6956
        %7034 = vmatpush.bf16.msra.mxu0 %v6948
        %7035 = vmatpush.bf16.msra.mxu0 %v6940
        %7036 = vmatpush.bf16.msra.mxu0 %v6932
        %7037 = vmatpush.bf16.msra.mxu0 %v6924
        %7038 = vmatpush.bf16.msra.mxu0 %v6916
        %7039 = vmatmul.bf16.gmra.mxu0 %v7029
        %v7040 = vpop.f32.mrf.mxu0
        %v7041 = vadd.f32 %v6736, %v7040
        %v7042 = vpop.f32.mrf.mxu0
        %v7043 = vadd.f32 %v6741, %v7042
        %7044 = vdwg.mxu0
        %7045 = vmatpush.bf16.msra.mxu0 0
        %7046 = vmatpush.bf16.msra.mxu0 %v6965
        %7047 = vmatpush.bf16.msra.mxu0 %v6957
        %7048 = vmatpush.bf16.msra.mxu0 %v6949
        %7049 = vmatpush.bf16.msra.mxu0 %v6941
        %7050 = vmatpush.bf16.msra.mxu0 %v6933
        %7051 = vmatpush.bf16.msra.mxu0 %v6925
        %7052 = vmatpush.bf16.msra.mxu0 %v6917
        %7053 = vmatmul.bf16.gmra.mxu0 %v7029
        %v7054 = vpop.f32.mrf.mxu0
        %v7055 = vadd.f32 %v6736, %v7054
        %v7056 = vpop.f32.mrf.mxu0
        %v7057 = vadd.f32 %v6741, %v7056
        %7058 = vdwg.mxu0
        %7059 = vmatpush.bf16.msra.mxu0 0
        %7060 = vmatpush.bf16.msra.mxu0 %v6966
        %7061 = vmatpush.bf16.msra.mxu0 %v6958
        %7062 = vmatpush.bf16.msra.mxu0 %v6950
        %7063 = vmatpush.bf16.msra.mxu0 %v6942
        %7064 = vmatpush.bf16.msra.mxu0 %v6934
        %7065 = vmatpush.bf16.msra.mxu0 %v6926
        %7066 = vmatpush.bf16.msra.mxu0 %v6918
        %7067 = vmatmul.bf16.gmra.mxu0 %v7029
        %v7068 = vpop.f32.mrf.mxu0
        %v7069 = vadd.f32 %v6736, %v7068
        %v7070 = vpop.f32.mrf.mxu0
        %v7071 = vadd.f32 %v6741, %v7070
        %7072 = vdwg.mxu0
        %7073 = vmatpush.bf16.msra.mxu0 0
        %7074 = vmatpush.bf16.msra.mxu0 %v6967
        %7075 = vmatpush.bf16.msra.mxu0 %v6959
        %7076 = vmatpush.bf16.msra.mxu0 %v6951
        %7077 = vmatpush.bf16.msra.mxu0 %v6943
        %7078 = vmatpush.bf16.msra.mxu0 %v6935
        %7079 = vmatpush.bf16.msra.mxu0 %v6927
        %7080 = vmatpush.bf16.msra.mxu0 %v6919
        %7081 = vmatmul.bf16.gmra.mxu0 %v7029
        %v7082 = vpop.f32.mrf.mxu0
        %v7083 = vadd.f32 %v6736, %v7082
        %v7084 = vpop.f32.mrf.mxu0
        %v7085 = vadd.f32 %v6741, %v7084
        %7086 = vdwg.mxu0
        %7087 = vmatpush.bf16.msra.mxu0 0
        %7088 = vmatpush.bf16.msra.mxu0 %v6968
        %7089 = vmatpush.bf16.msra.mxu0 %v6960
        %7090 = vmatpush.bf16.msra.mxu0 %v6952
        %7091 = vmatpush.bf16.msra.mxu0 %v6944
        %7092 = vmatpush.bf16.msra.mxu0 %v6936
        %7093 = vmatpush.bf16.msra.mxu0 %v6928
        %7094 = vmatpush.bf16.msra.mxu0 %v6920
        %7095 = vmatmul.bf16.gmra.mxu0 %v7029
        %v7096 = vpop.f32.mrf.mxu0
        %v7097 = vadd.f32 %v6736, %v7096
        %v7098 = vpop.f32.mrf.mxu0
        %v7099 = vadd.f32 %v6741, %v7098
        %7100 = vdwg.mxu0
        %7101 = vmatpush.bf16.msra.mxu0 0
        %7102 = vmatpush.bf16.msra.mxu0 %v6969
        %7103 = vmatpush.bf16.msra.mxu0 %v6961
        %7104 = vmatpush.bf16.msra.mxu0 %v6953
        %7105 = vmatpush.bf16.msra.mxu0 %v6945
        %7106 = vmatpush.bf16.msra.mxu0 %v6937
        %7107 = vmatpush.bf16.msra.mxu0 %v6929
        %7108 = vmatpush.bf16.msra.mxu0 %v6921
        %7109 = vmatmul.bf16.gmra.mxu0 %v7029
        %v7110 = vpop.f32.mrf.mxu0
        %v7111 = vadd.f32 %v6736, %v7110
        %v7112 = vpop.f32.mrf.mxu0
        %v7113 = vadd.f32 %v6741, %v7112
        %7114 = vdwg.mxu0
        %7115 = vmatpush.bf16.msra.mxu0 0
        %7116 = vmatpush.bf16.msra.mxu0 %v6970
        %7117 = vmatpush.bf16.msra.mxu0 %v6962
        %7118 = vmatpush.bf16.msra.mxu0 %v6954
        %7119 = vmatpush.bf16.msra.mxu0 %v6946
        %7120 = vmatpush.bf16.msra.mxu0 %v6938
        %7121 = vmatpush.bf16.msra.mxu0 %v6930
        %7122 = vmatpush.bf16.msra.mxu0 %v6922
        %7123 = vmatmul.bf16.gmra.mxu0 %v7029
        %v7124 = vpop.f32.mrf.mxu0
        %v7125 = vadd.f32 %v6736, %v7124
        %v7126 = vpop.f32.mrf.mxu0
        %v7127 = vadd.f32 %v6741, %v7126
        %7128 = vdwg.mxu0
        %7129 = vmatpush.bf16.msra.mxu0 0
        %7130 = vmatpush.bf16.msra.mxu0 %v6971
        %7131 = vmatpush.bf16.msra.mxu0 %v6963
        %7132 = vmatpush.bf16.msra.mxu0 %v6955
        %7133 = vmatpush.bf16.msra.mxu0 %v6947
        %7134 = vmatpush.bf16.msra.mxu0 %v6939
        %7135 = vmatpush.bf16.msra.mxu0 %v6931
        %7136 = vmatpush.bf16.msra.mxu0 %v6923
        %7137 = vmatmul.bf16.gmra.mxu0 %v7029
        %v7138 = vpop.f32.mrf.mxu0
        %v7139 = vadd.f32 %v6736, %v7138
        %v7140 = vpop.f32.mrf.mxu0
        %v7141 = vadd.f32 %v6741, %v7140
        %7142 = vdwg.mxu0
        %vm7143 = vcmp.ge.f32.partialorder %v7041, 0.0
        %vm7144 = vcmp.ge.f32.partialorder %v7055, 0.0
        %vm7145 = vcmp.ge.f32.partialorder %v7069, 0.0
        %vm7146 = vcmp.ge.f32.partialorder %v7083, 0.0
        %vm7147 = vcmp.ge.f32.partialorder %v7097, 0.0
        %vm7148 = vcmp.ge.f32.partialorder %v7111, 0.0
        %vm7149 = vcmp.ge.f32.partialorder %v7125, 0.0
        %vm7150 = vcmp.ge.f32.partialorder %v7139, 0.0
        %vm7151 = vcmp.ge.f32.partialorder %v7043, 0.0
        %vm7152 = vcmp.ge.f32.partialorder %v7057, 0.0
        %vm7153 = vcmp.ge.f32.partialorder %v7071, 0.0
        %vm7154 = vcmp.ge.f32.partialorder %v7085, 0.0
        %vm7155 = vcmp.ge.f32.partialorder %v7099, 0.0
        %vm7156 = vcmp.ge.f32.partialorder %v7113, 0.0
        %vm7157 = vcmp.ge.f32.partialorder %v7127, 0.0
        %vm7158 = vcmp.ge.f32.partialorder %v7141, 0.0
        %v7159 = vmul.f32 %v7041, 0.2
        %v7160 = vmul.f32 %v7055, 0.2
        %v7161 = vmul.f32 %v7069, 0.2
        %v7162 = vmul.f32 %v7083, 0.2
        %v7163 = vmul.f32 %v7097, 0.2
        %v7164 = vmul.f32 %v7111, 0.2
        %v7165 = vmul.f32 %v7125, 0.2
        %v7166 = vmul.f32 %v7139, 0.2
        %v7167 = vmul.f32 %v7043, 0.2
        %v7168 = vmul.f32 %v7057, 0.2
        %v7169 = vmul.f32 %v7071, 0.2
        %v7170 = vmul.f32 %v7085, 0.2
        %v7171 = vmul.f32 %v7099, 0.2
        %v7172 = vmul.f32 %v7113, 0.2
        %v7173 = vmul.f32 %v7127, 0.2
        %v7174 = vmul.f32 %v7141, 0.2
        %v7175 = vsel %vm7143, %v7041, %v7159
        %v7176 = vsel %vm7144, %v7055, %v7160
        %v7177 = vsel %vm7145, %v7069, %v7161
        %v7178 = vsel %vm7146, %v7083, %v7162
        %v7179 = vsel %vm7147, %v7097, %v7163
        %v7180 = vsel %vm7148, %v7111, %v7164
        %v7181 = vsel %vm7149, %v7125, %v7165
        %v7182 = vsel %vm7150, %v7139, %v7166
        %v7183 = vsel %vm7151, %v7043, %v7167
        %v7184 = vsel %vm7152, %v7057, %v7168
        %v7185 = vsel %vm7153, %v7071, %v7169
        %v7186 = vsel %vm7154, %v7085, %v7170
        %v7187 = vsel %vm7155, %v7099, %v7171
        %v7188 = vsel %vm7156, %v7113, %v7172
        %v7189 = vsel %vm7157, %v7127, %v7173
        %v7190 = vsel %vm7158, %v7141, %v7174
        %v7191 = vpack.c.bf16 %v7183, %v7175
        %v7192 = vpack.c.bf16 %v7184, %v7176
        %v7193 = vpack.c.bf16 %v7185, %v7177
        %v7194 = vpack.c.bf16 %v7186, %v7178
        %v7195 = vpack.c.bf16 %v7187, %v7179
        %v7196 = vpack.c.bf16 %v7188, %v7180
        %v7197 = vpack.c.bf16 %v7189, %v7181
        %v7198 = vpack.c.bf16 %v7190, %v7182
        %v7199 = vld [vmem:[#allocation22] sm:$0xff]
        %v7200 = vld [vmem:[#allocation22 + $0x8] sm:$0xff]
        %v7201 = vld [vmem:[#allocation22 + $0x10] sm:$0xff]
        %v7202 = vld [vmem:[#allocation22 + $0x18] sm:$0xff]
        %v7203 = vld [vmem:[#allocation22 + $0x20] sm:$0xff]
        %v7204 = vld [vmem:[#allocation22 + $0x28] sm:$0xff]
        %v7205 = vld [vmem:[#allocation22 + $0x30] sm:$0xff]
        %v7206 = vld [vmem:[#allocation22 + $0x38] sm:$0xff]
        %v7207 = vld [vmem:[#allocation22 + $0x40] sm:$0xff]
        %v7208 = vld [vmem:[#allocation22 + $0x48] sm:$0xff]
        %v7209 = vld [vmem:[#allocation22 + $0x50] sm:$0xff]
        %v7210 = vld [vmem:[#allocation22 + $0x58] sm:$0xff]
        %v7211 = vld [vmem:[#allocation22 + $0x60] sm:$0xff]
        %v7212 = vld [vmem:[#allocation22 + $0x68] sm:$0xff]
        %v7213 = vld [vmem:[#allocation22 + $0x70] sm:$0xff]
        %v7214 = vld [vmem:[#allocation22 + $0x78] sm:$0xff]
        %v7215 = vld [vmem:[#allocation22 + $0x80] sm:$0xff]
        %v7216 = vld [vmem:[#allocation22 + $0x88] sm:$0xff]
        %v7217 = vld [vmem:[#allocation22 + $0x90] sm:$0xff]
        %v7218 = vld [vmem:[#allocation22 + $0x98] sm:$0xff]
        %v7219 = vld [vmem:[#allocation22 + $0xa0] sm:$0xff]
        %v7220 = vld [vmem:[#allocation22 + $0xa8] sm:$0xff]
        %v7221 = vld [vmem:[#allocation22 + $0xb0] sm:$0xff]
        %v7222 = vld [vmem:[#allocation22 + $0xb8] sm:$0xff]
        %v7223 = vld [vmem:[#allocation22 + $0xc0] sm:$0xff]
        %v7224 = vld [vmem:[#allocation22 + $0xc8] sm:$0xff]
        %v7225 = vld [vmem:[#allocation22 + $0xd0] sm:$0xff]
        %v7226 = vld [vmem:[#allocation22 + $0xd8] sm:$0xff]
        %v7227 = vld [vmem:[#allocation22 + $0xe0] sm:$0xff]
        %v7228 = vld [vmem:[#allocation22 + $0xe8] sm:$0xff]
        %v7229 = vld [vmem:[#allocation22 + $0xf0] sm:$0xff]
        %v7230 = vld [vmem:[#allocation22 + $0xf8] sm:$0xff]
        %v7231 = vld [vmem:[#allocation22 + $0x100] sm:$0xff]
        %v7232 = vld [vmem:[#allocation22 + $0x108] sm:$0xff]
        %v7233 = vld [vmem:[#allocation22 + $0x110] sm:$0xff]
        %v7234 = vld [vmem:[#allocation22 + $0x118] sm:$0xff]
        %v7235 = vld [vmem:[#allocation22 + $0x120] sm:$0xff]
        %v7236 = vld [vmem:[#allocation22 + $0x128] sm:$0xff]
        %v7237 = vld [vmem:[#allocation22 + $0x130] sm:$0xff]
        %v7238 = vld [vmem:[#allocation22 + $0x138] sm:$0xff]
        %v7239 = vld [vmem:[#allocation22 + $0x140] sm:$0xff]
        %v7240 = vld [vmem:[#allocation22 + $0x148] sm:$0xff]
        %v7241 = vld [vmem:[#allocation22 + $0x150] sm:$0xff]
        %v7242 = vld [vmem:[#allocation22 + $0x158] sm:$0xff]
        %v7243 = vld [vmem:[#allocation22 + $0x160] sm:$0xff]
        %v7244 = vld [vmem:[#allocation22 + $0x168] sm:$0xff]
        %v7245 = vld [vmem:[#allocation22 + $0x170] sm:$0xff]
        %v7246 = vld [vmem:[#allocation22 + $0x178] sm:$0xff]
        %v7247 = vld [vmem:[#allocation22 + $0x180] sm:$0xff]
        %v7248 = vld [vmem:[#allocation22 + $0x188] sm:$0xff]
        %v7249 = vld [vmem:[#allocation22 + $0x190] sm:$0xff]
        %v7250 = vld [vmem:[#allocation22 + $0x198] sm:$0xff]
        %v7251 = vld [vmem:[#allocation22 + $0x1a0] sm:$0xff]
        %v7252 = vld [vmem:[#allocation22 + $0x1a8] sm:$0xff]
        %v7253 = vld [vmem:[#allocation22 + $0x1b0] sm:$0xff]
        %v7254 = vld [vmem:[#allocation22 + $0x1b8] sm:$0xff]
        %v7255 = vld [vmem:[#allocation22 + $0x1c0] sm:$0xff]
        %v7256 = vld [vmem:[#allocation22 + $0x1c8] sm:$0xff]
        %v7257 = vld [vmem:[#allocation22 + $0x1d0] sm:$0xff]
        %v7258 = vld [vmem:[#allocation22 + $0x1d8] sm:$0xff]
        %v7259 = vld [vmem:[#allocation22 + $0x1e0] sm:$0xff]
        %v7260 = vld [vmem:[#allocation22 + $0x1e8] sm:$0xff]
        %v7261 = vld [vmem:[#allocation22 + $0x1f0] sm:$0xff]
        %v7262 = vld [vmem:[#allocation22 + $0x1f8] sm:$0xff]
        %v7263 = vld [vmem:[#allocation22 + $0x200] sm:$0xff]
        %v7264 = vld [vmem:[#allocation22 + $0x208] sm:$0xff]
        %v7265 = vld [vmem:[#allocation22 + $0x210] sm:$0xff]
        %v7266 = vld [vmem:[#allocation22 + $0x218] sm:$0xff]
        %v7267 = vld [vmem:[#allocation22 + $0x220] sm:$0xff]
        %v7268 = vld [vmem:[#allocation22 + $0x228] sm:$0xff]
        %v7269 = vld [vmem:[#allocation22 + $0x230] sm:$0xff]
        %v7270 = vld [vmem:[#allocation22 + $0x238] sm:$0xff]
        %v7271 = vld [vmem:[#allocation22 + $0x240] sm:$0xff]
        %v7272 = vld [vmem:[#allocation22 + $0x248] sm:$0xff]
        %v7273 = vld [vmem:[#allocation22 + $0x250] sm:$0xff]
        %v7274 = vld [vmem:[#allocation22 + $0x258] sm:$0xff]
        %v7275 = vld [vmem:[#allocation22 + $0x260] sm:$0xff]
        %v7276 = vld [vmem:[#allocation22 + $0x268] sm:$0xff]
        %v7277 = vld [vmem:[#allocation22 + $0x270] sm:$0xff]
        %v7278 = vld [vmem:[#allocation22 + $0x278] sm:$0xff]
        %v7279 = vld [vmem:[#allocation22 + $0x280] sm:$0xff]
        %v7280 = vld [vmem:[#allocation22 + $0x288] sm:$0xff]
        %v7281 = vld [vmem:[#allocation22 + $0x290] sm:$0xff]
        %v7282 = vld [vmem:[#allocation22 + $0x298] sm:$0xff]
        %v7283 = vld [vmem:[#allocation22 + $0x2a0] sm:$0xff]
        %v7284 = vld [vmem:[#allocation22 + $0x2a8] sm:$0xff]
        %v7285 = vld [vmem:[#allocation22 + $0x2b0] sm:$0xff]
        %v7286 = vld [vmem:[#allocation22 + $0x2b8] sm:$0xff]
        %v7287 = vld [vmem:[#allocation22 + $0x2c0] sm:$0xff]
        %v7288 = vld [vmem:[#allocation22 + $0x2c8] sm:$0xff]
        %v7289 = vld [vmem:[#allocation22 + $0x2d0] sm:$0xff]
        %v7290 = vld [vmem:[#allocation22 + $0x2d8] sm:$0xff]
        %v7291 = vld [vmem:[#allocation22 + $0x2e0] sm:$0xff]
        %v7292 = vld [vmem:[#allocation22 + $0x2e8] sm:$0xff]
        %v7293 = vld [vmem:[#allocation22 + $0x2f0] sm:$0xff]
        %v7294 = vld [vmem:[#allocation22 + $0x2f8] sm:$0xff]
        %v7295 = vld [vmem:[#allocation22 + $0x300] sm:$0xff]
        %v7296 = vld [vmem:[#allocation22 + $0x308] sm:$0xff]
        %v7297 = vld [vmem:[#allocation22 + $0x310] sm:$0xff]
        %v7298 = vld [vmem:[#allocation22 + $0x318] sm:$0xff]
        %v7299 = vld [vmem:[#allocation22 + $0x320] sm:$0xff]
        %v7300 = vld [vmem:[#allocation22 + $0x328] sm:$0xff]
        %v7301 = vld [vmem:[#allocation22 + $0x330] sm:$0xff]
        %v7302 = vld [vmem:[#allocation22 + $0x338] sm:$0xff]
        %v7303 = vld [vmem:[#allocation22 + $0x340] sm:$0xff]
        %v7304 = vld [vmem:[#allocation22 + $0x348] sm:$0xff]
        %v7305 = vld [vmem:[#allocation22 + $0x350] sm:$0xff]
        %v7306 = vld [vmem:[#allocation22 + $0x358] sm:$0xff]
        %v7307 = vld [vmem:[#allocation22 + $0x360] sm:$0xff]
        %v7308 = vld [vmem:[#allocation22 + $0x368] sm:$0xff]
        %v7309 = vld [vmem:[#allocation22 + $0x370] sm:$0xff]
        %v7310 = vld [vmem:[#allocation22 + $0x378] sm:$0xff]
        %v7311 = vld [vmem:[#allocation22 + $0x380] sm:$0xff]
        %v7312 = vld [vmem:[#allocation22 + $0x388] sm:$0xff]
        %v7313 = vld [vmem:[#allocation22 + $0x390] sm:$0xff]
        %v7314 = vld [vmem:[#allocation22 + $0x398] sm:$0xff]
        %v7315 = vld [vmem:[#allocation22 + $0x3a0] sm:$0xff]
        %v7316 = vld [vmem:[#allocation22 + $0x3a8] sm:$0xff]
        %v7317 = vld [vmem:[#allocation22 + $0x3b0] sm:$0xff]
        %v7318 = vld [vmem:[#allocation22 + $0x3b8] sm:$0xff]
        %v7319 = vld [vmem:[#allocation22 + $0x3c0] sm:$0xff]
        %v7320 = vld [vmem:[#allocation22 + $0x3c8] sm:$0xff]
        %v7321 = vld [vmem:[#allocation22 + $0x3d0] sm:$0xff]
        %v7322 = vld [vmem:[#allocation22 + $0x3d8] sm:$0xff]
        %v7323 = vld [vmem:[#allocation22 + $0x3e0] sm:$0xff]
        %v7324 = vld [vmem:[#allocation22 + $0x3e8] sm:$0xff]
        %v7325 = vld [vmem:[#allocation22 + $0x3f0] sm:$0xff]
        %v7326 = vld [vmem:[#allocation22 + $0x3f8] sm:$0xff]
        %v7455 = vunpack.c.l.b16 %v7199
        %v7456 = vunpack.c.h.b16 %v7199
        %v7457 = vunpack.c.l.b16 %v7200
        %v7458 = vunpack.c.h.b16 %v7200
        %v7459 = vunpack.c.l.b16 %v7201
        %v7460 = vunpack.c.h.b16 %v7201
        %v7461 = vunpack.c.l.b16 %v7202
        %v7462 = vunpack.c.h.b16 %v7202
        %v7463 = vunpack.c.l.b16 %v7203
        %v7464 = vunpack.c.h.b16 %v7203
        %v7465 = vunpack.c.l.b16 %v7204
        %v7466 = vunpack.c.h.b16 %v7204
        %v7467 = vunpack.c.l.b16 %v7205
        %v7468 = vunpack.c.h.b16 %v7205
        %v7469 = vunpack.c.l.b16 %v7206
        %v7470 = vunpack.c.h.b16 %v7206
        %v7471 = vunpack.c.l.b16 %v7207
        %v7472 = vunpack.c.h.b16 %v7207
        %v7473 = vunpack.c.l.b16 %v7208
        %v7474 = vunpack.c.h.b16 %v7208
        %v7475 = vunpack.c.l.b16 %v7209
        %v7476 = vunpack.c.h.b16 %v7209
        %v7477 = vunpack.c.l.b16 %v7210
        %v7478 = vunpack.c.h.b16 %v7210
        %v7479 = vunpack.c.l.b16 %v7211
        %v7480 = vunpack.c.h.b16 %v7211
        %v7481 = vunpack.c.l.b16 %v7212
        %v7482 = vunpack.c.h.b16 %v7212
        %v7483 = vunpack.c.l.b16 %v7213
        %v7484 = vunpack.c.h.b16 %v7213
        %v7485 = vunpack.c.l.b16 %v7214
        %v7486 = vunpack.c.h.b16 %v7214
        %v7487 = vunpack.c.l.b16 %v7215
        %v7488 = vunpack.c.h.b16 %v7215
        %v7489 = vunpack.c.l.b16 %v7216
        %v7490 = vunpack.c.h.b16 %v7216
        %v7491 = vunpack.c.l.b16 %v7217
        %v7492 = vunpack.c.h.b16 %v7217
        %v7493 = vunpack.c.l.b16 %v7218
        %v7494 = vunpack.c.h.b16 %v7218
        %v7495 = vunpack.c.l.b16 %v7219
        %v7496 = vunpack.c.h.b16 %v7219
        %v7497 = vunpack.c.l.b16 %v7220
        %v7498 = vunpack.c.h.b16 %v7220
        %v7499 = vunpack.c.l.b16 %v7221
        %v7500 = vunpack.c.h.b16 %v7221
        %v7501 = vunpack.c.l.b16 %v7222
        %v7502 = vunpack.c.h.b16 %v7222
        %v7503 = vunpack.c.l.b16 %v7223
        %v7504 = vunpack.c.h.b16 %v7223
        %v7505 = vunpack.c.l.b16 %v7224
        %v7506 = vunpack.c.h.b16 %v7224
        %v7507 = vunpack.c.l.b16 %v7225
        %v7508 = vunpack.c.h.b16 %v7225
        %v7509 = vunpack.c.l.b16 %v7226
        %v7510 = vunpack.c.h.b16 %v7226
        %v7511 = vunpack.c.l.b16 %v7227
        %v7512 = vunpack.c.h.b16 %v7227
        %v7513 = vunpack.c.l.b16 %v7228
        %v7514 = vunpack.c.h.b16 %v7228
        %v7515 = vunpack.c.l.b16 %v7229
        %v7516 = vunpack.c.h.b16 %v7229
        %v7517 = vunpack.c.l.b16 %v7230
        %v7518 = vunpack.c.h.b16 %v7230
        %v7519 = vunpack.c.l.b16 %v7231
        %v7520 = vunpack.c.h.b16 %v7231
        %v7521 = vunpack.c.l.b16 %v7232
        %v7522 = vunpack.c.h.b16 %v7232
        %v7523 = vunpack.c.l.b16 %v7233
        %v7524 = vunpack.c.h.b16 %v7233
        %v7525 = vunpack.c.l.b16 %v7234
        %v7526 = vunpack.c.h.b16 %v7234
        %v7527 = vunpack.c.l.b16 %v7235
        %v7528 = vunpack.c.h.b16 %v7235
        %v7529 = vunpack.c.l.b16 %v7236
        %v7530 = vunpack.c.h.b16 %v7236
        %v7531 = vunpack.c.l.b16 %v7237
        %v7532 = vunpack.c.h.b16 %v7237
        %v7533 = vunpack.c.l.b16 %v7238
        %v7534 = vunpack.c.h.b16 %v7238
        %v7535 = vunpack.c.l.b16 %v7239
        %v7536 = vunpack.c.h.b16 %v7239
        %v7537 = vunpack.c.l.b16 %v7240
        %v7538 = vunpack.c.h.b16 %v7240
        %v7539 = vunpack.c.l.b16 %v7241
        %v7540 = vunpack.c.h.b16 %v7241
        %v7541 = vunpack.c.l.b16 %v7242
        %v7542 = vunpack.c.h.b16 %v7242
        %v7543 = vunpack.c.l.b16 %v7243
        %v7544 = vunpack.c.h.b16 %v7243
        %v7545 = vunpack.c.l.b16 %v7244
        %v7546 = vunpack.c.h.b16 %v7244
        %v7547 = vunpack.c.l.b16 %v7245
        %v7548 = vunpack.c.h.b16 %v7245
        %v7549 = vunpack.c.l.b16 %v7246
        %v7550 = vunpack.c.h.b16 %v7246
        %v7551 = vunpack.c.l.b16 %v7247
        %v7552 = vunpack.c.h.b16 %v7247
        %v7553 = vunpack.c.l.b16 %v7248
        %v7554 = vunpack.c.h.b16 %v7248
        %v7555 = vunpack.c.l.b16 %v7249
        %v7556 = vunpack.c.h.b16 %v7249
        %v7557 = vunpack.c.l.b16 %v7250
        %v7558 = vunpack.c.h.b16 %v7250
        %v7559 = vunpack.c.l.b16 %v7251
        %v7560 = vunpack.c.h.b16 %v7251
        %v7561 = vunpack.c.l.b16 %v7252
        %v7562 = vunpack.c.h.b16 %v7252
        %v7563 = vunpack.c.l.b16 %v7253
        %v7564 = vunpack.c.h.b16 %v7253
        %v7565 = vunpack.c.l.b16 %v7254
        %v7566 = vunpack.c.h.b16 %v7254
        %v7567 = vunpack.c.l.b16 %v7255
        %v7568 = vunpack.c.h.b16 %v7255
        %v7569 = vunpack.c.l.b16 %v7256
        %v7570 = vunpack.c.h.b16 %v7256
        %v7571 = vunpack.c.l.b16 %v7257
        %v7572 = vunpack.c.h.b16 %v7257
        %v7573 = vunpack.c.l.b16 %v7258
        %v7574 = vunpack.c.h.b16 %v7258
        %v7575 = vunpack.c.l.b16 %v7259
        %v7576 = vunpack.c.h.b16 %v7259
        %v7577 = vunpack.c.l.b16 %v7260
        %v7578 = vunpack.c.h.b16 %v7260
        %v7579 = vunpack.c.l.b16 %v7261
        %v7580 = vunpack.c.h.b16 %v7261
        %v7581 = vunpack.c.l.b16 %v7262
        %v7582 = vunpack.c.h.b16 %v7262
        %v7583 = vunpack.c.l.b16 %v7263
        %v7584 = vunpack.c.h.b16 %v7263
        %v7585 = vunpack.c.l.b16 %v7264
        %v7586 = vunpack.c.h.b16 %v7264
        %v7587 = vunpack.c.l.b16 %v7265
        %v7588 = vunpack.c.h.b16 %v7265
        %v7589 = vunpack.c.l.b16 %v7266
        %v7590 = vunpack.c.h.b16 %v7266
        %v7591 = vunpack.c.l.b16 %v7267
        %v7592 = vunpack.c.h.b16 %v7267
        %v7593 = vunpack.c.l.b16 %v7268
        %v7594 = vunpack.c.h.b16 %v7268
        %v7595 = vunpack.c.l.b16 %v7269
        %v7596 = vunpack.c.h.b16 %v7269
        %v7597 = vunpack.c.l.b16 %v7270
        %v7598 = vunpack.c.h.b16 %v7270
        %v7599 = vunpack.c.l.b16 %v7271
        %v7600 = vunpack.c.h.b16 %v7271
        %v7601 = vunpack.c.l.b16 %v7272
        %v7602 = vunpack.c.h.b16 %v7272
        %v7603 = vunpack.c.l.b16 %v7273
        %v7604 = vunpack.c.h.b16 %v7273
        %v7605 = vunpack.c.l.b16 %v7274
        %v7606 = vunpack.c.h.b16 %v7274
        %v7607 = vunpack.c.l.b16 %v7275
        %v7608 = vunpack.c.h.b16 %v7275
        %v7609 = vunpack.c.l.b16 %v7276
        %v7610 = vunpack.c.h.b16 %v7276
        %v7611 = vunpack.c.l.b16 %v7277
        %v7612 = vunpack.c.h.b16 %v7277
        %v7613 = vunpack.c.l.b16 %v7278
        %v7614 = vunpack.c.h.b16 %v7278
        %v7615 = vunpack.c.l.b16 %v7279
        %v7616 = vunpack.c.h.b16 %v7279
        %v7617 = vunpack.c.l.b16 %v7280
        %v7618 = vunpack.c.h.b16 %v7280
        %v7619 = vunpack.c.l.b16 %v7281
        %v7620 = vunpack.c.h.b16 %v7281
        %v7621 = vunpack.c.l.b16 %v7282
        %v7622 = vunpack.c.h.b16 %v7282
        %v7623 = vunpack.c.l.b16 %v7283
        %v7624 = vunpack.c.h.b16 %v7283
        %v7625 = vunpack.c.l.b16 %v7284
        %v7626 = vunpack.c.h.b16 %v7284
        %v7627 = vunpack.c.l.b16 %v7285
        %v7628 = vunpack.c.h.b16 %v7285
        %v7629 = vunpack.c.l.b16 %v7286
        %v7630 = vunpack.c.h.b16 %v7286
        %v7631 = vunpack.c.l.b16 %v7287
        %v7632 = vunpack.c.h.b16 %v7287
        %v7633 = vunpack.c.l.b16 %v7288
        %v7634 = vunpack.c.h.b16 %v7288
        %v7635 = vunpack.c.l.b16 %v7289
        %v7636 = vunpack.c.h.b16 %v7289
        %v7637 = vunpack.c.l.b16 %v7290
        %v7638 = vunpack.c.h.b16 %v7290
        %v7639 = vunpack.c.l.b16 %v7291
        %v7640 = vunpack.c.h.b16 %v7291
        %v7641 = vunpack.c.l.b16 %v7292
        %v7642 = vunpack.c.h.b16 %v7292
        %v7643 = vunpack.c.l.b16 %v7293
        %v7644 = vunpack.c.h.b16 %v7293
        %v7645 = vunpack.c.l.b16 %v7294
        %v7646 = vunpack.c.h.b16 %v7294
        %v7647 = vunpack.c.l.b16 %v7295
        %v7648 = vunpack.c.h.b16 %v7295
        %v7649 = vunpack.c.l.b16 %v7296
        %v7650 = vunpack.c.h.b16 %v7296
        %v7651 = vunpack.c.l.b16 %v7297
        %v7652 = vunpack.c.h.b16 %v7297
        %v7653 = vunpack.c.l.b16 %v7298
        %v7654 = vunpack.c.h.b16 %v7298
        %v7655 = vunpack.c.l.b16 %v7299
        %v7656 = vunpack.c.h.b16 %v7299
        %v7657 = vunpack.c.l.b16 %v7300
        %v7658 = vunpack.c.h.b16 %v7300
        %v7659 = vunpack.c.l.b16 %v7301
        %v7660 = vunpack.c.h.b16 %v7301
        %v7661 = vunpack.c.l.b16 %v7302
        %v7662 = vunpack.c.h.b16 %v7302
        %v7663 = vunpack.c.l.b16 %v7303
        %v7664 = vunpack.c.h.b16 %v7303
        %v7665 = vunpack.c.l.b16 %v7304
        %v7666 = vunpack.c.h.b16 %v7304
        %v7667 = vunpack.c.l.b16 %v7305
        %v7668 = vunpack.c.h.b16 %v7305
        %v7669 = vunpack.c.l.b16 %v7306
        %v7670 = vunpack.c.h.b16 %v7306
        %v7671 = vunpack.c.l.b16 %v7307
        %v7672 = vunpack.c.h.b16 %v7307
        %v7673 = vunpack.c.l.b16 %v7308
        %v7674 = vunpack.c.h.b16 %v7308
        %v7675 = vunpack.c.l.b16 %v7309
        %v7676 = vunpack.c.h.b16 %v7309
        %v7677 = vunpack.c.l.b16 %v7310
        %v7678 = vunpack.c.h.b16 %v7310
        %v7679 = vunpack.c.l.b16 %v7311
        %v7680 = vunpack.c.h.b16 %v7311
        %v7681 = vunpack.c.l.b16 %v7312
        %v7682 = vunpack.c.h.b16 %v7312
        %v7683 = vunpack.c.l.b16 %v7313
        %v7684 = vunpack.c.h.b16 %v7313
        %v7685 = vunpack.c.l.b16 %v7314
        %v7686 = vunpack.c.h.b16 %v7314
        %v7687 = vunpack.c.l.b16 %v7315
        %v7688 = vunpack.c.h.b16 %v7315
        %v7689 = vunpack.c.l.b16 %v7316
        %v7690 = vunpack.c.h.b16 %v7316
        %v7691 = vunpack.c.l.b16 %v7317
        %v7692 = vunpack.c.h.b16 %v7317
        %v7693 = vunpack.c.l.b16 %v7318
        %v7694 = vunpack.c.h.b16 %v7318
        %v7695 = vunpack.c.l.b16 %v7319
        %v7696 = vunpack.c.h.b16 %v7319
        %v7697 = vunpack.c.l.b16 %v7320
        %v7698 = vunpack.c.h.b16 %v7320
        %v7699 = vunpack.c.l.b16 %v7321
        %v7700 = vunpack.c.h.b16 %v7321
        %v7701 = vunpack.c.l.b16 %v7322
        %v7702 = vunpack.c.h.b16 %v7322
        %v7703 = vunpack.c.l.b16 %v7323
        %v7704 = vunpack.c.h.b16 %v7323
        %v7705 = vunpack.c.l.b16 %v7324
        %v7706 = vunpack.c.h.b16 %v7324
        %v7707 = vunpack.c.l.b16 %v7325
        %v7708 = vunpack.c.h.b16 %v7325
        %v7709 = vunpack.c.l.b16 %v7326
        %v7710 = vunpack.c.h.b16 %v7326
        %v7711 = vpack.c.b16 %v7457, %v7455
        %v7712 = vpack.c.b16 %v7458, %v7456
        %v7713 = vpack.c.b16 %v7461, %v7459
        %v7714 = vpack.c.b16 %v7462, %v7460
        %v7715 = vpack.c.b16 %v7465, %v7463
        %v7716 = vpack.c.b16 %v7466, %v7464
        %v7717 = vpack.c.b16 %v7469, %v7467
        %v7718 = vpack.c.b16 %v7470, %v7468
        %v7719 = vpack.c.b16 %v7473, %v7471
        %v7720 = vpack.c.b16 %v7474, %v7472
        %v7721 = vpack.c.b16 %v7477, %v7475
        %v7722 = vpack.c.b16 %v7478, %v7476
        %v7723 = vpack.c.b16 %v7481, %v7479
        %v7724 = vpack.c.b16 %v7482, %v7480
        %v7725 = vpack.c.b16 %v7485, %v7483
        %v7726 = vpack.c.b16 %v7486, %v7484
        %v7727 = vpack.c.b16 %v7489, %v7487
        %v7728 = vpack.c.b16 %v7490, %v7488
        %v7729 = vpack.c.b16 %v7493, %v7491
        %v7730 = vpack.c.b16 %v7494, %v7492
        %v7731 = vpack.c.b16 %v7497, %v7495
        %v7732 = vpack.c.b16 %v7498, %v7496
        %v7733 = vpack.c.b16 %v7501, %v7499
        %v7734 = vpack.c.b16 %v7502, %v7500
        %v7735 = vpack.c.b16 %v7505, %v7503
        %v7736 = vpack.c.b16 %v7506, %v7504
        %v7737 = vpack.c.b16 %v7509, %v7507
        %v7738 = vpack.c.b16 %v7510, %v7508
        %v7739 = vpack.c.b16 %v7513, %v7511
        %v7740 = vpack.c.b16 %v7514, %v7512
        %v7741 = vpack.c.b16 %v7517, %v7515
        %v7742 = vpack.c.b16 %v7518, %v7516
        %v7743 = vpack.c.b16 %v7521, %v7519
        %v7744 = vpack.c.b16 %v7522, %v7520
        %v7745 = vpack.c.b16 %v7525, %v7523
        %v7746 = vpack.c.b16 %v7526, %v7524
        %v7747 = vpack.c.b16 %v7529, %v7527
        %v7748 = vpack.c.b16 %v7530, %v7528
        %v7749 = vpack.c.b16 %v7533, %v7531
        %v7750 = vpack.c.b16 %v7534, %v7532
        %v7751 = vpack.c.b16 %v7537, %v7535
        %v7752 = vpack.c.b16 %v7538, %v7536
        %v7753 = vpack.c.b16 %v7541, %v7539
        %v7754 = vpack.c.b16 %v7542, %v7540
        %v7755 = vpack.c.b16 %v7545, %v7543
        %v7756 = vpack.c.b16 %v7546, %v7544
        %v7757 = vpack.c.b16 %v7549, %v7547
        %v7758 = vpack.c.b16 %v7550, %v7548
        %v7759 = vpack.c.b16 %v7553, %v7551
        %v7760 = vpack.c.b16 %v7554, %v7552
        %v7761 = vpack.c.b16 %v7557, %v7555
        %v7762 = vpack.c.b16 %v7558, %v7556
        %v7763 = vpack.c.b16 %v7561, %v7559
        %v7764 = vpack.c.b16 %v7562, %v7560
        %v7765 = vpack.c.b16 %v7565, %v7563
        %v7766 = vpack.c.b16 %v7566, %v7564
        %v7767 = vpack.c.b16 %v7569, %v7567
        %v7768 = vpack.c.b16 %v7570, %v7568
        %v7769 = vpack.c.b16 %v7573, %v7571
        %v7770 = vpack.c.b16 %v7574, %v7572
        %v7771 = vpack.c.b16 %v7577, %v7575
        %v7772 = vpack.c.b16 %v7578, %v7576
        %v7773 = vpack.c.b16 %v7581, %v7579
        %v7774 = vpack.c.b16 %v7582, %v7580
        %v7775 = vpack.c.b16 %v7585, %v7583
        %v7776 = vpack.c.b16 %v7586, %v7584
        %v7777 = vpack.c.b16 %v7589, %v7587
        %v7778 = vpack.c.b16 %v7590, %v7588
        %v7779 = vpack.c.b16 %v7593, %v7591
        %v7780 = vpack.c.b16 %v7594, %v7592
        %v7781 = vpack.c.b16 %v7597, %v7595
        %v7782 = vpack.c.b16 %v7598, %v7596
        %v7783 = vpack.c.b16 %v7601, %v7599
        %v7784 = vpack.c.b16 %v7602, %v7600
        %v7785 = vpack.c.b16 %v7605, %v7603
        %v7786 = vpack.c.b16 %v7606, %v7604
        %v7787 = vpack.c.b16 %v7609, %v7607
        %v7788 = vpack.c.b16 %v7610, %v7608
        %v7789 = vpack.c.b16 %v7613, %v7611
        %v7790 = vpack.c.b16 %v7614, %v7612
        %v7791 = vpack.c.b16 %v7617, %v7615
        %v7792 = vpack.c.b16 %v7618, %v7616
        %v7793 = vpack.c.b16 %v7621, %v7619
        %v7794 = vpack.c.b16 %v7622, %v7620
        %v7795 = vpack.c.b16 %v7625, %v7623
        %v7796 = vpack.c.b16 %v7626, %v7624
        %v7797 = vpack.c.b16 %v7629, %v7627
        %v7798 = vpack.c.b16 %v7630, %v7628
        %v7799 = vpack.c.b16 %v7633, %v7631
        %v7800 = vpack.c.b16 %v7634, %v7632
        %v7801 = vpack.c.b16 %v7637, %v7635
        %v7802 = vpack.c.b16 %v7638, %v7636
        %v7803 = vpack.c.b16 %v7641, %v7639
        %v7804 = vpack.c.b16 %v7642, %v7640
        %v7805 = vpack.c.b16 %v7645, %v7643
        %v7806 = vpack.c.b16 %v7646, %v7644
        %v7807 = vpack.c.b16 %v7649, %v7647
        %v7808 = vpack.c.b16 %v7650, %v7648
        %v7809 = vpack.c.b16 %v7653, %v7651
        %v7810 = vpack.c.b16 %v7654, %v7652
        %v7811 = vpack.c.b16 %v7657, %v7655
        %v7812 = vpack.c.b16 %v7658, %v7656
        %v7813 = vpack.c.b16 %v7661, %v7659
        %v7814 = vpack.c.b16 %v7662, %v7660
        %v7815 = vpack.c.b16 %v7665, %v7663
        %v7816 = vpack.c.b16 %v7666, %v7664
        %v7817 = vpack.c.b16 %v7669, %v7667
        %v7818 = vpack.c.b16 %v7670, %v7668
        %v7819 = vpack.c.b16 %v7673, %v7671
        %v7820 = vpack.c.b16 %v7674, %v7672
        %v7821 = vpack.c.b16 %v7677, %v7675
        %v7822 = vpack.c.b16 %v7678, %v7676
        %v7823 = vpack.c.b16 %v7681, %v7679
        %v7824 = vpack.c.b16 %v7682, %v7680
        %v7825 = vpack.c.b16 %v7685, %v7683
        %v7826 = vpack.c.b16 %v7686, %v7684
        %v7827 = vpack.c.b16 %v7689, %v7687
        %v7828 = vpack.c.b16 %v7690, %v7688
        %v7829 = vpack.c.b16 %v7693, %v7691
        %v7830 = vpack.c.b16 %v7694, %v7692
        %v7831 = vpack.c.b16 %v7697, %v7695
        %v7832 = vpack.c.b16 %v7698, %v7696
        %v7833 = vpack.c.b16 %v7701, %v7699
        %v7834 = vpack.c.b16 %v7702, %v7700
        %v7835 = vpack.c.b16 %v7705, %v7703
        %v7836 = vpack.c.b16 %v7706, %v7704
        %v7837 = vpack.c.b16 %v7709, %v7707
        %v7838 = vpack.c.b16 %v7710, %v7708
        %7967 = vmatpush.bf16.msra.mxu0 %v7725
        %7968 = vmatpush.bf16.msra.mxu0 %v7723
        %7969 = vmatpush.bf16.msra.mxu0 %v7721
        %7970 = vmatpush.bf16.msra.mxu0 %v7719
        %7971 = vmatpush.bf16.msra.mxu0 %v7717
        %7972 = vmatpush.bf16.msra.mxu0 %v7715
        %7973 = vmatpush.bf16.msra.mxu0 %v7713
        %7974 = vmatpush.bf16.msra.mxu0 %v7711
        %7975 = vmatmul.bf16.gmra.mxu0 %v7191
        %v7976 = vpop.f32.mrf.mxu0
        %v7977 = vadd.f32 0.0, %v7976
        %v7978 = vpop.f32.mrf.mxu0
        %v7979 = vadd.f32 0.0, %v7978
        %7980 = vdwg.mxu0
        %7981 = vmatpush.bf16.msra.mxu0 %v7741
        %7982 = vmatpush.bf16.msra.mxu0 %v7739
        %7983 = vmatpush.bf16.msra.mxu0 %v7737
        %7984 = vmatpush.bf16.msra.mxu0 %v7735
        %7985 = vmatpush.bf16.msra.mxu0 %v7733
        %7986 = vmatpush.bf16.msra.mxu0 %v7731
        %7987 = vmatpush.bf16.msra.mxu0 %v7729
        %7988 = vmatpush.bf16.msra.mxu0 %v7727
        %7989 = vmatmul.bf16.gmra.mxu0 %v7192
        %v7990 = vpop.f32.mrf.mxu0
        %v7991 = vadd.f32 %v7977, %v7990
        %v7992 = vpop.f32.mrf.mxu0
        %v7993 = vadd.f32 %v7979, %v7992
        %7994 = vdwg.mxu0
        %7995 = vmatpush.bf16.msra.mxu0 %v7757
        %7996 = vmatpush.bf16.msra.mxu0 %v7755
        %7997 = vmatpush.bf16.msra.mxu0 %v7753
        %7998 = vmatpush.bf16.msra.mxu0 %v7751
        %7999 = vmatpush.bf16.msra.mxu0 %v7749
        %8000 = vmatpush.bf16.msra.mxu0 %v7747
        %8001 = vmatpush.bf16.msra.mxu0 %v7745
        %8002 = vmatpush.bf16.msra.mxu0 %v7743
        %8003 = vmatmul.bf16.gmra.mxu0 %v7193
        %v8004 = vpop.f32.mrf.mxu0
        %v8005 = vadd.f32 %v7991, %v8004
        %v8006 = vpop.f32.mrf.mxu0
        %v8007 = vadd.f32 %v7993, %v8006
        %8008 = vdwg.mxu0
        %8009 = vmatpush.bf16.msra.mxu0 %v7773
        %8010 = vmatpush.bf16.msra.mxu0 %v7771
        %8011 = vmatpush.bf16.msra.mxu0 %v7769
        %8012 = vmatpush.bf16.msra.mxu0 %v7767
        %8013 = vmatpush.bf16.msra.mxu0 %v7765
        %8014 = vmatpush.bf16.msra.mxu0 %v7763
        %8015 = vmatpush.bf16.msra.mxu0 %v7761
        %8016 = vmatpush.bf16.msra.mxu0 %v7759
        %8017 = vmatmul.bf16.gmra.mxu0 %v7194
        %v8018 = vpop.f32.mrf.mxu0
        %v8019 = vadd.f32 %v8005, %v8018
        %v8020 = vpop.f32.mrf.mxu0
        %v8021 = vadd.f32 %v8007, %v8020
        %8022 = vdwg.mxu0
        %8023 = vmatpush.bf16.msra.mxu0 %v7789
        %8024 = vmatpush.bf16.msra.mxu0 %v7787
        %8025 = vmatpush.bf16.msra.mxu0 %v7785
        %8026 = vmatpush.bf16.msra.mxu0 %v7783
        %8027 = vmatpush.bf16.msra.mxu0 %v7781
        %8028 = vmatpush.bf16.msra.mxu0 %v7779
        %8029 = vmatpush.bf16.msra.mxu0 %v7777
        %8030 = vmatpush.bf16.msra.mxu0 %v7775
        %8031 = vmatmul.bf16.gmra.mxu0 %v7195
        %v8032 = vpop.f32.mrf.mxu0
        %v8033 = vadd.f32 %v8019, %v8032
        %v8034 = vpop.f32.mrf.mxu0
        %v8035 = vadd.f32 %v8021, %v8034
        %8036 = vdwg.mxu0
        %8037 = vmatpush.bf16.msra.mxu0 %v7805
        %8038 = vmatpush.bf16.msra.mxu0 %v7803
        %8039 = vmatpush.bf16.msra.mxu0 %v7801
        %8040 = vmatpush.bf16.msra.mxu0 %v7799
        %8041 = vmatpush.bf16.msra.mxu0 %v7797
        %8042 = vmatpush.bf16.msra.mxu0 %v7795
        %8043 = vmatpush.bf16.msra.mxu0 %v7793
        %8044 = vmatpush.bf16.msra.mxu0 %v7791
        %8045 = vmatmul.bf16.gmra.mxu0 %v7196
        %v8046 = vpop.f32.mrf.mxu0
        %v8047 = vadd.f32 %v8033, %v8046
        %v8048 = vpop.f32.mrf.mxu0
        %v8049 = vadd.f32 %v8035, %v8048
        %8050 = vdwg.mxu0
        %8051 = vmatpush.bf16.msra.mxu0 %v7821
        %8052 = vmatpush.bf16.msra.mxu0 %v7819
        %8053 = vmatpush.bf16.msra.mxu0 %v7817
        %8054 = vmatpush.bf16.msra.mxu0 %v7815
        %8055 = vmatpush.bf16.msra.mxu0 %v7813
        %8056 = vmatpush.bf16.msra.mxu0 %v7811
        %8057 = vmatpush.bf16.msra.mxu0 %v7809
        %8058 = vmatpush.bf16.msra.mxu0 %v7807
        %8059 = vmatmul.bf16.gmra.mxu0 %v7197
        %v8060 = vpop.f32.mrf.mxu0
        %v8061 = vadd.f32 %v8047, %v8060
        %v8062 = vpop.f32.mrf.mxu0
        %v8063 = vadd.f32 %v8049, %v8062
        %8064 = vdwg.mxu0
        %8065 = vmatpush.bf16.msra.mxu0 %v7837
        %8066 = vmatpush.bf16.msra.mxu0 %v7835
        %8067 = vmatpush.bf16.msra.mxu0 %v7833
        %8068 = vmatpush.bf16.msra.mxu0 %v7831
        %8069 = vmatpush.bf16.msra.mxu0 %v7829
        %8070 = vmatpush.bf16.msra.mxu0 %v7827
        %8071 = vmatpush.bf16.msra.mxu0 %v7825
        %8072 = vmatpush.bf16.msra.mxu0 %v7823
        %8073 = vmatmul.bf16.gmra.mxu0 %v7198
        %v8074 = vpop.f32.mrf.mxu0
        %v8075 = vadd.f32 %v8061, %v8074
        %v8076 = vpop.f32.mrf.mxu0
        %v8077 = vadd.f32 %v8063, %v8076
        %8078 = vdwg.mxu0
        %8079 = vmatpush.bf16.msra.mxu0 %v7726
        %8080 = vmatpush.bf16.msra.mxu0 %v7724
        %8081 = vmatpush.bf16.msra.mxu0 %v7722
        %8082 = vmatpush.bf16.msra.mxu0 %v7720
        %8083 = vmatpush.bf16.msra.mxu0 %v7718
        %8084 = vmatpush.bf16.msra.mxu0 %v7716
        %8085 = vmatpush.bf16.msra.mxu0 %v7714
        %8086 = vmatpush.bf16.msra.mxu0 %v7712
        %8087 = vmatmul.bf16.gmra.mxu0 %v7191
        %v8088 = vpop.f32.mrf.mxu0
        %v8089 = vadd.f32 0.0, %v8088
        %v8090 = vpop.f32.mrf.mxu0
        %v8091 = vadd.f32 0.0, %v8090
        %8092 = vdwg.mxu0
        %8093 = vmatpush.bf16.msra.mxu0 %v7742
        %8094 = vmatpush.bf16.msra.mxu0 %v7740
        %8095 = vmatpush.bf16.msra.mxu0 %v7738
        %8096 = vmatpush.bf16.msra.mxu0 %v7736
        %8097 = vmatpush.bf16.msra.mxu0 %v7734
        %8098 = vmatpush.bf16.msra.mxu0 %v7732
        %8099 = vmatpush.bf16.msra.mxu0 %v7730
        %8100 = vmatpush.bf16.msra.mxu0 %v7728
        %8101 = vmatmul.bf16.gmra.mxu0 %v7192
        %v8102 = vpop.f32.mrf.mxu0
        %v8103 = vadd.f32 %v8089, %v8102
        %v8104 = vpop.f32.mrf.mxu0
        %v8105 = vadd.f32 %v8091, %v8104
        %8106 = vdwg.mxu0
        %8107 = vmatpush.bf16.msra.mxu0 %v7758
        %8108 = vmatpush.bf16.msra.mxu0 %v7756
        %8109 = vmatpush.bf16.msra.mxu0 %v7754
        %8110 = vmatpush.bf16.msra.mxu0 %v7752
        %8111 = vmatpush.bf16.msra.mxu0 %v7750
        %8112 = vmatpush.bf16.msra.mxu0 %v7748
        %8113 = vmatpush.bf16.msra.mxu0 %v7746
        %8114 = vmatpush.bf16.msra.mxu0 %v7744
        %8115 = vmatmul.bf16.gmra.mxu0 %v7193
        %v8116 = vpop.f32.mrf.mxu0
        %v8117 = vadd.f32 %v8103, %v8116
        %v8118 = vpop.f32.mrf.mxu0
        %v8119 = vadd.f32 %v8105, %v8118
        %8120 = vdwg.mxu0
        %8121 = vmatpush.bf16.msra.mxu0 %v7774
        %8122 = vmatpush.bf16.msra.mxu0 %v7772
        %8123 = vmatpush.bf16.msra.mxu0 %v7770
        %8124 = vmatpush.bf16.msra.mxu0 %v7768
        %8125 = vmatpush.bf16.msra.mxu0 %v7766
        %8126 = vmatpush.bf16.msra.mxu0 %v7764
        %8127 = vmatpush.bf16.msra.mxu0 %v7762
        %8128 = vmatpush.bf16.msra.mxu0 %v7760
        %8129 = vmatmul.bf16.gmra.mxu0 %v7194
        %v8130 = vpop.f32.mrf.mxu0
        %v8131 = vadd.f32 %v8117, %v8130
        %v8132 = vpop.f32.mrf.mxu0
        %v8133 = vadd.f32 %v8119, %v8132
        %8134 = vdwg.mxu0
        %8135 = vmatpush.bf16.msra.mxu0 %v7790
        %8136 = vmatpush.bf16.msra.mxu0 %v7788
        %8137 = vmatpush.bf16.msra.mxu0 %v7786
        %8138 = vmatpush.bf16.msra.mxu0 %v7784
        %8139 = vmatpush.bf16.msra.mxu0 %v7782
        %8140 = vmatpush.bf16.msra.mxu0 %v7780
        %8141 = vmatpush.bf16.msra.mxu0 %v7778
        %8142 = vmatpush.bf16.msra.mxu0 %v7776
        %8143 = vmatmul.bf16.gmra.mxu0 %v7195
        %v8144 = vpop.f32.mrf.mxu0
        %v8145 = vadd.f32 %v8131, %v8144
        %v8146 = vpop.f32.mrf.mxu0
        %v8147 = vadd.f32 %v8133, %v8146
        %8148 = vdwg.mxu0
        %8149 = vmatpush.bf16.msra.mxu0 %v7806
        %8150 = vmatpush.bf16.msra.mxu0 %v7804
        %8151 = vmatpush.bf16.msra.mxu0 %v7802
        %8152 = vmatpush.bf16.msra.mxu0 %v7800
        %8153 = vmatpush.bf16.msra.mxu0 %v7798
        %8154 = vmatpush.bf16.msra.mxu0 %v7796
        %8155 = vmatpush.bf16.msra.mxu0 %v7794
        %8156 = vmatpush.bf16.msra.mxu0 %v7792
        %8157 = vmatmul.bf16.gmra.mxu0 %v7196
        %v8158 = vpop.f32.mrf.mxu0
        %v8159 = vadd.f32 %v8145, %v8158
        %v8160 = vpop.f32.mrf.mxu0
        %v8161 = vadd.f32 %v8147, %v8160
        %8162 = vdwg.mxu0
        %8163 = vmatpush.bf16.msra.mxu0 %v7822
        %8164 = vmatpush.bf16.msra.mxu0 %v7820
        %8165 = vmatpush.bf16.msra.mxu0 %v7818
        %8166 = vmatpush.bf16.msra.mxu0 %v7816
        %8167 = vmatpush.bf16.msra.mxu0 %v7814
        %8168 = vmatpush.bf16.msra.mxu0 %v7812
        %8169 = vmatpush.bf16.msra.mxu0 %v7810
        %8170 = vmatpush.bf16.msra.mxu0 %v7808
        %8171 = vmatmul.bf16.gmra.mxu0 %v7197
        %v8172 = vpop.f32.mrf.mxu0
        %v8173 = vadd.f32 %v8159, %v8172
        %v8174 = vpop.f32.mrf.mxu0
        %v8175 = vadd.f32 %v8161, %v8174
        %8176 = vdwg.mxu0
        %8177 = vmatpush.bf16.msra.mxu0 %v7838
        %8178 = vmatpush.bf16.msra.mxu0 %v7836
        %8179 = vmatpush.bf16.msra.mxu0 %v7834
        %8180 = vmatpush.bf16.msra.mxu0 %v7832
        %8181 = vmatpush.bf16.msra.mxu0 %v7830
        %8182 = vmatpush.bf16.msra.mxu0 %v7828
        %8183 = vmatpush.bf16.msra.mxu0 %v7826
        %8184 = vmatpush.bf16.msra.mxu0 %v7824
        %8185 = vmatmul.bf16.gmra.mxu0 %v7198
        %v8186 = vpop.f32.mrf.mxu0
        %v8187 = vadd.f32 %v8173, %v8186
        %v8188 = vpop.f32.mrf.mxu0
        %v8189 = vadd.f32 %v8175, %v8188
        %8190 = vdwg.mxu0
        %8191 = vst.msk [vmem:[#allocation17] sm:$0xf] %vm4591, 0
        %8192 = vst.msk [vmem:[#allocation17 + $0xc] sm:$0xf] %vm4591, 0
        %8193 = vst.msk [vmem:[#allocation17 + $0x8] sm:$0xf] %vm4593, 0
        %8194 = vst.msk [vmem:[#allocation17 + $0x14] sm:$0xf] %vm4593, 0
        %v8195 = vpack.c.bf16 %v8187, %v8075
        %v8196 = vpack.c.bf16 %v8189, %v8077
        %8199 = vrot.lane.b32.xlu0 %v8195, 3
        %v8200 = vpop.permute.xlu0 %8199
        %8201 = vrot.lane.b32.xlu0 %v8196, 3
        %v8202 = vpop.permute.xlu0 %8201
        %v8203 = vrot.slane %v8200, 4
        %v8204 = vrot.slane %v8202, 4
        %v8205 = vsel %vm4600, %v8203, %v8200
        %v8206 = vsel %vm4600, %v8204, %v8202
        %8211 = vst.msk [vmem:[#allocation17] sm:$0xff] %vm4605, %v8205
        %8212 = vst.msk [vmem:[#allocation17 + $0x8] sm:$0xf] %vm4591, %v8203
        %8213 = vst.msk [vmem:[#allocation17 + $0xc] sm:$0xff] %vm4605, %v8206
        %8214 = vst.msk [vmem:[#allocation17 + $0x14] sm:$0xf] %vm4591, %v8204
        %v8215 = vld [vmem:[#allocation17] sm:$0xff]
        %v8216 = vld [vmem:[#allocation17 + $0x8] sm:$0xf]
        %v8217 = vld [vmem:[#allocation17 + $0xc] sm:$0xff]
        %v8218 = vld [vmem:[#allocation17 + $0x14] sm:$0xf]
        %8219 = vst [vmem:[#allocation18] sm:$0xff] %v8215
        %8220 = vst [vmem:[#allocation18 + $0x8] sm:$0xff] %v8217
        %8225 = vrot.lane.b32.xlu0 %v8215, 127
        %v8226 = vpop.permute.xlu0 %8225
        %8227 = vrot.lane.b32.xlu0 %v8216, 127
        %v8228 = vpop.permute.xlu0 %8227
        %8229 = vrot.lane.b32.xlu0 %v8217, 127
        %v8230 = vpop.permute.xlu0 %8229
        %8231 = vrot.lane.b32.xlu0 %v8218, 127
        %v8232 = vpop.permute.xlu0 %8231
        %v8233 = vrot.slane %v8226, 4
        %v8234 = vrot.slane %v8228, 4
        %v8235 = vrot.slane %v8230, 4
        %v8236 = vrot.slane %v8232, 4
        %v8237 = vsel %vm2442, %v8233, %v8234
        %v8238 = vsel %vm2444, %v8226, %v8237
        %v8239 = vsel %vm2442, %v8235, %v8236
        %v8240 = vsel %vm2444, %v8230, %v8239
        %8243 = vst [vmem:[#allocation18 + $0x10] sm:$0xff] %v8238
        %8244 = vst [vmem:[#allocation18 + $0x18] sm:$0xff] %v8240
        %8245 = vrot.lane.b32.xlu0 %v8215, 126
        %v8246 = vpop.permute.xlu0 %8245
        %8247 = vrot.lane.b32.xlu0 %v8216, 126
        %v8248 = vpop.permute.xlu0 %8247
        %8249 = vrot.lane.b32.xlu0 %v8217, 126
        %v8250 = vpop.permute.xlu0 %8249
        %8251 = vrot.lane.b32.xlu0 %v8218, 126
        %v8252 = vpop.permute.xlu0 %8251
        %v8253 = vrot.slane %v8246, 4
        %v8254 = vrot.slane %v8248, 4
        %v8255 = vrot.slane %v8250, 4
        %v8256 = vrot.slane %v8252, 4
        %v8257 = vsel %vm2442, %v8253, %v8254
        %v8258 = vsel %vm2455, %v8246, %v8257
        %v8259 = vsel %vm2442, %v8255, %v8256
        %v8260 = vsel %vm2455, %v8250, %v8259
        %8263 = vst [vmem:[#allocation18 + $0x20] sm:$0xff] %v8258
        %8264 = vst [vmem:[#allocation18 + $0x28] sm:$0xff] %v8260
        %8265 = vrot.lane.b32.xlu0 %v8215, 125
        %v8266 = vpop.permute.xlu0 %8265
        %8267 = vrot.lane.b32.xlu0 %v8216, 125
        %v8268 = vpop.permute.xlu0 %8267
        %8269 = vrot.lane.b32.xlu0 %v8217, 125
        %v8270 = vpop.permute.xlu0 %8269
        %8271 = vrot.lane.b32.xlu0 %v8218, 125
        %v8272 = vpop.permute.xlu0 %8271
        %v8273 = vrot.slane %v8266, 4
        %v8274 = vrot.slane %v8268, 4
        %v8275 = vrot.slane %v8270, 4
        %v8276 = vrot.slane %v8272, 4
        %v8277 = vsel %vm2442, %v8273, %v8274
        %v8278 = vsel %vm2466, %v8266, %v8277
        %v8279 = vsel %vm2442, %v8275, %v8276
        %v8280 = vsel %vm2466, %v8270, %v8279
        %8283 = vst [vmem:[#allocation18 + $0x30] sm:$0xff] %v8278
        %8284 = vst [vmem:[#allocation18 + $0x38] sm:$0xff] %v8280
        %8285 = vrot.lane.b32.xlu0 %v8215, 124
        %v8286 = vpop.permute.xlu0 %8285
        %8287 = vrot.lane.b32.xlu0 %v8216, 124
        %v8288 = vpop.permute.xlu0 %8287
        %8289 = vrot.lane.b32.xlu0 %v8217, 124
        %v8290 = vpop.permute.xlu0 %8289
        %8291 = vrot.lane.b32.xlu0 %v8218, 124
        %v8292 = vpop.permute.xlu0 %8291
        %v8293 = vrot.slane %v8286, 4
        %v8294 = vrot.slane %v8288, 4
        %v8295 = vrot.slane %v8290, 4
        %v8296 = vrot.slane %v8292, 4
        %v8297 = vsel %vm2442, %v8293, %v8294
        %v8298 = vsel %vm2477, %v8286, %v8297
        %v8299 = vsel %vm2442, %v8295, %v8296
        %v8300 = vsel %vm2477, %v8290, %v8299
        %8303 = vst [vmem:[#allocation18 + $0x40] sm:$0xff] %v8298
        %8304 = vst [vmem:[#allocation18 + $0x48] sm:$0xff] %v8300
        %8305 = vrot.lane.b32.xlu0 %v8215, 123
        %v8306 = vpop.permute.xlu0 %8305
        %8307 = vrot.lane.b32.xlu0 %v8216, 123
        %v8308 = vpop.permute.xlu0 %8307
        %8309 = vrot.lane.b32.xlu0 %v8217, 123
        %v8310 = vpop.permute.xlu0 %8309
        %8311 = vrot.lane.b32.xlu0 %v8218, 123
        %v8312 = vpop.permute.xlu0 %8311
        %v8313 = vrot.slane %v8306, 4
        %v8314 = vrot.slane %v8308, 4
        %v8315 = vrot.slane %v8310, 4
        %v8316 = vrot.slane %v8312, 4
        %v8317 = vsel %vm2442, %v8313, %v8314
        %v8318 = vsel %vm2488, %v8306, %v8317
        %v8319 = vsel %vm2442, %v8315, %v8316
        %v8320 = vsel %vm2488, %v8310, %v8319
        %8323 = vst [vmem:[#allocation18 + $0x50] sm:$0xff] %v8318
        %8324 = vst [vmem:[#allocation18 + $0x58] sm:$0xff] %v8320
        %8325 = vrot.lane.b32.xlu0 %v8215, 122
        %v8326 = vpop.permute.xlu0 %8325
        %8327 = vrot.lane.b32.xlu0 %v8216, 122
        %v8328 = vpop.permute.xlu0 %8327
        %8329 = vrot.lane.b32.xlu0 %v8217, 122
        %v8330 = vpop.permute.xlu0 %8329
        %8331 = vrot.lane.b32.xlu0 %v8218, 122
        %v8332 = vpop.permute.xlu0 %8331
        %v8333 = vrot.slane %v8326, 4
        %v8334 = vrot.slane %v8328, 4
        %v8335 = vrot.slane %v8330, 4
        %v8336 = vrot.slane %v8332, 4
        %v8337 = vsel %vm2442, %v8333, %v8334
        %v8338 = vsel %vm2499, %v8326, %v8337
        %v8339 = vsel %vm2442, %v8335, %v8336
        %v8340 = vsel %vm2499, %v8330, %v8339
        %8343 = vst [vmem:[#allocation18 + $0x60] sm:$0xff] %v8338
        %8344 = vst [vmem:[#allocation18 + $0x68] sm:$0xff] %v8340
        %v8345 = vld [vmem:[%s39] sm:$0xf]
        %v8346 = vld [vmem:[%s39 + $0x4] sm:$0xf]
        %v8347 = vld [vmem:[#allocation18] sm:$0xff]
        %v8348 = vld [vmem:[#allocation18 + $0x8] sm:$0xff]
        %v8349 = vld [vmem:[#allocation18 + $0x10] sm:$0xff]
        %v8350 = vld [vmem:[#allocation18 + $0x18] sm:$0xff]
        %v8351 = vld [vmem:[#allocation18 + $0x20] sm:$0xff]
        %v8352 = vld [vmem:[#allocation18 + $0x28] sm:$0xff]
        %v8353 = vld [vmem:[#allocation18 + $0x30] sm:$0xff]
        %v8354 = vld [vmem:[#allocation18 + $0x38] sm:$0xff]
        %v8355 = vld [vmem:[#allocation18 + $0x40] sm:$0xff]
        %v8356 = vld [vmem:[#allocation18 + $0x48] sm:$0xff]
        %v8357 = vld [vmem:[#allocation18 + $0x50] sm:$0xff]
        %v8358 = vld [vmem:[#allocation18 + $0x58] sm:$0xff]
        %v8359 = vld [vmem:[#allocation18 + $0x60] sm:$0xff]
        %v8360 = vld [vmem:[#allocation18 + $0x68] sm:$0xff]
        %v8361 = vld [vmem:[%s41] sm:$0xff]
        %v8362 = vld [vmem:[%s41 + $0x8] sm:$0xff]
        %8364 = vset.pattern.permute.xlu0 0
        %8365 = vperm.xlu0 %8364, %v8361
        %v8366 = vpop.permute.xlu0 %8365
        %8369 = vset.pattern.permute.xlu0 0
        %8370 = vperm.xlu0 %8369, %v8362
        %v8371 = vpop.permute.xlu0 %8370
        %v8375 = vunpack.c.l.b16 %v8345
        %v8376 = vunpack.c.l.b16 %v8346
        %v8377 = vpack.c.b16 %v8376, %v8375
        %v8392 = vunpack.c.l.b16 %v8347
        %v8393 = vunpack.c.h.b16 %v8347
        %v8394 = vunpack.c.l.b16 %v8348
        %v8395 = vunpack.c.h.b16 %v8348
        %v8396 = vunpack.c.l.b16 %v8349
        %v8397 = vunpack.c.h.b16 %v8349
        %v8398 = vunpack.c.l.b16 %v8350
        %v8399 = vunpack.c.h.b16 %v8350
        %v8400 = vunpack.c.l.b16 %v8351
        %v8401 = vunpack.c.h.b16 %v8351
        %v8402 = vunpack.c.l.b16 %v8352
        %v8403 = vunpack.c.h.b16 %v8352
        %v8404 = vunpack.c.l.b16 %v8353
        %v8405 = vunpack.c.h.b16 %v8353
        %v8406 = vunpack.c.l.b16 %v8354
        %v8407 = vunpack.c.h.b16 %v8354
        %v8408 = vunpack.c.l.b16 %v8355
        %v8409 = vunpack.c.h.b16 %v8355
        %v8410 = vunpack.c.l.b16 %v8356
        %v8411 = vunpack.c.h.b16 %v8356
        %v8412 = vunpack.c.l.b16 %v8357
        %v8413 = vunpack.c.h.b16 %v8357
        %v8414 = vunpack.c.l.b16 %v8358
        %v8415 = vunpack.c.h.b16 %v8358
        %v8416 = vunpack.c.l.b16 %v8359
        %v8417 = vunpack.c.h.b16 %v8359
        %v8418 = vunpack.c.l.b16 %v8360
        %v8419 = vunpack.c.h.b16 %v8360
        %v8420 = vpack.c.b16 %v8394, %v8392
        %v8421 = vpack.c.b16 %v8395, %v8393
        %v8422 = vpack.c.b16 %v8398, %v8396
        %v8423 = vpack.c.b16 %v8399, %v8397
        %v8424 = vpack.c.b16 %v8402, %v8400
        %v8425 = vpack.c.b16 %v8403, %v8401
        %v8426 = vpack.c.b16 %v8406, %v8404
        %v8427 = vpack.c.b16 %v8407, %v8405
        %v8428 = vpack.c.b16 %v8410, %v8408
        %v8429 = vpack.c.b16 %v8411, %v8409
        %v8430 = vpack.c.b16 %v8414, %v8412
        %v8431 = vpack.c.b16 %v8415, %v8413
        %v8432 = vpack.c.b16 %v8418, %v8416
        %v8433 = vpack.c.b16 %v8419, %v8417
        %v8449 = vsel %vm3211, %v8377, 0
        %8451 = vmatpush.bf16.msra.mxu0 0
        %8452 = vmatpush.bf16.msra.mxu0 %v8432
        %8453 = vmatpush.bf16.msra.mxu0 %v8430
        %8454 = vmatpush.bf16.msra.mxu0 %v8428
        %8455 = vmatpush.bf16.msra.mxu0 %v8426
        %8456 = vmatpush.bf16.msra.mxu0 %v8424
        %8457 = vmatpush.bf16.msra.mxu0 %v8422
        %8458 = vmatpush.bf16.msra.mxu0 %v8420
        %8459 = vmatmul.bf16.gmra.mxu0 %v8449
        %v8460 = vpop.f32.mrf.mxu0
        %v8461 = vadd.f32 %v8366, %v8460
        %v8462 = vpop.f32.mrf.mxu0
        %v8463 = vadd.f32 %v8371, %v8462
        %8464 = vdwg.mxu0
        %8465 = vmatpush.bf16.msra.mxu0 0
        %8466 = vmatpush.bf16.msra.mxu0 %v8433
        %8467 = vmatpush.bf16.msra.mxu0 %v8431
        %8468 = vmatpush.bf16.msra.mxu0 %v8429
        %8469 = vmatpush.bf16.msra.mxu0 %v8427
        %8470 = vmatpush.bf16.msra.mxu0 %v8425
        %8471 = vmatpush.bf16.msra.mxu0 %v8423
        %8472 = vmatpush.bf16.msra.mxu0 %v8421
        %8473 = vmatmul.bf16.gmra.mxu0 %v8449
        %v8474 = vpop.f32.mrf.mxu0
        %v8475 = vadd.f32 %v8366, %v8474
        %v8476 = vpop.f32.mrf.mxu0
        %v8477 = vadd.f32 %v8371, %v8476
        %8478 = vdwg.mxu0
        %vm8479 = vcmp.ge.f32.partialorder %v8461, 0.0
        %vm8480 = vcmp.ge.f32.partialorder %v8475, 0.0
        %vm8481 = vcmp.ge.f32.partialorder %v8463, 0.0
        %vm8482 = vcmp.ge.f32.partialorder %v8477, 0.0
        %v8483 = vmul.f32 %v8461, 0.2
        %v8484 = vmul.f32 %v8475, 0.2
        %v8485 = vmul.f32 %v8463, 0.2
        %v8486 = vmul.f32 %v8477, 0.2
        %v8487 = vsel %vm8479, %v8461, %v8483
        %v8488 = vsel %vm8480, %v8475, %v8484
        %v8489 = vsel %vm8481, %v8463, %v8485
        %v8490 = vsel %vm8482, %v8477, %v8486
        %v8491 = vpack.c.bf16 %v8489, %v8487
        %v8492 = vpack.c.bf16 %v8490, %v8488
        %v8493 = vld [vmem:[%s53] sm:$0xf]
        %v8494 = vld [vmem:[%s53 + $0x4] sm:$0xf]
        %v8495 = vld [vmem:[%s53 + $0x8] sm:$0xf]
        %v8496 = vld [vmem:[%s53 + $0xc] sm:$0xf]
        %v8497 = vld [vmem:[%s53 + $0x10] sm:$0xf]
        %v8498 = vld [vmem:[%s53 + $0x14] sm:$0xf]
        %v8499 = vld [vmem:[%s53 + $0x18] sm:$0xf]
        %v8500 = vld [vmem:[%s53 + $0x1c] sm:$0xf]
        %v8501 = vld [vmem:[%s53 + $0x20] sm:$0xf]
        %v8502 = vld [vmem:[%s53 + $0x24] sm:$0xf]
        %v8503 = vld [vmem:[%s53 + $0x28] sm:$0xf]
        %v8504 = vld [vmem:[%s53 + $0x2c] sm:$0xf]
        %v8505 = vld [vmem:[%s53 + $0x30] sm:$0xf]
        %v8506 = vld [vmem:[%s53 + $0x34] sm:$0xf]
        %v8507 = vld [vmem:[%s53 + $0x38] sm:$0xf]
        %v8508 = vld [vmem:[%s53 + $0x3c] sm:$0xf]
        %v8509 = vld [vmem:[%s53 + $0x40] sm:$0xf]
        %v8510 = vld [vmem:[%s53 + $0x44] sm:$0xf]
        %v8511 = vld [vmem:[%s53 + $0x48] sm:$0xf]
        %v8512 = vld [vmem:[%s53 + $0x4c] sm:$0xf]
        %v8513 = vld [vmem:[%s53 + $0x50] sm:$0xf]
        %v8514 = vld [vmem:[%s53 + $0x54] sm:$0xf]
        %v8515 = vld [vmem:[%s53 + $0x58] sm:$0xf]
        %v8516 = vld [vmem:[%s53 + $0x5c] sm:$0xf]
        %v8517 = vld [vmem:[%s53 + $0x60] sm:$0xf]
        %v8518 = vld [vmem:[%s53 + $0x64] sm:$0xf]
        %v8519 = vld [vmem:[%s53 + $0x68] sm:$0xf]
        %v8520 = vld [vmem:[%s53 + $0x6c] sm:$0xf]
        %v8521 = vld [vmem:[%s53 + $0x70] sm:$0xf]
        %v8522 = vld [vmem:[%s53 + $0x74] sm:$0xf]
        %v8523 = vld [vmem:[%s53 + $0x78] sm:$0xf]
        %v8524 = vld [vmem:[%s53 + $0x7c] sm:$0xf]
        %v8557 = vunpack.c.l.b16 %v8493
        %v8558 = vunpack.c.l.b16 %v8494
        %v8559 = vunpack.c.l.b16 %v8495
        %v8560 = vunpack.c.l.b16 %v8496
        %v8561 = vunpack.c.l.b16 %v8497
        %v8562 = vunpack.c.l.b16 %v8498
        %v8563 = vunpack.c.l.b16 %v8499
        %v8564 = vunpack.c.l.b16 %v8500
        %v8565 = vunpack.c.l.b16 %v8501
        %v8566 = vunpack.c.l.b16 %v8502
        %v8567 = vunpack.c.l.b16 %v8503
        %v8568 = vunpack.c.l.b16 %v8504
        %v8569 = vunpack.c.l.b16 %v8505
        %v8570 = vunpack.c.l.b16 %v8506
        %v8571 = vunpack.c.l.b16 %v8507
        %v8572 = vunpack.c.l.b16 %v8508
        %v8573 = vunpack.c.l.b16 %v8509
        %v8574 = vunpack.c.l.b16 %v8510
        %v8575 = vunpack.c.l.b16 %v8511
        %v8576 = vunpack.c.l.b16 %v8512
        %v8577 = vunpack.c.l.b16 %v8513
        %v8578 = vunpack.c.l.b16 %v8514
        %v8579 = vunpack.c.l.b16 %v8515
        %v8580 = vunpack.c.l.b16 %v8516
        %v8581 = vunpack.c.l.b16 %v8517
        %v8582 = vunpack.c.l.b16 %v8518
        %v8583 = vunpack.c.l.b16 %v8519
        %v8584 = vunpack.c.l.b16 %v8520
        %v8585 = vunpack.c.l.b16 %v8521
        %v8586 = vunpack.c.l.b16 %v8522
        %v8587 = vunpack.c.l.b16 %v8523
        %v8588 = vunpack.c.l.b16 %v8524
        %v8589 = vpack.c.b16 %v8558, %v8557
        %v8590 = vpack.c.b16 %v8560, %v8559
        %v8591 = vpack.c.b16 %v8562, %v8561
        %v8592 = vpack.c.b16 %v8564, %v8563
        %v8593 = vpack.c.b16 %v8566, %v8565
        %v8594 = vpack.c.b16 %v8568, %v8567
        %v8595 = vpack.c.b16 %v8570, %v8569
        %v8596 = vpack.c.b16 %v8572, %v8571
        %v8597 = vpack.c.b16 %v8574, %v8573
        %v8598 = vpack.c.b16 %v8576, %v8575
        %v8599 = vpack.c.b16 %v8578, %v8577
        %v8600 = vpack.c.b16 %v8580, %v8579
        %v8601 = vpack.c.b16 %v8582, %v8581
        %v8602 = vpack.c.b16 %v8584, %v8583
        %v8603 = vpack.c.b16 %v8586, %v8585
        %v8604 = vpack.c.b16 %v8588, %v8587
        %8621 = vmatpush.bf16.msra.mxu0 %v8596
        %8622 = vmatpush.bf16.msra.mxu0 %v8595
        %8623 = vmatpush.bf16.msra.mxu0 %v8594
        %8624 = vmatpush.bf16.msra.mxu0 %v8593
        %8625 = vmatpush.bf16.msra.mxu0 %v8592
        %8626 = vmatpush.bf16.msra.mxu0 %v8591
        %8627 = vmatpush.bf16.msra.mxu0 %v8590
        %8628 = vmatpush.bf16.msra.mxu0 %v8589
        %8629 = vmatmul.bf16.gmra.mxu0 %v8491
        %v8630 = vpop.f32.mrf.mxu0
        %v8631 = vadd.f32 0.0, %v8630
        %v8632 = vpop.f32.mrf.mxu0
        %v8633 = vadd.f32 0.0, %v8632
        %8634 = vdwg.mxu0
        %8635 = vmatpush.bf16.msra.mxu0 %v8604
        %8636 = vmatpush.bf16.msra.mxu0 %v8603
        %8637 = vmatpush.bf16.msra.mxu0 %v8602
        %8638 = vmatpush.bf16.msra.mxu0 %v8601
        %8639 = vmatpush.bf16.msra.mxu0 %v8600
        %8640 = vmatpush.bf16.msra.mxu0 %v8599
        %8641 = vmatpush.bf16.msra.mxu0 %v8598
        %8642 = vmatpush.bf16.msra.mxu0 %v8597
        %8643 = vmatmul.bf16.gmra.mxu0 %v8492
        %v8644 = vpop.f32.mrf.mxu0
        %v8645 = vadd.f32 %v8631, %v8644
        %v8646 = vpop.f32.mrf.mxu0
        %v8647 = vadd.f32 %v8633, %v8646
        %8648 = vdwg.mxu0
        %8649 = vst.msk [vmem:[#allocation19] sm:$0xf] %vm4591, 0
        %8650 = vst.msk [vmem:[#allocation19 + $0x4] sm:$0xf] %vm4591, 0
        %8651 = vst.msk [vmem:[#allocation19] sm:$0xf] %vm4944, 0
        %8652 = vst.msk [vmem:[#allocation19 + $0x4] sm:$0xf] %vm4944, 0
        %v8653 = vpack.c.bf16 %v8645, %v8645
        %v8654 = vpack.c.bf16 %v8647, %v8647
        %8657 = vrot.lane.b32.xlu0 %v8653, 3
        %v8658 = vpop.permute.xlu0 %8657
        %8659 = vrot.lane.b32.xlu0 %v8654, 3
        %v8660 = vpop.permute.xlu0 %8659
        %8663 = vst.msk [vmem:[#allocation19] sm:$0xf] %vm4957, %v8658
        %8664 = vst.msk [vmem:[#allocation19 + $0x4] sm:$0xf] %vm4957, %v8660
        %v8665 = vld [vmem:[#allocation19] sm:$0xf]
        %v8666 = vld [vmem:[#allocation19 + $0x4] sm:$0xf]
        %8667 = vst.msk [vmem:[#allocation20] sm:$0xf] %vm2928, %v8665
        %8668 = vst.msk [vmem:[#allocation20 + $0x4] sm:$0xf] %vm2928, %v8666
        %8671 = vrot.lane.b32.xlu0 %v8665, 127
        %v8672 = vpop.permute.xlu0 %8671
        %8673 = vrot.lane.b32.xlu0 %v8666, 127
        %v8674 = vpop.permute.xlu0 %8673
        %8677 = vst.msk [vmem:[#allocation20 + $0x8] sm:$0xf] %vm2928, %v8672
        %8678 = vst.msk [vmem:[#allocation20 + $0xc] sm:$0xf] %vm2928, %v8674
        %8679 = vrot.lane.b32.xlu0 %v8665, 126
        %v8680 = vpop.permute.xlu0 %8679
        %8681 = vrot.lane.b32.xlu0 %v8666, 126
        %v8682 = vpop.permute.xlu0 %8681
        %8685 = vst.msk [vmem:[#allocation20 + $0x10] sm:$0xf] %vm2928, %v8680
        %8686 = vst.msk [vmem:[#allocation20 + $0x14] sm:$0xf] %vm2928, %v8682
        %8687 = vrot.lane.b32.xlu0 %v8665, 125
        %v8688 = vpop.permute.xlu0 %8687
        %8689 = vrot.lane.b32.xlu0 %v8666, 125
        %v8690 = vpop.permute.xlu0 %8689
        %8693 = vst.msk [vmem:[#allocation20 + $0x18] sm:$0xf] %vm2928, %v8688
        %8694 = vst.msk [vmem:[#allocation20 + $0x1c] sm:$0xf] %vm2928, %v8690
        %8695 = vrot.lane.b32.xlu0 %v8665, 124
        %v8696 = vpop.permute.xlu0 %8695
        %8697 = vrot.lane.b32.xlu0 %v8666, 124
        %v8698 = vpop.permute.xlu0 %8697
        %8701 = vst.msk [vmem:[#allocation20 + $0x20] sm:$0xf] %vm2928, %v8696
        %8702 = vst.msk [vmem:[#allocation20 + $0x24] sm:$0xf] %vm2928, %v8698
        %8703 = vrot.lane.b32.xlu0 %v8665, 123
        %v8704 = vpop.permute.xlu0 %8703
        %8705 = vrot.lane.b32.xlu0 %v8666, 123
        %v8706 = vpop.permute.xlu0 %8705
        %8709 = vst.msk [vmem:[#allocation20 + $0x28] sm:$0xf] %vm2928, %v8704
        %8710 = vst.msk [vmem:[#allocation20 + $0x2c] sm:$0xf] %vm2928, %v8706
        %8711 = vrot.lane.b32.xlu0 %v8665, 122
        %v8712 = vpop.permute.xlu0 %8711
        %8713 = vrot.lane.b32.xlu0 %v8666, 122
        %v8714 = vpop.permute.xlu0 %8713
        %8717 = vst.msk [vmem:[#allocation20 + $0x30] sm:$0xf] %vm2928, %v8712
        %8718 = vst.msk [vmem:[#allocation20 + $0x34] sm:$0xf] %vm2928, %v8714
        %v8719 = vld [vmem:[%s43] sm:$0xf]
        %v8720 = vld [vmem:[%s43 + $0x4] sm:$0xf]
        %v8721 = vld [vmem:[%s43 + $0x8] sm:$0xf]
        %v8722 = vld [vmem:[%s43 + $0xc] sm:$0xf]
        %v8723 = vld [vmem:[#allocation20] sm:$0xf]
        %v8724 = vld [vmem:[#allocation20 + $0x4] sm:$0xf]
        %v8725 = vld [vmem:[#allocation20 + $0x8] sm:$0xf]
        %v8726 = vld [vmem:[#allocation20 + $0xc] sm:$0xf]
        %v8727 = vld [vmem:[#allocation20 + $0x10] sm:$0xf]
        %v8728 = vld [vmem:[#allocation20 + $0x14] sm:$0xf]
        %v8729 = vld [vmem:[#allocation20 + $0x18] sm:$0xf]
        %v8730 = vld [vmem:[#allocation20 + $0x1c] sm:$0xf]
        %v8731 = vld [vmem:[#allocation20 + $0x20] sm:$0xf]
        %v8732 = vld [vmem:[#allocation20 + $0x24] sm:$0xf]
        %v8733 = vld [vmem:[#allocation20 + $0x28] sm:$0xf]
        %v8734 = vld [vmem:[#allocation20 + $0x2c] sm:$0xf]
        %v8735 = vld [vmem:[#allocation20 + $0x30] sm:$0xf]
        %v8736 = vld [vmem:[#allocation20 + $0x34] sm:$0xf]
        %v8737 = vld [vmem:[%s45] sm:$0xff]
        %v8738 = vld [vmem:[%s45 + $0x8] sm:$0xff]
        %v8739 = vld [vmem:[%s45 + $0x10] sm:$0xff]
        %v8740 = vld [vmem:[%s45 + $0x18] sm:$0xff]
        %8742 = vset.pattern.permute.xlu0 0
        %8743 = vperm.xlu0 %8742, %v8737
        %v8744 = vpop.permute.xlu0 %8743
        %8747 = vset.pattern.permute.xlu0 0
        %8748 = vperm.xlu0 %8747, %v8738
        %v8749 = vpop.permute.xlu0 %8748
        %8752 = vset.pattern.permute.xlu0 0
        %8753 = vperm.xlu0 %8752, %v8739
        %v8754 = vpop.permute.xlu0 %8753
        %8757 = vset.pattern.permute.xlu0 0
        %8758 = vperm.xlu0 %8757, %v8740
        %v8759 = vpop.permute.xlu0 %8758
        %v8765 = vunpack.c.l.b16 %v8719
        %v8766 = vunpack.c.l.b16 %v8720
        %v8767 = vunpack.c.l.b16 %v8721
        %v8768 = vunpack.c.l.b16 %v8722
        %v8769 = vpack.c.b16 %v8766, %v8765
        %v8770 = vpack.c.b16 %v8768, %v8767
        %v8785 = vunpack.c.l.b16 %v8723
        %v8786 = vunpack.c.l.b16 %v8724
        %v8787 = vunpack.c.l.b16 %v8725
        %v8788 = vunpack.c.l.b16 %v8726
        %v8789 = vunpack.c.l.b16 %v8727
        %v8790 = vunpack.c.l.b16 %v8728
        %v8791 = vunpack.c.l.b16 %v8729
        %v8792 = vunpack.c.l.b16 %v8730
        %v8793 = vunpack.c.l.b16 %v8731
        %v8794 = vunpack.c.l.b16 %v8732
        %v8795 = vunpack.c.l.b16 %v8733
        %v8796 = vunpack.c.l.b16 %v8734
        %v8797 = vunpack.c.l.b16 %v8735
        %v8798 = vunpack.c.l.b16 %v8736
        %v8799 = vpack.c.b16 %v8786, %v8785
        %v8800 = vpack.c.b16 %v8788, %v8787
        %v8801 = vpack.c.b16 %v8790, %v8789
        %v8802 = vpack.c.b16 %v8792, %v8791
        %v8803 = vpack.c.b16 %v8794, %v8793
        %v8804 = vpack.c.b16 %v8796, %v8795
        %v8805 = vpack.c.b16 %v8798, %v8797
        %v8814 = vsel %vm3211, %v8769, 0
        %v8817 = vsel %vm3211, %v8770, 0
        %8819 = vmatpush.bf16.msra.mxu0 0
        %8820 = vmatpush.bf16.msra.mxu0 %v8805
        %8821 = vmatpush.bf16.msra.mxu0 %v8804
        %8822 = vmatpush.bf16.msra.mxu0 %v8803
        %8823 = vmatpush.bf16.msra.mxu0 %v8802
        %8824 = vmatpush.bf16.msra.mxu0 %v8801
        %8825 = vmatpush.bf16.msra.mxu0 %v8800
        %8826 = vmatpush.bf16.msra.mxu0 %v8799
        %8827 = vmatmul.bf16.gmra.mxu0 %v8814
        %v8828 = vpop.f32.mrf.mxu0
        %v8829 = vadd.f32 %v8744, %v8828
        %v8830 = vpop.f32.mrf.mxu0
        %v8831 = vadd.f32 %v8749, %v8830
        %8832 = vmatmul.bf16.gmra.mxu0 %v8817
        %v8833 = vpop.f32.mrf.mxu0
        %v8834 = vadd.f32 %v8754, %v8833
        %v8835 = vpop.f32.mrf.mxu0
        %v8836 = vadd.f32 %v8759, %v8835
        %8837 = vdwg.mxu0
        %vm8838 = vcmp.ge.f32.partialorder %v8829, 0.0
        %vm8839 = vcmp.ge.f32.partialorder %v8831, 0.0
        %vm8840 = vcmp.ge.f32.partialorder %v8834, 0.0
        %vm8841 = vcmp.ge.f32.partialorder %v8836, 0.0
        %v8842 = vmul.f32 %v8829, 0.2
        %v8843 = vmul.f32 %v8831, 0.2
        %v8844 = vmul.f32 %v8834, 0.2
        %v8845 = vmul.f32 %v8836, 0.2
        %v8846 = vsel %vm8838, %v8829, %v8842
        %v8847 = vsel %vm8839, %v8831, %v8843
        %v8848 = vsel %vm8840, %v8834, %v8844
        %v8849 = vsel %vm8841, %v8836, %v8845
        %v8850 = vpack.c.bf16 %v8847, %v8846
        %v8851 = vpack.c.bf16 %v8849, %v8848
        %v8852 = vld [vmem:[%s55] sm:$0xf]
        %v8853 = vld [vmem:[%s55 + $0x4] sm:$0xf]
        %v8854 = vld [vmem:[%s55 + $0x8] sm:$0xf]
        %v8855 = vld [vmem:[%s55 + $0xc] sm:$0xf]
        %v8856 = vld [vmem:[%s55 + $0x10] sm:$0xf]
        %v8857 = vld [vmem:[%s55 + $0x14] sm:$0xf]
        %v8858 = vld [vmem:[%s55 + $0x18] sm:$0xf]
        %v8859 = vld [vmem:[%s55 + $0x1c] sm:$0xf]
        %v8868 = vunpack.c.l.b16 %v8852
        %v8869 = vunpack.c.l.b16 %v8853
        %v8870 = vunpack.c.l.b16 %v8854
        %v8871 = vunpack.c.l.b16 %v8855
        %v8872 = vunpack.c.l.b16 %v8856
        %v8873 = vunpack.c.l.b16 %v8857
        %v8874 = vunpack.c.l.b16 %v8858
        %v8875 = vunpack.c.l.b16 %v8859
        %v8876 = vpack.c.b16 %v8869, %v8868
        %v8877 = vpack.c.b16 %v8871, %v8870
        %v8878 = vpack.c.b16 %v8873, %v8872
        %v8879 = vpack.c.b16 %v8875, %v8874
        %v8885 = vsel %vm3302, %v8850, 0
        %v8888 = vsel %vm3302, %v8851, 0
        %8890 = vmatpush.bf16.msra.mxu0 0
        %8891 = vmatpush.bf16.msra.mxu0 0
        %8892 = vmatpush.bf16.msra.mxu0 0
        %8893 = vmatpush.bf16.msra.mxu0 0
        %8894 = vmatpush.bf16.msra.mxu0 %v8879
        %8895 = vmatpush.bf16.msra.mxu0 %v8878
        %8896 = vmatpush.bf16.msra.mxu0 %v8877
        %8897 = vmatpush.bf16.msra.mxu0 %v8876
        %8898 = vmatmul.bf16.gmra.mxu0 %v8885
        %v8899 = vpop.f32.mrf.mxu0
        %v8900 = vadd.f32 0.0, %v8899
        %v8901 = vpop.f32.mrf.mxu0
        %v8902 = vadd.f32 0.0, %v8901
        %8903 = vmatmul.bf16.gmra.mxu0 %v8888
        %v8904 = vpop.f32.mrf.mxu0
        %v8905 = vadd.f32 0.0, %v8904
        %v8906 = vpop.f32.mrf.mxu0
        %v8907 = vadd.f32 0.0, %v8906
        %8908 = vdwg.mxu0
        %8909 = vst.msk [vmem:[%s1045] sm:$0xff] %vm3328, %v8900
        %8910 = vst.msk [vmem:[%s1045 + $0x8] sm:$0xff] %vm3328, %v8902
        %8911 = vst.msk [vmem:[%s1045 + $0x10] sm:$0xff] %vm3328, %v8905
        %8912 = vst.msk [vmem:[%s1045 + $0x18] sm:$0xff] %vm3328, %v8907
        %v8913 = vld [vmem:[%s47] sm:$0xff]
        %v8914 = vld [vmem:[%s47 + $0x8] sm:$0xff]
        %v8915 = vld [vmem:[%s47 + $0x10] sm:$0xff]
        %v8916 = vld [vmem:[%s47 + $0x18] sm:$0xff]
        %v8917 = vld [vmem:[%s47 + $0x20] sm:$0xff]
        %v8918 = vld [vmem:[%s47 + $0x28] sm:$0xff]
        %v8919 = vld [vmem:[%s47 + $0x30] sm:$0xff]
        %v8920 = vld [vmem:[%s47 + $0x38] sm:$0xff]
        %v8921 = vmul.f32 %v8913, %v8900
        %v8922 = vmul.f32 %v8914, %v8902
        %v8923 = vmul.f32 %v8915, %v8905
        %v8924 = vmul.f32 %v8916, %v8907
        %v8925 = vmul.f32 %v8917, %v8900
        %v8926 = vmul.f32 %v8918, %v8902
        %v8927 = vmul.f32 %v8919, %v8905
        %v8928 = vmul.f32 %v8920, %v8907
        %v8929 = vsel %vm3328, %v8921, 0.0
        %8930 = vadd.xlane.f32.xlu0 %v8929
        %v8931 = vpop.xlane.xlu0 %8930
        %v8932 = vsel %vm3328, %v8922, 0.0
        %8933 = vadd.xlane.f32.xlu0 %v8932
        %v8934 = vpop.xlane.xlu0 %8933
        %v8935 = vsel %vm3328, %v8923, 0.0
        %8936 = vadd.xlane.f32.xlu0 %v8935
        %v8937 = vpop.xlane.xlu0 %8936
        %v8938 = vsel %vm3328, %v8924, 0.0
        %8939 = vadd.xlane.f32.xlu0 %v8938
        %v8940 = vpop.xlane.xlu0 %8939
        %v8941 = vsel %vm3328, %v8925, 0.0
        %8942 = vadd.xlane.f32.xlu0 %v8941
        %v8943 = vpop.xlane.xlu0 %8942
        %v8944 = vsel %vm3328, %v8926, 0.0
        %8945 = vadd.xlane.f32.xlu0 %v8944
        %v8946 = vpop.xlane.xlu0 %8945
        %v8947 = vsel %vm3328, %v8927, 0.0
        %8948 = vadd.xlane.f32.xlu0 %v8947
        %v8949 = vpop.xlane.xlu0 %8948
        %v8950 = vsel %vm3328, %v8928, 0.0
        %8951 = vadd.xlane.f32.xlu0 %v8950
        %v8952 = vpop.xlane.xlu0 %8951
        %v8961 = vlaneseq
        %v8962 = vand.u32 %v8961, 127
        %v8963 = vperm.slane %v8931, %v8962
        %v8964 = vadd.s32 %v8962, 4294967288
        %v8965 = vperm.slane %v8934, %v8964
        %vm8966 = vcmask 130112
        %v8967 = vsel %vm8966, %v8965, %v8963
        %v8968 = vadd.s32 %v8962, 4294967280
        %v8969 = vperm.slane %v8937, %v8968
        %vm8970 = vcmask 195712
        %v8971 = vsel %vm8970, %v8969, %v8967
        %v8972 = vadd.s32 %v8962, 4294967272
        %v8973 = vperm.slane %v8940, %v8972
        %vm8974 = vcmask 261312
        %v8975 = vsel %vm8974, %v8973, %v8971
        %v8976 = vperm.slane %v8943, %v8962
        %v8977 = vperm.slane %v8946, %v8964
        %v8978 = vsel %vm8966, %v8977, %v8976
        %v8979 = vperm.slane %v8949, %v8968
        %v8980 = vsel %vm8970, %v8979, %v8978
        %v8981 = vperm.slane %v8952, %v8972
        %v8982 = vsel %vm8974, %v8981, %v8980
        %vm8983 = vcmask 1041409
        %v8984 = vsel %vm8983, %v8982, %v8975
        %vm8986 = vcmask 254976
        %v8987 = vsel %vm8986, %v8984, 0.0
        %8988 = vadd.xlane.f32.xlu0 %v8987
        %v8989 = vpop.xlane.xlu0 %8988
        %v8990 = vld [vmem:[%s49] sm:$0x3]
        %v8991 = vadd.f32 %v8989, %v8990
        %vm8992 = vcmask 1024
        %v8993 = vsel %vm8992, %v8991, -inf
        %v8994 = vrot.slane %v8993, 4
        %v8995 = vmax.f32 %v8993, %v8994
        %v8996 = vrot.slane %v8995, 2
        %v8997 = vmax.f32 %v8995, %v8996
        %v8998 = vrot.slane %v8997, 1
        %v8999 = vmax.f32 %v8997, %v8998
        %v9000 = vsub.f32 %v8991, %v8999
        %v9001 = vmul.f32 %v9000, 1.442695
        %v9002 = vpow.pop %v9001
        %v9003 = vsel %vm8992, %v9002, 0.0
        %v9004 = vrot.slane %v9003, 4
        %v9005 = vadd.f32 %v9003, %v9004
        %v9006 = vrot.slane %v9005, 2
        %v9007 = vadd.f32 %v9005, %v9006
        %v9008 = vrot.slane %v9007, 1
        %v9009 = vadd.f32 %v9007, %v9008
        %v9010 = vrcp.pop %v9009
        %v9011 = vmul.f32 %v9009, %v9010
        %v9012 = vsub.f32 1.0, %v9011
        %v9013 = vmul.f32 %v9010, %v9012
        %v9014 = vadd.f32 %v9010, %v9013
        %vm9015 = vweird.f32 %v9009
        %vm9016 = vweird.f32 %v9010
        %vm9017 = vmor %vm9015, %vm9016
        %v9018 = vsel %vm9017, %v9010, %v9014
        %v9019 = vand.u32 2147483647, %v9009
        %vm9020 = vcmp.eq.f32.partialorder %v9019, 8.507059e+37
        %v9021 = vand.u32 %v9009, 2147483648
        %v9022 = vor.u32 1.1754944e-38, %v9021
        %v9023 = vsel %vm9020, %v9022, %v9018
        %v9024 = vmul.f32 %v9002, %v9023
        %9025 = vst.msk [vmem:[%s1030] sm:$0x3] %vm8992, %v9024
        %p9026 = scmp.lt.s32.totalorder %s80, 1
        %s9027 = scalar_select %p9026, %s80, 1
        %s9028 = scalar_lea.vmem %s57, %s9027
        %p9029 = scmp.lt.s32.totalorder %s80, 1
        %s9030 = scalar_select %p9029, %s80, 1
        %s9031 = smul.addr %s9030, 2
        %s9032 = scalar_lea.vmem %s59, %s9031
        %p9033 = scmp.lt.s32.totalorder %s80, 1
        %s9034 = scalar_select %p9033, %s80, 1
        %s9035 = smul.addr %s9034, 4
        %s9036 = smul.addr %s9035, 8
        %s9037 = scalar_lea.vmem %s61, %s9036
        %p9038 = scmp.lt.s32.totalorder %s80, 1
        %s9039 = scalar_select %p9038, %s80, 1
        %s9040 = smul.addr %s9039, 4
        %s9041 = smul.addr %s9040, 8
        %s9042 = scalar_lea.vmem %s63, %s9041
        %p9043 = scmp.lt.s32.totalorder %s80, 1
        %s9044 = scalar_select %p9043, %s80, 1
        %s9045 = smul.addr %s9044, 4
        %s9046 = smul.addr %s9045, 8
        %s9047 = scalar_lea.vmem %s65, %s9046
        // Predicated region
        $region137: #{forward.1} parent=131 // pred_check
          %p9048 = pneg %p691
        $region138: #{forward.1} parent=131 // pred_check_branch
          %9050 = sbr.rel (%p9048) target = $region140
        $region139: #{forward.1} parent=131 // pred_region
          _
        $region140: #{forward.1} parent=131 // pred_fallthru
          _
        // Predicated region
        $region141: #{forward.1} parent=131 // pred_check
          %p9051 = pneg %p717
        $region142: #{forward.1} parent=131 // pred_check_branch
          %9053 = sbr.rel (%p9051) target = $region144
        $region143: #{forward.1} parent=131 // pred_region
          _
        $region144: #{forward.1} parent=131 // pred_fallthru
          _
        // Predicated region
        $region145: #{forward.1} parent=131 // pred_check
          %p9054 = pneg %p743
        $region146: #{forward.1} parent=131 // pred_check_branch
          %9056 = sbr.rel (%p9054) target = $region148
        $region147: #{forward.1} parent=131 // pred_region
          _
        $region148: #{forward.1} parent=131 // pred_fallthru
          _
        // Predicated region
        $region149: #{forward.1} parent=131 // pred_check
          %p9057 = pneg %p769
        $region150: #{forward.1} parent=131 // pred_check_branch
          %9059 = sbr.rel (%p9057) target = $region152
        $region151: #{forward.1} parent=131 // pred_region
          _
        $region152: #{forward.1} parent=131 // pred_fallthru
          _
        // Predicated region
        $region153: #{forward.1} parent=131 // pred_check
          %p9060 = pneg %p795
        $region154: #{forward.1} parent=131 // pred_check_branch
          %9062 = sbr.rel (%p9060) target = $region156
        $region155: #{forward.1} parent=131 // pred_region
          _
        $region156: #{forward.1} parent=131 // pred_fallthru
          _
      $region132: #{forward.1} parent=5 // pred_fallthru
        _
      %p9063 = scmp.le.s32.totalorder 2, %s75
      // Predicated region
      $region157: #{forward.1} parent=5 // pred_check
        %p9064 = pneg %p9063
      $region158: #{forward.1} parent=5 // pred_check_branch
        %9066 = sbr.rel (%p9064) target = $region160
      $region159: #{forward.1} parent=5 // pred_region
        %s9067 = ssub.s32 %s75, 2
        // Predicated region
        $region161: #{forward.1} parent=159 // pred_check
          %p9068 = pneg %p697
        $region162: #{forward.1} parent=159 // pred_check_branch
          %9070 = sbr.rel (%p9068) target = $region164
        $region163: #{forward.1} parent=159 // pred_region
          %p9071 = scmp.lt.s32.totalorder %s81, 1
          %s9072 = scalar_select %p9071, %s81, 1
          %s9073 = scalar_lea.vmem %s57, %s9072
        $region164: #{forward.1} parent=159 // pred_fallthru
          _
        // Predicated region
        $region165: #{forward.1} parent=159 // pred_check
          %p9074 = pneg %p723
        $region166: #{forward.1} parent=159 // pred_check_branch
          %9076 = sbr.rel (%p9074) target = $region168
        $region167: #{forward.1} parent=159 // pred_region
          %p9077 = scmp.lt.s32.totalorder %s81, 1
          %s9078 = scalar_select %p9077, %s81, 1
          %s9079 = smul.addr %s9078, 2
          %s9080 = scalar_lea.vmem %s59, %s9079
        $region168: #{forward.1} parent=159 // pred_fallthru
          _
        // Predicated region
        $region169: #{forward.1} parent=159 // pred_check
          %p9081 = pneg %p749
        $region170: #{forward.1} parent=159 // pred_check_branch
          %9083 = sbr.rel (%p9081) target = $region172
        $region171: #{forward.1} parent=159 // pred_region
          %p9084 = scmp.lt.s32.totalorder %s81, 1
          %s9085 = scalar_select %p9084, %s81, 1
          %s9086 = smul.addr %s9085, 4
          %s9087 = smul.addr %s9086, 8
          %s9088 = scalar_lea.vmem %s61, %s9087
        $region172: #{forward.1} parent=159 // pred_fallthru
          _
        // Predicated region
        $region173: #{forward.1} parent=159 // pred_check
          %p9089 = pneg %p775
        $region174: #{forward.1} parent=159 // pred_check_branch
          %9091 = sbr.rel (%p9089) target = $region176
        $region175: #{forward.1} parent=159 // pred_region
          %p9092 = scmp.lt.s32.totalorder %s81, 1
          %s9093 = scalar_select %p9092, %s81, 1
          %s9094 = smul.addr %s9093, 4
          %s9095 = smul.addr %s9094, 8
          %s9096 = scalar_lea.vmem %s63, %s9095
        $region176: #{forward.1} parent=159 // pred_fallthru
          _
        // Predicated region
        $region177: #{forward.1} parent=159 // pred_check
          %p9097 = pneg %p801
        $region178: #{forward.1} parent=159 // pred_check_branch
          %9099 = sbr.rel (%p9097) target = $region180
        $region179: #{forward.1} parent=159 // pred_region
          %p9100 = scmp.lt.s32.totalorder %s81, 1
          %s9101 = scalar_select %p9100, %s81, 1
          %s9102 = smul.addr %s9101, 4
          %s9103 = smul.addr %s9102, 8
          %s9104 = scalar_lea.vmem %s65, %s9103
        $region180: #{forward.1} parent=159 // pred_fallthru
          _
      $region160: #{forward.1} parent=5 // pred_fallthru
        _
    $region6: #{forward.1} parent=1 // loop_footer
      %s79 = sadd.s32 1, %s75
    $region7: #{forward.1} parent=1 // loop_footer_branch
      %74 = sbr.rel target = $region3
    $region8: #{forward.1} parent=1 // loop_exit
      _
    %9105 = vsyncpa [#allocation23], 1
    %s9106 = scalar_lea.sflag [#allocation23], 1
    %9107 = vsyncpa %s9106, 1

</llo_original>
